<compile_context>
chip_gen: v6e
topology: v6e:2x2x1
jax: 0.10.0
libtpu: 0.0.40
codegen_flags: <defaults>
</compile_context>

<pallas_src>
import functools
import math

import jax
import jax.numpy as jnp
import numpy as np
from jax.experimental import pallas as pl
from jax.experimental.pallas import tpu as pltpu

# ----------------------------- model hyper-params (small, consistent) --------
B = 2                 # batch of images
IMG = 16              # image spatial size
PATCH = 8             # ViT patch size  -> 2x2 = 4 patches
N_PATCH = (IMG // PATCH) ** 2
LV = 1 + N_PATCH      # visual seq len (cls + patches)
DV = 32               # visual width
VIS_LAYERS = 2
VIS_HEADS = 2
VIS_MLP = 64

T = 2                 # num_templates
C = 3                 # n_cls (classnames)
N_CTX = 4             # context tokens
LT = 16               # text context length (stand-in for CLIP's 77)
DT = 32               # text transformer width (ctx_dim)
TXT_LAYERS = 2
TXT_HEADS = 2
TXT_MLP = 64

DE = 32               # joint embedding dim
N_TXT = T * C         # number of text sequences

F32 = jnp.float32
BF16 = jnp.bfloat16
NEG = -1e9

MAT_WIDTH = 96        # widest matrix (Wqkv: 3*D)
MAT_ROW_ALIGN = 16    # bf16 sublane-tile alignment for slab entries
VEC_WIDTH = 96        # widest bias vector (bqkv)


# ----------------------------- weight-slab packing (host-side, once) ---------
class _MatPacker:
    """Packs all 2-D weight matrices into one (rows, MAT_WIDTH) bf16 slab.

    Entry row offsets are multiples of 16 so every static in-kernel slice
    starts on a bf16 sublane-tile boundary.
    """

    def __init__(self, width, row_align):
        self.width = width
        self.row_align = row_align
        self.parts = []
        self.offset = 0

    def add(self, arr):
        arr = np.asarray(arr, np.float32)
        r, c = arr.shape
        assert c <= self.width
        entry = (self.offset, r, c)
        r_pad = -(-r // self.row_align) * self.row_align
        buf = np.zeros((r_pad, self.width), np.float32)
        buf[:r, :c] = arr
        self.parts.append(buf)
        self.offset += r_pad
        return entry

    def finalize(self):
        return jnp.asarray(np.concatenate(self.parts, axis=0), BF16)


class _VecPacker:
    """Packs every bias / LayerNorm vector as one row of a (n, VEC_WIDTH) f32 slab."""

    def __init__(self, width):
        self.width = width
        self.rows = []

    def add(self, vec):
        vec = np.asarray(vec, np.float32).reshape(-1)
        assert vec.shape[0] <= self.width
        entry = (len(self.rows), vec.shape[0])
        row = np.zeros((self.width,), np.float32)
        row[: vec.shape[0]] = vec
        self.rows.append(row)
        return entry

    def finalize(self):
        return jnp.asarray(np.stack(self.rows, axis=0), F32)


# ----------------------------- in-kernel helpers ------------------------------
def _mat(ref, entry):
    off, r, c = entry                       # static python ints -> free view
    return ref[off:off + r, 0:c]


def _vec(ref, entry):
    row, c = entry
    return ref[row:row + 1, 0:c]            # (1, c), broadcasts over rows


def _mm(a, b):
    # bf16 operands on the MXU, f32 accumulation.
    return jnp.dot(a.astype(BF16), b.astype(BF16), preferred_element_type=F32)


def _mm_nt(a, b):
    # a @ b.T without an in-kernel transpose: contract last dims of both.
    return jax.lax.dot_general(a.astype(BF16), b.astype(BF16),
                               (((1,), (1,)), ((), ())),
                               preferred_element_type=F32)


def _ln(v, g, b, eps=1e-5):
    mu = jnp.mean(v, axis=-1, keepdims=True)
    var = jnp.mean((v - mu) ** 2, axis=-1, keepdims=True)
    return (v - mu) * jax.lax.rsqrt(var + eps) * g + b


def _l2norm(x):
    return x * jax.lax.rsqrt(jnp.sum(x * x, axis=-1, keepdims=True))


def _block_mask(n_seq, seq_len, causal):
    """Block-diagonal (per flattened sequence) additive mask, built in-kernel.

    Uses only iota + compares (no int division) so it lowers to plain VPU ops.
    """
    n = n_seq * seq_len
    row = jax.lax.broadcasted_iota(jnp.int32, (n, n), 0)
    col = jax.lax.broadcasted_iota(jnp.int32, (n, n), 1)
    keep = jnp.zeros((n, n), jnp.bool_)
    for s in range(n_seq):                            # static unroll, tiny
        lo, hi = s * seq_len, (s + 1) * seq_len
        keep = keep | ((row >= lo) & (row < hi) & (col >= lo) & (col < hi))
    if causal:
        keep = keep & (row >= col)
    return jnp.where(keep, 0.0, NEG)


def _encoder_stack(x, mask, wref, vref, cfg, num_heads):
    """Pre-LN CLIP transformer blocks on a flattened (N*L, D) f32 slab."""
    d = x.shape[-1]
    dh = d // num_heads
    scale = 1.0 / math.sqrt(dh)
    for lyr in cfg["layers"]:
        # ---- attention (fused QKV, per-head scores, single WO) ----
        h = _ln(x, _vec(vref, lyr["ln1_g"]), _vec(vref, lyr["ln1_b"]))
        qkv = _mm(h, _mat(wref, lyr["wqkv"])) + _vec(vref, lyr["bqkv"])  # (NL,3d)
        ctx = []
        for hh in range(num_heads):
            q = qkv[:, hh * dh:(hh + 1) * dh]
            k = qkv[:, d + hh * dh:d + (hh + 1) * dh]
            v = qkv[:, 2 * d + hh * dh:2 * d + (hh + 1) * dh]
            s = _mm_nt(q, k) * scale + mask                              # (NL,NL)
            s = s - jnp.max(s, axis=-1, keepdims=True)
            p = jnp.exp(s)
            p = p * pl.reciprocal(jnp.sum(p, axis=-1, keepdims=True), approx=True)
            ctx.append(_mm(p, v))                                        # (NL,dh)
        ctx = jnp.concatenate(ctx, axis=-1)                              # (NL,d)
        x = x + _mm(ctx, _mat(wref, lyr["wo"])) + _vec(vref, lyr["bo"])
        # ---- MLP (QuickGELU) ----
        h2 = _ln(x, _vec(vref, lyr["ln2_g"]), _vec(vref, lyr["ln2_b"]))
        m = _mm(h2, _mat(wref, lyr["w1"])) + _vec(vref, lyr["b1"])
        m = m * jax.nn.sigmoid(1.702 * m)
        x = x + _mm(m, _mat(wref, lyr["w2"])) + _vec(vref, lyr["b2"])
    return x


# ----------------------------- the single fused kernel ------------------------
def fused_clip_kernel(scale_ref, txt_x0_ref, patch_ref, wmat_ref, vec_ref,
                      txt_out_ref, logits_out_ref,
                      *, layout, eot_rows, batch, n_patch):
    # ---- text encoder -------------------------------------------------------
    tl = layout["txt"]
    xt = txt_x0_ref[...]                                     # (N_TXT*LT, DT)
    tmask = _block_mask(N_TXT, LT, causal=True)
    xt = _encoder_stack(xt, tmask, wmat_ref, vec_ref, tl, TXT_HEADS)
    xt = _ln(xt, _vec(vec_ref, tl["lnf_g"]), _vec(vec_ref, tl["lnf_b"]))
    # EOT gather: static row slices (positions known at trace time).
    x_eot = jnp.concatenate([xt[r:r + 1, :] for r in eot_rows], axis=0)  # (N_TXT,DT)
    t_norm = _l2norm(_mm(x_eot, _mat(wmat_ref, tl["proj"])))             # (N_TXT,DE)
    txt_out_ref[...] = t_norm

    # ---- vision encoder -----------------------------------------------------
    vl = layout["vis"]
    lv = 1 + n_patch
    xp = _mm(patch_ref[...], _mat(wmat_ref, vl["conv1"]))    # (B*P, DV) patch embed
    pos_pat = _mat(wmat_ref, vl["pos_patch"])                # (P, DV)
    cls_row = _vec(vec_ref, vl["cls_pos"])                   # (1, DV)
    parts = []
    for b in range(batch):                                   # CLS + pos assembly
        parts.append(cls_row)
        parts.append(xp[b * n_patch:(b + 1) * n_patch, :] + pos_pat)
    xv = jnp.concatenate(parts, axis=0)                      # (B*LV, DV)
    xv = _ln(xv, _vec(vec_ref, vl["lnpre_g"]), _vec(vec_ref, vl["lnpre_b"]))
    vmask = _block_mask(batch, lv, causal=False)
    xv = _encoder_stack(xv, vmask, wmat_ref, vec_ref, vl, VIS_HEADS)
    xv = _ln(xv, _vec(vec_ref, vl["lnpost_g"]), _vec(vec_ref, vl["lnpost_b"]))
    # drop CLS rows (dense=True): static row slices, no matmul.
    dense = jnp.concatenate(
        [xv[b * lv + 1:(b + 1) * lv, :] for b in range(batch)], axis=0)  # (B*P,DV)
    img_n = _l2norm(_mm(dense, _mat(wmat_ref, vl["proj"])))              # (B*P,DE)

    # ---- cosine logits ------------------------------------------------------
    logits_out_ref[...] = jnp.exp(scale_ref[0]) * _mm_nt(img_n, t_norm)


def fused_forward(scale, txt_x0, patches, wmat, vecs, layout, eot_rows,
                  batch, n_patch, n_txt):
    kernel = functools.partial(fused_clip_kernel, layout=layout,
                               eot_rows=tuple(eot_rows), batch=batch,
                               n_patch=n_patch)
    vmem = pl.BlockSpec(memory_space=pltpu.MemorySpace.VMEM)
    smem = pl.BlockSpec(memory_space=pltpu.MemorySpace.SMEM)
    return pl.pallas_call(
        kernel,
        out_shape=(jax.ShapeDtypeStruct((n_txt, DE), F32),
                   jax.ShapeDtypeStruct((batch * n_patch, n_txt), F32)),
        in_specs=[smem, vmem, vmem, vmem, vmem],
        out_specs=(vmem, vmem),
    )(scale, txt_x0, patches, wmat, vecs)


# ----------------------------- parameter construction -------------------------
def _block_params(key, d, mlp):
    ks = jax.random.split(key, 4)
    return {
        "ln1_g": jnp.ones((d,), F32), "ln1_b": jnp.zeros((d,), F32),
        "wqkv": 0.02 * jax.random.normal(ks[0], (d, 3 * d), F32),
        "bqkv": jnp.zeros((3 * d,), F32),
        "wo": 0.02 * jax.random.normal(ks[1], (d, d), F32),
        "bo": jnp.zeros((d,), F32),
        "ln2_g": jnp.ones((d,), F32), "ln2_b": jnp.zeros((d,), F32),
        "w1": 0.02 * jax.random.normal(ks[2], (d, mlp), F32),
        "b1": jnp.zeros((mlp,), F32),
        "w2": 0.02 * jax.random.normal(ks[3], (mlp, d), F32),
        "b2": jnp.zeros((d,), F32),
    }


def init_params(key):
    keys = iter(jax.random.split(key, 32))
    p = {}
    # ---- prompt learner (num_templates branch, class_token_position='end') ----
    p["ctx"] = 0.02 * jax.random.normal(next(keys), (T, N_CTX, DT), F32)
    p["token_prefix"] = 0.02 * jax.random.normal(next(keys), (T, C, 1, DT), F32)
    p["token_suffix"] = 0.02 * jax.random.normal(
        next(keys), (T, C, LT - 1 - N_CTX, DT), F32)
    # synthetic tokenized prompts: EOT token (max id) position depends on class
    pos = jnp.arange(LT)[None, None, :]
    eot_pos = jnp.broadcast_to((1 + N_CTX + 1 + jnp.arange(C))[None, :, None],
                               (T, C, 1))
    tok = jnp.where(pos < eot_pos, 400 + pos, 0)
    tok = jnp.where(pos == eot_pos, 49407, tok).astype(jnp.int32)
    p["tokenized_prompts"] = tok                       # (T, C, LT)
    # ---- text encoder ----
    p["txt_pos"] = 0.01 * jax.random.normal(next(keys), (LT, DT), F32)
    p["txt_blocks"] = [_block_params(next(keys), DT, TXT_MLP)
                       for _ in range(TXT_LAYERS)]
    p["txt_lnf_g"] = jnp.ones((DT,), F32)
    p["txt_lnf_b"] = jnp.zeros((DT,), F32)
    p["text_projection"] = 0.02 * jax.random.normal(next(keys), (DT, DE), F32)
    # ---- image encoder (ViT, dense=True) ----
    p["conv1_w"] = 0.02 * jax.random.normal(next(keys), (3 * PATCH * PATCH, DV), F32)
    p["class_emb"] = 0.02 * jax.random.normal(next(keys), (DV,), F32)
    p["vis_pos"] = 0.01 * jax.random.normal(next(keys), (LV, DV), F32)
    p["vis_lnpre_g"] = jnp.ones((DV,), F32)
    p["vis_lnpre_b"] = jnp.zeros((DV,), F32)
    p["vis_blocks"] = [_block_params(next(keys), DV, VIS_MLP)
                       for _ in range(VIS_LAYERS)]
    p["vis_lnpost_g"] = jnp.ones((DV,), F32)
    p["vis_lnpost_b"] = jnp.zeros((DV,), F32)
    p["vis_proj"] = 0.02 * jax.random.normal(next(keys), (DV, DE), F32)
    # ---- CLIP logit scale ----
    p["logit_scale"] = jnp.array([math.log(1.0 / 0.07)], F32)
    return p


def _pack_model(p):
    """Pack all weights into one bf16 matrix slab + one f32 vector slab."""
    mat = _MatPacker(MAT_WIDTH, MAT_ROW_ALIGN)
    vec = _VecPacker(VEC_WIDTH)

    def pack_blocks(blocks):
        out = []
        for b in blocks:
            out.append({
                "ln1_g": vec.add(b["ln1_g"]), "ln1_b": vec.add(b["ln1_b"]),
                "wqkv": mat.add(b["wqkv"]), "bqkv": vec.add(b["bqkv"]),
                "wo": mat.add(b["wo"]), "bo": vec.add(b["bo"]),
                "ln2_g": vec.add(b["ln2_g"]), "ln2_b": vec.add(b["ln2_b"]),
                "w1": mat.add(b["w1"]), "b1": vec.add(b["b1"]),
                "w2": mat.add(b["w2"]), "b2": vec.add(b["b2"]),
            })
        return out

    layout = {"txt": {}, "vis": {}}
    t = layout["txt"]
    t["layers"] = pack_blocks(p["txt_blocks"])
    t["lnf_g"] = vec.add(p["txt_lnf_g"])
    t["lnf_b"] = vec.add(p["txt_lnf_b"])
    t["proj"] = mat.add(p["text_projection"])

    v = layout["vis"]
    v["conv1"] = mat.add(p["conv1_w"])
    v["pos_patch"] = mat.add(p["vis_pos"][1:])
    v["cls_pos"] = vec.add(p["class_emb"] + p["vis_pos"][0])
    v["lnpre_g"] = vec.add(p["vis_lnpre_g"])
    v["lnpre_b"] = vec.add(p["vis_lnpre_b"])
    v["layers"] = pack_blocks(p["vis_blocks"])
    v["lnpost_g"] = vec.add(p["vis_lnpost_g"])
    v["lnpost_b"] = vec.add(p["vis_lnpost_b"])
    v["proj"] = mat.add(p["vis_proj"])

    return mat.finalize(), vec.finalize(), layout


# ----------------------------- model ------------------------------------------
class ClipTestTimeTuning:
    """num_templates is not None; ctx_position='end'; learned_cls=False."""

    def __init__(self, key):
        self.p = init_params(key)
        self.wmat, self.vecs, self.layout = _pack_model(self.p)
        # EOT positions are concrete at trace time -> static row indices.
        eot = np.asarray(
            jnp.argmax(self.p["tokenized_prompts"].reshape(N_TXT, LT), axis=-1))
        self.eot_rows = tuple(int(i * LT + e) for i, e in enumerate(eot))
        self.txt_pos_tiled = jnp.tile(self.p["txt_pos"], (N_TXT, 1))

    # --- PromptLearner.forward (end position, not learned cls) ---
    def prompt_learner(self):
        ctx = jnp.broadcast_to(self.p["ctx"][:, None], (T, C, N_CTX, DT))
        return jnp.concatenate(
            [self.p["token_prefix"], ctx, self.p["token_suffix"]], axis=-2)

    def inference(self, image):
        b, cc, h, w = image.shape
        gh, gw = h // PATCH, w // PATCH
        n_patch = gh * gw
        # ---- glue: patchify NCHW -> (B*P, C*PATCH*PATCH)
        x = image.reshape(b, cc, gh, PATCH, gw, PATCH)
        patches = x.transpose(0, 2, 4, 1, 3, 5).reshape(
            b * n_patch, cc * PATCH * PATCH)
        # ---- glue: prompt assembly (+ positional embedding) -> one text slab
        prompts = self.prompt_learner().reshape(N_TXT * LT, DT)
        txt_x0 = prompts + self.txt_pos_tiled

        txt2d, logits2d = fused_forward(
            self.p["logit_scale"], txt_x0, patches, self.wmat, self.vecs,
            self.layout, self.eot_rows, b, n_patch, N_TXT)
        # (reference's stack-of-one + mean over templates is a numerical no-op)
        logits = logits2d.reshape(b, n_patch, T, C)
        text_out = txt2d.reshape(T, C, DE).transpose(1, 0, 2)[None]  # (1,C,T,DE)
        return logits, text_out

    def __call__(self, inp):
        if isinstance(inp, tuple):
            # TODO(synk): contrast_prompt_tuning branch not defined in reference module
            raise NotImplementedError
        if inp.ndim == 2:
            # TODO(synk): directional_prompt_tuning branch not defined in reference module
            raise NotImplementedError
        return self.inference(inp)


# ----------------------------- main --------------------------------------------
if __name__ == "__main__":
    key = jax.random.PRNGKey(0)
    k_model, k_img = jax.random.split(key)
    model = ClipTestTimeTuning(k_model)
    image = jax.random.normal(k_img, (B, 3, IMG, IMG), F32)     # NCHW, like PyTorch
    logits, text_feats = model(image)
    jax.block_until_ready(logits)
    jax.block_until_ready(text_feats)
    assert logits.shape == (B, N_PATCH, T, C)
    assert text_feats.shape == (1, C, T, DE)
    assert bool(jnp.all(jnp.isfinite(logits)))
    assert bool(jnp.all(jnp.isfinite(text_feats)))
    print("KERNEL_OK")
</pallas_src>

<mosaic_0001>
module attributes {stable_mosaic.version = 11 : i64} {
  func.func @fused_clip_kernel(%arg0: memref<1xf32, #tpu.memory_space<smem>>, %arg1: memref<96x32xf32, #tpu.memory_space<vmem>>, %arg2: memref<8x192xf32, #tpu.memory_space<vmem>>, %arg3: memref<912x96xbf16, #tpu.memory_space<vmem>>, %arg4: memref<39x96xf32, #tpu.memory_space<vmem>>, %arg5: memref<6x32xf32, #tpu.memory_space<vmem>>, %arg6: memref<8x6xf32, #tpu.memory_space<vmem>>) attributes {dimension_semantics = [], scalar_prefetch = 0 : i64, scratch_operands = 0 : i64, tpu.core_type = #tpu.core_type<tc>} {
    %c0 = arith.constant 0 : index
    %c0_0 = arith.constant 0 : index
    %0 = vector.load %arg1[%c0, %c0_0] : memref<96x32xf32, #tpu.memory_space<vmem>>, vector<96x32xf32>
    %1 = tpu.iota {dimensions = array<i32: 0>} : vector<96x96xi32>
    %2 = tpu.iota {dimensions = array<i32: 1>} : vector<96x96xi32>
    %false = arith.constant false
    %3 = vector.broadcast %false : i1 to vector<96x96xi1>
    %c0_i32 = arith.constant 0 : i32
    %4 = vector.broadcast %c0_i32 : i32 to vector<96x96xi32>
    %5 = arith.cmpi sge, %1, %4 : vector<96x96xi32>
    %c16_i32 = arith.constant 16 : i32
    %6 = vector.broadcast %c16_i32 : i32 to vector<96x96xi32>
    %7 = arith.cmpi slt, %1, %6 : vector<96x96xi32>
    %8 = arith.andi %5, %7 : vector<96x96xi1>
    %c0_i32_1 = arith.constant 0 : i32
    %9 = vector.broadcast %c0_i32_1 : i32 to vector<96x96xi32>
    %10 = arith.cmpi sge, %2, %9 : vector<96x96xi32>
    %11 = arith.andi %8, %10 : vector<96x96xi1>
    %c16_i32_2 = arith.constant 16 : i32
    %12 = vector.broadcast %c16_i32_2 : i32 to vector<96x96xi32>
    %13 = arith.cmpi slt, %2, %12 : vector<96x96xi32>
    %14 = arith.andi %11, %13 : vector<96x96xi1>
    %15 = arith.ori %3, %14 : vector<96x96xi1>
    %c16_i32_3 = arith.constant 16 : i32
    %16 = vector.broadcast %c16_i32_3 : i32 to vector<96x96xi32>
    %17 = arith.cmpi sge, %1, %16 : vector<96x96xi32>
    %c32_i32 = arith.constant 32 : i32
    %18 = vector.broadcast %c32_i32 : i32 to vector<96x96xi32>
    %19 = arith.cmpi slt, %1, %18 : vector<96x96xi32>
    %20 = arith.andi %17, %19 : vector<96x96xi1>
    %c16_i32_4 = arith.constant 16 : i32
    %21 = vector.broadcast %c16_i32_4 : i32 to vector<96x96xi32>
    %22 = arith.cmpi sge, %2, %21 : vector<96x96xi32>
    %23 = arith.andi %20, %22 : vector<96x96xi1>
    %c32_i32_5 = arith.constant 32 : i32
    %24 = vector.broadcast %c32_i32_5 : i32 to vector<96x96xi32>
    %25 = arith.cmpi slt, %2, %24 : vector<96x96xi32>
    %26 = arith.andi %23, %25 : vector<96x96xi1>
    %27 = arith.ori %15, %26 : vector<96x96xi1>
    %c32_i32_6 = arith.constant 32 : i32
    %28 = vector.broadcast %c32_i32_6 : i32 to vector<96x96xi32>
    %29 = arith.cmpi sge, %1, %28 : vector<96x96xi32>
    %c48_i32 = arith.constant 48 : i32
    %30 = vector.broadcast %c48_i32 : i32 to vector<96x96xi32>
    %31 = arith.cmpi slt, %1, %30 : vector<96x96xi32>
    %32 = arith.andi %29, %31 : vector<96x96xi1>
    %c32_i32_7 = arith.constant 32 : i32
    %33 = vector.broadcast %c32_i32_7 : i32 to vector<96x96xi32>
    %34 = arith.cmpi sge, %2, %33 : vector<96x96xi32>
    %35 = arith.andi %32, %34 : vector<96x96xi1>
    %c48_i32_8 = arith.constant 48 : i32
    %36 = vector.broadcast %c48_i32_8 : i32 to vector<96x96xi32>
    %37 = arith.cmpi slt, %2, %36 : vector<96x96xi32>
    %38 = arith.andi %35, %37 : vector<96x96xi1>
    %39 = arith.ori %27, %38 : vector<96x96xi1>
    %c48_i32_9 = arith.constant 48 : i32
    %40 = vector.broadcast %c48_i32_9 : i32 to vector<96x96xi32>
    %41 = arith.cmpi sge, %1, %40 : vector<96x96xi32>
    %c64_i32 = arith.constant 64 : i32
    %42 = vector.broadcast %c64_i32 : i32 to vector<96x96xi32>
    %43 = arith.cmpi slt, %1, %42 : vector<96x96xi32>
    %44 = arith.andi %41, %43 : vector<96x96xi1>
    %c48_i32_10 = arith.constant 48 : i32
    %45 = vector.broadcast %c48_i32_10 : i32 to vector<96x96xi32>
    %46 = arith.cmpi sge, %2, %45 : vector<96x96xi32>
    %47 = arith.andi %44, %46 : vector<96x96xi1>
    %c64_i32_11 = arith.constant 64 : i32
    %48 = vector.broadcast %c64_i32_11 : i32 to vector<96x96xi32>
    %49 = arith.cmpi slt, %2, %48 : vector<96x96xi32>
    %50 = arith.andi %47, %49 : vector<96x96xi1>
    %51 = arith.ori %39, %50 : vector<96x96xi1>
    %c64_i32_12 = arith.constant 64 : i32
    %52 = vector.broadcast %c64_i32_12 : i32 to vector<96x96xi32>
    %53 = arith.cmpi sge, %1, %52 : vector<96x96xi32>
    %c80_i32 = arith.constant 80 : i32
    %54 = vector.broadcast %c80_i32 : i32 to vector<96x96xi32>
    %55 = arith.cmpi slt, %1, %54 : vector<96x96xi32>
    %56 = arith.andi %53, %55 : vector<96x96xi1>
    %c64_i32_13 = arith.constant 64 : i32
    %57 = vector.broadcast %c64_i32_13 : i32 to vector<96x96xi32>
    %58 = arith.cmpi sge, %2, %57 : vector<96x96xi32>
    %59 = arith.andi %56, %58 : vector<96x96xi1>
    %c80_i32_14 = arith.constant 80 : i32
    %60 = vector.broadcast %c80_i32_14 : i32 to vector<96x96xi32>
    %61 = arith.cmpi slt, %2, %60 : vector<96x96xi32>
    %62 = arith.andi %59, %61 : vector<96x96xi1>
    %63 = arith.ori %51, %62 : vector<96x96xi1>
    %c80_i32_15 = arith.constant 80 : i32
    %64 = vector.broadcast %c80_i32_15 : i32 to vector<96x96xi32>
    %65 = arith.cmpi sge, %1, %64 : vector<96x96xi32>
    %c96_i32 = arith.constant 96 : i32
    %66 = vector.broadcast %c96_i32 : i32 to vector<96x96xi32>
    %67 = arith.cmpi slt, %1, %66 : vector<96x96xi32>
    %68 = arith.andi %65, %67 : vector<96x96xi1>
    %c80_i32_16 = arith.constant 80 : i32
    %69 = vector.broadcast %c80_i32_16 : i32 to vector<96x96xi32>
    %70 = arith.cmpi sge, %2, %69 : vector<96x96xi32>
    %71 = arith.andi %68, %70 : vector<96x96xi1>
    %c96_i32_17 = arith.constant 96 : i32
    %72 = vector.broadcast %c96_i32_17 : i32 to vector<96x96xi32>
    %73 = arith.cmpi slt, %2, %72 : vector<96x96xi32>
    %74 = arith.andi %71, %73 : vector<96x96xi1>
    %75 = arith.ori %63, %74 : vector<96x96xi1>
    %76 = arith.cmpi sge, %1, %2 : vector<96x96xi32>
    %77 = arith.andi %75, %76 : vector<96x96xi1>
    %cst = arith.constant 0.000000e+00 : f32
    %cst_18 = arith.constant -1.000000e+09 : f32
    %78 = vector.broadcast %cst : f32 to vector<96x96xf32>
    %79 = vector.broadcast %cst_18 : f32 to vector<96x96xf32>
    %80 = arith.select %77, %78, %79 : vector<96x96xi1>, vector<96x96xf32>
    %c0_19 = arith.constant 0 : index
    %c0_20 = arith.constant 0 : index
    %81 = vector.load %arg4[%c0_19, %c0_20] : memref<39x96xf32, #tpu.memory_space<vmem>>, vector<1x32xf32>
    %c1 = arith.constant 1 : index
    %c0_21 = arith.constant 0 : index
    %82 = vector.load %arg4[%c1, %c0_21] : memref<39x96xf32, #tpu.memory_space<vmem>>, vector<1x32xf32>
    %cst_22 = arith.constant dense<0.000000e+00> : vector<96xf32>
    %83 = vector.multi_reduction <add>, %0, %cst_22 [1] : vector<96x32xf32> to vector<96xf32>
    %84 = vector.shape_cast %83 : vector<96xf32> to vector<96x1xf32>
    %cst_23 = arith.constant 3.200000e+01 : f32
    %85 = vector.broadcast %cst_23 : f32 to vector<96x1xf32>
    %86 = arith.divf %84, %85 : vector<96x1xf32>
    %87 = vector.broadcast %86 : vector<96x1xf32> to vector<96x32xf32>
    %88 = arith.subf %0, %87 : vector<96x32xf32>
    %89 = arith.mulf %88, %88 : vector<96x32xf32>
    %cst_24 = arith.constant dense<0.000000e+00> : vector<96xf32>
    %90 = vector.multi_reduction <add>, %89, %cst_24 [1] : vector<96x32xf32> to vector<96xf32>
    %91 = vector.shape_cast %90 : vector<96xf32> to vector<96x1xf32>
    %cst_25 = arith.constant 3.200000e+01 : f32
    %92 = vector.broadcast %cst_25 : f32 to vector<96x1xf32>
    %93 = arith.divf %91, %92 : vector<96x1xf32>
    %94 = vector.broadcast %86 : vector<96x1xf32> to vector<96x32xf32>
    %95 = arith.subf %0, %94 : vector<96x32xf32>
    %cst_26 = arith.constant 9.99999974E-6 : f32
    %96 = vector.broadcast %cst_26 : f32 to vector<96x1xf32>
    %97 = arith.addf %93, %96 : vector<96x1xf32>
    %98 = math.rsqrt %97 : vector<96x1xf32>
    %99 = vector.broadcast %98 : vector<96x1xf32> to vector<96x32xf32>
    %100 = arith.mulf %95, %99 : vector<96x32xf32>
    %101 = vector.broadcast %81 : vector<1x32xf32> to vector<96x32xf32>
    %102 = arith.mulf %100, %101 : vector<96x32xf32>
    %103 = vector.broadcast %82 : vector<1x32xf32> to vector<96x32xf32>
    %104 = arith.addf %102, %103 : vector<96x32xf32>
    %c0_27 = arith.constant 0 : index
    %c0_28 = arith.constant 0 : index
    %105 = vector.load %arg3[%c0_27, %c0_28] : memref<912x96xbf16, #tpu.memory_space<vmem>>, vector<32x96xbf16>
    %106 = arith.truncf %104 : vector<96x32xf32> to vector<96x32xbf16>
    %cst_29 = arith.constant dense<0.000000e+00> : vector<96x96xf32>
    %107 = tpu.matmul %106, %105, %cst_29 {dimension_numbers = #tpu.dot_dimension_numbers<[1], [0], [0], [1], [0, 0, 1, 1], [], []>} : vector<96x32xbf16>, vector<32x96xbf16>, vector<96x96xf32> -> vector<96x96xf32>
    %c2 = arith.constant 2 : index
    %c0_30 = arith.constant 0 : index
    %108 = vector.load %arg4[%c2, %c0_30] : memref<39x96xf32, #tpu.memory_space<vmem>>, vector<1x96xf32>
    %109 = vector.broadcast %108 : vector<1x96xf32> to vector<96x96xf32>
    %110 = arith.addf %107, %109 : vector<96x96xf32>
    %111 = vector.extract_strided_slice %110 {offsets = [0, 0], sizes = [96, 16], strides = [1, 1]} : vector<96x96xf32> to vector<96x16xf32>
    %112 = vector.extract_strided_slice %110 {offsets = [0, 32], sizes = [96, 16], strides = [1, 1]} : vector<96x96xf32> to vector<96x16xf32>
    %113 = vector.extract_strided_slice %110 {offsets = [0, 64], sizes = [96, 16], strides = [1, 1]} : vector<96x96xf32> to vector<96x16xf32>
    %114 = arith.truncf %111 : vector<96x16xf32> to vector<96x16xbf16>
    %115 = arith.truncf %112 : vector<96x16xf32> to vector<96x16xbf16>
    %cst_31 = arith.constant dense<0.000000e+00> : vector<96x96xf32>
    %116 = tpu.matmul %114, %115, %cst_31 {dimension_numbers = #tpu.dot_dimension_numbers<[1], [1], [0], [0], [0, 0, 1, 0], [], []>} : vector<96x16xbf16>, vector<96x16xbf16>, vector<96x96xf32> -> vector<96x96xf32>
    %cst_32 = arith.constant 2.500000e-01 : f32
    %117 = vector.broadcast %cst_32 : f32 to vector<96x96xf32>
    %118 = arith.mulf %116, %117 : vector<96x96xf32>
    %119 = arith.addf %118, %80 : vector<96x96xf32>
    %cst_33 = arith.constant dense<0xFF800000> : vector<96xf32>
    %120 = vector.multi_reduction <maximumf>, %119, %cst_33 [1] : vector<96x96xf32> to vector<96xf32>
    %121 = vector.shape_cast %120 : vector<96xf32> to vector<96x1xf32>
    %122 = vector.broadcast %121 : vector<96x1xf32> to vector<96x96xf32>
    %123 = arith.subf %119, %122 : vector<96x96xf32>
    %124 = math.exp %123 : vector<96x96xf32>
    %cst_34 = arith.constant dense<0.000000e+00> : vector<96xf32>
    %125 = vector.multi_reduction <add>, %124, %cst_34 [1] : vector<96x96xf32> to vector<96xf32>
    %126 = vector.shape_cast %125 : vector<96xf32> to vector<96x1xf32>
    %127 = tpu.reciprocal %126 {approx = true} : vector<96x1xf32> -> vector<96x1xf32>
    %128 = vector.broadcast %127 : vector<96x1xf32> to vector<96x96xf32>
    %129 = arith.mulf %124, %128 : vector<96x96xf32>
    %130 = arith.truncf %129 : vector<96x96xf32> to vector<96x96xbf16>
    %131 = arith.truncf %113 : vector<96x16xf32> to vector<96x16xbf16>
    %cst_35 = arith.constant dense<0.000000e+00> : vector<96x16xf32>
    %132 = tpu.matmul %130, %131, %cst_35 {dimension_numbers = #tpu.dot_dimension_numbers<[1], [0], [0], [1], [0, 0, 1, 1], [], []>} : vector<96x96xbf16>, vector<96x16xbf16>, vector<96x16xf32> -> vector<96x16xf32>
    %133 = vector.extract_strided_slice %110 {offsets = [0, 16], sizes = [96, 16], strides = [1, 1]} : vector<96x96xf32> to vector<96x16xf32>
    %134 = vector.extract_strided_slice %110 {offsets = [0, 48], sizes = [96, 16], strides = [1, 1]} : vector<96x96xf32> to vector<96x16xf32>
    %135 = vector.extract_strided_slice %110 {offsets = [0, 80], sizes = [96, 16], strides = [1, 1]} : vector<96x96xf32> to vector<96x16xf32>
    %136 = arith.truncf %133 : vector<96x16xf32> to vector<96x16xbf16>
    %137 = arith.truncf %134 : vector<96x16xf32> to vector<96x16xbf16>
    %cst_36 = arith.constant dense<0.000000e+00> : vector<96x96xf32>
    %138 = tpu.matmul %136, %137, %cst_36 {dimension_numbers = #tpu.dot_dimension_numbers<[1], [1], [0], [0], [0, 0, 1, 0], [], []>} : vector<96x16xbf16>, vector<96x16xbf16>, vector<96x96xf32> -> vector<96x96xf32>
    %cst_37 = arith.constant 2.500000e-01 : f32
    %139 = vector.broadcast %cst_37 : f32 to vector<96x96xf32>
    %140 = arith.mulf %138, %139 : vector<96x96xf32>
    %141 = arith.addf %140, %80 : vector<96x96xf32>
    %cst_38 = arith.constant dense<0xFF800000> : vector<96xf32>
    %142 = vector.multi_reduction <maximumf>, %141, %cst_38 [1] : vector<96x96xf32> to vector<96xf32>
    %143 = vector.shape_cast %142 : vector<96xf32> to vector<96x1xf32>
    %144 = vector.broadcast %143 : vector<96x1xf32> to vector<96x96xf32>
    %145 = arith.subf %141, %144 : vector<96x96xf32>
    %146 = math.exp %145 : vector<96x96xf32>
    %cst_39 = arith.constant dense<0.000000e+00> : vector<96xf32>
    %147 = vector.multi_reduction <add>, %146, %cst_39 [1] : vector<96x96xf32> to vector<96xf32>
    %148 = vector.shape_cast %147 : vector<96xf32> to vector<96x1xf32>
    %149 = tpu.reciprocal %148 {approx = true} : vector<96x1xf32> -> vector<96x1xf32>
    %150 = vector.broadcast %149 : vector<96x1xf32> to vector<96x96xf32>
    %151 = arith.mulf %146, %150 : vector<96x96xf32>
    %152 = arith.truncf %151 : vector<96x96xf32> to vector<96x96xbf16>
    %153 = arith.truncf %135 : vector<96x16xf32> to vector<96x16xbf16>
    %cst_40 = arith.constant dense<0.000000e+00> : vector<96x16xf32>
    %154 = tpu.matmul %152, %153, %cst_40 {dimension_numbers = #tpu.dot_dimension_numbers<[1], [0], [0], [1], [0, 0, 1, 1], [], []>} : vector<96x96xbf16>, vector<96x16xbf16>, vector<96x16xf32> -> vector<96x16xf32>
    %155 = tpu.concatenate %132, %154 in 1 : vector<96x16xf32>, vector<96x16xf32> -> vector<96x32xf32>
    %c32 = arith.constant 32 : index
    %c0_41 = arith.constant 0 : index
    %156 = vector.load %arg3[%c32, %c0_41] : memref<912x96xbf16, #tpu.memory_space<vmem>>, vector<32x32xbf16>
    %157 = arith.truncf %155 : vector<96x32xf32> to vector<96x32xbf16>
    %cst_42 = arith.constant dense<0.000000e+00> : vector<96x32xf32>
    %158 = tpu.matmul %157, %156, %cst_42 {dimension_numbers = #tpu.dot_dimension_numbers<[1], [0], [0], [1], [0, 0, 1, 1], [], []>} : vector<96x32xbf16>, vector<32x32xbf16>, vector<96x32xf32> -> vector<96x32xf32>
    %159 = arith.addf %0, %158 : vector<96x32xf32>
    %c3 = arith.constant 3 : index
    %c0_43 = arith.constant 0 : index
    %160 = vector.load %arg4[%c3, %c0_43] : memref<39x96xf32, #tpu.memory_space<vmem>>, vector<1x32xf32>
    %161 = vector.broadcast %160 : vector<1x32xf32> to vector<96x32xf32>
    %162 = arith.addf %159, %161 : vector<96x32xf32>
    %c4 = arith.constant 4 : index
    %c0_44 = arith.constant 0 : index
    %163 = vector.load %arg4[%c4, %c0_44] : memref<39x96xf32, #tpu.memory_space<vmem>>, vector<1x32xf32>
    %c5 = arith.constant 5 : index
    %c0_45 = arith.constant 0 : index
    %164 = vector.load %arg4[%c5, %c0_45] : memref<39x96xf32, #tpu.memory_space<vmem>>, vector<1x32xf32>
    %cst_46 = arith.constant dense<0.000000e+00> : vector<96xf32>
    %165 = vector.multi_reduction <add>, %162, %cst_46 [1] : vector<96x32xf32> to vector<96xf32>
    %166 = vector.shape_cast %165 : vector<96xf32> to vector<96x1xf32>
    %cst_47 = arith.constant 3.200000e+01 : f32
    %167 = vector.broadcast %cst_47 : f32 to vector<96x1xf32>
    %168 = arith.divf %166, %167 : vector<96x1xf32>
    %169 = vector.broadcast %168 : vector<96x1xf32> to vector<96x32xf32>
    %170 = arith.subf %162, %169 : vector<96x32xf32>
    %171 = arith.mulf %170, %170 : vector<96x32xf32>
    %cst_48 = arith.constant dense<0.000000e+00> : vector<96xf32>
    %172 = vector.multi_reduction <add>, %171, %cst_48 [1] : vector<96x32xf32> to vector<96xf32>
    %173 = vector.shape_cast %172 : vector<96xf32> to vector<96x1xf32>
    %cst_49 = arith.constant 3.200000e+01 : f32
    %174 = vector.broadcast %cst_49 : f32 to vector<96x1xf32>
    %175 = arith.divf %173, %174 : vector<96x1xf32>
    %176 = vector.broadcast %168 : vector<96x1xf32> to vector<96x32xf32>
    %177 = arith.subf %162, %176 : vector<96x32xf32>
    %cst_50 = arith.constant 9.99999974E-6 : f32
    %178 = vector.broadcast %cst_50 : f32 to vector<96x1xf32>
    %179 = arith.addf %175, %178 : vector<96x1xf32>
    %180 = math.rsqrt %179 : vector<96x1xf32>
    %181 = vector.broadcast %180 : vector<96x1xf32> to vector<96x32xf32>
    %182 = arith.mulf %177, %181 : vector<96x32xf32>
    %183 = vector.broadcast %163 : vector<1x32xf32> to vector<96x32xf32>
    %184 = arith.mulf %182, %183 : vector<96x32xf32>
    %185 = vector.broadcast %164 : vector<1x32xf32> to vector<96x32xf32>
    %186 = arith.addf %184, %185 : vector<96x32xf32>
    %c64 = arith.constant 64 : index
    %c0_51 = arith.constant 0 : index
    %187 = vector.load %arg3[%c64, %c0_51] : memref<912x96xbf16, #tpu.memory_space<vmem>>, vector<32x64xbf16>
    %188 = arith.truncf %186 : vector<96x32xf32> to vector<96x32xbf16>
    %cst_52 = arith.constant dense<0.000000e+00> : vector<96x64xf32>
    %189 = tpu.matmul %188, %187, %cst_52 {dimension_numbers = #tpu.dot_dimension_numbers<[1], [0], [0], [1], [0, 0, 1, 1], [], []>} : vector<96x32xbf16>, vector<32x64xbf16>, vector<96x64xf32> -> vector<96x64xf32>
    %c6 = arith.constant 6 : index
    %c0_53 = arith.constant 0 : index
    %190 = vector.load %arg4[%c6, %c0_53] : memref<39x96xf32, #tpu.memory_space<vmem>>, vector<1x64xf32>
    %191 = vector.broadcast %190 : vector<1x64xf32> to vector<96x64xf32>
    %192 = arith.addf %189, %191 : vector<96x64xf32>
    %cst_54 = arith.constant 1.702000e+00 : f32
    %193 = vector.broadcast %cst_54 : f32 to vector<96x64xf32>
    %194 = arith.mulf %193, %192 : vector<96x64xf32>
    %195 = arith.negf %194 : vector<96x64xf32>
    %196 = math.exp %195 : vector<96x64xf32>
    %cst_55 = arith.constant 1.000000e+00 : f32
    %197 = vector.broadcast %cst_55 : f32 to vector<96x64xf32>
    %198 = arith.addf %197, %196 : vector<96x64xf32>
    %199 = arith.divf %197, %198 : vector<96x64xf32>
    %200 = arith.mulf %192, %199 : vector<96x64xf32>
    %c96 = arith.constant 96 : index
    %c0_56 = arith.constant 0 : index
    %201 = vector.load %arg3[%c96, %c0_56] : memref<912x96xbf16, #tpu.memory_space<vmem>>, vector<64x32xbf16>
    %202 = arith.truncf %200 : vector<96x64xf32> to vector<96x64xbf16>
    %cst_57 = arith.constant dense<0.000000e+00> : vector<96x32xf32>
    %203 = tpu.matmul %202, %201, %cst_57 {dimension_numbers = #tpu.dot_dimension_numbers<[1], [0], [0], [1], [0, 0, 1, 1], [], []>} : vector<96x64xbf16>, vector<64x32xbf16>, vector<96x32xf32> -> vector<96x32xf32>
    %204 = arith.addf %162, %203 : vector<96x32xf32>
    %c7 = arith.constant 7 : index
    %c0_58 = arith.constant 0 : index
    %205 = vector.load %arg4[%c7, %c0_58] : memref<39x96xf32, #tpu.memory_space<vmem>>, vector<1x32xf32>
    %206 = vector.broadcast %205 : vector<1x32xf32> to vector<96x32xf32>
    %207 = arith.addf %204, %206 : vector<96x32xf32>
    %c8 = arith.constant 8 : index
    %c0_59 = arith.constant 0 : index
    %208 = vector.load %arg4[%c8, %c0_59] : memref<39x96xf32, #tpu.memory_space<vmem>>, vector<1x32xf32>
    %c9 = arith.constant 9 : index
    %c0_60 = arith.constant 0 : index
    %209 = vector.load %arg4[%c9, %c0_60] : memref<39x96xf32, #tpu.memory_space<vmem>>, vector<1x32xf32>
    %cst_61 = arith.constant dense<0.000000e+00> : vector<96xf32>
    %210 = vector.multi_reduction <add>, %207, %cst_61 [1] : vector<96x32xf32> to vector<96xf32>
    %211 = vector.shape_cast %210 : vector<96xf32> to vector<96x1xf32>
    %cst_62 = arith.constant 3.200000e+01 : f32
    %212 = vector.broadcast %cst_62 : f32 to vector<96x1xf32>
    %213 = arith.divf %211, %212 : vector<96x1xf32>
    %214 = vector.broadcast %213 : vector<96x1xf32> to vector<96x32xf32>
    %215 = arith.subf %207, %214 : vector<96x32xf32>
    %216 = arith.mulf %215, %215 : vector<96x32xf32>
    %cst_63 = arith.constant dense<0.000000e+00> : vector<96xf32>
    %217 = vector.multi_reduction <add>, %216, %cst_63 [1] : vector<96x32xf32> to vector<96xf32>
    %218 = vector.shape_cast %217 : vector<96xf32> to vector<96x1xf32>
    %cst_64 = arith.constant 3.200000e+01 : f32
    %219 = vector.broadcast %cst_64 : f32 to vector<96x1xf32>
    %220 = arith.divf %218, %219 : vector<96x1xf32>
    %221 = vector.broadcast %213 : vector<96x1xf32> to vector<96x32xf32>
    %222 = arith.subf %207, %221 : vector<96x32xf32>
    %cst_65 = arith.constant 9.99999974E-6 : f32
    %223 = vector.broadcast %cst_65 : f32 to vector<96x1xf32>
    %224 = arith.addf %220, %223 : vector<96x1xf32>
    %225 = math.rsqrt %224 : vector<96x1xf32>
    %226 = vector.broadcast %225 : vector<96x1xf32> to vector<96x32xf32>
    %227 = arith.mulf %222, %226 : vector<96x32xf32>
    %228 = vector.broadcast %208 : vector<1x32xf32> to vector<96x32xf32>
    %229 = arith.mulf %227, %228 : vector<96x32xf32>
    %230 = vector.broadcast %209 : vector<1x32xf32> to vector<96x32xf32>
    %231 = arith.addf %229, %230 : vector<96x32xf32>
    %c160 = arith.constant 160 : index
    %c0_66 = arith.constant 0 : index
    %232 = vector.load %arg3[%c160, %c0_66] : memref<912x96xbf16, #tpu.memory_space<vmem>>, vector<32x96xbf16>
    %233 = arith.truncf %231 : vector<96x32xf32> to vector<96x32xbf16>
    %cst_67 = arith.constant dense<0.000000e+00> : vector<96x96xf32>
    %234 = tpu.matmul %233, %232, %cst_67 {dimension_numbers = #tpu.dot_dimension_numbers<[1], [0], [0], [1], [0, 0, 1, 1], [], []>} : vector<96x32xbf16>, vector<32x96xbf16>, vector<96x96xf32> -> vector<96x96xf32>
    %c10 = arith.constant 10 : index
    %c0_68 = arith.constant 0 : index
    %235 = vector.load %arg4[%c10, %c0_68] : memref<39x96xf32, #tpu.memory_space<vmem>>, vector<1x96xf32>
    %236 = vector.broadcast %235 : vector<1x96xf32> to vector<96x96xf32>
    %237 = arith.addf %234, %236 : vector<96x96xf32>
    %238 = vector.extract_strided_slice %237 {offsets = [0, 0], sizes = [96, 16], strides = [1, 1]} : vector<96x96xf32> to vector<96x16xf32>
    %239 = vector.extract_strided_slice %237 {offsets = [0, 32], sizes = [96, 16], strides = [1, 1]} : vector<96x96xf32> to vector<96x16xf32>
    %240 = vector.extract_strided_slice %237 {offsets = [0, 64], sizes = [96, 16], strides = [1, 1]} : vector<96x96xf32> to vector<96x16xf32>
    %241 = arith.truncf %238 : vector<96x16xf32> to vector<96x16xbf16>
    %242 = arith.truncf %239 : vector<96x16xf32> to vector<96x16xbf16>
    %cst_69 = arith.constant dense<0.000000e+00> : vector<96x96xf32>
    %243 = tpu.matmul %241, %242, %cst_69 {dimension_numbers = #tpu.dot_dimension_numbers<[1], [1], [0], [0], [0, 0, 1, 0], [], []>} : vector<96x16xbf16>, vector<96x16xbf16>, vector<96x96xf32> -> vector<96x96xf32>
    %cst_70 = arith.constant 2.500000e-01 : f32
    %244 = vector.broadcast %cst_70 : f32 to vector<96x96xf32>
    %245 = arith.mulf %243, %244 : vector<96x96xf32>
    %246 = arith.addf %245, %80 : vector<96x96xf32>
    %cst_71 = arith.constant dense<0xFF800000> : vector<96xf32>
    %247 = vector.multi_reduction <maximumf>, %246, %cst_71 [1] : vector<96x96xf32> to vector<96xf32>
    %248 = vector.shape_cast %247 : vector<96xf32> to vector<96x1xf32>
    %249 = vector.broadcast %248 : vector<96x1xf32> to vector<96x96xf32>
    %250 = arith.subf %246, %249 : vector<96x96xf32>
    %251 = math.exp %250 : vector<96x96xf32>
    %cst_72 = arith.constant dense<0.000000e+00> : vector<96xf32>
    %252 = vector.multi_reduction <add>, %251, %cst_72 [1] : vector<96x96xf32> to vector<96xf32>
    %253 = vector.shape_cast %252 : vector<96xf32> to vector<96x1xf32>
    %254 = tpu.reciprocal %253 {approx = true} : vector<96x1xf32> -> vector<96x1xf32>
    %255 = vector.broadcast %254 : vector<96x1xf32> to vector<96x96xf32>
    %256 = arith.mulf %251, %255 : vector<96x96xf32>
    %257 = arith.truncf %256 : vector<96x96xf32> to vector<96x96xbf16>
    %258 = arith.truncf %240 : vector<96x16xf32> to vector<96x16xbf16>
    %cst_73 = arith.constant dense<0.000000e+00> : vector<96x16xf32>
    %259 = tpu.matmul %257, %258, %cst_73 {dimension_numbers = #tpu.dot_dimension_numbers<[1], [0], [0], [1], [0, 0, 1, 1], [], []>} : vector<96x96xbf16>, vector<96x16xbf16>, vector<96x16xf32> -> vector<96x16xf32>
    %260 = vector.extract_strided_slice %237 {offsets = [0, 16], sizes = [96, 16], strides = [1, 1]} : vector<96x96xf32> to vector<96x16xf32>
    %261 = vector.extract_strided_slice %237 {offsets = [0, 48], sizes = [96, 16], strides = [1, 1]} : vector<96x96xf32> to vector<96x16xf32>
    %262 = vector.extract_strided_slice %237 {offsets = [0, 80], sizes = [96, 16], strides = [1, 1]} : vector<96x96xf32> to vector<96x16xf32>
    %263 = arith.truncf %260 : vector<96x16xf32> to vector<96x16xbf16>
    %264 = arith.truncf %261 : vector<96x16xf32> to vector<96x16xbf16>
    %cst_74 = arith.constant dense<0.000000e+00> : vector<96x96xf32>
    %265 = tpu.matmul %263, %264, %cst_74 {dimension_numbers = #tpu.dot_dimension_numbers<[1], [1], [0], [0], [0, 0, 1, 0], [], []>} : vector<96x16xbf16>, vector<96x16xbf16>, vector<96x96xf32> -> vector<96x96xf32>
    %cst_75 = arith.constant 2.500000e-01 : f32
    %266 = vector.broadcast %cst_75 : f32 to vector<96x96xf32>
    %267 = arith.mulf %265, %266 : vector<96x96xf32>
    %268 = arith.addf %267, %80 : vector<96x96xf32>
    %cst_76 = arith.constant dense<0xFF800000> : vector<96xf32>
    %269 = vector.multi_reduction <maximumf>, %268, %cst_76 [1] : vector<96x96xf32> to vector<96xf32>
    %270 = vector.shape_cast %269 : vector<96xf32> to vector<96x1xf32>
    %271 = vector.broadcast %270 : vector<96x1xf32> to vector<96x96xf32>
    %272 = arith.subf %268, %271 : vector<96x96xf32>
    %273 = math.exp %272 : vector<96x96xf32>
    %cst_77 = arith.constant dense<0.000000e+00> : vector<96xf32>
    %274 = vector.multi_reduction <add>, %273, %cst_77 [1] : vector<96x96xf32> to vector<96xf32>
    %275 = vector.shape_cast %274 : vector<96xf32> to vector<96x1xf32>
    %276 = tpu.reciprocal %275 {approx = true} : vector<96x1xf32> -> vector<96x1xf32>
    %277 = vector.broadcast %276 : vector<96x1xf32> to vector<96x96xf32>
    %278 = arith.mulf %273, %277 : vector<96x96xf32>
    %279 = arith.truncf %278 : vector<96x96xf32> to vector<96x96xbf16>
    %280 = arith.truncf %262 : vector<96x16xf32> to vector<96x16xbf16>
    %cst_78 = arith.constant dense<0.000000e+00> : vector<96x16xf32>
    %281 = tpu.matmul %279, %280, %cst_78 {dimension_numbers = #tpu.dot_dimension_numbers<[1], [0], [0], [1], [0, 0, 1, 1], [], []>} : vector<96x96xbf16>, vector<96x16xbf16>, vector<96x16xf32> -> vector<96x16xf32>
    %282 = tpu.concatenate %259, %281 in 1 : vector<96x16xf32>, vector<96x16xf32> -> vector<96x32xf32>
    %c192 = arith.constant 192 : index
    %c0_79 = arith.constant 0 : index
    %283 = vector.load %arg3[%c192, %c0_79] : memref<912x96xbf16, #tpu.memory_space<vmem>>, vector<32x32xbf16>
    %284 = arith.truncf %282 : vector<96x32xf32> to vector<96x32xbf16>
    %cst_80 = arith.constant dense<0.000000e+00> : vector<96x32xf32>
    %285 = tpu.matmul %284, %283, %cst_80 {dimension_numbers = #tpu.dot_dimension_numbers<[1], [0], [0], [1], [0, 0, 1, 1], [], []>} : vector<96x32xbf16>, vector<32x32xbf16>, vector<96x32xf32> -> vector<96x32xf32>
    %286 = arith.addf %207, %285 : vector<96x32xf32>
    %c11 = arith.constant 11 : index
    %c0_81 = arith.constant 0 : index
    %287 = vector.load %arg4[%c11, %c0_81] : memref<39x96xf32, #tpu.memory_space<vmem>>, vector<1x32xf32>
    %288 = vector.broadcast %287 : vector<1x32xf32> to vector<96x32xf32>
    %289 = arith.addf %286, %288 : vector<96x32xf32>
    %c12 = arith.constant 12 : index
    %c0_82 = arith.constant 0 : index
    %290 = vector.load %arg4[%c12, %c0_82] : memref<39x96xf32, #tpu.memory_space<vmem>>, vector<1x32xf32>
    %c13 = arith.constant 13 : index
    %c0_83 = arith.constant 0 : index
    %291 = vector.load %arg4[%c13, %c0_83] : memref<39x96xf32, #tpu.memory_space<vmem>>, vector<1x32xf32>
    %cst_84 = arith.constant dense<0.000000e+00> : vector<96xf32>
    %292 = vector.multi_reduction <add>, %289, %cst_84 [1] : vector<96x32xf32> to vector<96xf32>
    %293 = vector.shape_cast %292 : vector<96xf32> to vector<96x1xf32>
    %cst_85 = arith.constant 3.200000e+01 : f32
    %294 = vector.broadcast %cst_85 : f32 to vector<96x1xf32>
    %295 = arith.divf %293, %294 : vector<96x1xf32>
    %296 = vector.broadcast %295 : vector<96x1xf32> to vector<96x32xf32>
    %297 = arith.subf %289, %296 : vector<96x32xf32>
    %298 = arith.mulf %297, %297 : vector<96x32xf32>
    %cst_86 = arith.constant dense<0.000000e+00> : vector<96xf32>
    %299 = vector.multi_reduction <add>, %298, %cst_86 [1] : vector<96x32xf32> to vector<96xf32>
    %300 = vector.shape_cast %299 : vector<96xf32> to vector<96x1xf32>
    %cst_87 = arith.constant 3.200000e+01 : f32
    %301 = vector.broadcast %cst_87 : f32 to vector<96x1xf32>
    %302 = arith.divf %300, %301 : vector<96x1xf32>
    %303 = vector.broadcast %295 : vector<96x1xf32> to vector<96x32xf32>
    %304 = arith.subf %289, %303 : vector<96x32xf32>
    %cst_88 = arith.constant 9.99999974E-6 : f32
    %305 = vector.broadcast %cst_88 : f32 to vector<96x1xf32>
    %306 = arith.addf %302, %305 : vector<96x1xf32>
    %307 = math.rsqrt %306 : vector<96x1xf32>
    %308 = vector.broadcast %307 : vector<96x1xf32> to vector<96x32xf32>
    %309 = arith.mulf %304, %308 : vector<96x32xf32>
    %310 = vector.broadcast %290 : vector<1x32xf32> to vector<96x32xf32>
    %311 = arith.mulf %309, %310 : vector<96x32xf32>
    %312 = vector.broadcast %291 : vector<1x32xf32> to vector<96x32xf32>
    %313 = arith.addf %311, %312 : vector<96x32xf32>
    %c224 = arith.constant 224 : index
    %c0_89 = arith.constant 0 : index
    %314 = vector.load %arg3[%c224, %c0_89] : memref<912x96xbf16, #tpu.memory_space<vmem>>, vector<32x64xbf16>
    %315 = arith.truncf %313 : vector<96x32xf32> to vector<96x32xbf16>
    %cst_90 = arith.constant dense<0.000000e+00> : vector<96x64xf32>
    %316 = tpu.matmul %315, %314, %cst_90 {dimension_numbers = #tpu.dot_dimension_numbers<[1], [0], [0], [1], [0, 0, 1, 1], [], []>} : vector<96x32xbf16>, vector<32x64xbf16>, vector<96x64xf32> -> vector<96x64xf32>
    %c14 = arith.constant 14 : index
    %c0_91 = arith.constant 0 : index
    %317 = vector.load %arg4[%c14, %c0_91] : memref<39x96xf32, #tpu.memory_space<vmem>>, vector<1x64xf32>
    %318 = vector.broadcast %317 : vector<1x64xf32> to vector<96x64xf32>
    %319 = arith.addf %316, %318 : vector<96x64xf32>
    %cst_92 = arith.constant 1.702000e+00 : f32
    %320 = vector.broadcast %cst_92 : f32 to vector<96x64xf32>
    %321 = arith.mulf %320, %319 : vector<96x64xf32>
    %322 = arith.negf %321 : vector<96x64xf32>
    %323 = math.exp %322 : vector<96x64xf32>
    %cst_93 = arith.constant 1.000000e+00 : f32
    %324 = vector.broadcast %cst_93 : f32 to vector<96x64xf32>
    %325 = arith.addf %324, %323 : vector<96x64xf32>
    %326 = arith.divf %324, %325 : vector<96x64xf32>
    %327 = arith.mulf %319, %326 : vector<96x64xf32>
    %c256 = arith.constant 256 : index
    %c0_94 = arith.constant 0 : index
    %328 = vector.load %arg3[%c256, %c0_94] : memref<912x96xbf16, #tpu.memory_space<vmem>>, vector<64x32xbf16>
    %329 = arith.truncf %327 : vector<96x64xf32> to vector<96x64xbf16>
    %cst_95 = arith.constant dense<0.000000e+00> : vector<96x32xf32>
    %330 = tpu.matmul %329, %328, %cst_95 {dimension_numbers = #tpu.dot_dimension_numbers<[1], [0], [0], [1], [0, 0, 1, 1], [], []>} : vector<96x64xbf16>, vector<64x32xbf16>, vector<96x32xf32> -> vector<96x32xf32>
    %331 = arith.addf %289, %330 : vector<96x32xf32>
    %c15 = arith.constant 15 : index
    %c0_96 = arith.constant 0 : index
    %332 = vector.load %arg4[%c15, %c0_96] : memref<39x96xf32, #tpu.memory_space<vmem>>, vector<1x32xf32>
    %333 = vector.broadcast %332 : vector<1x32xf32> to vector<96x32xf32>
    %334 = arith.addf %331, %333 : vector<96x32xf32>
    %c16 = arith.constant 16 : index
    %c0_97 = arith.constant 0 : index
    %335 = vector.load %arg4[%c16, %c0_97] : memref<39x96xf32, #tpu.memory_space<vmem>>, vector<1x32xf32>
    %c17 = arith.constant 17 : index
    %c0_98 = arith.constant 0 : index
    %336 = vector.load %arg4[%c17, %c0_98] : memref<39x96xf32, #tpu.memory_space<vmem>>, vector<1x32xf32>
    %cst_99 = arith.constant dense<0.000000e+00> : vector<96xf32>
    %337 = vector.multi_reduction <add>, %334, %cst_99 [1] : vector<96x32xf32> to vector<96xf32>
    %338 = vector.shape_cast %337 : vector<96xf32> to vector<96x1xf32>
    %cst_100 = arith.constant 3.200000e+01 : f32
    %339 = vector.broadcast %cst_100 : f32 to vector<96x1xf32>
    %340 = arith.divf %338, %339 : vector<96x1xf32>
    %341 = vector.broadcast %340 : vector<96x1xf32> to vector<96x32xf32>
    %342 = arith.subf %334, %341 : vector<96x32xf32>
    %343 = arith.mulf %342, %342 : vector<96x32xf32>
    %cst_101 = arith.constant dense<0.000000e+00> : vector<96xf32>
    %344 = vector.multi_reduction <add>, %343, %cst_101 [1] : vector<96x32xf32> to vector<96xf32>
    %345 = vector.shape_cast %344 : vector<96xf32> to vector<96x1xf32>
    %cst_102 = arith.constant 3.200000e+01 : f32
    %346 = vector.broadcast %cst_102 : f32 to vector<96x1xf32>
    %347 = arith.divf %345, %346 : vector<96x1xf32>
    %348 = vector.broadcast %340 : vector<96x1xf32> to vector<96x32xf32>
    %349 = arith.subf %334, %348 : vector<96x32xf32>
    %cst_103 = arith.constant 9.99999974E-6 : f32
    %350 = vector.broadcast %cst_103 : f32 to vector<96x1xf32>
    %351 = arith.addf %347, %350 : vector<96x1xf32>
    %352 = math.rsqrt %351 : vector<96x1xf32>
    %353 = vector.broadcast %352 : vector<96x1xf32> to vector<96x32xf32>
    %354 = arith.mulf %349, %353 : vector<96x32xf32>
    %355 = vector.broadcast %335 : vector<1x32xf32> to vector<96x32xf32>
    %356 = arith.mulf %354, %355 : vector<96x32xf32>
    %357 = vector.broadcast %336 : vector<1x32xf32> to vector<96x32xf32>
    %358 = arith.addf %356, %357 : vector<96x32xf32>
    %359 = vector.extract_strided_slice %358 {offsets = [6, 0], sizes = [1, 32], strides = [1, 1]} : vector<96x32xf32> to vector<1x32xf32>
    %360 = vector.extract_strided_slice %358 {offsets = [23, 0], sizes = [1, 32], strides = [1, 1]} : vector<96x32xf32> to vector<1x32xf32>
    %361 = vector.extract_strided_slice %358 {offsets = [40, 0], sizes = [1, 32], strides = [1, 1]} : vector<96x32xf32> to vector<1x32xf32>
    %362 = vector.extract_strided_slice %358 {offsets = [54, 0], sizes = [1, 32], strides = [1, 1]} : vector<96x32xf32> to vector<1x32xf32>
    %363 = vector.extract_strided_slice %358 {offsets = [71, 0], sizes = [1, 32], strides = [1, 1]} : vector<96x32xf32> to vector<1x32xf32>
    %364 = vector.extract_strided_slice %358 {offsets = [88, 0], sizes = [1, 32], strides = [1, 1]} : vector<96x32xf32> to vector<1x32xf32>
    %365 = tpu.concatenate %359, %360, %361, %362, %363, %364 in 0 : vector<1x32xf32>, vector<1x32xf32>, vector<1x32xf32>, vector<1x32xf32>, vector<1x32xf32>, vector<1x32xf32> -> vector<6x32xf32>
    %c320 = arith.constant 320 : index
    %c0_104 = arith.constant 0 : index
    %366 = vector.load %arg3[%c320, %c0_104] : memref<912x96xbf16, #tpu.memory_space<vmem>>, vector<32x32xbf16>
    %367 = arith.truncf %365 : vector<6x32xf32> to vector<6x32xbf16>
    %cst_105 = arith.constant dense<0.000000e+00> : vector<6x32xf32>
    %368 = tpu.matmul %367, %366, %cst_105 {dimension_numbers = #tpu.dot_dimension_numbers<[1], [0], [0], [1], [0, 0, 1, 1], [], []>} : vector<6x32xbf16>, vector<32x32xbf16>, vector<6x32xf32> -> vector<6x32xf32>
    %369 = arith.mulf %368, %368 : vector<6x32xf32>
    %cst_106 = arith.constant dense<0.000000e+00> : vector<6xf32>
    %370 = vector.multi_reduction <add>, %369, %cst_106 [1] : vector<6x32xf32> to vector<6xf32>
    %371 = vector.shape_cast %370 : vector<6xf32> to vector<6x1xf32>
    %372 = math.rsqrt %371 : vector<6x1xf32>
    %373 = vector.broadcast %372 : vector<6x1xf32> to vector<6x32xf32>
    %374 = arith.mulf %368, %373 : vector<6x32xf32>
    %c0_107 = arith.constant 0 : index
    %c0_108 = arith.constant 0 : index
    %375 = vector.load %arg5[%c0_107, %c0_108] : memref<6x32xf32, #tpu.memory_space<vmem>>, vector<6x32xf32>
    tpu.vector_store %arg5[%c0_107, %c0_108], %374 {strides = array<i32>} : memref<6x32xf32, #tpu.memory_space<vmem>>, vector<6x32xf32>,
    %c0_109 = arith.constant 0 : index
    %c0_110 = arith.constant 0 : index
    %376 = vector.load %arg2[%c0_109, %c0_110] : memref<8x192xf32, #tpu.memory_space<vmem>>, vector<8x192xf32>
    %c352 = arith.constant 352 : index
    %c0_111 = arith.constant 0 : index
    %377 = vector.load %arg3[%c352, %c0_111] : memref<912x96xbf16, #tpu.memory_space<vmem>>, vector<192x32xbf16>
    %378 = arith.truncf %376 : vector<8x192xf32> to vector<8x192xbf16>
    %cst_112 = arith.constant dense<0.000000e+00> : vector<8x32xf32>
    %379 = tpu.matmul %378, %377, %cst_112 {dimension_numbers = #tpu.dot_dimension_numbers<[1], [0], [0], [1], [0, 0, 1, 1], [], []>} : vector<8x192xbf16>, vector<192x32xbf16>, vector<8x32xf32> -> vector<8x32xf32>
    %c544 = arith.constant 544 : index
    %c0_113 = arith.constant 0 : index
    %380 = vector.load %arg3[%c544, %c0_113] : memref<912x96xbf16, #tpu.memory_space<vmem>>, vector<4x32xbf16>
    %c18 = arith.constant 18 : index
    %c0_114 = arith.constant 0 : index
    %381 = vector.load %arg4[%c18, %c0_114] : memref<39x96xf32, #tpu.memory_space<vmem>>, vector<1x32xf32>
    %382 = vector.extract_strided_slice %379 {offsets = [0, 0], sizes = [4, 32], strides = [1, 1]} : vector<8x32xf32> to vector<4x32xf32>
    %383 = arith.extf %380 : vector<4x32xbf16> to vector<4x32xf32>
    %384 = arith.addf %382, %383 : vector<4x32xf32>
    %385 = vector.extract_strided_slice %379 {offsets = [4, 0], sizes = [4, 32], strides = [1, 1]} : vector<8x32xf32> to vector<4x32xf32>
    %386 = arith.extf %380 : vector<4x32xbf16> to vector<4x32xf32>
    %387 = arith.addf %385, %386 : vector<4x32xf32>
    %388 = tpu.concatenate %381, %384, %381, %387 in 0 : vector<1x32xf32>, vector<4x32xf32>, vector<1x32xf32>, vector<4x32xf32> -> vector<10x32xf32>
    %c19 = arith.constant 19 : index
    %c0_115 = arith.constant 0 : index
    %389 = vector.load %arg4[%c19, %c0_115] : memref<39x96xf32, #tpu.memory_space<vmem>>, vector<1x32xf32>
    %c20 = arith.constant 20 : index
    %c0_116 = arith.constant 0 : index
    %390 = vector.load %arg4[%c20, %c0_116] : memref<39x96xf32, #tpu.memory_space<vmem>>, vector<1x32xf32>
    %cst_117 = arith.constant dense<0.000000e+00> : vector<10xf32>
    %391 = vector.multi_reduction <add>, %388, %cst_117 [1] : vector<10x32xf32> to vector<10xf32>
    %392 = vector.shape_cast %391 : vector<10xf32> to vector<10x1xf32>
    %cst_118 = arith.constant 3.200000e+01 : f32
    %393 = vector.broadcast %cst_118 : f32 to vector<10x1xf32>
    %394 = arith.divf %392, %393 : vector<10x1xf32>
    %395 = vector.broadcast %394 : vector<10x1xf32> to vector<10x32xf32>
    %396 = arith.subf %388, %395 : vector<10x32xf32>
    %397 = arith.mulf %396, %396 : vector<10x32xf32>
    %cst_119 = arith.constant dense<0.000000e+00> : vector<10xf32>
    %398 = vector.multi_reduction <add>, %397, %cst_119 [1] : vector<10x32xf32> to vector<10xf32>
    %399 = vector.shape_cast %398 : vector<10xf32> to vector<10x1xf32>
    %cst_120 = arith.constant 3.200000e+01 : f32
    %400 = vector.broadcast %cst_120 : f32 to vector<10x1xf32>
    %401 = arith.divf %399, %400 : vector<10x1xf32>
    %402 = vector.broadcast %394 : vector<10x1xf32> to vector<10x32xf32>
    %403 = arith.subf %388, %402 : vector<10x32xf32>
    %cst_121 = arith.constant 9.99999974E-6 : f32
    %404 = vector.broadcast %cst_121 : f32 to vector<10x1xf32>
    %405 = arith.addf %401, %404 : vector<10x1xf32>
    %406 = math.rsqrt %405 : vector<10x1xf32>
    %407 = vector.broadcast %406 : vector<10x1xf32> to vector<10x32xf32>
    %408 = arith.mulf %403, %407 : vector<10x32xf32>
    %409 = vector.broadcast %389 : vector<1x32xf32> to vector<10x32xf32>
    %410 = arith.mulf %408, %409 : vector<10x32xf32>
    %411 = vector.broadcast %390 : vector<1x32xf32> to vector<10x32xf32>
    %412 = arith.addf %410, %411 : vector<10x32xf32>
    %413 = tpu.iota {dimensions = array<i32: 0>} : vector<10x10xi32>
    %414 = tpu.iota {dimensions = array<i32: 1>} : vector<10x10xi32>
    %false_122 = arith.constant false
    %415 = vector.broadcast %false_122 : i1 to vector<10x10xi1>
    %c0_i32_123 = arith.constant 0 : i32
    %416 = vector.broadcast %c0_i32_123 : i32 to vector<10x10xi32>
    %417 = arith.cmpi sge, %413, %416 : vector<10x10xi32>
    %c5_i32 = arith.constant 5 : i32
    %418 = vector.broadcast %c5_i32 : i32 to vector<10x10xi32>
    %419 = arith.cmpi slt, %413, %418 : vector<10x10xi32>
    %420 = arith.andi %417, %419 : vector<10x10xi1>
    %c0_i32_124 = arith.constant 0 : i32
    %421 = vector.broadcast %c0_i32_124 : i32 to vector<10x10xi32>
    %422 = arith.cmpi sge, %414, %421 : vector<10x10xi32>
    %423 = arith.andi %420, %422 : vector<10x10xi1>
    %c5_i32_125 = arith.constant 5 : i32
    %424 = vector.broadcast %c5_i32_125 : i32 to vector<10x10xi32>
    %425 = arith.cmpi slt, %414, %424 : vector<10x10xi32>
    %426 = arith.andi %423, %425 : vector<10x10xi1>
    %427 = arith.ori %415, %426 : vector<10x10xi1>
    %c5_i32_126 = arith.constant 5 : i32
    %428 = vector.broadcast %c5_i32_126 : i32 to vector<10x10xi32>
    %429 = arith.cmpi sge, %413, %428 : vector<10x10xi32>
    %c10_i32 = arith.constant 10 : i32
    %430 = vector.broadcast %c10_i32 : i32 to vector<10x10xi32>
    %431 = arith.cmpi slt, %413, %430 : vector<10x10xi32>
    %432 = arith.andi %429, %431 : vector<10x10xi1>
    %c5_i32_127 = arith.constant 5 : i32
    %433 = vector.broadcast %c5_i32_127 : i32 to vector<10x10xi32>
    %434 = arith.cmpi sge, %414, %433 : vector<10x10xi32>
    %435 = arith.andi %432, %434 : vector<10x10xi1>
    %c10_i32_128 = arith.constant 10 : i32
    %436 = vector.broadcast %c10_i32_128 : i32 to vector<10x10xi32>
    %437 = arith.cmpi slt, %414, %436 : vector<10x10xi32>
    %438 = arith.andi %435, %437 : vector<10x10xi1>
    %439 = arith.ori %427, %438 : vector<10x10xi1>
    %cst_129 = arith.constant 0.000000e+00 : f32
    %cst_130 = arith.constant -1.000000e+09 : f32
    %440 = vector.broadcast %cst_129 : f32 to vector<10x10xf32>
    %441 = vector.broadcast %cst_130 : f32 to vector<10x10xf32>
    %442 = arith.select %439, %440, %441 : vector<10x10xi1>, vector<10x10xf32>
    %c21 = arith.constant 21 : index
    %c0_131 = arith.constant 0 : index
    %443 = vector.load %arg4[%c21, %c0_131] : memref<39x96xf32, #tpu.memory_space<vmem>>, vector<1x32xf32>
    %c22 = arith.constant 22 : index
    %c0_132 = arith.constant 0 : index
    %444 = vector.load %arg4[%c22, %c0_132] : memref<39x96xf32, #tpu.memory_space<vmem>>, vector<1x32xf32>
    %cst_133 = arith.constant dense<0.000000e+00> : vector<10xf32>
    %445 = vector.multi_reduction <add>, %412, %cst_133 [1] : vector<10x32xf32> to vector<10xf32>
    %446 = vector.shape_cast %445 : vector<10xf32> to vector<10x1xf32>
    %cst_134 = arith.constant 3.200000e+01 : f32
    %447 = vector.broadcast %cst_134 : f32 to vector<10x1xf32>
    %448 = arith.divf %446, %447 : vector<10x1xf32>
    %449 = vector.broadcast %448 : vector<10x1xf32> to vector<10x32xf32>
    %450 = arith.subf %412, %449 : vector<10x32xf32>
    %451 = arith.mulf %450, %450 : vector<10x32xf32>
    %cst_135 = arith.constant dense<0.000000e+00> : vector<10xf32>
    %452 = vector.multi_reduction <add>, %451, %cst_135 [1] : vector<10x32xf32> to vector<10xf32>
    %453 = vector.shape_cast %452 : vector<10xf32> to vector<10x1xf32>
    %cst_136 = arith.constant 3.200000e+01 : f32
    %454 = vector.broadcast %cst_136 : f32 to vector<10x1xf32>
    %455 = arith.divf %453, %454 : vector<10x1xf32>
    %456 = vector.broadcast %448 : vector<10x1xf32> to vector<10x32xf32>
    %457 = arith.subf %412, %456 : vector<10x32xf32>
    %cst_137 = arith.constant 9.99999974E-6 : f32
    %458 = vector.broadcast %cst_137 : f32 to vector<10x1xf32>
    %459 = arith.addf %455, %458 : vector<10x1xf32>
    %460 = math.rsqrt %459 : vector<10x1xf32>
    %461 = vector.broadcast %460 : vector<10x1xf32> to vector<10x32xf32>
    %462 = arith.mulf %457, %461 : vector<10x32xf32>
    %463 = vector.broadcast %443 : vector<1x32xf32> to vector<10x32xf32>
    %464 = arith.mulf %462, %463 : vector<10x32xf32>
    %465 = vector.broadcast %444 : vector<1x32xf32> to vector<10x32xf32>
    %466 = arith.addf %464, %465 : vector<10x32xf32>
    %c560 = arith.constant 560 : index
    %c0_138 = arith.constant 0 : index
    %467 = vector.load %arg3[%c560, %c0_138] : memref<912x96xbf16, #tpu.memory_space<vmem>>, vector<32x96xbf16>
    %468 = arith.truncf %466 : vector<10x32xf32> to vector<10x32xbf16>
    %cst_139 = arith.constant dense<0.000000e+00> : vector<10x96xf32>
    %469 = tpu.matmul %468, %467, %cst_139 {dimension_numbers = #tpu.dot_dimension_numbers<[1], [0], [0], [1], [0, 0, 1, 1], [], []>} : vector<10x32xbf16>, vector<32x96xbf16>, vector<10x96xf32> -> vector<10x96xf32>
    %c23 = arith.constant 23 : index
    %c0_140 = arith.constant 0 : index
    %470 = vector.load %arg4[%c23, %c0_140] : memref<39x96xf32, #tpu.memory_space<vmem>>, vector<1x96xf32>
    %471 = vector.broadcast %470 : vector<1x96xf32> to vector<10x96xf32>
    %472 = arith.addf %469, %471 : vector<10x96xf32>
    %473 = vector.extract_strided_slice %472 {offsets = [0, 0], sizes = [10, 16], strides = [1, 1]} : vector<10x96xf32> to vector<10x16xf32>
    %474 = vector.extract_strided_slice %472 {offsets = [0, 32], sizes = [10, 16], strides = [1, 1]} : vector<10x96xf32> to vector<10x16xf32>
    %475 = vector.extract_strided_slice %472 {offsets = [0, 64], sizes = [10, 16], strides = [1, 1]} : vector<10x96xf32> to vector<10x16xf32>
    %476 = arith.truncf %473 : vector<10x16xf32> to vector<10x16xbf16>
    %477 = arith.truncf %474 : vector<10x16xf32> to vector<10x16xbf16>
    %cst_141 = arith.constant dense<0.000000e+00> : vector<10x10xf32>
    %478 = tpu.matmul %476, %477, %cst_141 {dimension_numbers = #tpu.dot_dimension_numbers<[1], [1], [0], [0], [0, 0, 1, 0], [], []>} : vector<10x16xbf16>, vector<10x16xbf16>, vector<10x10xf32> -> vector<10x10xf32>
    %cst_142 = arith.constant 2.500000e-01 : f32
    %479 = vector.broadcast %cst_142 : f32 to vector<10x10xf32>
    %480 = arith.mulf %478, %479 : vector<10x10xf32>
    %481 = arith.addf %480, %442 : vector<10x10xf32>
    %cst_143 = arith.constant dense<0xFF800000> : vector<10xf32>
    %482 = vector.multi_reduction <maximumf>, %481, %cst_143 [1] : vector<10x10xf32> to vector<10xf32>
    %483 = vector.shape_cast %482 : vector<10xf32> to vector<10x1xf32>
    %484 = vector.broadcast %483 : vector<10x1xf32> to vector<10x10xf32>
    %485 = arith.subf %481, %484 : vector<10x10xf32>
    %486 = math.exp %485 : vector<10x10xf32>
    %cst_144 = arith.constant dense<0.000000e+00> : vector<10xf32>
    %487 = vector.multi_reduction <add>, %486, %cst_144 [1] : vector<10x10xf32> to vector<10xf32>
    %488 = vector.shape_cast %487 : vector<10xf32> to vector<10x1xf32>
    %489 = tpu.reciprocal %488 {approx = true} : vector<10x1xf32> -> vector<10x1xf32>
    %490 = vector.broadcast %489 : vector<10x1xf32> to vector<10x10xf32>
    %491 = arith.mulf %486, %490 : vector<10x10xf32>
    %492 = arith.truncf %491 : vector<10x10xf32> to vector<10x10xbf16>
    %493 = arith.truncf %475 : vector<10x16xf32> to vector<10x16xbf16>
    %cst_145 = arith.constant dense<0.000000e+00> : vector<10x16xf32>
    %494 = tpu.matmul %492, %493, %cst_145 {dimension_numbers = #tpu.dot_dimension_numbers<[1], [0], [0], [1], [0, 0, 1, 1], [], []>} : vector<10x10xbf16>, vector<10x16xbf16>, vector<10x16xf32> -> vector<10x16xf32>
    %495 = vector.extract_strided_slice %472 {offsets = [0, 16], sizes = [10, 16], strides = [1, 1]} : vector<10x96xf32> to vector<10x16xf32>
    %496 = vector.extract_strided_slice %472 {offsets = [0, 48], sizes = [10, 16], strides = [1, 1]} : vector<10x96xf32> to vector<10x16xf32>
    %497 = vector.extract_strided_slice %472 {offsets = [0, 80], sizes = [10, 16], strides = [1, 1]} : vector<10x96xf32> to vector<10x16xf32>
    %498 = arith.truncf %495 : vector<10x16xf32> to vector<10x16xbf16>
    %499 = arith.truncf %496 : vector<10x16xf32> to vector<10x16xbf16>
    %cst_146 = arith.constant dense<0.000000e+00> : vector<10x10xf32>
    %500 = tpu.matmul %498, %499, %cst_146 {dimension_numbers = #tpu.dot_dimension_numbers<[1], [1], [0], [0], [0, 0, 1, 0], [], []>} : vector<10x16xbf16>, vector<10x16xbf16>, vector<10x10xf32> -> vector<10x10xf32>
    %cst_147 = arith.constant 2.500000e-01 : f32
    %501 = vector.broadcast %cst_147 : f32 to vector<10x10xf32>
    %502 = arith.mulf %500, %501 : vector<10x10xf32>
    %503 = arith.addf %502, %442 : vector<10x10xf32>
    %cst_148 = arith.constant dense<0xFF800000> : vector<10xf32>
    %504 = vector.multi_reduction <maximumf>, %503, %cst_148 [1] : vector<10x10xf32> to vector<10xf32>
    %505 = vector.shape_cast %504 : vector<10xf32> to vector<10x1xf32>
    %506 = vector.broadcast %505 : vector<10x1xf32> to vector<10x10xf32>
    %507 = arith.subf %503, %506 : vector<10x10xf32>
    %508 = math.exp %507 : vector<10x10xf32>
    %cst_149 = arith.constant dense<0.000000e+00> : vector<10xf32>
    %509 = vector.multi_reduction <add>, %508, %cst_149 [1] : vector<10x10xf32> to vector<10xf32>
    %510 = vector.shape_cast %509 : vector<10xf32> to vector<10x1xf32>
    %511 = tpu.reciprocal %510 {approx = true} : vector<10x1xf32> -> vector<10x1xf32>
    %512 = vector.broadcast %511 : vector<10x1xf32> to vector<10x10xf32>
    %513 = arith.mulf %508, %512 : vector<10x10xf32>
    %514 = arith.truncf %513 : vector<10x10xf32> to vector<10x10xbf16>
    %515 = arith.truncf %497 : vector<10x16xf32> to vector<10x16xbf16>
    %cst_150 = arith.constant dense<0.000000e+00> : vector<10x16xf32>
    %516 = tpu.matmul %514, %515, %cst_150 {dimension_numbers = #tpu.dot_dimension_numbers<[1], [0], [0], [1], [0, 0, 1, 1], [], []>} : vector<10x10xbf16>, vector<10x16xbf16>, vector<10x16xf32> -> vector<10x16xf32>
    %517 = tpu.concatenate %494, %516 in 1 : vector<10x16xf32>, vector<10x16xf32> -> vector<10x32xf32>
    %c592 = arith.constant 592 : index
    %c0_151 = arith.constant 0 : index
    %518 = vector.load %arg3[%c592, %c0_151] : memref<912x96xbf16, #tpu.memory_space<vmem>>, vector<32x32xbf16>
    %519 = arith.truncf %517 : vector<10x32xf32> to vector<10x32xbf16>
    %cst_152 = arith.constant dense<0.000000e+00> : vector<10x32xf32>
    %520 = tpu.matmul %519, %518, %cst_152 {dimension_numbers = #tpu.dot_dimension_numbers<[1], [0], [0], [1], [0, 0, 1, 1], [], []>} : vector<10x32xbf16>, vector<32x32xbf16>, vector<10x32xf32> -> vector<10x32xf32>
    %521 = arith.addf %412, %520 : vector<10x32xf32>
    %c24 = arith.constant 24 : index
    %c0_153 = arith.constant 0 : index
    %522 = vector.load %arg4[%c24, %c0_153] : memref<39x96xf32, #tpu.memory_space<vmem>>, vector<1x32xf32>
    %523 = vector.broadcast %522 : vector<1x32xf32> to vector<10x32xf32>
    %524 = arith.addf %521, %523 : vector<10x32xf32>
    %c25 = arith.constant 25 : index
    %c0_154 = arith.constant 0 : index
    %525 = vector.load %arg4[%c25, %c0_154] : memref<39x96xf32, #tpu.memory_space<vmem>>, vector<1x32xf32>
    %c26 = arith.constant 26 : index
    %c0_155 = arith.constant 0 : index
    %526 = vector.load %arg4[%c26, %c0_155] : memref<39x96xf32, #tpu.memory_space<vmem>>, vector<1x32xf32>
    %cst_156 = arith.constant dense<0.000000e+00> : vector<10xf32>
    %527 = vector.multi_reduction <add>, %524, %cst_156 [1] : vector<10x32xf32> to vector<10xf32>
    %528 = vector.shape_cast %527 : vector<10xf32> to vector<10x1xf32>
    %cst_157 = arith.constant 3.200000e+01 : f32
    %529 = vector.broadcast %cst_157 : f32 to vector<10x1xf32>
    %530 = arith.divf %528, %529 : vector<10x1xf32>
    %531 = vector.broadcast %530 : vector<10x1xf32> to vector<10x32xf32>
    %532 = arith.subf %524, %531 : vector<10x32xf32>
    %533 = arith.mulf %532, %532 : vector<10x32xf32>
    %cst_158 = arith.constant dense<0.000000e+00> : vector<10xf32>
    %534 = vector.multi_reduction <add>, %533, %cst_158 [1] : vector<10x32xf32> to vector<10xf32>
    %535 = vector.shape_cast %534 : vector<10xf32> to vector<10x1xf32>
    %cst_159 = arith.constant 3.200000e+01 : f32
    %536 = vector.broadcast %cst_159 : f32 to vector<10x1xf32>
    %537 = arith.divf %535, %536 : vector<10x1xf32>
    %538 = vector.broadcast %530 : vector<10x1xf32> to vector<10x32xf32>
    %539 = arith.subf %524, %538 : vector<10x32xf32>
    %cst_160 = arith.constant 9.99999974E-6 : f32
    %540 = vector.broadcast %cst_160 : f32 to vector<10x1xf32>
    %541 = arith.addf %537, %540 : vector<10x1xf32>
    %542 = math.rsqrt %541 : vector<10x1xf32>
    %543 = vector.broadcast %542 : vector<10x1xf32> to vector<10x32xf32>
    %544 = arith.mulf %539, %543 : vector<10x32xf32>
    %545 = vector.broadcast %525 : vector<1x32xf32> to vector<10x32xf32>
    %546 = arith.mulf %544, %545 : vector<10x32xf32>
    %547 = vector.broadcast %526 : vector<1x32xf32> to vector<10x32xf32>
    %548 = arith.addf %546, %547 : vector<10x32xf32>
    %c624 = arith.constant 624 : index
    %c0_161 = arith.constant 0 : index
    %549 = vector.load %arg3[%c624, %c0_161] : memref<912x96xbf16, #tpu.memory_space<vmem>>, vector<32x64xbf16>
    %550 = arith.truncf %548 : vector<10x32xf32> to vector<10x32xbf16>
    %cst_162 = arith.constant dense<0.000000e+00> : vector<10x64xf32>
    %551 = tpu.matmul %550, %549, %cst_162 {dimension_numbers = #tpu.dot_dimension_numbers<[1], [0], [0], [1], [0, 0, 1, 1], [], []>} : vector<10x32xbf16>, vector<32x64xbf16>, vector<10x64xf32> -> vector<10x64xf32>
    %c27 = arith.constant 27 : index
    %c0_163 = arith.constant 0 : index
    %552 = vector.load %arg4[%c27, %c0_163] : memref<39x96xf32, #tpu.memory_space<vmem>>, vector<1x64xf32>
    %553 = vector.broadcast %552 : vector<1x64xf32> to vector<10x64xf32>
    %554 = arith.addf %551, %553 : vector<10x64xf32>
    %cst_164 = arith.constant 1.702000e+00 : f32
    %555 = vector.broadcast %cst_164 : f32 to vector<10x64xf32>
    %556 = arith.mulf %555, %554 : vector<10x64xf32>
    %557 = arith.negf %556 : vector<10x64xf32>
    %558 = math.exp %557 : vector<10x64xf32>
    %cst_165 = arith.constant 1.000000e+00 : f32
    %559 = vector.broadcast %cst_165 : f32 to vector<10x64xf32>
    %560 = arith.addf %559, %558 : vector<10x64xf32>
    %561 = arith.divf %559, %560 : vector<10x64xf32>
    %562 = arith.mulf %554, %561 : vector<10x64xf32>
    %c656 = arith.constant 656 : index
    %c0_166 = arith.constant 0 : index
    %563 = vector.load %arg3[%c656, %c0_166] : memref<912x96xbf16, #tpu.memory_space<vmem>>, vector<64x32xbf16>
    %564 = arith.truncf %562 : vector<10x64xf32> to vector<10x64xbf16>
    %cst_167 = arith.constant dense<0.000000e+00> : vector<10x32xf32>
    %565 = tpu.matmul %564, %563, %cst_167 {dimension_numbers = #tpu.dot_dimension_numbers<[1], [0], [0], [1], [0, 0, 1, 1], [], []>} : vector<10x64xbf16>, vector<64x32xbf16>, vector<10x32xf32> -> vector<10x32xf32>
    %566 = arith.addf %524, %565 : vector<10x32xf32>
    %c28 = arith.constant 28 : index
    %c0_168 = arith.constant 0 : index
    %567 = vector.load %arg4[%c28, %c0_168] : memref<39x96xf32, #tpu.memory_space<vmem>>, vector<1x32xf32>
    %568 = vector.broadcast %567 : vector<1x32xf32> to vector<10x32xf32>
    %569 = arith.addf %566, %568 : vector<10x32xf32>
    %c29 = arith.constant 29 : index
    %c0_169 = arith.constant 0 : index
    %570 = vector.load %arg4[%c29, %c0_169] : memref<39x96xf32, #tpu.memory_space<vmem>>, vector<1x32xf32>
    %c30 = arith.constant 30 : index
    %c0_170 = arith.constant 0 : index
    %571 = vector.load %arg4[%c30, %c0_170] : memref<39x96xf32, #tpu.memory_space<vmem>>, vector<1x32xf32>
    %cst_171 = arith.constant dense<0.000000e+00> : vector<10xf32>
    %572 = vector.multi_reduction <add>, %569, %cst_171 [1] : vector<10x32xf32> to vector<10xf32>
    %573 = vector.shape_cast %572 : vector<10xf32> to vector<10x1xf32>
    %cst_172 = arith.constant 3.200000e+01 : f32
    %574 = vector.broadcast %cst_172 : f32 to vector<10x1xf32>
    %575 = arith.divf %573, %574 : vector<10x1xf32>
    %576 = vector.broadcast %575 : vector<10x1xf32> to vector<10x32xf32>
    %577 = arith.subf %569, %576 : vector<10x32xf32>
    %578 = arith.mulf %577, %577 : vector<10x32xf32>
    %cst_173 = arith.constant dense<0.000000e+00> : vector<10xf32>
    %579 = vector.multi_reduction <add>, %578, %cst_173 [1] : vector<10x32xf32> to vector<10xf32>
    %580 = vector.shape_cast %579 : vector<10xf32> to vector<10x1xf32>
    %cst_174 = arith.constant 3.200000e+01 : f32
    %581 = vector.broadcast %cst_174 : f32 to vector<10x1xf32>
    %582 = arith.divf %580, %581 : vector<10x1xf32>
    %583 = vector.broadcast %575 : vector<10x1xf32> to vector<10x32xf32>
    %584 = arith.subf %569, %583 : vector<10x32xf32>
    %cst_175 = arith.constant 9.99999974E-6 : f32
    %585 = vector.broadcast %cst_175 : f32 to vector<10x1xf32>
    %586 = arith.addf %582, %585 : vector<10x1xf32>
    %587 = math.rsqrt %586 : vector<10x1xf32>
    %588 = vector.broadcast %587 : vector<10x1xf32> to vector<10x32xf32>
    %589 = arith.mulf %584, %588 : vector<10x32xf32>
    %590 = vector.broadcast %570 : vector<1x32xf32> to vector<10x32xf32>
    %591 = arith.mulf %589, %590 : vector<10x32xf32>
    %592 = vector.broadcast %571 : vector<1x32xf32> to vector<10x32xf32>
    %593 = arith.addf %591, %592 : vector<10x32xf32>
    %c720 = arith.constant 720 : index
    %c0_176 = arith.constant 0 : index
    %594 = vector.load %arg3[%c720, %c0_176] : memref<912x96xbf16, #tpu.memory_space<vmem>>, vector<32x96xbf16>
    %595 = arith.truncf %593 : vector<10x32xf32> to vector<10x32xbf16>
    %cst_177 = arith.constant dense<0.000000e+00> : vector<10x96xf32>
    %596 = tpu.matmul %595, %594, %cst_177 {dimension_numbers = #tpu.dot_dimension_numbers<[1], [0], [0], [1], [0, 0, 1, 1], [], []>} : vector<10x32xbf16>, vector<32x96xbf16>, vector<10x96xf32> -> vector<10x96xf32>
    %c31 = arith.constant 31 : index
    %c0_178 = arith.constant 0 : index
    %597 = vector.load %arg4[%c31, %c0_178] : memref<39x96xf32, #tpu.memory_space<vmem>>, vector<1x96xf32>
    %598 = vector.broadcast %597 : vector<1x96xf32> to vector<10x96xf32>
    %599 = arith.addf %596, %598 : vector<10x96xf32>
    %600 = vector.extract_strided_slice %599 {offsets = [0, 0], sizes = [10, 16], strides = [1, 1]} : vector<10x96xf32> to vector<10x16xf32>
    %601 = vector.extract_strided_slice %599 {offsets = [0, 32], sizes = [10, 16], strides = [1, 1]} : vector<10x96xf32> to vector<10x16xf32>
    %602 = vector.extract_strided_slice %599 {offsets = [0, 64], sizes = [10, 16], strides = [1, 1]} : vector<10x96xf32> to vector<10x16xf32>
    %603 = arith.truncf %600 : vector<10x16xf32> to vector<10x16xbf16>
    %604 = arith.truncf %601 : vector<10x16xf32> to vector<10x16xbf16>
    %cst_179 = arith.constant dense<0.000000e+00> : vector<10x10xf32>
    %605 = tpu.matmul %603, %604, %cst_179 {dimension_numbers = #tpu.dot_dimension_numbers<[1], [1], [0], [0], [0, 0, 1, 0], [], []>} : vector<10x16xbf16>, vector<10x16xbf16>, vector<10x10xf32> -> vector<10x10xf32>
    %cst_180 = arith.constant 2.500000e-01 : f32
    %606 = vector.broadcast %cst_180 : f32 to vector<10x10xf32>
    %607 = arith.mulf %605, %606 : vector<10x10xf32>
    %608 = arith.addf %607, %442 : vector<10x10xf32>
    %cst_181 = arith.constant dense<0xFF800000> : vector<10xf32>
    %609 = vector.multi_reduction <maximumf>, %608, %cst_181 [1] : vector<10x10xf32> to vector<10xf32>
    %610 = vector.shape_cast %609 : vector<10xf32> to vector<10x1xf32>
    %611 = vector.broadcast %610 : vector<10x1xf32> to vector<10x10xf32>
    %612 = arith.subf %608, %611 : vector<10x10xf32>
    %613 = math.exp %612 : vector<10x10xf32>
    %cst_182 = arith.constant dense<0.000000e+00> : vector<10xf32>
    %614 = vector.multi_reduction <add>, %613, %cst_182 [1] : vector<10x10xf32> to vector<10xf32>
    %615 = vector.shape_cast %614 : vector<10xf32> to vector<10x1xf32>
    %616 = tpu.reciprocal %615 {approx = true} : vector<10x1xf32> -> vector<10x1xf32>
    %617 = vector.broadcast %616 : vector<10x1xf32> to vector<10x10xf32>
    %618 = arith.mulf %613, %617 : vector<10x10xf32>
    %619 = arith.truncf %618 : vector<10x10xf32> to vector<10x10xbf16>
    %620 = arith.truncf %602 : vector<10x16xf32> to vector<10x16xbf16>
    %cst_183 = arith.constant dense<0.000000e+00> : vector<10x16xf32>
    %621 = tpu.matmul %619, %620, %cst_183 {dimension_numbers = #tpu.dot_dimension_numbers<[1], [0], [0], [1], [0, 0, 1, 1], [], []>} : vector<10x10xbf16>, vector<10x16xbf16>, vector<10x16xf32> -> vector<10x16xf32>
    %622 = vector.extract_strided_slice %599 {offsets = [0, 16], sizes = [10, 16], strides = [1, 1]} : vector<10x96xf32> to vector<10x16xf32>
    %623 = vector.extract_strided_slice %599 {offsets = [0, 48], sizes = [10, 16], strides = [1, 1]} : vector<10x96xf32> to vector<10x16xf32>
    %624 = vector.extract_strided_slice %599 {offsets = [0, 80], sizes = [10, 16], strides = [1, 1]} : vector<10x96xf32> to vector<10x16xf32>
    %625 = arith.truncf %622 : vector<10x16xf32> to vector<10x16xbf16>
    %626 = arith.truncf %623 : vector<10x16xf32> to vector<10x16xbf16>
    %cst_184 = arith.constant dense<0.000000e+00> : vector<10x10xf32>
    %627 = tpu.matmul %625, %626, %cst_184 {dimension_numbers = #tpu.dot_dimension_numbers<[1], [1], [0], [0], [0, 0, 1, 0], [], []>} : vector<10x16xbf16>, vector<10x16xbf16>, vector<10x10xf32> -> vector<10x10xf32>
    %cst_185 = arith.constant 2.500000e-01 : f32
    %628 = vector.broadcast %cst_185 : f32 to vector<10x10xf32>
    %629 = arith.mulf %627, %628 : vector<10x10xf32>
    %630 = arith.addf %629, %442 : vector<10x10xf32>
    %cst_186 = arith.constant dense<0xFF800000> : vector<10xf32>
    %631 = vector.multi_reduction <maximumf>, %630, %cst_186 [1] : vector<10x10xf32> to vector<10xf32>
    %632 = vector.shape_cast %631 : vector<10xf32> to vector<10x1xf32>
    %633 = vector.broadcast %632 : vector<10x1xf32> to vector<10x10xf32>
    %634 = arith.subf %630, %633 : vector<10x10xf32>
    %635 = math.exp %634 : vector<10x10xf32>
    %cst_187 = arith.constant dense<0.000000e+00> : vector<10xf32>
    %636 = vector.multi_reduction <add>, %635, %cst_187 [1] : vector<10x10xf32> to vector<10xf32>
    %637 = vector.shape_cast %636 : vector<10xf32> to vector<10x1xf32>
    %638 = tpu.reciprocal %637 {approx = true} : vector<10x1xf32> -> vector<10x1xf32>
    %639 = vector.broadcast %638 : vector<10x1xf32> to vector<10x10xf32>
    %640 = arith.mulf %635, %639 : vector<10x10xf32>
    %641 = arith.truncf %640 : vector<10x10xf32> to vector<10x10xbf16>
    %642 = arith.truncf %624 : vector<10x16xf32> to vector<10x16xbf16>
    %cst_188 = arith.constant dense<0.000000e+00> : vector<10x16xf32>
    %643 = tpu.matmul %641, %642, %cst_188 {dimension_numbers = #tpu.dot_dimension_numbers<[1], [0], [0], [1], [0, 0, 1, 1], [], []>} : vector<10x10xbf16>, vector<10x16xbf16>, vector<10x16xf32> -> vector<10x16xf32>
    %644 = tpu.concatenate %621, %643 in 1 : vector<10x16xf32>, vector<10x16xf32> -> vector<10x32xf32>
    %c752 = arith.constant 752 : index
    %c0_189 = arith.constant 0 : index
    %645 = vector.load %arg3[%c752, %c0_189] : memref<912x96xbf16, #tpu.memory_space<vmem>>, vector<32x32xbf16>
    %646 = arith.truncf %644 : vector<10x32xf32> to vector<10x32xbf16>
    %cst_190 = arith.constant dense<0.000000e+00> : vector<10x32xf32>
    %647 = tpu.matmul %646, %645, %cst_190 {dimension_numbers = #tpu.dot_dimension_numbers<[1], [0], [0], [1], [0, 0, 1, 1], [], []>} : vector<10x32xbf16>, vector<32x32xbf16>, vector<10x32xf32> -> vector<10x32xf32>
    %648 = arith.addf %569, %647 : vector<10x32xf32>
    %c32_191 = arith.constant 32 : index
    %c0_192 = arith.constant 0 : index
    %649 = vector.load %arg4[%c32_191, %c0_192] : memref<39x96xf32, #tpu.memory_space<vmem>>, vector<1x32xf32>
    %650 = vector.broadcast %649 : vector<1x32xf32> to vector<10x32xf32>
    %651 = arith.addf %648, %650 : vector<10x32xf32>
    %c33 = arith.constant 33 : index
    %c0_193 = arith.constant 0 : index
    %652 = vector.load %arg4[%c33, %c0_193] : memref<39x96xf32, #tpu.memory_space<vmem>>, vector<1x32xf32>
    %c34 = arith.constant 34 : index
    %c0_194 = arith.constant 0 : index
    %653 = vector.load %arg4[%c34, %c0_194] : memref<39x96xf32, #tpu.memory_space<vmem>>, vector<1x32xf32>
    %cst_195 = arith.constant dense<0.000000e+00> : vector<10xf32>
    %654 = vector.multi_reduction <add>, %651, %cst_195 [1] : vector<10x32xf32> to vector<10xf32>
    %655 = vector.shape_cast %654 : vector<10xf32> to vector<10x1xf32>
    %cst_196 = arith.constant 3.200000e+01 : f32
    %656 = vector.broadcast %cst_196 : f32 to vector<10x1xf32>
    %657 = arith.divf %655, %656 : vector<10x1xf32>
    %658 = vector.broadcast %657 : vector<10x1xf32> to vector<10x32xf32>
    %659 = arith.subf %651, %658 : vector<10x32xf32>
    %660 = arith.mulf %659, %659 : vector<10x32xf32>
    %cst_197 = arith.constant dense<0.000000e+00> : vector<10xf32>
    %661 = vector.multi_reduction <add>, %660, %cst_197 [1] : vector<10x32xf32> to vector<10xf32>
    %662 = vector.shape_cast %661 : vector<10xf32> to vector<10x1xf32>
    %cst_198 = arith.constant 3.200000e+01 : f32
    %663 = vector.broadcast %cst_198 : f32 to vector<10x1xf32>
    %664 = arith.divf %662, %663 : vector<10x1xf32>
    %665 = vector.broadcast %657 : vector<10x1xf32> to vector<10x32xf32>
    %666 = arith.subf %651, %665 : vector<10x32xf32>
    %cst_199 = arith.constant 9.99999974E-6 : f32
    %667 = vector.broadcast %cst_199 : f32 to vector<10x1xf32>
    %668 = arith.addf %664, %667 : vector<10x1xf32>
    %669 = math.rsqrt %668 : vector<10x1xf32>
    %670 = vector.broadcast %669 : vector<10x1xf32> to vector<10x32xf32>
    %671 = arith.mulf %666, %670 : vector<10x32xf32>
    %672 = vector.broadcast %652 : vector<1x32xf32> to vector<10x32xf32>
    %673 = arith.mulf %671, %672 : vector<10x32xf32>
    %674 = vector.broadcast %653 : vector<1x32xf32> to vector<10x32xf32>
    %675 = arith.addf %673, %674 : vector<10x32xf32>
    %c784 = arith.constant 784 : index
    %c0_200 = arith.constant 0 : index
    %676 = vector.load %arg3[%c784, %c0_200] : memref<912x96xbf16, #tpu.memory_space<vmem>>, vector<32x64xbf16>
    %677 = arith.truncf %675 : vector<10x32xf32> to vector<10x32xbf16>
    %cst_201 = arith.constant dense<0.000000e+00> : vector<10x64xf32>
    %678 = tpu.matmul %677, %676, %cst_201 {dimension_numbers = #tpu.dot_dimension_numbers<[1], [0], [0], [1], [0, 0, 1, 1], [], []>} : vector<10x32xbf16>, vector<32x64xbf16>, vector<10x64xf32> -> vector<10x64xf32>
    %c35 = arith.constant 35 : index
    %c0_202 = arith.constant 0 : index
    %679 = vector.load %arg4[%c35, %c0_202] : memref<39x96xf32, #tpu.memory_space<vmem>>, vector<1x64xf32>
    %680 = vector.broadcast %679 : vector<1x64xf32> to vector<10x64xf32>
    %681 = arith.addf %678, %680 : vector<10x64xf32>
    %cst_203 = arith.constant 1.702000e+00 : f32
    %682 = vector.broadcast %cst_203 : f32 to vector<10x64xf32>
    %683 = arith.mulf %682, %681 : vector<10x64xf32>
    %684 = arith.negf %683 : vector<10x64xf32>
    %685 = math.exp %684 : vector<10x64xf32>
    %cst_204 = arith.constant 1.000000e+00 : f32
    %686 = vector.broadcast %cst_204 : f32 to vector<10x64xf32>
    %687 = arith.addf %686, %685 : vector<10x64xf32>
    %688 = arith.divf %686, %687 : vector<10x64xf32>
    %689 = arith.mulf %681, %688 : vector<10x64xf32>
    %c816 = arith.constant 816 : index
    %c0_205 = arith.constant 0 : index
    %690 = vector.load %arg3[%c816, %c0_205] : memref<912x96xbf16, #tpu.memory_space<vmem>>, vector<64x32xbf16>
    %691 = arith.truncf %689 : vector<10x64xf32> to vector<10x64xbf16>
    %cst_206 = arith.constant dense<0.000000e+00> : vector<10x32xf32>
    %692 = tpu.matmul %691, %690, %cst_206 {dimension_numbers = #tpu.dot_dimension_numbers<[1], [0], [0], [1], [0, 0, 1, 1], [], []>} : vector<10x64xbf16>, vector<64x32xbf16>, vector<10x32xf32> -> vector<10x32xf32>
    %693 = arith.addf %651, %692 : vector<10x32xf32>
    %c36 = arith.constant 36 : index
    %c0_207 = arith.constant 0 : index
    %694 = vector.load %arg4[%c36, %c0_207] : memref<39x96xf32, #tpu.memory_space<vmem>>, vector<1x32xf32>
    %695 = vector.broadcast %694 : vector<1x32xf32> to vector<10x32xf32>
    %696 = arith.addf %693, %695 : vector<10x32xf32>
    %c37 = arith.constant 37 : index
    %c0_208 = arith.constant 0 : index
    %697 = vector.load %arg4[%c37, %c0_208] : memref<39x96xf32, #tpu.memory_space<vmem>>, vector<1x32xf32>
    %c38 = arith.constant 38 : index
    %c0_209 = arith.constant 0 : index
    %698 = vector.load %arg4[%c38, %c0_209] : memref<39x96xf32, #tpu.memory_space<vmem>>, vector<1x32xf32>
    %cst_210 = arith.constant dense<0.000000e+00> : vector<10xf32>
    %699 = vector.multi_reduction <add>, %696, %cst_210 [1] : vector<10x32xf32> to vector<10xf32>
    %700 = vector.shape_cast %699 : vector<10xf32> to vector<10x1xf32>
    %cst_211 = arith.constant 3.200000e+01 : f32
    %701 = vector.broadcast %cst_211 : f32 to vector<10x1xf32>
    %702 = arith.divf %700, %701 : vector<10x1xf32>
    %703 = vector.broadcast %702 : vector<10x1xf32> to vector<10x32xf32>
    %704 = arith.subf %696, %703 : vector<10x32xf32>
    %705 = arith.mulf %704, %704 : vector<10x32xf32>
    %cst_212 = arith.constant dense<0.000000e+00> : vector<10xf32>
    %706 = vector.multi_reduction <add>, %705, %cst_212 [1] : vector<10x32xf32> to vector<10xf32>
    %707 = vector.shape_cast %706 : vector<10xf32> to vector<10x1xf32>
    %cst_213 = arith.constant 3.200000e+01 : f32
    %708 = vector.broadcast %cst_213 : f32 to vector<10x1xf32>
    %709 = arith.divf %707, %708 : vector<10x1xf32>
    %710 = vector.broadcast %702 : vector<10x1xf32> to vector<10x32xf32>
    %711 = arith.subf %696, %710 : vector<10x32xf32>
    %cst_214 = arith.constant 9.99999974E-6 : f32
    %712 = vector.broadcast %cst_214 : f32 to vector<10x1xf32>
    %713 = arith.addf %709, %712 : vector<10x1xf32>
    %714 = math.rsqrt %713 : vector<10x1xf32>
    %715 = vector.broadcast %714 : vector<10x1xf32> to vector<10x32xf32>
    %716 = arith.mulf %711, %715 : vector<10x32xf32>
    %717 = vector.broadcast %697 : vector<1x32xf32> to vector<10x32xf32>
    %718 = arith.mulf %716, %717 : vector<10x32xf32>
    %719 = vector.broadcast %698 : vector<1x32xf32> to vector<10x32xf32>
    %720 = arith.addf %718, %719 : vector<10x32xf32>
    %721 = vector.extract_strided_slice %720 {offsets = [1, 0], sizes = [4, 32], strides = [1, 1]} : vector<10x32xf32> to vector<4x32xf32>
    %722 = vector.extract_strided_slice %720 {offsets = [6, 0], sizes = [4, 32], strides = [1, 1]} : vector<10x32xf32> to vector<4x32xf32>
    %723 = tpu.concatenate %721, %722 in 0 : vector<4x32xf32>, vector<4x32xf32> -> vector<8x32xf32>
    %c880 = arith.constant 880 : index
    %c0_215 = arith.constant 0 : index
    %724 = vector.load %arg3[%c880, %c0_215] : memref<912x96xbf16, #tpu.memory_space<vmem>>, vector<32x32xbf16>
    %725 = arith.truncf %723 : vector<8x32xf32> to vector<8x32xbf16>
    %cst_216 = arith.constant dense<0.000000e+00> : vector<8x32xf32>
    %726 = tpu.matmul %725, %724, %cst_216 {dimension_numbers = #tpu.dot_dimension_numbers<[1], [0], [0], [1], [0, 0, 1, 1], [], []>} : vector<8x32xbf16>, vector<32x32xbf16>, vector<8x32xf32> -> vector<8x32xf32>
    %727 = arith.mulf %726, %726 : vector<8x32xf32>
    %cst_217 = arith.constant dense<0.000000e+00> : vector<8xf32>
    %728 = vector.multi_reduction <add>, %727, %cst_217 [1] : vector<8x32xf32> to vector<8xf32>
    %729 = vector.shape_cast %728 : vector<8xf32> to vector<8x1xf32>
    %730 = math.rsqrt %729 : vector<8x1xf32>
    %731 = vector.broadcast %730 : vector<8x1xf32> to vector<8x32xf32>
    %732 = arith.mulf %726, %731 : vector<8x32xf32>
    %c0_218 = arith.constant 0 : index
    %733 = memref.load %arg0[%c0_218] : memref<1xf32, #tpu.memory_space<smem>>
    %734 = math.exp %733 : f32
    %735 = arith.truncf %732 : vector<8x32xf32> to vector<8x32xbf16>
    %736 = arith.truncf %374 : vector<6x32xf32> to vector<6x32xbf16>
    %cst_219 = arith.constant dense<0.000000e+00> : vector<8x6xf32>
    %737 = tpu.matmul %735, %736, %cst_219 {dimension_numbers = #tpu.dot_dimension_numbers<[1], [1], [0], [0], [0, 0, 1, 0], [], []>} : vector<8x32xbf16>, vector<6x32xbf16>, vector<8x6xf32> -> vector<8x6xf32>
    %738 = vector.broadcast %734 : f32 to vector<8x6xf32>
    %739 = arith.mulf %738, %737 : vector<8x6xf32>
    %c0_220 = arith.constant 0 : index
    %c0_221 = arith.constant 0 : index
    %740 = vector.load %arg6[%c0_220, %c0_221] : memref<8x6xf32, #tpu.memory_space<vmem>>, vector<8x6xf32>
    tpu.vector_store %arg6[%c0_220, %c0_221], %739 {strides = array<i32>} : memref<8x6xf32, #tpu.memory_space<vmem>>, vector<8x6xf32>,
    return
  }
}

</mosaic_0001>

<llo_original>
// kernel: tpu_custom_call.1
$region0: #{tpu_custom_call.1}
  #allocation0 [shape = 'u32[]', space=smem, size = 0x4, offset = 0x4, fixed_abs, tag = 'smem constant byte address 0x4 - core index']
  #allocation1 [shape = 'u32[144,128]{1,0:T(1,128)}', space=vmem, size = 0x12000, scoped, tag = 'internal scratch']
  #allocation2 [shape = 'f32[1]{0:T(128)S(6)}', space=smem, size = 0x200, scoped, tag = 'scoped memory for tpu_custom_call.1']
  %s0 = inlined_call_operand.<no memory space> [shape: f32[1], index: 0, kind: input, shape index: {}]
  %s1 = inlined_call_operand.vmem [shape: f32[96,32], index: 1, kind: input, shape index: {}]
  %s2 = inlined_call_operand.vmem [shape: f32[8,192], index: 2, kind: input, shape index: {}]
  %s3 = inlined_call_operand.vmem [shape: bf16[912,96], index: 3, kind: input, shape index: {}]
  %s4 = inlined_call_operand.vmem [shape: f32[39,96], index: 4, kind: input, shape index: {}]
  %s5 = inlined_call_operand.hbm [shape: f32[6,32], index: 5, kind: output, shape index: {0}]
  %s6 = inlined_call_operand.hbm [shape: f32[8,6], index: 6, kind: output, shape index: {1}]
  %7 = xla_tuple %s5, %s6
  %s8 = sld [smem:[#allocation0]]
  $region38: #{tpu_custom_call.1} parent=0
    _
  %s10 = ssub.s32 1, %s8
  %s11 = scalar_select 0, %s10, %s8
  %12 = sst [smem:[#allocation2]] %s0
  $region1: #{tpu_custom_call.1} parent=0
    #allocation3 [shape = 'u8[4096]{0}', space=vmem, size = 0x1000, scoped, tag = 'output window, operand 0, single buffered']
    #allocation4 [shape = 's32[1]{0}', space=sflag, size = 0x4, scoped, tag = 'scoped memory for tpu_custom_call.1']
    #allocation5 [shape = 'u8[4096]{0}', space=vmem, size = 0x1000, scoped, tag = 'output window, operand 1, single buffered']
    #allocation6 [shape = 's32[1]{0}', space=sflag, size = 0x4, scoped, tag = 'scoped memory for tpu_custom_call.1']
    %13 = vsyncpa [#allocation4], 0
    %14 = vsyncpa [#allocation6], 0
    // Predicated region
    $region2: #{tpu_custom_call.1} parent=1 // pred_check
      _
    $region3: #{tpu_custom_call.1} parent=1 // pred_check_branch
      %16 = sbr.rel (0) target = $region5
    $region4: #{tpu_custom_call.1} parent=1 // pred_region
      _
    $region5: #{tpu_custom_call.1} parent=1 // pred_fallthru
      _
    // Predicated region
    $region6: #{tpu_custom_call.1} parent=1 // pred_check
      _
    $region7: #{tpu_custom_call.1} parent=1 // pred_check_branch
      %18 = sbr.rel (0) target = $region9
    $region8: #{tpu_custom_call.1} parent=1 // pred_region
      _
    $region9: #{tpu_custom_call.1} parent=1 // pred_fallthru
      _
    // Predicated region
    $region10: #{tpu_custom_call.1} parent=1 // pred_check
      _
    $region11: #{tpu_custom_call.1} parent=1 // pred_check_branch
      %20 = sbr.rel (0) target = $region13
    $region12: #{tpu_custom_call.1} parent=1 // pred_region
      _
    $region13: #{tpu_custom_call.1} parent=1 // pred_fallthru
      _
    // Predicated region
    $region14: #{tpu_custom_call.1} parent=1 // pred_check
      _
    $region15: #{tpu_custom_call.1} parent=1 // pred_check_branch
      %22 = sbr.rel (0) target = $region17
    $region16: #{tpu_custom_call.1} parent=1 // pred_region
      _
    $region17: #{tpu_custom_call.1} parent=1 // pred_fallthru
      _
    // Predicated region
    $region18: #{tpu_custom_call.1} parent=1 // pred_check
      _
    $region19: #{tpu_custom_call.1} parent=1 // pred_check_branch
      %24 = sbr.rel (0) target = $region21
    $region20: #{tpu_custom_call.1} parent=1 // pred_region
      _
    $region21: #{tpu_custom_call.1} parent=1 // pred_fallthru
      _
    %v26 = vld [vmem:[%s1] sm:$0xff]
    %v27 = vld [vmem:[%s1 + $0x8] sm:$0xff]
    %v28 = vld [vmem:[%s1 + $0x10] sm:$0xff]
    %v29 = vld [vmem:[%s1 + $0x18] sm:$0xff]
    %v30 = vld [vmem:[%s1 + $0x20] sm:$0xff]
    %v31 = vld [vmem:[%s1 + $0x28] sm:$0xff]
    %v32 = vld [vmem:[%s1 + $0x30] sm:$0xff]
    %v33 = vld [vmem:[%s1 + $0x38] sm:$0xff]
    %v34 = vld [vmem:[%s1 + $0x40] sm:$0xff]
    %v35 = vld [vmem:[%s1 + $0x48] sm:$0xff]
    %v36 = vld [vmem:[%s1 + $0x50] sm:$0xff]
    %v37 = vld [vmem:[%s1 + $0x58] sm:$0xff]
    %v38 = vlaneseq
    %v39 = vshrl.u32 %v38, 7
    %v40 = vadd.s32 %v39, 8
    %v41 = vadd.s32 %v39, 16
    %v42 = vadd.s32 %v39, 24
    %v43 = vadd.s32 %v39, 32
    %v44 = vadd.s32 %v39, 40
    %v45 = vadd.s32 %v39, 48
    %v46 = vadd.s32 %v39, 56
    %v47 = vadd.s32 %v39, 64
    %v48 = vadd.s32 %v39, 72
    %v49 = vadd.s32 %v39, 80
    %v50 = vadd.s32 %v39, 88
    %v51 = vlaneseq
    %v52 = vand.u32 %v51, 127
    %vm53 = vcmp.ge.s32.totalorder %v39, 0
    %vm54 = vcmp.ge.s32.totalorder %v40, 0
    %vm55 = vcmp.ge.s32.totalorder %v41, 0
    %vm56 = vcmp.ge.s32.totalorder %v42, 0
    %vm57 = vcmp.ge.s32.totalorder %v43, 0
    %vm58 = vcmp.ge.s32.totalorder %v44, 0
    %vm59 = vcmp.ge.s32.totalorder %v45, 0
    %vm60 = vcmp.ge.s32.totalorder %v46, 0
    %vm61 = vcmp.ge.s32.totalorder %v47, 0
    %vm62 = vcmp.ge.s32.totalorder %v48, 0
    %vm63 = vcmp.ge.s32.totalorder %v49, 0
    %vm64 = vcmp.ge.s32.totalorder %v50, 0
    %vm65 = vcmp.lt.s32.totalorder %v39, 16
    %vm66 = vcmp.lt.s32.totalorder %v40, 16
    %vm67 = vcmp.lt.s32.totalorder %v41, 16
    %vm68 = vcmp.lt.s32.totalorder %v42, 16
    %vm69 = vcmp.lt.s32.totalorder %v43, 16
    %vm70 = vcmp.lt.s32.totalorder %v44, 16
    %vm71 = vcmp.lt.s32.totalorder %v45, 16
    %vm72 = vcmp.lt.s32.totalorder %v46, 16
    %vm73 = vcmp.lt.s32.totalorder %v47, 16
    %vm74 = vcmp.lt.s32.totalorder %v48, 16
    %vm75 = vcmp.lt.s32.totalorder %v49, 16
    %vm76 = vcmp.lt.s32.totalorder %v50, 16
    %vm77 = vmand %vm53, %vm65
    %vm78 = vmand %vm54, %vm66
    %vm79 = vmand %vm55, %vm67
    %vm80 = vmand %vm56, %vm68
    %vm81 = vmand %vm57, %vm69
    %vm82 = vmand %vm58, %vm70
    %vm83 = vmand %vm59, %vm71
    %vm84 = vmand %vm60, %vm72
    %vm85 = vmand %vm61, %vm73
    %vm86 = vmand %vm62, %vm74
    %vm87 = vmand %vm63, %vm75
    %vm88 = vmand %vm64, %vm76
    %vm89 = vcmp.ge.s32.totalorder %v52, 0
    %vm90 = vmand %vm77, %vm89
    %vm91 = vmand %vm78, %vm89
    %vm92 = vmand %vm79, %vm89
    %vm93 = vmand %vm80, %vm89
    %vm94 = vmand %vm81, %vm89
    %vm95 = vmand %vm82, %vm89
    %vm96 = vmand %vm83, %vm89
    %vm97 = vmand %vm84, %vm89
    %vm98 = vmand %vm85, %vm89
    %vm99 = vmand %vm86, %vm89
    %vm100 = vmand %vm87, %vm89
    %vm101 = vmand %vm88, %vm89
    %vm102 = vcmp.lt.s32.totalorder %v52, 16
    %vm103 = vmand %vm90, %vm102
    %vm104 = vmand %vm91, %vm102
    %vm105 = vmand %vm92, %vm102
    %vm106 = vmand %vm93, %vm102
    %vm107 = vmand %vm94, %vm102
    %vm108 = vmand %vm95, %vm102
    %vm109 = vmand %vm96, %vm102
    %vm110 = vmand %vm97, %vm102
    %vm111 = vmand %vm98, %vm102
    %vm112 = vmand %vm99, %vm102
    %vm113 = vmand %vm100, %vm102
    %vm114 = vmand %vm101, %vm102
    %vm115 = vcmp.ge.s32.totalorder %v39, 16
    %vm116 = vcmp.ge.s32.totalorder %v40, 16
    %vm117 = vcmp.ge.s32.totalorder %v41, 16
    %vm118 = vcmp.ge.s32.totalorder %v42, 16
    %vm119 = vcmp.ge.s32.totalorder %v43, 16
    %vm120 = vcmp.ge.s32.totalorder %v44, 16
    %vm121 = vcmp.ge.s32.totalorder %v45, 16
    %vm122 = vcmp.ge.s32.totalorder %v46, 16
    %vm123 = vcmp.ge.s32.totalorder %v47, 16
    %vm124 = vcmp.ge.s32.totalorder %v48, 16
    %vm125 = vcmp.ge.s32.totalorder %v49, 16
    %vm126 = vcmp.ge.s32.totalorder %v50, 16
    %vm127 = vcmp.lt.s32.totalorder %v39, 32
    %vm128 = vcmp.lt.s32.totalorder %v40, 32
    %vm129 = vcmp.lt.s32.totalorder %v41, 32
    %vm130 = vcmp.lt.s32.totalorder %v42, 32
    %vm131 = vcmp.lt.s32.totalorder %v43, 32
    %vm132 = vcmp.lt.s32.totalorder %v44, 32
    %vm133 = vcmp.lt.s32.totalorder %v45, 32
    %vm134 = vcmp.lt.s32.totalorder %v46, 32
    %vm135 = vcmp.lt.s32.totalorder %v47, 32
    %vm136 = vcmp.lt.s32.totalorder %v48, 32
    %vm137 = vcmp.lt.s32.totalorder %v49, 32
    %vm138 = vcmp.lt.s32.totalorder %v50, 32
    %vm139 = vmand %vm115, %vm127
    %vm140 = vmand %vm116, %vm128
    %vm141 = vmand %vm117, %vm129
    %vm142 = vmand %vm118, %vm130
    %vm143 = vmand %vm119, %vm131
    %vm144 = vmand %vm120, %vm132
    %vm145 = vmand %vm121, %vm133
    %vm146 = vmand %vm122, %vm134
    %vm147 = vmand %vm123, %vm135
    %vm148 = vmand %vm124, %vm136
    %vm149 = vmand %vm125, %vm137
    %vm150 = vmand %vm126, %vm138
    %vm151 = vcmp.ge.s32.totalorder %v52, 16
    %vm152 = vmand %vm139, %vm151
    %vm153 = vmand %vm140, %vm151
    %vm154 = vmand %vm141, %vm151
    %vm155 = vmand %vm142, %vm151
    %vm156 = vmand %vm143, %vm151
    %vm157 = vmand %vm144, %vm151
    %vm158 = vmand %vm145, %vm151
    %vm159 = vmand %vm146, %vm151
    %vm160 = vmand %vm147, %vm151
    %vm161 = vmand %vm148, %vm151
    %vm162 = vmand %vm149, %vm151
    %vm163 = vmand %vm150, %vm151
    %vm164 = vcmp.lt.s32.totalorder %v52, 32
    %vm165 = vmand %vm152, %vm164
    %vm166 = vmand %vm153, %vm164
    %vm167 = vmand %vm154, %vm164
    %vm168 = vmand %vm155, %vm164
    %vm169 = vmand %vm156, %vm164
    %vm170 = vmand %vm157, %vm164
    %vm171 = vmand %vm158, %vm164
    %vm172 = vmand %vm159, %vm164
    %vm173 = vmand %vm160, %vm164
    %vm174 = vmand %vm161, %vm164
    %vm175 = vmand %vm162, %vm164
    %vm176 = vmand %vm163, %vm164
    %vm177 = vmor %vm103, %vm165
    %vm178 = vmor %vm104, %vm166
    %vm179 = vmor %vm105, %vm167
    %vm180 = vmor %vm106, %vm168
    %vm181 = vmor %vm107, %vm169
    %vm182 = vmor %vm108, %vm170
    %vm183 = vmor %vm109, %vm171
    %vm184 = vmor %vm110, %vm172
    %vm185 = vmor %vm111, %vm173
    %vm186 = vmor %vm112, %vm174
    %vm187 = vmor %vm113, %vm175
    %vm188 = vmor %vm114, %vm176
    %vm189 = vcmp.ge.s32.totalorder %v39, 32
    %vm190 = vcmp.ge.s32.totalorder %v40, 32
    %vm191 = vcmp.ge.s32.totalorder %v41, 32
    %vm192 = vcmp.ge.s32.totalorder %v42, 32
    %vm193 = vcmp.ge.s32.totalorder %v43, 32
    %vm194 = vcmp.ge.s32.totalorder %v44, 32
    %vm195 = vcmp.ge.s32.totalorder %v45, 32
    %vm196 = vcmp.ge.s32.totalorder %v46, 32
    %vm197 = vcmp.ge.s32.totalorder %v47, 32
    %vm198 = vcmp.ge.s32.totalorder %v48, 32
    %vm199 = vcmp.ge.s32.totalorder %v49, 32
    %vm200 = vcmp.ge.s32.totalorder %v50, 32
    %vm201 = vcmp.lt.s32.totalorder %v39, 48
    %vm202 = vcmp.lt.s32.totalorder %v40, 48
    %vm203 = vcmp.lt.s32.totalorder %v41, 48
    %vm204 = vcmp.lt.s32.totalorder %v42, 48
    %vm205 = vcmp.lt.s32.totalorder %v43, 48
    %vm206 = vcmp.lt.s32.totalorder %v44, 48
    %vm207 = vcmp.lt.s32.totalorder %v45, 48
    %vm208 = vcmp.lt.s32.totalorder %v46, 48
    %vm209 = vcmp.lt.s32.totalorder %v47, 48
    %vm210 = vcmp.lt.s32.totalorder %v48, 48
    %vm211 = vcmp.lt.s32.totalorder %v49, 48
    %vm212 = vcmp.lt.s32.totalorder %v50, 48
    %vm213 = vmand %vm189, %vm201
    %vm214 = vmand %vm190, %vm202
    %vm215 = vmand %vm191, %vm203
    %vm216 = vmand %vm192, %vm204
    %vm217 = vmand %vm193, %vm205
    %vm218 = vmand %vm194, %vm206
    %vm219 = vmand %vm195, %vm207
    %vm220 = vmand %vm196, %vm208
    %vm221 = vmand %vm197, %vm209
    %vm222 = vmand %vm198, %vm210
    %vm223 = vmand %vm199, %vm211
    %vm224 = vmand %vm200, %vm212
    %vm225 = vcmp.ge.s32.totalorder %v52, 32
    %vm226 = vmand %vm213, %vm225
    %vm227 = vmand %vm214, %vm225
    %vm228 = vmand %vm215, %vm225
    %vm229 = vmand %vm216, %vm225
    %vm230 = vmand %vm217, %vm225
    %vm231 = vmand %vm218, %vm225
    %vm232 = vmand %vm219, %vm225
    %vm233 = vmand %vm220, %vm225
    %vm234 = vmand %vm221, %vm225
    %vm235 = vmand %vm222, %vm225
    %vm236 = vmand %vm223, %vm225
    %vm237 = vmand %vm224, %vm225
    %vm238 = vcmp.lt.s32.totalorder %v52, 48
    %vm239 = vmand %vm226, %vm238
    %vm240 = vmand %vm227, %vm238
    %vm241 = vmand %vm228, %vm238
    %vm242 = vmand %vm229, %vm238
    %vm243 = vmand %vm230, %vm238
    %vm244 = vmand %vm231, %vm238
    %vm245 = vmand %vm232, %vm238
    %vm246 = vmand %vm233, %vm238
    %vm247 = vmand %vm234, %vm238
    %vm248 = vmand %vm235, %vm238
    %vm249 = vmand %vm236, %vm238
    %vm250 = vmand %vm237, %vm238
    %vm251 = vmor %vm177, %vm239
    %vm252 = vmor %vm178, %vm240
    %vm253 = vmor %vm179, %vm241
    %vm254 = vmor %vm180, %vm242
    %vm255 = vmor %vm181, %vm243
    %vm256 = vmor %vm182, %vm244
    %vm257 = vmor %vm183, %vm245
    %vm258 = vmor %vm184, %vm246
    %vm259 = vmor %vm185, %vm247
    %vm260 = vmor %vm186, %vm248
    %vm261 = vmor %vm187, %vm249
    %vm262 = vmor %vm188, %vm250
    %vm263 = vcmp.ge.s32.totalorder %v39, 48
    %vm264 = vcmp.ge.s32.totalorder %v40, 48
    %vm265 = vcmp.ge.s32.totalorder %v41, 48
    %vm266 = vcmp.ge.s32.totalorder %v42, 48
    %vm267 = vcmp.ge.s32.totalorder %v43, 48
    %vm268 = vcmp.ge.s32.totalorder %v44, 48
    %vm269 = vcmp.ge.s32.totalorder %v45, 48
    %vm270 = vcmp.ge.s32.totalorder %v46, 48
    %vm271 = vcmp.ge.s32.totalorder %v47, 48
    %vm272 = vcmp.ge.s32.totalorder %v48, 48
    %vm273 = vcmp.ge.s32.totalorder %v49, 48
    %vm274 = vcmp.ge.s32.totalorder %v50, 48
    %vm275 = vcmp.lt.s32.totalorder %v39, 64
    %vm276 = vcmp.lt.s32.totalorder %v40, 64
    %vm277 = vcmp.lt.s32.totalorder %v41, 64
    %vm278 = vcmp.lt.s32.totalorder %v42, 64
    %vm279 = vcmp.lt.s32.totalorder %v43, 64
    %vm280 = vcmp.lt.s32.totalorder %v44, 64
    %vm281 = vcmp.lt.s32.totalorder %v45, 64
    %vm282 = vcmp.lt.s32.totalorder %v46, 64
    %vm283 = vcmp.lt.s32.totalorder %v47, 64
    %vm284 = vcmp.lt.s32.totalorder %v48, 64
    %vm285 = vcmp.lt.s32.totalorder %v49, 64
    %vm286 = vcmp.lt.s32.totalorder %v50, 64
    %vm287 = vmand %vm263, %vm275
    %vm288 = vmand %vm264, %vm276
    %vm289 = vmand %vm265, %vm277
    %vm290 = vmand %vm266, %vm278
    %vm291 = vmand %vm267, %vm279
    %vm292 = vmand %vm268, %vm280
    %vm293 = vmand %vm269, %vm281
    %vm294 = vmand %vm270, %vm282
    %vm295 = vmand %vm271, %vm283
    %vm296 = vmand %vm272, %vm284
    %vm297 = vmand %vm273, %vm285
    %vm298 = vmand %vm274, %vm286
    %vm299 = vcmp.ge.s32.totalorder %v52, 48
    %vm300 = vmand %vm287, %vm299
    %vm301 = vmand %vm288, %vm299
    %vm302 = vmand %vm289, %vm299
    %vm303 = vmand %vm290, %vm299
    %vm304 = vmand %vm291, %vm299
    %vm305 = vmand %vm292, %vm299
    %vm306 = vmand %vm293, %vm299
    %vm307 = vmand %vm294, %vm299
    %vm308 = vmand %vm295, %vm299
    %vm309 = vmand %vm296, %vm299
    %vm310 = vmand %vm297, %vm299
    %vm311 = vmand %vm298, %vm299
    %vm312 = vcmp.lt.s32.totalorder %v52, 64
    %vm313 = vmand %vm300, %vm312
    %vm314 = vmand %vm301, %vm312
    %vm315 = vmand %vm302, %vm312
    %vm316 = vmand %vm303, %vm312
    %vm317 = vmand %vm304, %vm312
    %vm318 = vmand %vm305, %vm312
    %vm319 = vmand %vm306, %vm312
    %vm320 = vmand %vm307, %vm312
    %vm321 = vmand %vm308, %vm312
    %vm322 = vmand %vm309, %vm312
    %vm323 = vmand %vm310, %vm312
    %vm324 = vmand %vm311, %vm312
    %vm325 = vmor %vm251, %vm313
    %vm326 = vmor %vm252, %vm314
    %vm327 = vmor %vm253, %vm315
    %vm328 = vmor %vm254, %vm316
    %vm329 = vmor %vm255, %vm317
    %vm330 = vmor %vm256, %vm318
    %vm331 = vmor %vm257, %vm319
    %vm332 = vmor %vm258, %vm320
    %vm333 = vmor %vm259, %vm321
    %vm334 = vmor %vm260, %vm322
    %vm335 = vmor %vm261, %vm323
    %vm336 = vmor %vm262, %vm324
    %vm337 = vcmp.ge.s32.totalorder %v39, 64
    %vm338 = vcmp.ge.s32.totalorder %v40, 64
    %vm339 = vcmp.ge.s32.totalorder %v41, 64
    %vm340 = vcmp.ge.s32.totalorder %v42, 64
    %vm341 = vcmp.ge.s32.totalorder %v43, 64
    %vm342 = vcmp.ge.s32.totalorder %v44, 64
    %vm343 = vcmp.ge.s32.totalorder %v45, 64
    %vm344 = vcmp.ge.s32.totalorder %v46, 64
    %vm345 = vcmp.ge.s32.totalorder %v47, 64
    %vm346 = vcmp.ge.s32.totalorder %v48, 64
    %vm347 = vcmp.ge.s32.totalorder %v49, 64
    %vm348 = vcmp.ge.s32.totalorder %v50, 64
    %vm349 = vcmp.lt.s32.totalorder %v39, 80
    %vm350 = vcmp.lt.s32.totalorder %v40, 80
    %vm351 = vcmp.lt.s32.totalorder %v41, 80
    %vm352 = vcmp.lt.s32.totalorder %v42, 80
    %vm353 = vcmp.lt.s32.totalorder %v43, 80
    %vm354 = vcmp.lt.s32.totalorder %v44, 80
    %vm355 = vcmp.lt.s32.totalorder %v45, 80
    %vm356 = vcmp.lt.s32.totalorder %v46, 80
    %vm357 = vcmp.lt.s32.totalorder %v47, 80
    %vm358 = vcmp.lt.s32.totalorder %v48, 80
    %vm359 = vcmp.lt.s32.totalorder %v49, 80
    %vm360 = vcmp.lt.s32.totalorder %v50, 80
    %vm361 = vmand %vm337, %vm349
    %vm362 = vmand %vm338, %vm350
    %vm363 = vmand %vm339, %vm351
    %vm364 = vmand %vm340, %vm352
    %vm365 = vmand %vm341, %vm353
    %vm366 = vmand %vm342, %vm354
    %vm367 = vmand %vm343, %vm355
    %vm368 = vmand %vm344, %vm356
    %vm369 = vmand %vm345, %vm357
    %vm370 = vmand %vm346, %vm358
    %vm371 = vmand %vm347, %vm359
    %vm372 = vmand %vm348, %vm360
    %vm373 = vcmp.ge.s32.totalorder %v52, 64
    %vm374 = vmand %vm361, %vm373
    %vm375 = vmand %vm362, %vm373
    %vm376 = vmand %vm363, %vm373
    %vm377 = vmand %vm364, %vm373
    %vm378 = vmand %vm365, %vm373
    %vm379 = vmand %vm366, %vm373
    %vm380 = vmand %vm367, %vm373
    %vm381 = vmand %vm368, %vm373
    %vm382 = vmand %vm369, %vm373
    %vm383 = vmand %vm370, %vm373
    %vm384 = vmand %vm371, %vm373
    %vm385 = vmand %vm372, %vm373
    %vm386 = vcmp.lt.s32.totalorder %v52, 80
    %vm387 = vmand %vm374, %vm386
    %vm388 = vmand %vm375, %vm386
    %vm389 = vmand %vm376, %vm386
    %vm390 = vmand %vm377, %vm386
    %vm391 = vmand %vm378, %vm386
    %vm392 = vmand %vm379, %vm386
    %vm393 = vmand %vm380, %vm386
    %vm394 = vmand %vm381, %vm386
    %vm395 = vmand %vm382, %vm386
    %vm396 = vmand %vm383, %vm386
    %vm397 = vmand %vm384, %vm386
    %vm398 = vmand %vm385, %vm386
    %vm399 = vmor %vm325, %vm387
    %vm400 = vmor %vm326, %vm388
    %vm401 = vmor %vm327, %vm389
    %vm402 = vmor %vm328, %vm390
    %vm403 = vmor %vm329, %vm391
    %vm404 = vmor %vm330, %vm392
    %vm405 = vmor %vm331, %vm393
    %vm406 = vmor %vm332, %vm394
    %vm407 = vmor %vm333, %vm395
    %vm408 = vmor %vm334, %vm396
    %vm409 = vmor %vm335, %vm397
    %vm410 = vmor %vm336, %vm398
    %vm411 = vcmp.ge.s32.totalorder %v39, 80
    %vm412 = vcmp.ge.s32.totalorder %v40, 80
    %vm413 = vcmp.ge.s32.totalorder %v41, 80
    %vm414 = vcmp.ge.s32.totalorder %v42, 80
    %vm415 = vcmp.ge.s32.totalorder %v43, 80
    %vm416 = vcmp.ge.s32.totalorder %v44, 80
    %vm417 = vcmp.ge.s32.totalorder %v45, 80
    %vm418 = vcmp.ge.s32.totalorder %v46, 80
    %vm419 = vcmp.ge.s32.totalorder %v47, 80
    %vm420 = vcmp.ge.s32.totalorder %v48, 80
    %vm421 = vcmp.ge.s32.totalorder %v49, 80
    %vm422 = vcmp.ge.s32.totalorder %v50, 80
    %vm423 = vcmp.lt.s32.totalorder %v39, 96
    %vm424 = vcmp.lt.s32.totalorder %v40, 96
    %vm425 = vcmp.lt.s32.totalorder %v41, 96
    %vm426 = vcmp.lt.s32.totalorder %v42, 96
    %vm427 = vcmp.lt.s32.totalorder %v43, 96
    %vm428 = vcmp.lt.s32.totalorder %v44, 96
    %vm429 = vcmp.lt.s32.totalorder %v45, 96
    %vm430 = vcmp.lt.s32.totalorder %v46, 96
    %vm431 = vcmp.lt.s32.totalorder %v47, 96
    %vm432 = vcmp.lt.s32.totalorder %v48, 96
    %vm433 = vcmp.lt.s32.totalorder %v49, 96
    %vm434 = vcmp.lt.s32.totalorder %v50, 96
    %vm435 = vmand %vm411, %vm423
    %vm436 = vmand %vm412, %vm424
    %vm437 = vmand %vm413, %vm425
    %vm438 = vmand %vm414, %vm426
    %vm439 = vmand %vm415, %vm427
    %vm440 = vmand %vm416, %vm428
    %vm441 = vmand %vm417, %vm429
    %vm442 = vmand %vm418, %vm430
    %vm443 = vmand %vm419, %vm431
    %vm444 = vmand %vm420, %vm432
    %vm445 = vmand %vm421, %vm433
    %vm446 = vmand %vm422, %vm434
    %vm447 = vcmp.ge.s32.totalorder %v52, 80
    %vm448 = vmand %vm435, %vm447
    %vm449 = vmand %vm436, %vm447
    %vm450 = vmand %vm437, %vm447
    %vm451 = vmand %vm438, %vm447
    %vm452 = vmand %vm439, %vm447
    %vm453 = vmand %vm440, %vm447
    %vm454 = vmand %vm441, %vm447
    %vm455 = vmand %vm442, %vm447
    %vm456 = vmand %vm443, %vm447
    %vm457 = vmand %vm444, %vm447
    %vm458 = vmand %vm445, %vm447
    %vm459 = vmand %vm446, %vm447
    %vm460 = vcmp.lt.s32.totalorder %v52, 96
    %vm461 = vmand %vm448, %vm460
    %vm462 = vmand %vm449, %vm460
    %vm463 = vmand %vm450, %vm460
    %vm464 = vmand %vm451, %vm460
    %vm465 = vmand %vm452, %vm460
    %vm466 = vmand %vm453, %vm460
    %vm467 = vmand %vm454, %vm460
    %vm468 = vmand %vm455, %vm460
    %vm469 = vmand %vm456, %vm460
    %vm470 = vmand %vm457, %vm460
    %vm471 = vmand %vm458, %vm460
    %vm472 = vmand %vm459, %vm460
    %vm473 = vmor %vm399, %vm461
    %vm474 = vmor %vm400, %vm462
    %vm475 = vmor %vm401, %vm463
    %vm476 = vmor %vm402, %vm464
    %vm477 = vmor %vm403, %vm465
    %vm478 = vmor %vm404, %vm466
    %vm479 = vmor %vm405, %vm467
    %vm480 = vmor %vm406, %vm468
    %vm481 = vmor %vm407, %vm469
    %vm482 = vmor %vm408, %vm470
    %vm483 = vmor %vm409, %vm471
    %vm484 = vmor %vm410, %vm472
    %vm485 = vcmp.ge.s32.totalorder %v39, %v52
    %vm486 = vcmp.ge.s32.totalorder %v40, %v52
    %vm487 = vcmp.ge.s32.totalorder %v41, %v52
    %vm488 = vcmp.ge.s32.totalorder %v42, %v52
    %vm489 = vcmp.ge.s32.totalorder %v43, %v52
    %vm490 = vcmp.ge.s32.totalorder %v44, %v52
    %vm491 = vcmp.ge.s32.totalorder %v45, %v52
    %vm492 = vcmp.ge.s32.totalorder %v46, %v52
    %vm493 = vcmp.ge.s32.totalorder %v47, %v52
    %vm494 = vcmp.ge.s32.totalorder %v48, %v52
    %vm495 = vcmp.ge.s32.totalorder %v49, %v52
    %vm496 = vcmp.ge.s32.totalorder %v50, %v52
    %vm497 = vmand %vm473, %vm485
    %vm498 = vmand %vm474, %vm486
    %vm499 = vmand %vm475, %vm487
    %vm500 = vmand %vm476, %vm488
    %vm501 = vmand %vm477, %vm489
    %vm502 = vmand %vm478, %vm490
    %vm503 = vmand %vm479, %vm491
    %vm504 = vmand %vm480, %vm492
    %vm505 = vmand %vm481, %vm493
    %vm506 = vmand %vm482, %vm494
    %vm507 = vmand %vm483, %vm495
    %vm508 = vmand %vm484, %vm496
    %v509 = vsel %vm497, 0.0, -1e+09
    %v510 = vsel %vm498, 0.0, -1e+09
    %v511 = vsel %vm499, 0.0, -1e+09
    %v512 = vsel %vm500, 0.0, -1e+09
    %v513 = vsel %vm501, 0.0, -1e+09
    %v514 = vsel %vm502, 0.0, -1e+09
    %v515 = vsel %vm503, 0.0, -1e+09
    %v516 = vsel %vm504, 0.0, -1e+09
    %v517 = vsel %vm505, 0.0, -1e+09
    %v518 = vsel %vm506, 0.0, -1e+09
    %v519 = vsel %vm507, 0.0, -1e+09
    %v520 = vsel %vm508, 0.0, -1e+09
    %v521 = vld [vmem:[%s4] sm:$0x1]
    %v522 = vld [vmem:[%s4 + $0x1] sm:$0x1]
    %vm523 = vcmask 261120
    %v524 = vsel %vm523, %v26, 0.0
    %525 = vadd.xlane.f32.xlu0 %v524
    %v526 = vpop.xlane.xlu0 %525
    %v527 = vsel %vm523, %v27, 0.0
    %528 = vadd.xlane.f32.xlu0 %v527
    %v529 = vpop.xlane.xlu0 %528
    %v530 = vsel %vm523, %v28, 0.0
    %531 = vadd.xlane.f32.xlu0 %v530
    %v532 = vpop.xlane.xlu0 %531
    %v533 = vsel %vm523, %v29, 0.0
    %534 = vadd.xlane.f32.xlu0 %v533
    %v535 = vpop.xlane.xlu0 %534
    %v536 = vsel %vm523, %v30, 0.0
    %537 = vadd.xlane.f32.xlu0 %v536
    %v538 = vpop.xlane.xlu0 %537
    %v539 = vsel %vm523, %v31, 0.0
    %540 = vadd.xlane.f32.xlu0 %v539
    %v541 = vpop.xlane.xlu0 %540
    %v542 = vsel %vm523, %v32, 0.0
    %543 = vadd.xlane.f32.xlu0 %v542
    %v544 = vpop.xlane.xlu0 %543
    %v545 = vsel %vm523, %v33, 0.0
    %546 = vadd.xlane.f32.xlu0 %v545
    %v547 = vpop.xlane.xlu0 %546
    %v548 = vsel %vm523, %v34, 0.0
    %549 = vadd.xlane.f32.xlu0 %v548
    %v550 = vpop.xlane.xlu0 %549
    %v551 = vsel %vm523, %v35, 0.0
    %552 = vadd.xlane.f32.xlu0 %v551
    %v553 = vpop.xlane.xlu0 %552
    %v554 = vsel %vm523, %v36, 0.0
    %555 = vadd.xlane.f32.xlu0 %v554
    %v556 = vpop.xlane.xlu0 %555
    %v557 = vsel %vm523, %v37, 0.0
    %558 = vadd.xlane.f32.xlu0 %v557
    %v559 = vpop.xlane.xlu0 %558
    %v560 = vrcp.pop 32.0
    %v561 = vmul.f32 %v526, %v560
    %v562 = vmul.f32 %v529, %v560
    %v563 = vmul.f32 %v532, %v560
    %v564 = vmul.f32 %v535, %v560
    %v565 = vmul.f32 %v538, %v560
    %v566 = vmul.f32 %v541, %v560
    %v567 = vmul.f32 %v544, %v560
    %v568 = vmul.f32 %v547, %v560
    %v569 = vmul.f32 %v550, %v560
    %v570 = vmul.f32 %v553, %v560
    %v571 = vmul.f32 %v556, %v560
    %v572 = vmul.f32 %v559, %v560
    %v573 = vsub.f32 %v26, %v561
    %v574 = vsub.f32 %v27, %v562
    %v575 = vsub.f32 %v28, %v563
    %v576 = vsub.f32 %v29, %v564
    %v577 = vsub.f32 %v30, %v565
    %v578 = vsub.f32 %v31, %v566
    %v579 = vsub.f32 %v32, %v567
    %v580 = vsub.f32 %v33, %v568
    %v581 = vsub.f32 %v34, %v569
    %v582 = vsub.f32 %v35, %v570
    %v583 = vsub.f32 %v36, %v571
    %v584 = vsub.f32 %v37, %v572
    %v585 = vmul.f32 %v573, %v573
    %v586 = vmul.f32 %v574, %v574
    %v587 = vmul.f32 %v575, %v575
    %v588 = vmul.f32 %v576, %v576
    %v589 = vmul.f32 %v577, %v577
    %v590 = vmul.f32 %v578, %v578
    %v591 = vmul.f32 %v579, %v579
    %v592 = vmul.f32 %v580, %v580
    %v593 = vmul.f32 %v581, %v581
    %v594 = vmul.f32 %v582, %v582
    %v595 = vmul.f32 %v583, %v583
    %v596 = vmul.f32 %v584, %v584
    %v597 = vsel %vm523, %v585, 0.0
    %598 = vadd.xlane.f32.xlu0 %v597
    %v599 = vpop.xlane.xlu0 %598
    %v600 = vsel %vm523, %v586, 0.0
    %601 = vadd.xlane.f32.xlu0 %v600
    %v602 = vpop.xlane.xlu0 %601
    %v603 = vsel %vm523, %v587, 0.0
    %604 = vadd.xlane.f32.xlu0 %v603
    %v605 = vpop.xlane.xlu0 %604
    %v606 = vsel %vm523, %v588, 0.0
    %607 = vadd.xlane.f32.xlu0 %v606
    %v608 = vpop.xlane.xlu0 %607
    %v609 = vsel %vm523, %v589, 0.0
    %610 = vadd.xlane.f32.xlu0 %v609
    %v611 = vpop.xlane.xlu0 %610
    %v612 = vsel %vm523, %v590, 0.0
    %613 = vadd.xlane.f32.xlu0 %v612
    %v614 = vpop.xlane.xlu0 %613
    %v615 = vsel %vm523, %v591, 0.0
    %616 = vadd.xlane.f32.xlu0 %v615
    %v617 = vpop.xlane.xlu0 %616
    %v618 = vsel %vm523, %v592, 0.0
    %619 = vadd.xlane.f32.xlu0 %v618
    %v620 = vpop.xlane.xlu0 %619
    %v621 = vsel %vm523, %v593, 0.0
    %622 = vadd.xlane.f32.xlu0 %v621
    %v623 = vpop.xlane.xlu0 %622
    %v624 = vsel %vm523, %v594, 0.0
    %625 = vadd.xlane.f32.xlu0 %v624
    %v626 = vpop.xlane.xlu0 %625
    %v627 = vsel %vm523, %v595, 0.0
    %628 = vadd.xlane.f32.xlu0 %v627
    %v629 = vpop.xlane.xlu0 %628
    %v630 = vsel %vm523, %v596, 0.0
    %631 = vadd.xlane.f32.xlu0 %v630
    %v632 = vpop.xlane.xlu0 %631
    %v633 = vmul.f32 %v599, %v560
    %v634 = vmul.f32 %v602, %v560
    %v635 = vmul.f32 %v605, %v560
    %v636 = vmul.f32 %v608, %v560
    %v637 = vmul.f32 %v611, %v560
    %v638 = vmul.f32 %v614, %v560
    %v639 = vmul.f32 %v617, %v560
    %v640 = vmul.f32 %v620, %v560
    %v641 = vmul.f32 %v623, %v560
    %v642 = vmul.f32 %v626, %v560
    %v643 = vmul.f32 %v629, %v560
    %v644 = vmul.f32 %v632, %v560
    %v645 = vadd.f32 %v633, 1e-05
    %v646 = vadd.f32 %v634, 1e-05
    %v647 = vadd.f32 %v635, 1e-05
    %v648 = vadd.f32 %v636, 1e-05
    %v649 = vadd.f32 %v637, 1e-05
    %v650 = vadd.f32 %v638, 1e-05
    %v651 = vadd.f32 %v639, 1e-05
    %v652 = vadd.f32 %v640, 1e-05
    %v653 = vadd.f32 %v641, 1e-05
    %v654 = vadd.f32 %v642, 1e-05
    %v655 = vadd.f32 %v643, 1e-05
    %v656 = vadd.f32 %v644, 1e-05
    %v657 = vrsqrt.pop %v645
    %v658 = vrsqrt.pop %v646
    %v659 = vrsqrt.pop %v647
    %v660 = vrsqrt.pop %v648
    %v661 = vrsqrt.pop %v649
    %v662 = vrsqrt.pop %v650
    %v663 = vrsqrt.pop %v651
    %v664 = vrsqrt.pop %v652
    %v665 = vrsqrt.pop %v653
    %v666 = vrsqrt.pop %v654
    %v667 = vrsqrt.pop %v655
    %v668 = vrsqrt.pop %v656
    %v669 = vmul.f32 %v573, %v657
    %v670 = vmul.f32 %v574, %v658
    %v671 = vmul.f32 %v575, %v659
    %v672 = vmul.f32 %v576, %v660
    %v673 = vmul.f32 %v577, %v661
    %v674 = vmul.f32 %v578, %v662
    %v675 = vmul.f32 %v579, %v663
    %v676 = vmul.f32 %v580, %v664
    %v677 = vmul.f32 %v581, %v665
    %v678 = vmul.f32 %v582, %v666
    %v679 = vmul.f32 %v583, %v667
    %v680 = vmul.f32 %v584, %v668
    %v681 = vlaneseq
    %v682 = vshrl.u32 %v681, 7
    %v683 = vsub.s32 0, %v682
    %v684 = vrot.slane %v521, %v683
    %v685 = vmul.f32 %v669, %v684
    %v686 = vmul.f32 %v670, %v684
    %v687 = vmul.f32 %v671, %v684
    %v688 = vmul.f32 %v672, %v684
    %v689 = vmul.f32 %v673, %v684
    %v690 = vmul.f32 %v674, %v684
    %v691 = vmul.f32 %v675, %v684
    %v692 = vmul.f32 %v676, %v684
    %v693 = vmul.f32 %v677, %v684
    %v694 = vmul.f32 %v678, %v684
    %v695 = vmul.f32 %v679, %v684
    %v696 = vmul.f32 %v680, %v684
    %v697 = vlaneseq
    %v698 = vshrl.u32 %v697, 7
    %v699 = vsub.s32 0, %v698
    %v700 = vrot.slane %v522, %v699
    %v701 = vadd.f32 %v685, %v700
    %v702 = vadd.f32 %v686, %v700
    %v703 = vadd.f32 %v687, %v700
    %v704 = vadd.f32 %v688, %v700
    %v705 = vadd.f32 %v689, %v700
    %v706 = vadd.f32 %v690, %v700
    %v707 = vadd.f32 %v691, %v700
    %v708 = vadd.f32 %v692, %v700
    %v709 = vadd.f32 %v693, %v700
    %v710 = vadd.f32 %v694, %v700
    %v711 = vadd.f32 %v695, %v700
    %v712 = vadd.f32 %v696, %v700
    %v713 = vld [vmem:[%s3] sm:$0xf]
    %v714 = vld [vmem:[%s3 + $0x4] sm:$0xf]
    %v715 = vld [vmem:[%s3 + $0x8] sm:$0xf]
    %v716 = vld [vmem:[%s3 + $0xc] sm:$0xf]
    %v717 = vpack.c.bf16 %v702, %v701
    %v718 = vpack.c.bf16 %v704, %v703
    %v719 = vpack.c.bf16 %v706, %v705
    %v720 = vpack.c.bf16 %v708, %v707
    %v721 = vpack.c.bf16 %v710, %v709
    %v722 = vpack.c.bf16 %v712, %v711
    %v723 = vld [vmem:[%s4 + $0x2] sm:$0x1]
    %v724 = vlaneseq
    %v725 = vshrl.u32 %v724, 7
    %v726 = vsub.s32 0, %v725
    %v727 = vrot.slane %v723, %v726
    %v732 = vunpack.c.l.b16 %v713
    %v733 = vunpack.c.l.b16 %v714
    %v734 = vunpack.c.l.b16 %v715
    %v735 = vunpack.c.l.b16 %v716
    %v736 = vpack.c.b16 %v733, %v732
    %v737 = vpack.c.b16 %v735, %v734
    %v741 = vsel %vm523, %v717, 0
    %v744 = vsel %vm523, %v718, 0
    %v747 = vsel %vm523, %v719, 0
    %v750 = vsel %vm523, %v720, 0
    %v753 = vsel %vm523, %v721, 0
    %v756 = vsel %vm523, %v722, 0
    %758 = vmatprep.subr.bf16.mxu0 0
    %759 = vmatpush1.bf16.msra.mxu0 0
    %760 = vmatprep.subr.bf16.mxu0 0
    %761 = vmatpush1.bf16.msra.mxu0 0
    %762 = vmatprep.subr.bf16.mxu0 0
    %763 = vmatpush1.bf16.msra.mxu0 0
    %764 = vmatprep.subr.bf16.mxu0 0
    %765 = vmatpush1.bf16.msra.mxu0 0
    %766 = vmatprep.subr.bf16.mxu0 0
    %767 = vmatpush1.bf16.msra.mxu0 0
    %768 = vmatprep.subr.bf16.mxu0 0
    %769 = vmatpush1.bf16.msra.mxu0 0
    %770 = vmatprep.subr.bf16.mxu0 0
    %771 = vmatpush1.bf16.msra.mxu0 %v737
    %772 = vmatprep.subr.bf16.mxu0 0
    %773 = vmatpush1.bf16.msra.mxu0 %v736
    %774 = vmatprep.subr.bf16.mxu0 0
    %775 = vmatpush2.bf16.msra.mxu0 0
    %776 = vmatprep.subr.bf16.mxu0 0
    %777 = vmatpush2.bf16.msra.mxu0 0
    %778 = vmatprep.subr.bf16.mxu0 0
    %779 = vmatpush2.bf16.msra.mxu0 0
    %780 = vmatprep.subr.bf16.mxu0 0
    %781 = vmatpush2.bf16.msra.mxu0 0
    %782 = vmatprep.subr.bf16.mxu0 0
    %783 = vmatpush2.bf16.msra.mxu0 0
    %784 = vmatprep.subr.bf16.mxu0 0
    %785 = vmatpush2.bf16.msra.mxu0 0
    %786 = vmatprep.subr.bf16.mxu0 0
    %787 = vmatpush2.bf16.msra.mxu0 0
    %788 = vmatprep.subr.bf16.mxu0 0
    %789 = vmatpush2.bf16.msra.mxu0 0
    %790 = vmatprep.mubr.bf16.mxu0 0
    %791 = vmatmul.mubr.bf16.gmra.mxu0 %v741
    %v792 = vpop.f32.mrf.mxu0
    %v793 = vadd.f32 %v727, %v792
    %v794 = vpop.f32.mrf.mxu0
    %v795 = vpop.f32.mrf.mxu0
    %v796 = vadd.f32 %v727, %v795
    %v797 = vpop.f32.mrf.mxu0
    %798 = vmatprep.mubr.bf16.mxu0 0
    %799 = vmatmul.mubr.bf16.gmra.mxu0 %v744
    %v800 = vpop.f32.mrf.mxu0
    %v801 = vadd.f32 %v727, %v800
    %v802 = vpop.f32.mrf.mxu0
    %v803 = vpop.f32.mrf.mxu0
    %v804 = vadd.f32 %v727, %v803
    %v805 = vpop.f32.mrf.mxu0
    %806 = vmatprep.mubr.bf16.mxu0 0
    %807 = vmatmul.mubr.bf16.gmra.mxu0 %v747
    %v808 = vpop.f32.mrf.mxu0
    %v809 = vadd.f32 %v727, %v808
    %v810 = vpop.f32.mrf.mxu0
    %v811 = vpop.f32.mrf.mxu0
    %v812 = vadd.f32 %v727, %v811
    %v813 = vpop.f32.mrf.mxu0
    %814 = vmatprep.mubr.bf16.mxu0 0
    %815 = vmatmul.mubr.bf16.gmra.mxu0 %v750
    %v816 = vpop.f32.mrf.mxu0
    %v817 = vadd.f32 %v727, %v816
    %v818 = vpop.f32.mrf.mxu0
    %v819 = vpop.f32.mrf.mxu0
    %v820 = vadd.f32 %v727, %v819
    %v821 = vpop.f32.mrf.mxu0
    %822 = vmatprep.mubr.bf16.mxu0 0
    %823 = vmatmul.mubr.bf16.gmra.mxu0 %v753
    %v824 = vpop.f32.mrf.mxu0
    %v825 = vadd.f32 %v727, %v824
    %v826 = vpop.f32.mrf.mxu0
    %v827 = vpop.f32.mrf.mxu0
    %v828 = vadd.f32 %v727, %v827
    %v829 = vpop.f32.mrf.mxu0
    %830 = vmatprep.mubr.bf16.mxu0 0
    %831 = vmatmul.mubr.bf16.gmra.mxu0 %v756
    %v832 = vpop.f32.mrf.mxu0
    %v833 = vadd.f32 %v727, %v832
    %v834 = vpop.f32.mrf.mxu0
    %v835 = vpop.f32.mrf.mxu0
    %v836 = vadd.f32 %v727, %v835
    %v837 = vpop.f32.mrf.mxu0
    %838 = vdwg.mxu0
    %v839 = vpack.c.bf16 %v796, %v793
    %v840 = vpack.c.bf16 %v804, %v801
    %v841 = vpack.c.bf16 %v812, %v809
    %v842 = vpack.c.bf16 %v820, %v817
    %v843 = vpack.c.bf16 %v828, %v825
    %v844 = vpack.c.bf16 %v836, %v833
    %851 = vrot.lane.b32.xlu0 %v839, 96
    %v852 = vpop.permute.xlu0 %851
    %853 = vrot.lane.b32.xlu0 %v840, 96
    %v854 = vpop.permute.xlu0 %853
    %855 = vrot.lane.b32.xlu0 %v841, 96
    %v856 = vpop.permute.xlu0 %855
    %857 = vrot.lane.b32.xlu0 %v842, 96
    %v858 = vpop.permute.xlu0 %857
    %859 = vrot.lane.b32.xlu0 %v843, 96
    %v860 = vpop.permute.xlu0 %859
    %861 = vrot.lane.b32.xlu0 %v844, 96
    %v862 = vpop.permute.xlu0 %861
    %vm863 = vcmask 130048
    %v865 = vsel %vm863, %v839, 0
    %v868 = vsel %vm863, %v840, 0
    %v871 = vsel %vm863, %v841, 0
    %v874 = vsel %vm863, %v842, 0
    %v877 = vsel %vm863, %v843, 0
    %v880 = vsel %vm863, %v844, 0
    %v883 = vsel %vm863, %v852, 0
    %v886 = vsel %vm863, %v854, 0
    %v889 = vsel %vm863, %v856, 0
    %v892 = vsel %vm863, %v858, 0
    %v895 = vsel %vm863, %v860, 0
    %v898 = vsel %vm863, %v862, 0
    %900 = vmatprep.subr.bf16.mxu0 0
    %901 = vmatpush1.bf16.xpose.msra.mxu0 0
    %902 = vmatprep.subr.bf16.mxu0 0
    %903 = vmatpush1.bf16.xpose.msra.mxu0 0
    %904 = vmatprep.subr.bf16.mxu0 0
    %905 = vmatpush1.bf16.xpose.msra.mxu0 %v898
    %906 = vmatprep.subr.bf16.mxu0 0
    %907 = vmatpush1.bf16.xpose.msra.mxu0 %v895
    %908 = vmatprep.subr.bf16.mxu0 0
    %909 = vmatpush1.bf16.xpose.msra.mxu0 %v892
    %910 = vmatprep.subr.bf16.mxu0 0
    %911 = vmatpush1.bf16.xpose.msra.mxu0 %v889
    %912 = vmatprep.subr.bf16.mxu0 0
    %913 = vmatpush1.bf16.xpose.msra.mxu0 %v886
    %914 = vmatprep.subr.bf16.mxu0 0
    %915 = vmatpush1.bf16.xpose.msra.mxu0 %v883
    %916 = vmatprep.subr.bf16.mxu0 0
    %917 = vmatpush2.bf16.xpose.msra.mxu0 0
    %918 = vmatprep.subr.bf16.mxu0 0
    %919 = vmatpush2.bf16.xpose.msra.mxu0 0
    %920 = vmatprep.subr.bf16.mxu0 0
    %921 = vmatpush2.bf16.xpose.msra.mxu0 0
    %922 = vmatprep.subr.bf16.mxu0 0
    %923 = vmatpush2.bf16.xpose.msra.mxu0 0
    %924 = vmatprep.subr.bf16.mxu0 0
    %925 = vmatpush2.bf16.xpose.msra.mxu0 0
    %926 = vmatprep.subr.bf16.mxu0 0
    %927 = vmatpush2.bf16.xpose.msra.mxu0 0
    %928 = vmatprep.subr.bf16.mxu0 0
    %929 = vmatpush2.bf16.xpose.msra.mxu0 0
    %930 = vmatprep.subr.bf16.mxu0 0
    %931 = vmatpush2.bf16.xpose.msra.mxu0 0
    %932 = vmatprep.mubr.bf16.mxu0 0
    %933 = vmatmul.mubr.bf16.gmra.mxu0 %v865
    %v934 = vpop.f32.mrf.mxu0
    %v935 = vadd.f32 0.0, %v934
    %v936 = vpop.f32.mrf.mxu0
    %v937 = vpop.f32.mrf.mxu0
    %v938 = vadd.f32 0.0, %v937
    %v939 = vpop.f32.mrf.mxu0
    %940 = vmatprep.mubr.bf16.mxu0 0
    %941 = vmatmul.mubr.bf16.gmra.mxu0 %v868
    %v942 = vpop.f32.mrf.mxu0
    %v943 = vadd.f32 0.0, %v942
    %v944 = vpop.f32.mrf.mxu0
    %v945 = vpop.f32.mrf.mxu0
    %v946 = vadd.f32 0.0, %v945
    %v947 = vpop.f32.mrf.mxu0
    %948 = vmatprep.mubr.bf16.mxu0 0
    %949 = vmatmul.mubr.bf16.gmra.mxu0 %v871
    %v950 = vpop.f32.mrf.mxu0
    %v951 = vadd.f32 0.0, %v950
    %v952 = vpop.f32.mrf.mxu0
    %v953 = vpop.f32.mrf.mxu0
    %v954 = vadd.f32 0.0, %v953
    %v955 = vpop.f32.mrf.mxu0
    %956 = vmatprep.mubr.bf16.mxu0 0
    %957 = vmatmul.mubr.bf16.gmra.mxu0 %v874
    %v958 = vpop.f32.mrf.mxu0
    %v959 = vadd.f32 0.0, %v958
    %v960 = vpop.f32.mrf.mxu0
    %v961 = vpop.f32.mrf.mxu0
    %v962 = vadd.f32 0.0, %v961
    %v963 = vpop.f32.mrf.mxu0
    %964 = vmatprep.mubr.bf16.mxu0 0
    %965 = vmatmul.mubr.bf16.gmra.mxu0 %v877
    %v966 = vpop.f32.mrf.mxu0
    %v967 = vadd.f32 0.0, %v966
    %v968 = vpop.f32.mrf.mxu0
    %v969 = vpop.f32.mrf.mxu0
    %v970 = vadd.f32 0.0, %v969
    %v971 = vpop.f32.mrf.mxu0
    %972 = vmatprep.mubr.bf16.mxu0 0
    %973 = vmatmul.mubr.bf16.gmra.mxu0 %v880
    %v974 = vpop.f32.mrf.mxu0
    %v975 = vadd.f32 0.0, %v974
    %v976 = vpop.f32.mrf.mxu0
    %v977 = vpop.f32.mrf.mxu0
    %v978 = vadd.f32 0.0, %v977
    %v979 = vpop.f32.mrf.mxu0
    %980 = vdwg.mxu0
    %v981 = vmul.f32 %v935, 0.25
    %v982 = vmul.f32 %v938, 0.25
    %v983 = vmul.f32 %v943, 0.25
    %v984 = vmul.f32 %v946, 0.25
    %v985 = vmul.f32 %v951, 0.25
    %v986 = vmul.f32 %v954, 0.25
    %v987 = vmul.f32 %v959, 0.25
    %v988 = vmul.f32 %v962, 0.25
    %v989 = vmul.f32 %v967, 0.25
    %v990 = vmul.f32 %v970, 0.25
    %v991 = vmul.f32 %v975, 0.25
    %v992 = vmul.f32 %v978, 0.25
    %v993 = vadd.f32 %v981, %v509
    %v994 = vadd.f32 %v982, %v510
    %v995 = vadd.f32 %v983, %v511
    %v996 = vadd.f32 %v984, %v512
    %v997 = vadd.f32 %v985, %v513
    %v998 = vadd.f32 %v986, %v514
    %v999 = vadd.f32 %v987, %v515
    %v1000 = vadd.f32 %v988, %v516
    %v1001 = vadd.f32 %v989, %v517
    %v1002 = vadd.f32 %v990, %v518
    %v1003 = vadd.f32 %v991, %v519
    %v1004 = vadd.f32 %v992, %v520
    %vm1005 = vcmask 785408
    %v1006 = vsel %vm1005, %v993, -inf
    %1007 = vmax.xlane.f32.xlu0 %v1006
    %v1008 = vpop.xlane.xlu0 %1007
    %v1009 = vsel %vm1005, %v994, -inf
    %1010 = vmax.xlane.f32.xlu0 %v1009
    %v1011 = vpop.xlane.xlu0 %1010
    %v1012 = vsel %vm1005, %v995, -inf
    %1013 = vmax.xlane.f32.xlu0 %v1012
    %v1014 = vpop.xlane.xlu0 %1013
    %v1015 = vsel %vm1005, %v996, -inf
    %1016 = vmax.xlane.f32.xlu0 %v1015
    %v1017 = vpop.xlane.xlu0 %1016
    %v1018 = vsel %vm1005, %v997, -inf
    %1019 = vmax.xlane.f32.xlu0 %v1018
    %v1020 = vpop.xlane.xlu0 %1019
    %v1021 = vsel %vm1005, %v998, -inf
    %1022 = vmax.xlane.f32.xlu0 %v1021
    %v1023 = vpop.xlane.xlu0 %1022
    %v1024 = vsel %vm1005, %v999, -inf
    %1025 = vmax.xlane.f32.xlu0 %v1024
    %v1026 = vpop.xlane.xlu0 %1025
    %v1027 = vsel %vm1005, %v1000, -inf
    %1028 = vmax.xlane.f32.xlu0 %v1027
    %v1029 = vpop.xlane.xlu0 %1028
    %v1030 = vsel %vm1005, %v1001, -inf
    %1031 = vmax.xlane.f32.xlu0 %v1030
    %v1032 = vpop.xlane.xlu0 %1031
    %v1033 = vsel %vm1005, %v1002, -inf
    %1034 = vmax.xlane.f32.xlu0 %v1033
    %v1035 = vpop.xlane.xlu0 %1034
    %v1036 = vsel %vm1005, %v1003, -inf
    %1037 = vmax.xlane.f32.xlu0 %v1036
    %v1038 = vpop.xlane.xlu0 %1037
    %v1039 = vsel %vm1005, %v1004, -inf
    %1040 = vmax.xlane.f32.xlu0 %v1039
    %v1041 = vpop.xlane.xlu0 %1040
    %v1042 = vsub.f32 %v993, %v1008
    %v1043 = vsub.f32 %v994, %v1011
    %v1044 = vsub.f32 %v995, %v1014
    %v1045 = vsub.f32 %v996, %v1017
    %v1046 = vsub.f32 %v997, %v1020
    %v1047 = vsub.f32 %v998, %v1023
    %v1048 = vsub.f32 %v999, %v1026
    %v1049 = vsub.f32 %v1000, %v1029
    %v1050 = vsub.f32 %v1001, %v1032
    %v1051 = vsub.f32 %v1002, %v1035
    %v1052 = vsub.f32 %v1003, %v1038
    %v1053 = vsub.f32 %v1004, %v1041
    %v1054 = vmul.f32 %v1042, 1.442695
    %v1055 = vpow.pop %v1054
    %v1056 = vmul.f32 %v1043, 1.442695
    %v1057 = vpow.pop %v1056
    %v1058 = vmul.f32 %v1044, 1.442695
    %v1059 = vpow.pop %v1058
    %v1060 = vmul.f32 %v1045, 1.442695
    %v1061 = vpow.pop %v1060
    %v1062 = vmul.f32 %v1046, 1.442695
    %v1063 = vpow.pop %v1062
    %v1064 = vmul.f32 %v1047, 1.442695
    %v1065 = vpow.pop %v1064
    %v1066 = vmul.f32 %v1048, 1.442695
    %v1067 = vpow.pop %v1066
    %v1068 = vmul.f32 %v1049, 1.442695
    %v1069 = vpow.pop %v1068
    %v1070 = vmul.f32 %v1050, 1.442695
    %v1071 = vpow.pop %v1070
    %v1072 = vmul.f32 %v1051, 1.442695
    %v1073 = vpow.pop %v1072
    %v1074 = vmul.f32 %v1052, 1.442695
    %v1075 = vpow.pop %v1074
    %v1076 = vmul.f32 %v1053, 1.442695
    %v1077 = vpow.pop %v1076
    %v1078 = vsel %vm1005, %v1055, 0.0
    %1079 = vadd.xlane.f32.xlu0 %v1078
    %v1080 = vpop.xlane.xlu0 %1079
    %v1081 = vsel %vm1005, %v1057, 0.0
    %1082 = vadd.xlane.f32.xlu0 %v1081
    %v1083 = vpop.xlane.xlu0 %1082
    %v1084 = vsel %vm1005, %v1059, 0.0
    %1085 = vadd.xlane.f32.xlu0 %v1084
    %v1086 = vpop.xlane.xlu0 %1085
    %v1087 = vsel %vm1005, %v1061, 0.0
    %1088 = vadd.xlane.f32.xlu0 %v1087
    %v1089 = vpop.xlane.xlu0 %1088
    %v1090 = vsel %vm1005, %v1063, 0.0
    %1091 = vadd.xlane.f32.xlu0 %v1090
    %v1092 = vpop.xlane.xlu0 %1091
    %v1093 = vsel %vm1005, %v1065, 0.0
    %1094 = vadd.xlane.f32.xlu0 %v1093
    %v1095 = vpop.xlane.xlu0 %1094
    %v1096 = vsel %vm1005, %v1067, 0.0
    %1097 = vadd.xlane.f32.xlu0 %v1096
    %v1098 = vpop.xlane.xlu0 %1097
    %v1099 = vsel %vm1005, %v1069, 0.0
    %1100 = vadd.xlane.f32.xlu0 %v1099
    %v1101 = vpop.xlane.xlu0 %1100
    %v1102 = vsel %vm1005, %v1071, 0.0
    %1103 = vadd.xlane.f32.xlu0 %v1102
    %v1104 = vpop.xlane.xlu0 %1103
    %v1105 = vsel %vm1005, %v1073, 0.0
    %1106 = vadd.xlane.f32.xlu0 %v1105
    %v1107 = vpop.xlane.xlu0 %1106
    %v1108 = vsel %vm1005, %v1075, 0.0
    %1109 = vadd.xlane.f32.xlu0 %v1108
    %v1110 = vpop.xlane.xlu0 %1109
    %v1111 = vsel %vm1005, %v1077, 0.0
    %1112 = vadd.xlane.f32.xlu0 %v1111
    %v1113 = vpop.xlane.xlu0 %1112
    %v1114 = vrcp.pop %v1080
    %v1115 = vrcp.pop %v1083
    %v1116 = vrcp.pop %v1086
    %v1117 = vrcp.pop %v1089
    %v1118 = vrcp.pop %v1092
    %v1119 = vrcp.pop %v1095
    %v1120 = vrcp.pop %v1098
    %v1121 = vrcp.pop %v1101
    %v1122 = vrcp.pop %v1104
    %v1123 = vrcp.pop %v1107
    %v1124 = vrcp.pop %v1110
    %v1125 = vrcp.pop %v1113
    %v1126 = vmul.f32 %v1055, %v1114
    %v1127 = vmul.f32 %v1057, %v1115
    %v1128 = vmul.f32 %v1059, %v1116
    %v1129 = vmul.f32 %v1061, %v1117
    %v1130 = vmul.f32 %v1063, %v1118
    %v1131 = vmul.f32 %v1065, %v1119
    %v1132 = vmul.f32 %v1067, %v1120
    %v1133 = vmul.f32 %v1069, %v1121
    %v1134 = vmul.f32 %v1071, %v1122
    %v1135 = vmul.f32 %v1073, %v1123
    %v1136 = vmul.f32 %v1075, %v1124
    %v1137 = vmul.f32 %v1077, %v1125
    %v1138 = vpack.c.bf16 %v1127, %v1126
    %v1139 = vpack.c.bf16 %v1129, %v1128
    %v1140 = vpack.c.bf16 %v1131, %v1130
    %v1141 = vpack.c.bf16 %v1133, %v1132
    %v1142 = vpack.c.bf16 %v1135, %v1134
    %v1143 = vpack.c.bf16 %v1137, %v1136
    %1144 = vrot.lane.b32.xlu0 %v839, 64
    %v1145 = vpop.permute.xlu0 %1144
    %1146 = vrot.lane.b32.xlu0 %v840, 64
    %v1147 = vpop.permute.xlu0 %1146
    %1148 = vrot.lane.b32.xlu0 %v841, 64
    %v1149 = vpop.permute.xlu0 %1148
    %1150 = vrot.lane.b32.xlu0 %v842, 64
    %v1151 = vpop.permute.xlu0 %1150
    %1152 = vrot.lane.b32.xlu0 %v843, 64
    %v1153 = vpop.permute.xlu0 %1152
    %1154 = vrot.lane.b32.xlu0 %v844, 64
    %v1155 = vpop.permute.xlu0 %1154
    %v1163 = vsel %vm1005, %v1138, 0
    %v1166 = vsel %vm1005, %v1139, 0
    %v1169 = vsel %vm1005, %v1140, 0
    %v1172 = vsel %vm1005, %v1141, 0
    %v1175 = vsel %vm1005, %v1142, 0
    %v1178 = vsel %vm1005, %v1143, 0
    %1180 = vmatprep.subr.bf16.mxu0 0
    %1181 = vmatpush1.bf16.msra.mxu0 0
    %1182 = vmatprep.subr.bf16.mxu0 0
    %1183 = vmatpush1.bf16.msra.mxu0 0
    %1184 = vmatprep.subr.bf16.mxu0 0
    %1185 = vmatpush1.bf16.msra.mxu0 %v1155
    %1186 = vmatprep.subr.bf16.mxu0 0
    %1187 = vmatpush1.bf16.msra.mxu0 %v1153
    %1188 = vmatprep.subr.bf16.mxu0 0
    %1189 = vmatpush1.bf16.msra.mxu0 %v1151
    %1190 = vmatprep.subr.bf16.mxu0 0
    %1191 = vmatpush1.bf16.msra.mxu0 %v1149
    %1192 = vmatprep.subr.bf16.mxu0 0
    %1193 = vmatpush1.bf16.msra.mxu0 %v1147
    %1194 = vmatprep.subr.bf16.mxu0 0
    %1195 = vmatpush1.bf16.msra.mxu0 %v1145
    %1196 = vmatprep.subr.bf16.mxu0 0
    %1197 = vmatpush2.bf16.msra.mxu0 0
    %1198 = vmatprep.subr.bf16.mxu0 0
    %1199 = vmatpush2.bf16.msra.mxu0 0
    %1200 = vmatprep.subr.bf16.mxu0 0
    %1201 = vmatpush2.bf16.msra.mxu0 0
    %1202 = vmatprep.subr.bf16.mxu0 0
    %1203 = vmatpush2.bf16.msra.mxu0 0
    %1204 = vmatprep.subr.bf16.mxu0 0
    %1205 = vmatpush2.bf16.msra.mxu0 0
    %1206 = vmatprep.subr.bf16.mxu0 0
    %1207 = vmatpush2.bf16.msra.mxu0 0
    %1208 = vmatprep.subr.bf16.mxu0 0
    %1209 = vmatpush2.bf16.msra.mxu0 0
    %1210 = vmatprep.subr.bf16.mxu0 0
    %1211 = vmatpush2.bf16.msra.mxu0 0
    %1212 = vmatprep.mubr.bf16.mxu0 0
    %1213 = vmatmul.mubr.bf16.gmra.mxu0 %v1163
    %v1214 = vpop.f32.mrf.mxu0
    %v1215 = vadd.f32 0.0, %v1214
    %v1216 = vpop.f32.mrf.mxu0
    %v1217 = vpop.f32.mrf.mxu0
    %v1218 = vadd.f32 0.0, %v1217
    %v1219 = vpop.f32.mrf.mxu0
    %1220 = vmatprep.mubr.bf16.mxu0 0
    %1221 = vmatmul.mubr.bf16.gmra.mxu0 %v1166
    %v1222 = vpop.f32.mrf.mxu0
    %v1223 = vadd.f32 0.0, %v1222
    %v1224 = vpop.f32.mrf.mxu0
    %v1225 = vpop.f32.mrf.mxu0
    %v1226 = vadd.f32 0.0, %v1225
    %v1227 = vpop.f32.mrf.mxu0
    %1228 = vmatprep.mubr.bf16.mxu0 0
    %1229 = vmatmul.mubr.bf16.gmra.mxu0 %v1169
    %v1230 = vpop.f32.mrf.mxu0
    %v1231 = vadd.f32 0.0, %v1230
    %v1232 = vpop.f32.mrf.mxu0
    %v1233 = vpop.f32.mrf.mxu0
    %v1234 = vadd.f32 0.0, %v1233
    %v1235 = vpop.f32.mrf.mxu0
    %1236 = vmatprep.mubr.bf16.mxu0 0
    %1237 = vmatmul.mubr.bf16.gmra.mxu0 %v1172
    %v1238 = vpop.f32.mrf.mxu0
    %v1239 = vadd.f32 0.0, %v1238
    %v1240 = vpop.f32.mrf.mxu0
    %v1241 = vpop.f32.mrf.mxu0
    %v1242 = vadd.f32 0.0, %v1241
    %v1243 = vpop.f32.mrf.mxu0
    %1244 = vmatprep.mubr.bf16.mxu0 0
    %1245 = vmatmul.mubr.bf16.gmra.mxu0 %v1175
    %v1246 = vpop.f32.mrf.mxu0
    %v1247 = vadd.f32 0.0, %v1246
    %v1248 = vpop.f32.mrf.mxu0
    %v1249 = vpop.f32.mrf.mxu0
    %v1250 = vadd.f32 0.0, %v1249
    %v1251 = vpop.f32.mrf.mxu0
    %1252 = vmatprep.mubr.bf16.mxu0 0
    %1253 = vmatmul.mubr.bf16.gmra.mxu0 %v1178
    %v1254 = vpop.f32.mrf.mxu0
    %v1255 = vadd.f32 0.0, %v1254
    %v1256 = vpop.f32.mrf.mxu0
    %v1257 = vpop.f32.mrf.mxu0
    %v1258 = vadd.f32 0.0, %v1257
    %v1259 = vpop.f32.mrf.mxu0
    %1260 = vdwg.mxu0
    %1261 = vrot.lane.b32.xlu0 %v839, 112
    %v1262 = vpop.permute.xlu0 %1261
    %1263 = vrot.lane.b32.xlu0 %v840, 112
    %v1264 = vpop.permute.xlu0 %1263
    %1265 = vrot.lane.b32.xlu0 %v841, 112
    %v1266 = vpop.permute.xlu0 %1265
    %1267 = vrot.lane.b32.xlu0 %v842, 112
    %v1268 = vpop.permute.xlu0 %1267
    %1269 = vrot.lane.b32.xlu0 %v843, 112
    %v1270 = vpop.permute.xlu0 %1269
    %1271 = vrot.lane.b32.xlu0 %v844, 112
    %v1272 = vpop.permute.xlu0 %1271
    %1273 = vrot.lane.b32.xlu0 %v839, 80
    %v1274 = vpop.permute.xlu0 %1273
    %1275 = vrot.lane.b32.xlu0 %v840, 80
    %v1276 = vpop.permute.xlu0 %1275
    %1277 = vrot.lane.b32.xlu0 %v841, 80
    %v1278 = vpop.permute.xlu0 %1277
    %1279 = vrot.lane.b32.xlu0 %v842, 80
    %v1280 = vpop.permute.xlu0 %1279
    %1281 = vrot.lane.b32.xlu0 %v843, 80
    %v1282 = vpop.permute.xlu0 %1281
    %1283 = vrot.lane.b32.xlu0 %v844, 80
    %v1284 = vpop.permute.xlu0 %1283
    %v1286 = vsel %vm863, %v1262, 0
    %v1289 = vsel %vm863, %v1264, 0
    %v1292 = vsel %vm863, %v1266, 0
    %v1295 = vsel %vm863, %v1268, 0
    %v1298 = vsel %vm863, %v1270, 0
    %v1301 = vsel %vm863, %v1272, 0
    %v1304 = vsel %vm863, %v1274, 0
    %v1307 = vsel %vm863, %v1276, 0
    %v1310 = vsel %vm863, %v1278, 0
    %v1313 = vsel %vm863, %v1280, 0
    %v1316 = vsel %vm863, %v1282, 0
    %v1319 = vsel %vm863, %v1284, 0
    %1321 = vmatprep.subr.bf16.mxu0 0
    %1322 = vmatpush1.bf16.xpose.msra.mxu0 0
    %1323 = vmatprep.subr.bf16.mxu0 0
    %1324 = vmatpush1.bf16.xpose.msra.mxu0 0
    %1325 = vmatprep.subr.bf16.mxu0 0
    %1326 = vmatpush1.bf16.xpose.msra.mxu0 %v1319
    %1327 = vmatprep.subr.bf16.mxu0 0
    %1328 = vmatpush1.bf16.xpose.msra.mxu0 %v1316
    %1329 = vmatprep.subr.bf16.mxu0 0
    %1330 = vmatpush1.bf16.xpose.msra.mxu0 %v1313
    %1331 = vmatprep.subr.bf16.mxu0 0
    %1332 = vmatpush1.bf16.xpose.msra.mxu0 %v1310
    %1333 = vmatprep.subr.bf16.mxu0 0
    %1334 = vmatpush1.bf16.xpose.msra.mxu0 %v1307
    %1335 = vmatprep.subr.bf16.mxu0 0
    %1336 = vmatpush1.bf16.xpose.msra.mxu0 %v1304
    %1337 = vmatprep.subr.bf16.mxu0 0
    %1338 = vmatpush2.bf16.xpose.msra.mxu0 0
    %1339 = vmatprep.subr.bf16.mxu0 0
    %1340 = vmatpush2.bf16.xpose.msra.mxu0 0
    %1341 = vmatprep.subr.bf16.mxu0 0
    %1342 = vmatpush2.bf16.xpose.msra.mxu0 0
    %1343 = vmatprep.subr.bf16.mxu0 0
    %1344 = vmatpush2.bf16.xpose.msra.mxu0 0
    %1345 = vmatprep.subr.bf16.mxu0 0
    %1346 = vmatpush2.bf16.xpose.msra.mxu0 0
    %1347 = vmatprep.subr.bf16.mxu0 0
    %1348 = vmatpush2.bf16.xpose.msra.mxu0 0
    %1349 = vmatprep.subr.bf16.mxu0 0
    %1350 = vmatpush2.bf16.xpose.msra.mxu0 0
    %1351 = vmatprep.subr.bf16.mxu0 0
    %1352 = vmatpush2.bf16.xpose.msra.mxu0 0
    %1353 = vmatprep.mubr.bf16.mxu0 0
    %1354 = vmatmul.mubr.bf16.gmra.mxu0 %v1286
    %v1355 = vpop.f32.mrf.mxu0
    %v1356 = vadd.f32 0.0, %v1355
    %v1357 = vpop.f32.mrf.mxu0
    %v1358 = vpop.f32.mrf.mxu0
    %v1359 = vadd.f32 0.0, %v1358
    %v1360 = vpop.f32.mrf.mxu0
    %1361 = vmatprep.mubr.bf16.mxu0 0
    %1362 = vmatmul.mubr.bf16.gmra.mxu0 %v1289
    %v1363 = vpop.f32.mrf.mxu0
    %v1364 = vadd.f32 0.0, %v1363
    %v1365 = vpop.f32.mrf.mxu0
    %v1366 = vpop.f32.mrf.mxu0
    %v1367 = vadd.f32 0.0, %v1366
    %v1368 = vpop.f32.mrf.mxu0
    %1369 = vmatprep.mubr.bf16.mxu0 0
    %1370 = vmatmul.mubr.bf16.gmra.mxu0 %v1292
    %v1371 = vpop.f32.mrf.mxu0
    %v1372 = vadd.f32 0.0, %v1371
    %v1373 = vpop.f32.mrf.mxu0
    %v1374 = vpop.f32.mrf.mxu0
    %v1375 = vadd.f32 0.0, %v1374
    %v1376 = vpop.f32.mrf.mxu0
    %1377 = vmatprep.mubr.bf16.mxu0 0
    %1378 = vmatmul.mubr.bf16.gmra.mxu0 %v1295
    %v1379 = vpop.f32.mrf.mxu0
    %v1380 = vadd.f32 0.0, %v1379
    %v1381 = vpop.f32.mrf.mxu0
    %v1382 = vpop.f32.mrf.mxu0
    %v1383 = vadd.f32 0.0, %v1382
    %v1384 = vpop.f32.mrf.mxu0
    %1385 = vmatprep.mubr.bf16.mxu0 0
    %1386 = vmatmul.mubr.bf16.gmra.mxu0 %v1298
    %v1387 = vpop.f32.mrf.mxu0
    %v1388 = vadd.f32 0.0, %v1387
    %v1389 = vpop.f32.mrf.mxu0
    %v1390 = vpop.f32.mrf.mxu0
    %v1391 = vadd.f32 0.0, %v1390
    %v1392 = vpop.f32.mrf.mxu0
    %1393 = vmatprep.mubr.bf16.mxu0 0
    %1394 = vmatmul.mubr.bf16.gmra.mxu0 %v1301
    %v1395 = vpop.f32.mrf.mxu0
    %v1396 = vadd.f32 0.0, %v1395
    %v1397 = vpop.f32.mrf.mxu0
    %v1398 = vpop.f32.mrf.mxu0
    %v1399 = vadd.f32 0.0, %v1398
    %v1400 = vpop.f32.mrf.mxu0
    %1401 = vdwg.mxu0
    %v1402 = vmul.f32 %v1356, 0.25
    %v1403 = vmul.f32 %v1359, 0.25
    %v1404 = vmul.f32 %v1364, 0.25
    %v1405 = vmul.f32 %v1367, 0.25
    %v1406 = vmul.f32 %v1372, 0.25
    %v1407 = vmul.f32 %v1375, 0.25
    %v1408 = vmul.f32 %v1380, 0.25
    %v1409 = vmul.f32 %v1383, 0.25
    %v1410 = vmul.f32 %v1388, 0.25
    %v1411 = vmul.f32 %v1391, 0.25
    %v1412 = vmul.f32 %v1396, 0.25
    %v1413 = vmul.f32 %v1399, 0.25
    %v1414 = vadd.f32 %v1402, %v509
    %v1415 = vadd.f32 %v1403, %v510
    %v1416 = vadd.f32 %v1404, %v511
    %v1417 = vadd.f32 %v1405, %v512
    %v1418 = vadd.f32 %v1406, %v513
    %v1419 = vadd.f32 %v1407, %v514
    %v1420 = vadd.f32 %v1408, %v515
    %v1421 = vadd.f32 %v1409, %v516
    %v1422 = vadd.f32 %v1410, %v517
    %v1423 = vadd.f32 %v1411, %v518
    %v1424 = vadd.f32 %v1412, %v519
    %v1425 = vadd.f32 %v1413, %v520
    %v1426 = vsel %vm1005, %v1414, -inf
    %1427 = vmax.xlane.f32.xlu0 %v1426
    %v1428 = vpop.xlane.xlu0 %1427
    %v1429 = vsel %vm1005, %v1415, -inf
    %1430 = vmax.xlane.f32.xlu0 %v1429
    %v1431 = vpop.xlane.xlu0 %1430
    %v1432 = vsel %vm1005, %v1416, -inf
    %1433 = vmax.xlane.f32.xlu0 %v1432
    %v1434 = vpop.xlane.xlu0 %1433
    %v1435 = vsel %vm1005, %v1417, -inf
    %1436 = vmax.xlane.f32.xlu0 %v1435
    %v1437 = vpop.xlane.xlu0 %1436
    %v1438 = vsel %vm1005, %v1418, -inf
    %1439 = vmax.xlane.f32.xlu0 %v1438
    %v1440 = vpop.xlane.xlu0 %1439
    %v1441 = vsel %vm1005, %v1419, -inf
    %1442 = vmax.xlane.f32.xlu0 %v1441
    %v1443 = vpop.xlane.xlu0 %1442
    %v1444 = vsel %vm1005, %v1420, -inf
    %1445 = vmax.xlane.f32.xlu0 %v1444
    %v1446 = vpop.xlane.xlu0 %1445
    %v1447 = vsel %vm1005, %v1421, -inf
    %1448 = vmax.xlane.f32.xlu0 %v1447
    %v1449 = vpop.xlane.xlu0 %1448
    %v1450 = vsel %vm1005, %v1422, -inf
    %1451 = vmax.xlane.f32.xlu0 %v1450
    %v1452 = vpop.xlane.xlu0 %1451
    %v1453 = vsel %vm1005, %v1423, -inf
    %1454 = vmax.xlane.f32.xlu0 %v1453
    %v1455 = vpop.xlane.xlu0 %1454
    %v1456 = vsel %vm1005, %v1424, -inf
    %1457 = vmax.xlane.f32.xlu0 %v1456
    %v1458 = vpop.xlane.xlu0 %1457
    %v1459 = vsel %vm1005, %v1425, -inf
    %1460 = vmax.xlane.f32.xlu0 %v1459
    %v1461 = vpop.xlane.xlu0 %1460
    %v1462 = vsub.f32 %v1414, %v1428
    %v1463 = vsub.f32 %v1415, %v1431
    %v1464 = vsub.f32 %v1416, %v1434
    %v1465 = vsub.f32 %v1417, %v1437
    %v1466 = vsub.f32 %v1418, %v1440
    %v1467 = vsub.f32 %v1419, %v1443
    %v1468 = vsub.f32 %v1420, %v1446
    %v1469 = vsub.f32 %v1421, %v1449
    %v1470 = vsub.f32 %v1422, %v1452
    %v1471 = vsub.f32 %v1423, %v1455
    %v1472 = vsub.f32 %v1424, %v1458
    %v1473 = vsub.f32 %v1425, %v1461
    %v1474 = vmul.f32 %v1462, 1.442695
    %v1475 = vpow.pop %v1474
    %v1476 = vmul.f32 %v1463, 1.442695
    %v1477 = vpow.pop %v1476
    %v1478 = vmul.f32 %v1464, 1.442695
    %v1479 = vpow.pop %v1478
    %v1480 = vmul.f32 %v1465, 1.442695
    %v1481 = vpow.pop %v1480
    %v1482 = vmul.f32 %v1466, 1.442695
    %v1483 = vpow.pop %v1482
    %v1484 = vmul.f32 %v1467, 1.442695
    %v1485 = vpow.pop %v1484
    %v1486 = vmul.f32 %v1468, 1.442695
    %v1487 = vpow.pop %v1486
    %v1488 = vmul.f32 %v1469, 1.442695
    %v1489 = vpow.pop %v1488
    %v1490 = vmul.f32 %v1470, 1.442695
    %v1491 = vpow.pop %v1490
    %v1492 = vmul.f32 %v1471, 1.442695
    %v1493 = vpow.pop %v1492
    %v1494 = vmul.f32 %v1472, 1.442695
    %v1495 = vpow.pop %v1494
    %v1496 = vmul.f32 %v1473, 1.442695
    %v1497 = vpow.pop %v1496
    %v1498 = vsel %vm1005, %v1475, 0.0
    %1499 = vadd.xlane.f32.xlu0 %v1498
    %v1500 = vpop.xlane.xlu0 %1499
    %v1501 = vsel %vm1005, %v1477, 0.0
    %1502 = vadd.xlane.f32.xlu0 %v1501
    %v1503 = vpop.xlane.xlu0 %1502
    %v1504 = vsel %vm1005, %v1479, 0.0
    %1505 = vadd.xlane.f32.xlu0 %v1504
    %v1506 = vpop.xlane.xlu0 %1505
    %v1507 = vsel %vm1005, %v1481, 0.0
    %1508 = vadd.xlane.f32.xlu0 %v1507
    %v1509 = vpop.xlane.xlu0 %1508
    %v1510 = vsel %vm1005, %v1483, 0.0
    %1511 = vadd.xlane.f32.xlu0 %v1510
    %v1512 = vpop.xlane.xlu0 %1511
    %v1513 = vsel %vm1005, %v1485, 0.0
    %1514 = vadd.xlane.f32.xlu0 %v1513
    %v1515 = vpop.xlane.xlu0 %1514
    %v1516 = vsel %vm1005, %v1487, 0.0
    %1517 = vadd.xlane.f32.xlu0 %v1516
    %v1518 = vpop.xlane.xlu0 %1517
    %v1519 = vsel %vm1005, %v1489, 0.0
    %1520 = vadd.xlane.f32.xlu0 %v1519
    %v1521 = vpop.xlane.xlu0 %1520
    %v1522 = vsel %vm1005, %v1491, 0.0
    %1523 = vadd.xlane.f32.xlu0 %v1522
    %v1524 = vpop.xlane.xlu0 %1523
    %v1525 = vsel %vm1005, %v1493, 0.0
    %1526 = vadd.xlane.f32.xlu0 %v1525
    %v1527 = vpop.xlane.xlu0 %1526
    %v1528 = vsel %vm1005, %v1495, 0.0
    %1529 = vadd.xlane.f32.xlu0 %v1528
    %v1530 = vpop.xlane.xlu0 %1529
    %v1531 = vsel %vm1005, %v1497, 0.0
    %1532 = vadd.xlane.f32.xlu0 %v1531
    %v1533 = vpop.xlane.xlu0 %1532
    %v1534 = vrcp.pop %v1500
    %v1535 = vrcp.pop %v1503
    %v1536 = vrcp.pop %v1506
    %v1537 = vrcp.pop %v1509
    %v1538 = vrcp.pop %v1512
    %v1539 = vrcp.pop %v1515
    %v1540 = vrcp.pop %v1518
    %v1541 = vrcp.pop %v1521
    %v1542 = vrcp.pop %v1524
    %v1543 = vrcp.pop %v1527
    %v1544 = vrcp.pop %v1530
    %v1545 = vrcp.pop %v1533
    %v1546 = vmul.f32 %v1475, %v1534
    %v1547 = vmul.f32 %v1477, %v1535
    %v1548 = vmul.f32 %v1479, %v1536
    %v1549 = vmul.f32 %v1481, %v1537
    %v1550 = vmul.f32 %v1483, %v1538
    %v1551 = vmul.f32 %v1485, %v1539
    %v1552 = vmul.f32 %v1487, %v1540
    %v1553 = vmul.f32 %v1489, %v1541
    %v1554 = vmul.f32 %v1491, %v1542
    %v1555 = vmul.f32 %v1493, %v1543
    %v1556 = vmul.f32 %v1495, %v1544
    %v1557 = vmul.f32 %v1497, %v1545
    %v1558 = vpack.c.bf16 %v1547, %v1546
    %v1559 = vpack.c.bf16 %v1549, %v1548
    %v1560 = vpack.c.bf16 %v1551, %v1550
    %v1561 = vpack.c.bf16 %v1553, %v1552
    %v1562 = vpack.c.bf16 %v1555, %v1554
    %v1563 = vpack.c.bf16 %v1557, %v1556
    %1564 = vrot.lane.b32.xlu0 %v839, 48
    %v1565 = vpop.permute.xlu0 %1564
    %1566 = vrot.lane.b32.xlu0 %v840, 48
    %v1567 = vpop.permute.xlu0 %1566
    %1568 = vrot.lane.b32.xlu0 %v841, 48
    %v1569 = vpop.permute.xlu0 %1568
    %1570 = vrot.lane.b32.xlu0 %v842, 48
    %v1571 = vpop.permute.xlu0 %1570
    %1572 = vrot.lane.b32.xlu0 %v843, 48
    %v1573 = vpop.permute.xlu0 %1572
    %1574 = vrot.lane.b32.xlu0 %v844, 48
    %v1575 = vpop.permute.xlu0 %1574
    %v1583 = vsel %vm1005, %v1558, 0
    %v1586 = vsel %vm1005, %v1559, 0
    %v1589 = vsel %vm1005, %v1560, 0
    %v1592 = vsel %vm1005, %v1561, 0
    %v1595 = vsel %vm1005, %v1562, 0
    %v1598 = vsel %vm1005, %v1563, 0
    %1600 = vmatprep.subr.bf16.mxu0 0
    %1601 = vmatpush1.bf16.msra.mxu0 0
    %1602 = vmatprep.subr.bf16.mxu0 0
    %1603 = vmatpush1.bf16.msra.mxu0 0
    %1604 = vmatprep.subr.bf16.mxu0 0
    %1605 = vmatpush1.bf16.msra.mxu0 %v1575
    %1606 = vmatprep.subr.bf16.mxu0 0
    %1607 = vmatpush1.bf16.msra.mxu0 %v1573
    %1608 = vmatprep.subr.bf16.mxu0 0
    %1609 = vmatpush1.bf16.msra.mxu0 %v1571
    %1610 = vmatprep.subr.bf16.mxu0 0
    %1611 = vmatpush1.bf16.msra.mxu0 %v1569
    %1612 = vmatprep.subr.bf16.mxu0 0
    %1613 = vmatpush1.bf16.msra.mxu0 %v1567
    %1614 = vmatprep.subr.bf16.mxu0 0
    %1615 = vmatpush1.bf16.msra.mxu0 %v1565
    %1616 = vmatprep.subr.bf16.mxu0 0
    %1617 = vmatpush2.bf16.msra.mxu0 0
    %1618 = vmatprep.subr.bf16.mxu0 0
    %1619 = vmatpush2.bf16.msra.mxu0 0
    %1620 = vmatprep.subr.bf16.mxu0 0
    %1621 = vmatpush2.bf16.msra.mxu0 0
    %1622 = vmatprep.subr.bf16.mxu0 0
    %1623 = vmatpush2.bf16.msra.mxu0 0
    %1624 = vmatprep.subr.bf16.mxu0 0
    %1625 = vmatpush2.bf16.msra.mxu0 0
    %1626 = vmatprep.subr.bf16.mxu0 0
    %1627 = vmatpush2.bf16.msra.mxu0 0
    %1628 = vmatprep.subr.bf16.mxu0 0
    %1629 = vmatpush2.bf16.msra.mxu0 0
    %1630 = vmatprep.subr.bf16.mxu0 0
    %1631 = vmatpush2.bf16.msra.mxu0 0
    %1632 = vmatprep.mubr.bf16.mxu0 0
    %1633 = vmatmul.mubr.bf16.gmra.mxu0 %v1583
    %v1634 = vpop.f32.mrf.mxu0
    %v1635 = vadd.f32 0.0, %v1634
    %v1636 = vpop.f32.mrf.mxu0
    %v1637 = vpop.f32.mrf.mxu0
    %v1638 = vadd.f32 0.0, %v1637
    %v1639 = vpop.f32.mrf.mxu0
    %1640 = vmatprep.mubr.bf16.mxu0 0
    %1641 = vmatmul.mubr.bf16.gmra.mxu0 %v1586
    %v1642 = vpop.f32.mrf.mxu0
    %v1643 = vadd.f32 0.0, %v1642
    %v1644 = vpop.f32.mrf.mxu0
    %v1645 = vpop.f32.mrf.mxu0
    %v1646 = vadd.f32 0.0, %v1645
    %v1647 = vpop.f32.mrf.mxu0
    %1648 = vmatprep.mubr.bf16.mxu0 0
    %1649 = vmatmul.mubr.bf16.gmra.mxu0 %v1589
    %v1650 = vpop.f32.mrf.mxu0
    %v1651 = vadd.f32 0.0, %v1650
    %v1652 = vpop.f32.mrf.mxu0
    %v1653 = vpop.f32.mrf.mxu0
    %v1654 = vadd.f32 0.0, %v1653
    %v1655 = vpop.f32.mrf.mxu0
    %1656 = vmatprep.mubr.bf16.mxu0 0
    %1657 = vmatmul.mubr.bf16.gmra.mxu0 %v1592
    %v1658 = vpop.f32.mrf.mxu0
    %v1659 = vadd.f32 0.0, %v1658
    %v1660 = vpop.f32.mrf.mxu0
    %v1661 = vpop.f32.mrf.mxu0
    %v1662 = vadd.f32 0.0, %v1661
    %v1663 = vpop.f32.mrf.mxu0
    %1664 = vmatprep.mubr.bf16.mxu0 0
    %1665 = vmatmul.mubr.bf16.gmra.mxu0 %v1595
    %v1666 = vpop.f32.mrf.mxu0
    %v1667 = vadd.f32 0.0, %v1666
    %v1668 = vpop.f32.mrf.mxu0
    %v1669 = vpop.f32.mrf.mxu0
    %v1670 = vadd.f32 0.0, %v1669
    %v1671 = vpop.f32.mrf.mxu0
    %1672 = vmatprep.mubr.bf16.mxu0 0
    %1673 = vmatmul.mubr.bf16.gmra.mxu0 %v1598
    %v1674 = vpop.f32.mrf.mxu0
    %v1675 = vadd.f32 0.0, %v1674
    %v1676 = vpop.f32.mrf.mxu0
    %v1677 = vpop.f32.mrf.mxu0
    %v1678 = vadd.f32 0.0, %v1677
    %v1679 = vpop.f32.mrf.mxu0
    %1680 = vdwg.mxu0
    %1693 = vrot.lane.b32.xlu0 %v1635, 16
    %v1694 = vpop.permute.xlu0 %1693
    %1695 = vrot.lane.b32.xlu0 %v1638, 16
    %v1696 = vpop.permute.xlu0 %1695
    %1697 = vrot.lane.b32.xlu0 %v1643, 16
    %v1698 = vpop.permute.xlu0 %1697
    %1699 = vrot.lane.b32.xlu0 %v1646, 16
    %v1700 = vpop.permute.xlu0 %1699
    %1701 = vrot.lane.b32.xlu0 %v1651, 16
    %v1702 = vpop.permute.xlu0 %1701
    %1703 = vrot.lane.b32.xlu0 %v1654, 16
    %v1704 = vpop.permute.xlu0 %1703
    %1705 = vrot.lane.b32.xlu0 %v1659, 16
    %v1706 = vpop.permute.xlu0 %1705
    %1707 = vrot.lane.b32.xlu0 %v1662, 16
    %v1708 = vpop.permute.xlu0 %1707
    %1709 = vrot.lane.b32.xlu0 %v1667, 16
    %v1710 = vpop.permute.xlu0 %1709
    %1711 = vrot.lane.b32.xlu0 %v1670, 16
    %v1712 = vpop.permute.xlu0 %1711
    %1713 = vrot.lane.b32.xlu0 %v1675, 16
    %v1714 = vpop.permute.xlu0 %1713
    %1715 = vrot.lane.b32.xlu0 %v1678, 16
    %v1716 = vpop.permute.xlu0 %1715
    %v1729 = vsel %vm863, %v1215, %v1694
    %v1730 = vsel %vm863, %v1218, %v1696
    %v1731 = vsel %vm863, %v1223, %v1698
    %v1732 = vsel %vm863, %v1226, %v1700
    %v1733 = vsel %vm863, %v1231, %v1702
    %v1734 = vsel %vm863, %v1234, %v1704
    %v1735 = vsel %vm863, %v1239, %v1706
    %v1736 = vsel %vm863, %v1242, %v1708
    %v1737 = vsel %vm863, %v1247, %v1710
    %v1738 = vsel %vm863, %v1250, %v1712
    %v1739 = vsel %vm863, %v1255, %v1714
    %v1740 = vsel %vm863, %v1258, %v1716
    %v1741 = vld [vmem:[%s3 + $0x10] sm:$0xf]
    %v1742 = vld [vmem:[%s3 + $0x14] sm:$0xf]
    %v1743 = vld [vmem:[%s3 + $0x18] sm:$0xf]
    %v1744 = vld [vmem:[%s3 + $0x1c] sm:$0xf]
    %v1745 = vpack.c.bf16 %v1730, %v1729
    %v1746 = vpack.c.bf16 %v1732, %v1731
    %v1747 = vpack.c.bf16 %v1734, %v1733
    %v1748 = vpack.c.bf16 %v1736, %v1735
    %v1749 = vpack.c.bf16 %v1738, %v1737
    %v1750 = vpack.c.bf16 %v1740, %v1739
    %v1755 = vunpack.c.l.b16 %v1741
    %v1756 = vunpack.c.l.b16 %v1742
    %v1757 = vunpack.c.l.b16 %v1743
    %v1758 = vunpack.c.l.b16 %v1744
    %v1759 = vpack.c.b16 %v1756, %v1755
    %v1760 = vpack.c.b16 %v1758, %v1757
    %v1764 = vsel %vm523, %v1745, 0
    %v1767 = vsel %vm523, %v1746, 0
    %v1770 = vsel %vm523, %v1747, 0
    %v1773 = vsel %vm523, %v1748, 0
    %v1776 = vsel %vm523, %v1749, 0
    %v1779 = vsel %vm523, %v1750, 0
    %1781 = vmatprep.subr.bf16.mxu0 0
    %1782 = vmatpush1.bf16.msra.mxu0 0
    %1783 = vmatprep.subr.bf16.mxu0 0
    %1784 = vmatpush1.bf16.msra.mxu0 0
    %1785 = vmatprep.subr.bf16.mxu0 0
    %1786 = vmatpush1.bf16.msra.mxu0 0
    %1787 = vmatprep.subr.bf16.mxu0 0
    %1788 = vmatpush1.bf16.msra.mxu0 0
    %1789 = vmatprep.subr.bf16.mxu0 0
    %1790 = vmatpush1.bf16.msra.mxu0 0
    %1791 = vmatprep.subr.bf16.mxu0 0
    %1792 = vmatpush1.bf16.msra.mxu0 0
    %1793 = vmatprep.subr.bf16.mxu0 0
    %1794 = vmatpush1.bf16.msra.mxu0 %v1760
    %1795 = vmatprep.subr.bf16.mxu0 0
    %1796 = vmatpush1.bf16.msra.mxu0 %v1759
    %1797 = vmatprep.subr.bf16.mxu0 0
    %1798 = vmatpush2.bf16.msra.mxu0 0
    %1799 = vmatprep.subr.bf16.mxu0 0
    %1800 = vmatpush2.bf16.msra.mxu0 0
    %1801 = vmatprep.subr.bf16.mxu0 0
    %1802 = vmatpush2.bf16.msra.mxu0 0
    %1803 = vmatprep.subr.bf16.mxu0 0
    %1804 = vmatpush2.bf16.msra.mxu0 0
    %1805 = vmatprep.subr.bf16.mxu0 0
    %1806 = vmatpush2.bf16.msra.mxu0 0
    %1807 = vmatprep.subr.bf16.mxu0 0
    %1808 = vmatpush2.bf16.msra.mxu0 0
    %1809 = vmatprep.subr.bf16.mxu0 0
    %1810 = vmatpush2.bf16.msra.mxu0 0
    %1811 = vmatprep.subr.bf16.mxu0 0
    %1812 = vmatpush2.bf16.msra.mxu0 0
    %1813 = vmatprep.mubr.bf16.mxu0 0
    %1814 = vmatmul.mubr.bf16.gmra.mxu0 %v1764
    %v1815 = vpop.f32.mrf.mxu0
    %v1816 = vadd.f32 0.0, %v1815
    %v1817 = vpop.f32.mrf.mxu0
    %v1818 = vpop.f32.mrf.mxu0
    %v1819 = vadd.f32 0.0, %v1818
    %v1820 = vpop.f32.mrf.mxu0
    %1821 = vmatprep.mubr.bf16.mxu0 0
    %1822 = vmatmul.mubr.bf16.gmra.mxu0 %v1767
    %v1823 = vpop.f32.mrf.mxu0
    %v1824 = vadd.f32 0.0, %v1823
    %v1825 = vpop.f32.mrf.mxu0
    %v1826 = vpop.f32.mrf.mxu0
    %v1827 = vadd.f32 0.0, %v1826
    %v1828 = vpop.f32.mrf.mxu0
    %1829 = vmatprep.mubr.bf16.mxu0 0
    %1830 = vmatmul.mubr.bf16.gmra.mxu0 %v1770
    %v1831 = vpop.f32.mrf.mxu0
    %v1832 = vadd.f32 0.0, %v1831
    %v1833 = vpop.f32.mrf.mxu0
    %v1834 = vpop.f32.mrf.mxu0
    %v1835 = vadd.f32 0.0, %v1834
    %v1836 = vpop.f32.mrf.mxu0
    %1837 = vmatprep.mubr.bf16.mxu0 0
    %1838 = vmatmul.mubr.bf16.gmra.mxu0 %v1773
    %v1839 = vpop.f32.mrf.mxu0
    %v1840 = vadd.f32 0.0, %v1839
    %v1841 = vpop.f32.mrf.mxu0
    %v1842 = vpop.f32.mrf.mxu0
    %v1843 = vadd.f32 0.0, %v1842
    %v1844 = vpop.f32.mrf.mxu0
    %1845 = vmatprep.mubr.bf16.mxu0 0
    %1846 = vmatmul.mubr.bf16.gmra.mxu0 %v1776
    %v1847 = vpop.f32.mrf.mxu0
    %v1848 = vadd.f32 0.0, %v1847
    %v1849 = vpop.f32.mrf.mxu0
    %v1850 = vpop.f32.mrf.mxu0
    %v1851 = vadd.f32 0.0, %v1850
    %v1852 = vpop.f32.mrf.mxu0
    %1853 = vmatprep.mubr.bf16.mxu0 0
    %1854 = vmatmul.mubr.bf16.gmra.mxu0 %v1779
    %v1855 = vpop.f32.mrf.mxu0
    %v1856 = vadd.f32 0.0, %v1855
    %v1857 = vpop.f32.mrf.mxu0
    %v1858 = vpop.f32.mrf.mxu0
    %v1859 = vadd.f32 0.0, %v1858
    %v1860 = vpop.f32.mrf.mxu0
    %1861 = vdwg.mxu0
    %v1862 = vadd.f32 %v26, %v1816
    %v1863 = vadd.f32 %v27, %v1819
    %v1864 = vadd.f32 %v28, %v1824
    %v1865 = vadd.f32 %v29, %v1827
    %v1866 = vadd.f32 %v30, %v1832
    %v1867 = vadd.f32 %v31, %v1835
    %v1868 = vadd.f32 %v32, %v1840
    %v1869 = vadd.f32 %v33, %v1843
    %v1870 = vadd.f32 %v34, %v1848
    %v1871 = vadd.f32 %v35, %v1851
    %v1872 = vadd.f32 %v36, %v1856
    %v1873 = vadd.f32 %v37, %v1859
    %v1874 = vld [vmem:[%s4 + $0x3] sm:$0x1]
    %v1875 = vlaneseq
    %v1876 = vshrl.u32 %v1875, 7
    %v1877 = vsub.s32 0, %v1876
    %v1878 = vrot.slane %v1874, %v1877
    %v1879 = vadd.f32 %v1862, %v1878
    %v1880 = vadd.f32 %v1863, %v1878
    %v1881 = vadd.f32 %v1864, %v1878
    %v1882 = vadd.f32 %v1865, %v1878
    %v1883 = vadd.f32 %v1866, %v1878
    %v1884 = vadd.f32 %v1867, %v1878
    %v1885 = vadd.f32 %v1868, %v1878
    %v1886 = vadd.f32 %v1869, %v1878
    %v1887 = vadd.f32 %v1870, %v1878
    %v1888 = vadd.f32 %v1871, %v1878
    %v1889 = vadd.f32 %v1872, %v1878
    %v1890 = vadd.f32 %v1873, %v1878
    %v1891 = vld [vmem:[%s4 + $0x4] sm:$0x1]
    %v1892 = vld [vmem:[%s4 + $0x5] sm:$0x1]
    %v1893 = vsel %vm523, %v1879, 0.0
    %1894 = vadd.xlane.f32.xlu0 %v1893
    %v1895 = vpop.xlane.xlu0 %1894
    %v1896 = vsel %vm523, %v1880, 0.0
    %1897 = vadd.xlane.f32.xlu0 %v1896
    %v1898 = vpop.xlane.xlu0 %1897
    %v1899 = vsel %vm523, %v1881, 0.0
    %1900 = vadd.xlane.f32.xlu0 %v1899
    %v1901 = vpop.xlane.xlu0 %1900
    %v1902 = vsel %vm523, %v1882, 0.0
    %1903 = vadd.xlane.f32.xlu0 %v1902
    %v1904 = vpop.xlane.xlu0 %1903
    %v1905 = vsel %vm523, %v1883, 0.0
    %1906 = vadd.xlane.f32.xlu0 %v1905
    %v1907 = vpop.xlane.xlu0 %1906
    %v1908 = vsel %vm523, %v1884, 0.0
    %1909 = vadd.xlane.f32.xlu0 %v1908
    %v1910 = vpop.xlane.xlu0 %1909
    %v1911 = vsel %vm523, %v1885, 0.0
    %1912 = vadd.xlane.f32.xlu0 %v1911
    %v1913 = vpop.xlane.xlu0 %1912
    %v1914 = vsel %vm523, %v1886, 0.0
    %1915 = vadd.xlane.f32.xlu0 %v1914
    %v1916 = vpop.xlane.xlu0 %1915
    %v1917 = vsel %vm523, %v1887, 0.0
    %1918 = vadd.xlane.f32.xlu0 %v1917
    %v1919 = vpop.xlane.xlu0 %1918
    %v1920 = vsel %vm523, %v1888, 0.0
    %1921 = vadd.xlane.f32.xlu0 %v1920
    %v1922 = vpop.xlane.xlu0 %1921
    %v1923 = vsel %vm523, %v1889, 0.0
    %1924 = vadd.xlane.f32.xlu0 %v1923
    %v1925 = vpop.xlane.xlu0 %1924
    %v1926 = vsel %vm523, %v1890, 0.0
    %1927 = vadd.xlane.f32.xlu0 %v1926
    %v1928 = vpop.xlane.xlu0 %1927
    %v1929 = vmul.f32 %v1895, %v560
    %v1930 = vmul.f32 %v1898, %v560
    %v1931 = vmul.f32 %v1901, %v560
    %v1932 = vmul.f32 %v1904, %v560
    %v1933 = vmul.f32 %v1907, %v560
    %v1934 = vmul.f32 %v1910, %v560
    %v1935 = vmul.f32 %v1913, %v560
    %v1936 = vmul.f32 %v1916, %v560
    %v1937 = vmul.f32 %v1919, %v560
    %v1938 = vmul.f32 %v1922, %v560
    %v1939 = vmul.f32 %v1925, %v560
    %v1940 = vmul.f32 %v1928, %v560
    %v1941 = vsub.f32 %v1879, %v1929
    %v1942 = vsub.f32 %v1880, %v1930
    %v1943 = vsub.f32 %v1881, %v1931
    %v1944 = vsub.f32 %v1882, %v1932
    %v1945 = vsub.f32 %v1883, %v1933
    %v1946 = vsub.f32 %v1884, %v1934
    %v1947 = vsub.f32 %v1885, %v1935
    %v1948 = vsub.f32 %v1886, %v1936
    %v1949 = vsub.f32 %v1887, %v1937
    %v1950 = vsub.f32 %v1888, %v1938
    %v1951 = vsub.f32 %v1889, %v1939
    %v1952 = vsub.f32 %v1890, %v1940
    %v1953 = vmul.f32 %v1941, %v1941
    %v1954 = vmul.f32 %v1942, %v1942
    %v1955 = vmul.f32 %v1943, %v1943
    %v1956 = vmul.f32 %v1944, %v1944
    %v1957 = vmul.f32 %v1945, %v1945
    %v1958 = vmul.f32 %v1946, %v1946
    %v1959 = vmul.f32 %v1947, %v1947
    %v1960 = vmul.f32 %v1948, %v1948
    %v1961 = vmul.f32 %v1949, %v1949
    %v1962 = vmul.f32 %v1950, %v1950
    %v1963 = vmul.f32 %v1951, %v1951
    %v1964 = vmul.f32 %v1952, %v1952
    %v1965 = vsel %vm523, %v1953, 0.0
    %1966 = vadd.xlane.f32.xlu0 %v1965
    %v1967 = vpop.xlane.xlu0 %1966
    %v1968 = vsel %vm523, %v1954, 0.0
    %1969 = vadd.xlane.f32.xlu0 %v1968
    %v1970 = vpop.xlane.xlu0 %1969
    %v1971 = vsel %vm523, %v1955, 0.0
    %1972 = vadd.xlane.f32.xlu0 %v1971
    %v1973 = vpop.xlane.xlu0 %1972
    %v1974 = vsel %vm523, %v1956, 0.0
    %1975 = vadd.xlane.f32.xlu0 %v1974
    %v1976 = vpop.xlane.xlu0 %1975
    %v1977 = vsel %vm523, %v1957, 0.0
    %1978 = vadd.xlane.f32.xlu0 %v1977
    %v1979 = vpop.xlane.xlu0 %1978
    %v1980 = vsel %vm523, %v1958, 0.0
    %1981 = vadd.xlane.f32.xlu0 %v1980
    %v1982 = vpop.xlane.xlu0 %1981
    %v1983 = vsel %vm523, %v1959, 0.0
    %1984 = vadd.xlane.f32.xlu0 %v1983
    %v1985 = vpop.xlane.xlu0 %1984
    %v1986 = vsel %vm523, %v1960, 0.0
    %1987 = vadd.xlane.f32.xlu0 %v1986
    %v1988 = vpop.xlane.xlu0 %1987
    %v1989 = vsel %vm523, %v1961, 0.0
    %1990 = vadd.xlane.f32.xlu0 %v1989
    %v1991 = vpop.xlane.xlu0 %1990
    %v1992 = vsel %vm523, %v1962, 0.0
    %1993 = vadd.xlane.f32.xlu0 %v1992
    %v1994 = vpop.xlane.xlu0 %1993
    %v1995 = vsel %vm523, %v1963, 0.0
    %1996 = vadd.xlane.f32.xlu0 %v1995
    %v1997 = vpop.xlane.xlu0 %1996
    %v1998 = vsel %vm523, %v1964, 0.0
    %1999 = vadd.xlane.f32.xlu0 %v1998
    %v2000 = vpop.xlane.xlu0 %1999
    %v2001 = vmul.f32 %v1967, %v560
    %v2002 = vmul.f32 %v1970, %v560
    %v2003 = vmul.f32 %v1973, %v560
    %v2004 = vmul.f32 %v1976, %v560
    %v2005 = vmul.f32 %v1979, %v560
    %v2006 = vmul.f32 %v1982, %v560
    %v2007 = vmul.f32 %v1985, %v560
    %v2008 = vmul.f32 %v1988, %v560
    %v2009 = vmul.f32 %v1991, %v560
    %v2010 = vmul.f32 %v1994, %v560
    %v2011 = vmul.f32 %v1997, %v560
    %v2012 = vmul.f32 %v2000, %v560
    %v2013 = vadd.f32 %v2001, 1e-05
    %v2014 = vadd.f32 %v2002, 1e-05
    %v2015 = vadd.f32 %v2003, 1e-05
    %v2016 = vadd.f32 %v2004, 1e-05
    %v2017 = vadd.f32 %v2005, 1e-05
    %v2018 = vadd.f32 %v2006, 1e-05
    %v2019 = vadd.f32 %v2007, 1e-05
    %v2020 = vadd.f32 %v2008, 1e-05
    %v2021 = vadd.f32 %v2009, 1e-05
    %v2022 = vadd.f32 %v2010, 1e-05
    %v2023 = vadd.f32 %v2011, 1e-05
    %v2024 = vadd.f32 %v2012, 1e-05
    %v2025 = vrsqrt.pop %v2013
    %v2026 = vrsqrt.pop %v2014
    %v2027 = vrsqrt.pop %v2015
    %v2028 = vrsqrt.pop %v2016
    %v2029 = vrsqrt.pop %v2017
    %v2030 = vrsqrt.pop %v2018
    %v2031 = vrsqrt.pop %v2019
    %v2032 = vrsqrt.pop %v2020
    %v2033 = vrsqrt.pop %v2021
    %v2034 = vrsqrt.pop %v2022
    %v2035 = vrsqrt.pop %v2023
    %v2036 = vrsqrt.pop %v2024
    %v2037 = vmul.f32 %v1941, %v2025
    %v2038 = vmul.f32 %v1942, %v2026
    %v2039 = vmul.f32 %v1943, %v2027
    %v2040 = vmul.f32 %v1944, %v2028
    %v2041 = vmul.f32 %v1945, %v2029
    %v2042 = vmul.f32 %v1946, %v2030
    %v2043 = vmul.f32 %v1947, %v2031
    %v2044 = vmul.f32 %v1948, %v2032
    %v2045 = vmul.f32 %v1949, %v2033
    %v2046 = vmul.f32 %v1950, %v2034
    %v2047 = vmul.f32 %v1951, %v2035
    %v2048 = vmul.f32 %v1952, %v2036
    %v2049 = vlaneseq
    %v2050 = vshrl.u32 %v2049, 7
    %v2051 = vsub.s32 0, %v2050
    %v2052 = vrot.slane %v1891, %v2051
    %v2053 = vmul.f32 %v2037, %v2052
    %v2054 = vmul.f32 %v2038, %v2052
    %v2055 = vmul.f32 %v2039, %v2052
    %v2056 = vmul.f32 %v2040, %v2052
    %v2057 = vmul.f32 %v2041, %v2052
    %v2058 = vmul.f32 %v2042, %v2052
    %v2059 = vmul.f32 %v2043, %v2052
    %v2060 = vmul.f32 %v2044, %v2052
    %v2061 = vmul.f32 %v2045, %v2052
    %v2062 = vmul.f32 %v2046, %v2052
    %v2063 = vmul.f32 %v2047, %v2052
    %v2064 = vmul.f32 %v2048, %v2052
    %v2065 = vlaneseq
    %v2066 = vshrl.u32 %v2065, 7
    %v2067 = vsub.s32 0, %v2066
    %v2068 = vrot.slane %v1892, %v2067
    %v2069 = vadd.f32 %v2053, %v2068
    %v2070 = vadd.f32 %v2054, %v2068
    %v2071 = vadd.f32 %v2055, %v2068
    %v2072 = vadd.f32 %v2056, %v2068
    %v2073 = vadd.f32 %v2057, %v2068
    %v2074 = vadd.f32 %v2058, %v2068
    %v2075 = vadd.f32 %v2059, %v2068
    %v2076 = vadd.f32 %v2060, %v2068
    %v2077 = vadd.f32 %v2061, %v2068
    %v2078 = vadd.f32 %v2062, %v2068
    %v2079 = vadd.f32 %v2063, %v2068
    %v2080 = vadd.f32 %v2064, %v2068
    %v2081 = vld [vmem:[%s3 + $0x20] sm:$0xf]
    %v2082 = vld [vmem:[%s3 + $0x24] sm:$0xf]
    %v2083 = vld [vmem:[%s3 + $0x28] sm:$0xf]
    %v2084 = vld [vmem:[%s3 + $0x2c] sm:$0xf]
    %v2085 = vpack.c.bf16 %v2070, %v2069
    %v2086 = vpack.c.bf16 %v2072, %v2071
    %v2087 = vpack.c.bf16 %v2074, %v2073
    %v2088 = vpack.c.bf16 %v2076, %v2075
    %v2089 = vpack.c.bf16 %v2078, %v2077
    %v2090 = vpack.c.bf16 %v2080, %v2079
    %v2091 = vld [vmem:[%s4 + $0x6] sm:$0x1]
    %v2092 = vlaneseq
    %v2093 = vshrl.u32 %v2092, 7
    %v2094 = vsub.s32 0, %v2093
    %v2095 = vrot.slane %v2091, %v2094
    %v2100 = vunpack.c.l.b16 %v2081
    %v2101 = vunpack.c.l.b16 %v2082
    %v2102 = vunpack.c.l.b16 %v2083
    %v2103 = vunpack.c.l.b16 %v2084
    %v2104 = vpack.c.b16 %v2101, %v2100
    %v2105 = vpack.c.b16 %v2103, %v2102
    %v2109 = vsel %vm523, %v2085, 0
    %v2112 = vsel %vm523, %v2086, 0
    %v2115 = vsel %vm523, %v2087, 0
    %v2118 = vsel %vm523, %v2088, 0
    %v2121 = vsel %vm523, %v2089, 0
    %v2124 = vsel %vm523, %v2090, 0
    %2126 = vmatprep.subr.bf16.mxu0 0
    %2127 = vmatpush1.bf16.msra.mxu0 0
    %2128 = vmatprep.subr.bf16.mxu0 0
    %2129 = vmatpush1.bf16.msra.mxu0 0
    %2130 = vmatprep.subr.bf16.mxu0 0
    %2131 = vmatpush1.bf16.msra.mxu0 0
    %2132 = vmatprep.subr.bf16.mxu0 0
    %2133 = vmatpush1.bf16.msra.mxu0 0
    %2134 = vmatprep.subr.bf16.mxu0 0
    %2135 = vmatpush1.bf16.msra.mxu0 0
    %2136 = vmatprep.subr.bf16.mxu0 0
    %2137 = vmatpush1.bf16.msra.mxu0 0
    %2138 = vmatprep.subr.bf16.mxu0 0
    %2139 = vmatpush1.bf16.msra.mxu0 %v2105
    %2140 = vmatprep.subr.bf16.mxu0 0
    %2141 = vmatpush1.bf16.msra.mxu0 %v2104
    %2142 = vmatprep.subr.bf16.mxu0 0
    %2143 = vmatpush2.bf16.msra.mxu0 0
    %2144 = vmatprep.subr.bf16.mxu0 0
    %2145 = vmatpush2.bf16.msra.mxu0 0
    %2146 = vmatprep.subr.bf16.mxu0 0
    %2147 = vmatpush2.bf16.msra.mxu0 0
    %2148 = vmatprep.subr.bf16.mxu0 0
    %2149 = vmatpush2.bf16.msra.mxu0 0
    %2150 = vmatprep.subr.bf16.mxu0 0
    %2151 = vmatpush2.bf16.msra.mxu0 0
    %2152 = vmatprep.subr.bf16.mxu0 0
    %2153 = vmatpush2.bf16.msra.mxu0 0
    %2154 = vmatprep.subr.bf16.mxu0 0
    %2155 = vmatpush2.bf16.msra.mxu0 0
    %2156 = vmatprep.subr.bf16.mxu0 0
    %2157 = vmatpush2.bf16.msra.mxu0 0
    %2158 = vmatprep.mubr.bf16.mxu0 0
    %2159 = vmatmul.mubr.bf16.gmra.mxu0 %v2109
    %v2160 = vpop.f32.mrf.mxu0
    %v2161 = vadd.f32 %v2095, %v2160
    %v2162 = vpop.f32.mrf.mxu0
    %v2163 = vpop.f32.mrf.mxu0
    %v2164 = vadd.f32 %v2095, %v2163
    %v2165 = vpop.f32.mrf.mxu0
    %2166 = vmatprep.mubr.bf16.mxu0 0
    %2167 = vmatmul.mubr.bf16.gmra.mxu0 %v2112
    %v2168 = vpop.f32.mrf.mxu0
    %v2169 = vadd.f32 %v2095, %v2168
    %v2170 = vpop.f32.mrf.mxu0
    %v2171 = vpop.f32.mrf.mxu0
    %v2172 = vadd.f32 %v2095, %v2171
    %v2173 = vpop.f32.mrf.mxu0
    %2174 = vmatprep.mubr.bf16.mxu0 0
    %2175 = vmatmul.mubr.bf16.gmra.mxu0 %v2115
    %v2176 = vpop.f32.mrf.mxu0
    %v2177 = vadd.f32 %v2095, %v2176
    %v2178 = vpop.f32.mrf.mxu0
    %v2179 = vpop.f32.mrf.mxu0
    %v2180 = vadd.f32 %v2095, %v2179
    %v2181 = vpop.f32.mrf.mxu0
    %2182 = vmatprep.mubr.bf16.mxu0 0
    %2183 = vmatmul.mubr.bf16.gmra.mxu0 %v2118
    %v2184 = vpop.f32.mrf.mxu0
    %v2185 = vadd.f32 %v2095, %v2184
    %v2186 = vpop.f32.mrf.mxu0
    %v2187 = vpop.f32.mrf.mxu0
    %v2188 = vadd.f32 %v2095, %v2187
    %v2189 = vpop.f32.mrf.mxu0
    %2190 = vmatprep.mubr.bf16.mxu0 0
    %2191 = vmatmul.mubr.bf16.gmra.mxu0 %v2121
    %v2192 = vpop.f32.mrf.mxu0
    %v2193 = vadd.f32 %v2095, %v2192
    %v2194 = vpop.f32.mrf.mxu0
    %v2195 = vpop.f32.mrf.mxu0
    %v2196 = vadd.f32 %v2095, %v2195
    %v2197 = vpop.f32.mrf.mxu0
    %2198 = vmatprep.mubr.bf16.mxu0 0
    %2199 = vmatmul.mubr.bf16.gmra.mxu0 %v2124
    %v2200 = vpop.f32.mrf.mxu0
    %v2201 = vadd.f32 %v2095, %v2200
    %v2202 = vpop.f32.mrf.mxu0
    %v2203 = vpop.f32.mrf.mxu0
    %v2204 = vadd.f32 %v2095, %v2203
    %v2205 = vpop.f32.mrf.mxu0
    %2206 = vdwg.mxu0
    %v2207 = vmul.f32 %v2161, 1.702
    %v2208 = vmul.f32 %v2164, 1.702
    %v2209 = vmul.f32 %v2169, 1.702
    %v2210 = vmul.f32 %v2172, 1.702
    %v2211 = vmul.f32 %v2177, 1.702
    %v2212 = vmul.f32 %v2180, 1.702
    %v2213 = vmul.f32 %v2185, 1.702
    %v2214 = vmul.f32 %v2188, 1.702
    %v2215 = vmul.f32 %v2193, 1.702
    %v2216 = vmul.f32 %v2196, 1.702
    %v2217 = vmul.f32 %v2201, 1.702
    %v2218 = vmul.f32 %v2204, 1.702
    %v2219 = vxor.u32 %v2207, 2147483648
    %v2220 = vxor.u32 %v2208, 2147483648
    %v2221 = vxor.u32 %v2209, 2147483648
    %v2222 = vxor.u32 %v2210, 2147483648
    %v2223 = vxor.u32 %v2211, 2147483648
    %v2224 = vxor.u32 %v2212, 2147483648
    %v2225 = vxor.u32 %v2213, 2147483648
    %v2226 = vxor.u32 %v2214, 2147483648
    %v2227 = vxor.u32 %v2215, 2147483648
    %v2228 = vxor.u32 %v2216, 2147483648
    %v2229 = vxor.u32 %v2217, 2147483648
    %v2230 = vxor.u32 %v2218, 2147483648
    %v2231 = vmul.f32 %v2219, 1.442695
    %v2232 = vpow.pop %v2231
    %v2233 = vmul.f32 %v2220, 1.442695
    %v2234 = vpow.pop %v2233
    %v2235 = vmul.f32 %v2221, 1.442695
    %v2236 = vpow.pop %v2235
    %v2237 = vmul.f32 %v2222, 1.442695
    %v2238 = vpow.pop %v2237
    %v2239 = vmul.f32 %v2223, 1.442695
    %v2240 = vpow.pop %v2239
    %v2241 = vmul.f32 %v2224, 1.442695
    %v2242 = vpow.pop %v2241
    %v2243 = vmul.f32 %v2225, 1.442695
    %v2244 = vpow.pop %v2243
    %v2245 = vmul.f32 %v2226, 1.442695
    %v2246 = vpow.pop %v2245
    %v2247 = vmul.f32 %v2227, 1.442695
    %v2248 = vpow.pop %v2247
    %v2249 = vmul.f32 %v2228, 1.442695
    %v2250 = vpow.pop %v2249
    %v2251 = vmul.f32 %v2229, 1.442695
    %v2252 = vpow.pop %v2251
    %v2253 = vmul.f32 %v2230, 1.442695
    %v2254 = vpow.pop %v2253
    %v2255 = vadd.f32 %v2232, 1.0
    %v2256 = vadd.f32 %v2234, 1.0
    %v2257 = vadd.f32 %v2236, 1.0
    %v2258 = vadd.f32 %v2238, 1.0
    %v2259 = vadd.f32 %v2240, 1.0
    %v2260 = vadd.f32 %v2242, 1.0
    %v2261 = vadd.f32 %v2244, 1.0
    %v2262 = vadd.f32 %v2246, 1.0
    %v2263 = vadd.f32 %v2248, 1.0
    %v2264 = vadd.f32 %v2250, 1.0
    %v2265 = vadd.f32 %v2252, 1.0
    %v2266 = vadd.f32 %v2254, 1.0
    %v2267 = vrcp.pop %v2255
    %v2268 = vmul.f32 1.0, %v2267
    %v2269 = vrcp.pop %v2256
    %v2270 = vmul.f32 1.0, %v2269
    %v2271 = vrcp.pop %v2257
    %v2272 = vmul.f32 1.0, %v2271
    %v2273 = vrcp.pop %v2258
    %v2274 = vmul.f32 1.0, %v2273
    %v2275 = vrcp.pop %v2259
    %v2276 = vmul.f32 1.0, %v2275
    %v2277 = vrcp.pop %v2260
    %v2278 = vmul.f32 1.0, %v2277
    %v2279 = vrcp.pop %v2261
    %v2280 = vmul.f32 1.0, %v2279
    %v2281 = vrcp.pop %v2262
    %v2282 = vmul.f32 1.0, %v2281
    %v2283 = vrcp.pop %v2263
    %v2284 = vmul.f32 1.0, %v2283
    %v2285 = vrcp.pop %v2264
    %v2286 = vmul.f32 1.0, %v2285
    %v2287 = vrcp.pop %v2265
    %v2288 = vmul.f32 1.0, %v2287
    %v2289 = vrcp.pop %v2266
    %v2290 = vmul.f32 1.0, %v2289
    %v2291 = vmul.f32 %v2161, %v2268
    %v2292 = vmul.f32 %v2164, %v2270
    %v2293 = vmul.f32 %v2169, %v2272
    %v2294 = vmul.f32 %v2172, %v2274
    %v2295 = vmul.f32 %v2177, %v2276
    %v2296 = vmul.f32 %v2180, %v2278
    %v2297 = vmul.f32 %v2185, %v2280
    %v2298 = vmul.f32 %v2188, %v2282
    %v2299 = vmul.f32 %v2193, %v2284
    %v2300 = vmul.f32 %v2196, %v2286
    %v2301 = vmul.f32 %v2201, %v2288
    %v2302 = vmul.f32 %v2204, %v2290
    %v2303 = vld [vmem:[%s3 + $0x30] sm:$0xf]
    %v2304 = vld [vmem:[%s3 + $0x34] sm:$0xf]
    %v2305 = vld [vmem:[%s3 + $0x38] sm:$0xf]
    %v2306 = vld [vmem:[%s3 + $0x3c] sm:$0xf]
    %v2307 = vld [vmem:[%s3 + $0x40] sm:$0xf]
    %v2308 = vld [vmem:[%s3 + $0x44] sm:$0xf]
    %v2309 = vld [vmem:[%s3 + $0x48] sm:$0xf]
    %v2310 = vld [vmem:[%s3 + $0x4c] sm:$0xf]
    %v2311 = vpack.c.bf16 %v2292, %v2291
    %v2312 = vpack.c.bf16 %v2294, %v2293
    %v2313 = vpack.c.bf16 %v2296, %v2295
    %v2314 = vpack.c.bf16 %v2298, %v2297
    %v2315 = vpack.c.bf16 %v2300, %v2299
    %v2316 = vpack.c.bf16 %v2302, %v2301
    %v2325 = vunpack.c.l.b16 %v2303
    %v2326 = vunpack.c.l.b16 %v2304
    %v2327 = vunpack.c.l.b16 %v2305
    %v2328 = vunpack.c.l.b16 %v2306
    %v2329 = vunpack.c.l.b16 %v2307
    %v2330 = vunpack.c.l.b16 %v2308
    %v2331 = vunpack.c.l.b16 %v2309
    %v2332 = vunpack.c.l.b16 %v2310
    %v2333 = vpack.c.b16 %v2326, %v2325
    %v2334 = vpack.c.b16 %v2328, %v2327
    %v2335 = vpack.c.b16 %v2330, %v2329
    %v2336 = vpack.c.b16 %v2332, %v2331
    %vm2341 = vcmask 523264
    %v2343 = vsel %vm2341, %v2311, 0
    %v2346 = vsel %vm2341, %v2312, 0
    %v2349 = vsel %vm2341, %v2313, 0
    %v2352 = vsel %vm2341, %v2314, 0
    %v2355 = vsel %vm2341, %v2315, 0
    %v2358 = vsel %vm2341, %v2316, 0
    %2360 = vmatprep.subr.bf16.mxu0 0
    %2361 = vmatpush1.bf16.msra.mxu0 0
    %2362 = vmatprep.subr.bf16.mxu0 0
    %2363 = vmatpush1.bf16.msra.mxu0 0
    %2364 = vmatprep.subr.bf16.mxu0 0
    %2365 = vmatpush1.bf16.msra.mxu0 0
    %2366 = vmatprep.subr.bf16.mxu0 0
    %2367 = vmatpush1.bf16.msra.mxu0 0
    %2368 = vmatprep.subr.bf16.mxu0 0
    %2369 = vmatpush1.bf16.msra.mxu0 %v2336
    %2370 = vmatprep.subr.bf16.mxu0 0
    %2371 = vmatpush1.bf16.msra.mxu0 %v2335
    %2372 = vmatprep.subr.bf16.mxu0 0
    %2373 = vmatpush1.bf16.msra.mxu0 %v2334
    %2374 = vmatprep.subr.bf16.mxu0 0
    %2375 = vmatpush1.bf16.msra.mxu0 %v2333
    %2376 = vmatprep.subr.bf16.mxu0 0
    %2377 = vmatpush2.bf16.msra.mxu0 0
    %2378 = vmatprep.subr.bf16.mxu0 0
    %2379 = vmatpush2.bf16.msra.mxu0 0
    %2380 = vmatprep.subr.bf16.mxu0 0
    %2381 = vmatpush2.bf16.msra.mxu0 0
    %2382 = vmatprep.subr.bf16.mxu0 0
    %2383 = vmatpush2.bf16.msra.mxu0 0
    %2384 = vmatprep.subr.bf16.mxu0 0
    %2385 = vmatpush2.bf16.msra.mxu0 0
    %2386 = vmatprep.subr.bf16.mxu0 0
    %2387 = vmatpush2.bf16.msra.mxu0 0
    %2388 = vmatprep.subr.bf16.mxu0 0
    %2389 = vmatpush2.bf16.msra.mxu0 0
    %2390 = vmatprep.subr.bf16.mxu0 0
    %2391 = vmatpush2.bf16.msra.mxu0 0
    %2392 = vmatprep.mubr.bf16.mxu0 0
    %2393 = vmatmul.mubr.bf16.gmra.mxu0 %v2343
    %v2394 = vpop.f32.mrf.mxu0
    %v2395 = vadd.f32 0.0, %v2394
    %v2396 = vpop.f32.mrf.mxu0
    %v2397 = vpop.f32.mrf.mxu0
    %v2398 = vadd.f32 0.0, %v2397
    %v2399 = vpop.f32.mrf.mxu0
    %2400 = vmatprep.mubr.bf16.mxu0 0
    %2401 = vmatmul.mubr.bf16.gmra.mxu0 %v2346
    %v2402 = vpop.f32.mrf.mxu0
    %v2403 = vadd.f32 0.0, %v2402
    %v2404 = vpop.f32.mrf.mxu0
    %v2405 = vpop.f32.mrf.mxu0
    %v2406 = vadd.f32 0.0, %v2405
    %v2407 = vpop.f32.mrf.mxu0
    %2408 = vmatprep.mubr.bf16.mxu0 0
    %2409 = vmatmul.mubr.bf16.gmra.mxu0 %v2349
    %v2410 = vpop.f32.mrf.mxu0
    %v2411 = vadd.f32 0.0, %v2410
    %v2412 = vpop.f32.mrf.mxu0
    %v2413 = vpop.f32.mrf.mxu0
    %v2414 = vadd.f32 0.0, %v2413
    %v2415 = vpop.f32.mrf.mxu0
    %2416 = vmatprep.mubr.bf16.mxu0 0
    %2417 = vmatmul.mubr.bf16.gmra.mxu0 %v2352
    %v2418 = vpop.f32.mrf.mxu0
    %v2419 = vadd.f32 0.0, %v2418
    %v2420 = vpop.f32.mrf.mxu0
    %v2421 = vpop.f32.mrf.mxu0
    %v2422 = vadd.f32 0.0, %v2421
    %v2423 = vpop.f32.mrf.mxu0
    %2424 = vmatprep.mubr.bf16.mxu0 0
    %2425 = vmatmul.mubr.bf16.gmra.mxu0 %v2355
    %v2426 = vpop.f32.mrf.mxu0
    %v2427 = vadd.f32 0.0, %v2426
    %v2428 = vpop.f32.mrf.mxu0
    %v2429 = vpop.f32.mrf.mxu0
    %v2430 = vadd.f32 0.0, %v2429
    %v2431 = vpop.f32.mrf.mxu0
    %2432 = vmatprep.mubr.bf16.mxu0 0
    %2433 = vmatmul.mubr.bf16.gmra.mxu0 %v2358
    %v2434 = vpop.f32.mrf.mxu0
    %v2435 = vadd.f32 0.0, %v2434
    %v2436 = vpop.f32.mrf.mxu0
    %v2437 = vpop.f32.mrf.mxu0
    %v2438 = vadd.f32 0.0, %v2437
    %v2439 = vpop.f32.mrf.mxu0
    %2440 = vdwg.mxu0
    %v2441 = vadd.f32 %v1879, %v2395
    %v2442 = vadd.f32 %v1880, %v2398
    %v2443 = vadd.f32 %v1881, %v2403
    %v2444 = vadd.f32 %v1882, %v2406
    %v2445 = vadd.f32 %v1883, %v2411
    %v2446 = vadd.f32 %v1884, %v2414
    %v2447 = vadd.f32 %v1885, %v2419
    %v2448 = vadd.f32 %v1886, %v2422
    %v2449 = vadd.f32 %v1887, %v2427
    %v2450 = vadd.f32 %v1888, %v2430
    %v2451 = vadd.f32 %v1889, %v2435
    %v2452 = vadd.f32 %v1890, %v2438
    %v2453 = vld [vmem:[%s4 + $0x7] sm:$0x1]
    %v2454 = vlaneseq
    %v2455 = vshrl.u32 %v2454, 7
    %v2456 = vsub.s32 0, %v2455
    %v2457 = vrot.slane %v2453, %v2456
    %v2458 = vadd.f32 %v2441, %v2457
    %v2459 = vadd.f32 %v2442, %v2457
    %v2460 = vadd.f32 %v2443, %v2457
    %v2461 = vadd.f32 %v2444, %v2457
    %v2462 = vadd.f32 %v2445, %v2457
    %v2463 = vadd.f32 %v2446, %v2457
    %v2464 = vadd.f32 %v2447, %v2457
    %v2465 = vadd.f32 %v2448, %v2457
    %v2466 = vadd.f32 %v2449, %v2457
    %v2467 = vadd.f32 %v2450, %v2457
    %v2468 = vadd.f32 %v2451, %v2457
    %v2469 = vadd.f32 %v2452, %v2457
    %v2470 = vld [vmem:[%s4 + $0x8] sm:$0x1]
    %v2471 = vld [vmem:[%s4 + $0x9] sm:$0x1]
    %v2472 = vsel %vm523, %v2458, 0.0
    %2473 = vadd.xlane.f32.xlu0 %v2472
    %v2474 = vpop.xlane.xlu0 %2473
    %v2475 = vsel %vm523, %v2459, 0.0
    %2476 = vadd.xlane.f32.xlu0 %v2475
    %v2477 = vpop.xlane.xlu0 %2476
    %v2478 = vsel %vm523, %v2460, 0.0
    %2479 = vadd.xlane.f32.xlu0 %v2478
    %v2480 = vpop.xlane.xlu0 %2479
    %v2481 = vsel %vm523, %v2461, 0.0
    %2482 = vadd.xlane.f32.xlu0 %v2481
    %v2483 = vpop.xlane.xlu0 %2482
    %v2484 = vsel %vm523, %v2462, 0.0
    %2485 = vadd.xlane.f32.xlu0 %v2484
    %v2486 = vpop.xlane.xlu0 %2485
    %v2487 = vsel %vm523, %v2463, 0.0
    %2488 = vadd.xlane.f32.xlu0 %v2487
    %v2489 = vpop.xlane.xlu0 %2488
    %v2490 = vsel %vm523, %v2464, 0.0
    %2491 = vadd.xlane.f32.xlu0 %v2490
    %v2492 = vpop.xlane.xlu0 %2491
    %v2493 = vsel %vm523, %v2465, 0.0
    %2494 = vadd.xlane.f32.xlu0 %v2493
    %v2495 = vpop.xlane.xlu0 %2494
    %v2496 = vsel %vm523, %v2466, 0.0
    %2497 = vadd.xlane.f32.xlu0 %v2496
    %v2498 = vpop.xlane.xlu0 %2497
    %v2499 = vsel %vm523, %v2467, 0.0
    %2500 = vadd.xlane.f32.xlu0 %v2499
    %v2501 = vpop.xlane.xlu0 %2500
    %v2502 = vsel %vm523, %v2468, 0.0
    %2503 = vadd.xlane.f32.xlu0 %v2502
    %v2504 = vpop.xlane.xlu0 %2503
    %v2505 = vsel %vm523, %v2469, 0.0
    %2506 = vadd.xlane.f32.xlu0 %v2505
    %v2507 = vpop.xlane.xlu0 %2506
    %v2508 = vmul.f32 %v2474, %v560
    %v2509 = vmul.f32 %v2477, %v560
    %v2510 = vmul.f32 %v2480, %v560
    %v2511 = vmul.f32 %v2483, %v560
    %v2512 = vmul.f32 %v2486, %v560
    %v2513 = vmul.f32 %v2489, %v560
    %v2514 = vmul.f32 %v2492, %v560
    %v2515 = vmul.f32 %v2495, %v560
    %v2516 = vmul.f32 %v2498, %v560
    %v2517 = vmul.f32 %v2501, %v560
    %v2518 = vmul.f32 %v2504, %v560
    %v2519 = vmul.f32 %v2507, %v560
    %v2520 = vsub.f32 %v2458, %v2508
    %v2521 = vsub.f32 %v2459, %v2509
    %v2522 = vsub.f32 %v2460, %v2510
    %v2523 = vsub.f32 %v2461, %v2511
    %v2524 = vsub.f32 %v2462, %v2512
    %v2525 = vsub.f32 %v2463, %v2513
    %v2526 = vsub.f32 %v2464, %v2514
    %v2527 = vsub.f32 %v2465, %v2515
    %v2528 = vsub.f32 %v2466, %v2516
    %v2529 = vsub.f32 %v2467, %v2517
    %v2530 = vsub.f32 %v2468, %v2518
    %v2531 = vsub.f32 %v2469, %v2519
    %v2532 = vmul.f32 %v2520, %v2520
    %v2533 = vmul.f32 %v2521, %v2521
    %v2534 = vmul.f32 %v2522, %v2522
    %v2535 = vmul.f32 %v2523, %v2523
    %v2536 = vmul.f32 %v2524, %v2524
    %v2537 = vmul.f32 %v2525, %v2525
    %v2538 = vmul.f32 %v2526, %v2526
    %v2539 = vmul.f32 %v2527, %v2527
    %v2540 = vmul.f32 %v2528, %v2528
    %v2541 = vmul.f32 %v2529, %v2529
    %v2542 = vmul.f32 %v2530, %v2530
    %v2543 = vmul.f32 %v2531, %v2531
    %v2544 = vsel %vm523, %v2532, 0.0
    %2545 = vadd.xlane.f32.xlu0 %v2544
    %v2546 = vpop.xlane.xlu0 %2545
    %v2547 = vsel %vm523, %v2533, 0.0
    %2548 = vadd.xlane.f32.xlu0 %v2547
    %v2549 = vpop.xlane.xlu0 %2548
    %v2550 = vsel %vm523, %v2534, 0.0
    %2551 = vadd.xlane.f32.xlu0 %v2550
    %v2552 = vpop.xlane.xlu0 %2551
    %v2553 = vsel %vm523, %v2535, 0.0
    %2554 = vadd.xlane.f32.xlu0 %v2553
    %v2555 = vpop.xlane.xlu0 %2554
    %v2556 = vsel %vm523, %v2536, 0.0
    %2557 = vadd.xlane.f32.xlu0 %v2556
    %v2558 = vpop.xlane.xlu0 %2557
    %v2559 = vsel %vm523, %v2537, 0.0
    %2560 = vadd.xlane.f32.xlu0 %v2559
    %v2561 = vpop.xlane.xlu0 %2560
    %v2562 = vsel %vm523, %v2538, 0.0
    %2563 = vadd.xlane.f32.xlu0 %v2562
    %v2564 = vpop.xlane.xlu0 %2563
    %v2565 = vsel %vm523, %v2539, 0.0
    %2566 = vadd.xlane.f32.xlu0 %v2565
    %v2567 = vpop.xlane.xlu0 %2566
    %v2568 = vsel %vm523, %v2540, 0.0
    %2569 = vadd.xlane.f32.xlu0 %v2568
    %v2570 = vpop.xlane.xlu0 %2569
    %v2571 = vsel %vm523, %v2541, 0.0
    %2572 = vadd.xlane.f32.xlu0 %v2571
    %v2573 = vpop.xlane.xlu0 %2572
    %v2574 = vsel %vm523, %v2542, 0.0
    %2575 = vadd.xlane.f32.xlu0 %v2574
    %v2576 = vpop.xlane.xlu0 %2575
    %v2577 = vsel %vm523, %v2543, 0.0
    %2578 = vadd.xlane.f32.xlu0 %v2577
    %v2579 = vpop.xlane.xlu0 %2578
    %v2580 = vmul.f32 %v2546, %v560
    %v2581 = vmul.f32 %v2549, %v560
    %v2582 = vmul.f32 %v2552, %v560
    %v2583 = vmul.f32 %v2555, %v560
    %v2584 = vmul.f32 %v2558, %v560
    %v2585 = vmul.f32 %v2561, %v560
    %v2586 = vmul.f32 %v2564, %v560
    %v2587 = vmul.f32 %v2567, %v560
    %v2588 = vmul.f32 %v2570, %v560
    %v2589 = vmul.f32 %v2573, %v560
    %v2590 = vmul.f32 %v2576, %v560
    %v2591 = vmul.f32 %v2579, %v560
    %v2592 = vadd.f32 %v2580, 1e-05
    %v2593 = vadd.f32 %v2581, 1e-05
    %v2594 = vadd.f32 %v2582, 1e-05
    %v2595 = vadd.f32 %v2583, 1e-05
    %v2596 = vadd.f32 %v2584, 1e-05
    %v2597 = vadd.f32 %v2585, 1e-05
    %v2598 = vadd.f32 %v2586, 1e-05
    %v2599 = vadd.f32 %v2587, 1e-05
    %v2600 = vadd.f32 %v2588, 1e-05
    %v2601 = vadd.f32 %v2589, 1e-05
    %v2602 = vadd.f32 %v2590, 1e-05
    %v2603 = vadd.f32 %v2591, 1e-05
    %v2604 = vrsqrt.pop %v2592
    %v2605 = vrsqrt.pop %v2593
    %v2606 = vrsqrt.pop %v2594
    %v2607 = vrsqrt.pop %v2595
    %v2608 = vrsqrt.pop %v2596
    %v2609 = vrsqrt.pop %v2597
    %v2610 = vrsqrt.pop %v2598
    %v2611 = vrsqrt.pop %v2599
    %v2612 = vrsqrt.pop %v2600
    %v2613 = vrsqrt.pop %v2601
    %v2614 = vrsqrt.pop %v2602
    %v2615 = vrsqrt.pop %v2603
    %v2616 = vmul.f32 %v2520, %v2604
    %v2617 = vmul.f32 %v2521, %v2605
    %v2618 = vmul.f32 %v2522, %v2606
    %v2619 = vmul.f32 %v2523, %v2607
    %v2620 = vmul.f32 %v2524, %v2608
    %v2621 = vmul.f32 %v2525, %v2609
    %v2622 = vmul.f32 %v2526, %v2610
    %v2623 = vmul.f32 %v2527, %v2611
    %v2624 = vmul.f32 %v2528, %v2612
    %v2625 = vmul.f32 %v2529, %v2613
    %v2626 = vmul.f32 %v2530, %v2614
    %v2627 = vmul.f32 %v2531, %v2615
    %v2628 = vlaneseq
    %v2629 = vshrl.u32 %v2628, 7
    %v2630 = vsub.s32 0, %v2629
    %v2631 = vrot.slane %v2470, %v2630
    %v2632 = vmul.f32 %v2616, %v2631
    %v2633 = vmul.f32 %v2617, %v2631
    %v2634 = vmul.f32 %v2618, %v2631
    %v2635 = vmul.f32 %v2619, %v2631
    %v2636 = vmul.f32 %v2620, %v2631
    %v2637 = vmul.f32 %v2621, %v2631
    %v2638 = vmul.f32 %v2622, %v2631
    %v2639 = vmul.f32 %v2623, %v2631
    %v2640 = vmul.f32 %v2624, %v2631
    %v2641 = vmul.f32 %v2625, %v2631
    %v2642 = vmul.f32 %v2626, %v2631
    %v2643 = vmul.f32 %v2627, %v2631
    %v2644 = vlaneseq
    %v2645 = vshrl.u32 %v2644, 7
    %v2646 = vsub.s32 0, %v2645
    %v2647 = vrot.slane %v2471, %v2646
    %v2648 = vadd.f32 %v2632, %v2647
    %v2649 = vadd.f32 %v2633, %v2647
    %v2650 = vadd.f32 %v2634, %v2647
    %v2651 = vadd.f32 %v2635, %v2647
    %v2652 = vadd.f32 %v2636, %v2647
    %v2653 = vadd.f32 %v2637, %v2647
    %v2654 = vadd.f32 %v2638, %v2647
    %v2655 = vadd.f32 %v2639, %v2647
    %v2656 = vadd.f32 %v2640, %v2647
    %v2657 = vadd.f32 %v2641, %v2647
    %v2658 = vadd.f32 %v2642, %v2647
    %v2659 = vadd.f32 %v2643, %v2647
    %v2660 = vld [vmem:[%s3 + $0x50] sm:$0xf]
    %v2661 = vld [vmem:[%s3 + $0x54] sm:$0xf]
    %v2662 = vld [vmem:[%s3 + $0x58] sm:$0xf]
    %v2663 = vld [vmem:[%s3 + $0x5c] sm:$0xf]
    %v2664 = vpack.c.bf16 %v2649, %v2648
    %v2665 = vpack.c.bf16 %v2651, %v2650
    %v2666 = vpack.c.bf16 %v2653, %v2652
    %v2667 = vpack.c.bf16 %v2655, %v2654
    %v2668 = vpack.c.bf16 %v2657, %v2656
    %v2669 = vpack.c.bf16 %v2659, %v2658
    %v2670 = vld [vmem:[%s4 + $0xa] sm:$0x1]
    %v2671 = vlaneseq
    %v2672 = vshrl.u32 %v2671, 7
    %v2673 = vsub.s32 0, %v2672
    %v2674 = vrot.slane %v2670, %v2673
    %v2679 = vunpack.c.l.b16 %v2660
    %v2680 = vunpack.c.l.b16 %v2661
    %v2681 = vunpack.c.l.b16 %v2662
    %v2682 = vunpack.c.l.b16 %v2663
    %v2683 = vpack.c.b16 %v2680, %v2679
    %v2684 = vpack.c.b16 %v2682, %v2681
    %v2688 = vsel %vm523, %v2664, 0
    %v2691 = vsel %vm523, %v2665, 0
    %v2694 = vsel %vm523, %v2666, 0
    %v2697 = vsel %vm523, %v2667, 0
    %v2700 = vsel %vm523, %v2668, 0
    %v2703 = vsel %vm523, %v2669, 0
    %2705 = vmatprep.subr.bf16.mxu0 0
    %2706 = vmatpush1.bf16.msra.mxu0 0
    %2707 = vmatprep.subr.bf16.mxu0 0
    %2708 = vmatpush1.bf16.msra.mxu0 0
    %2709 = vmatprep.subr.bf16.mxu0 0
    %2710 = vmatpush1.bf16.msra.mxu0 0
    %2711 = vmatprep.subr.bf16.mxu0 0
    %2712 = vmatpush1.bf16.msra.mxu0 0
    %2713 = vmatprep.subr.bf16.mxu0 0
    %2714 = vmatpush1.bf16.msra.mxu0 0
    %2715 = vmatprep.subr.bf16.mxu0 0
    %2716 = vmatpush1.bf16.msra.mxu0 0
    %2717 = vmatprep.subr.bf16.mxu0 0
    %2718 = vmatpush1.bf16.msra.mxu0 %v2684
    %2719 = vmatprep.subr.bf16.mxu0 0
    %2720 = vmatpush1.bf16.msra.mxu0 %v2683
    %2721 = vmatprep.subr.bf16.mxu0 0
    %2722 = vmatpush2.bf16.msra.mxu0 0
    %2723 = vmatprep.subr.bf16.mxu0 0
    %2724 = vmatpush2.bf16.msra.mxu0 0
    %2725 = vmatprep.subr.bf16.mxu0 0
    %2726 = vmatpush2.bf16.msra.mxu0 0
    %2727 = vmatprep.subr.bf16.mxu0 0
    %2728 = vmatpush2.bf16.msra.mxu0 0
    %2729 = vmatprep.subr.bf16.mxu0 0
    %2730 = vmatpush2.bf16.msra.mxu0 0
    %2731 = vmatprep.subr.bf16.mxu0 0
    %2732 = vmatpush2.bf16.msra.mxu0 0
    %2733 = vmatprep.subr.bf16.mxu0 0
    %2734 = vmatpush2.bf16.msra.mxu0 0
    %2735 = vmatprep.subr.bf16.mxu0 0
    %2736 = vmatpush2.bf16.msra.mxu0 0
    %2737 = vmatprep.mubr.bf16.mxu0 0
    %2738 = vmatmul.mubr.bf16.gmra.mxu0 %v2688
    %v2739 = vpop.f32.mrf.mxu0
    %v2740 = vadd.f32 %v2674, %v2739
    %v2741 = vpop.f32.mrf.mxu0
    %v2742 = vpop.f32.mrf.mxu0
    %v2743 = vadd.f32 %v2674, %v2742
    %v2744 = vpop.f32.mrf.mxu0
    %2745 = vmatprep.mubr.bf16.mxu0 0
    %2746 = vmatmul.mubr.bf16.gmra.mxu0 %v2691
    %v2747 = vpop.f32.mrf.mxu0
    %v2748 = vadd.f32 %v2674, %v2747
    %v2749 = vpop.f32.mrf.mxu0
    %v2750 = vpop.f32.mrf.mxu0
    %v2751 = vadd.f32 %v2674, %v2750
    %v2752 = vpop.f32.mrf.mxu0
    %2753 = vmatprep.mubr.bf16.mxu0 0
    %2754 = vmatmul.mubr.bf16.gmra.mxu0 %v2694
    %v2755 = vpop.f32.mrf.mxu0
    %v2756 = vadd.f32 %v2674, %v2755
    %v2757 = vpop.f32.mrf.mxu0
    %v2758 = vpop.f32.mrf.mxu0
    %v2759 = vadd.f32 %v2674, %v2758
    %v2760 = vpop.f32.mrf.mxu0
    %2761 = vmatprep.mubr.bf16.mxu0 0
    %2762 = vmatmul.mubr.bf16.gmra.mxu0 %v2697
    %v2763 = vpop.f32.mrf.mxu0
    %v2764 = vadd.f32 %v2674, %v2763
    %v2765 = vpop.f32.mrf.mxu0
    %v2766 = vpop.f32.mrf.mxu0
    %v2767 = vadd.f32 %v2674, %v2766
    %v2768 = vpop.f32.mrf.mxu0
    %2769 = vmatprep.mubr.bf16.mxu0 0
    %2770 = vmatmul.mubr.bf16.gmra.mxu0 %v2700
    %v2771 = vpop.f32.mrf.mxu0
    %v2772 = vadd.f32 %v2674, %v2771
    %v2773 = vpop.f32.mrf.mxu0
    %v2774 = vpop.f32.mrf.mxu0
    %v2775 = vadd.f32 %v2674, %v2774
    %v2776 = vpop.f32.mrf.mxu0
    %2777 = vmatprep.mubr.bf16.mxu0 0
    %2778 = vmatmul.mubr.bf16.gmra.mxu0 %v2703
    %v2779 = vpop.f32.mrf.mxu0
    %v2780 = vadd.f32 %v2674, %v2779
    %v2781 = vpop.f32.mrf.mxu0
    %v2782 = vpop.f32.mrf.mxu0
    %v2783 = vadd.f32 %v2674, %v2782
    %v2784 = vpop.f32.mrf.mxu0
    %2785 = vdwg.mxu0
    %v2786 = vpack.c.bf16 %v2743, %v2740
    %v2787 = vpack.c.bf16 %v2751, %v2748
    %v2788 = vpack.c.bf16 %v2759, %v2756
    %v2789 = vpack.c.bf16 %v2767, %v2764
    %v2790 = vpack.c.bf16 %v2775, %v2772
    %v2791 = vpack.c.bf16 %v2783, %v2780
    %2798 = vrot.lane.b32.xlu0 %v2786, 96
    %v2799 = vpop.permute.xlu0 %2798
    %2800 = vrot.lane.b32.xlu0 %v2787, 96
    %v2801 = vpop.permute.xlu0 %2800
    %2802 = vrot.lane.b32.xlu0 %v2788, 96
    %v2803 = vpop.permute.xlu0 %2802
    %2804 = vrot.lane.b32.xlu0 %v2789, 96
    %v2805 = vpop.permute.xlu0 %2804
    %2806 = vrot.lane.b32.xlu0 %v2790, 96
    %v2807 = vpop.permute.xlu0 %2806
    %2808 = vrot.lane.b32.xlu0 %v2791, 96
    %v2809 = vpop.permute.xlu0 %2808
    %v2811 = vsel %vm863, %v2786, 0
    %v2814 = vsel %vm863, %v2787, 0
    %v2817 = vsel %vm863, %v2788, 0
    %v2820 = vsel %vm863, %v2789, 0
    %v2823 = vsel %vm863, %v2790, 0
    %v2826 = vsel %vm863, %v2791, 0
    %v2829 = vsel %vm863, %v2799, 0
    %v2832 = vsel %vm863, %v2801, 0
    %v2835 = vsel %vm863, %v2803, 0
    %v2838 = vsel %vm863, %v2805, 0
    %v2841 = vsel %vm863, %v2807, 0
    %v2844 = vsel %vm863, %v2809, 0
    %2846 = vmatprep.subr.bf16.mxu0 0
    %2847 = vmatpush1.bf16.xpose.msra.mxu0 0
    %2848 = vmatprep.subr.bf16.mxu0 0
    %2849 = vmatpush1.bf16.xpose.msra.mxu0 0
    %2850 = vmatprep.subr.bf16.mxu0 0
    %2851 = vmatpush1.bf16.xpose.msra.mxu0 %v2844
    %2852 = vmatprep.subr.bf16.mxu0 0
    %2853 = vmatpush1.bf16.xpose.msra.mxu0 %v2841
    %2854 = vmatprep.subr.bf16.mxu0 0
    %2855 = vmatpush1.bf16.xpose.msra.mxu0 %v2838
    %2856 = vmatprep.subr.bf16.mxu0 0
    %2857 = vmatpush1.bf16.xpose.msra.mxu0 %v2835
    %2858 = vmatprep.subr.bf16.mxu0 0
    %2859 = vmatpush1.bf16.xpose.msra.mxu0 %v2832
    %2860 = vmatprep.subr.bf16.mxu0 0
    %2861 = vmatpush1.bf16.xpose.msra.mxu0 %v2829
    %2862 = vmatprep.subr.bf16.mxu0 0
    %2863 = vmatpush2.bf16.xpose.msra.mxu0 0
    %2864 = vmatprep.subr.bf16.mxu0 0
    %2865 = vmatpush2.bf16.xpose.msra.mxu0 0
    %2866 = vmatprep.subr.bf16.mxu0 0
    %2867 = vmatpush2.bf16.xpose.msra.mxu0 0
    %2868 = vmatprep.subr.bf16.mxu0 0
    %2869 = vmatpush2.bf16.xpose.msra.mxu0 0
    %2870 = vmatprep.subr.bf16.mxu0 0
    %2871 = vmatpush2.bf16.xpose.msra.mxu0 0
    %2872 = vmatprep.subr.bf16.mxu0 0
    %2873 = vmatpush2.bf16.xpose.msra.mxu0 0
    %2874 = vmatprep.subr.bf16.mxu0 0
    %2875 = vmatpush2.bf16.xpose.msra.mxu0 0
    %2876 = vmatprep.subr.bf16.mxu0 0
    %2877 = vmatpush2.bf16.xpose.msra.mxu0 0
    %2878 = vmatprep.mubr.bf16.mxu0 0
    %2879 = vmatmul.mubr.bf16.gmra.mxu0 %v2811
    %v2880 = vpop.f32.mrf.mxu0
    %v2881 = vadd.f32 0.0, %v2880
    %v2882 = vpop.f32.mrf.mxu0
    %v2883 = vpop.f32.mrf.mxu0
    %v2884 = vadd.f32 0.0, %v2883
    %v2885 = vpop.f32.mrf.mxu0
    %2886 = vmatprep.mubr.bf16.mxu0 0
    %2887 = vmatmul.mubr.bf16.gmra.mxu0 %v2814
    %v2888 = vpop.f32.mrf.mxu0
    %v2889 = vadd.f32 0.0, %v2888
    %v2890 = vpop.f32.mrf.mxu0
    %v2891 = vpop.f32.mrf.mxu0
    %v2892 = vadd.f32 0.0, %v2891
    %v2893 = vpop.f32.mrf.mxu0
    %2894 = vmatprep.mubr.bf16.mxu0 0
    %2895 = vmatmul.mubr.bf16.gmra.mxu0 %v2817
    %v2896 = vpop.f32.mrf.mxu0
    %v2897 = vadd.f32 0.0, %v2896
    %v2898 = vpop.f32.mrf.mxu0
    %v2899 = vpop.f32.mrf.mxu0
    %v2900 = vadd.f32 0.0, %v2899
    %v2901 = vpop.f32.mrf.mxu0
    %2902 = vmatprep.mubr.bf16.mxu0 0
    %2903 = vmatmul.mubr.bf16.gmra.mxu0 %v2820
    %v2904 = vpop.f32.mrf.mxu0
    %v2905 = vadd.f32 0.0, %v2904
    %v2906 = vpop.f32.mrf.mxu0
    %v2907 = vpop.f32.mrf.mxu0
    %v2908 = vadd.f32 0.0, %v2907
    %v2909 = vpop.f32.mrf.mxu0
    %2910 = vmatprep.mubr.bf16.mxu0 0
    %2911 = vmatmul.mubr.bf16.gmra.mxu0 %v2823
    %v2912 = vpop.f32.mrf.mxu0
    %v2913 = vadd.f32 0.0, %v2912
    %v2914 = vpop.f32.mrf.mxu0
    %v2915 = vpop.f32.mrf.mxu0
    %v2916 = vadd.f32 0.0, %v2915
    %v2917 = vpop.f32.mrf.mxu0
    %2918 = vmatprep.mubr.bf16.mxu0 0
    %2919 = vmatmul.mubr.bf16.gmra.mxu0 %v2826
    %v2920 = vpop.f32.mrf.mxu0
    %v2921 = vadd.f32 0.0, %v2920
    %v2922 = vpop.f32.mrf.mxu0
    %v2923 = vpop.f32.mrf.mxu0
    %v2924 = vadd.f32 0.0, %v2923
    %v2925 = vpop.f32.mrf.mxu0
    %2926 = vdwg.mxu0
    %v2927 = vmul.f32 %v2881, 0.25
    %v2928 = vmul.f32 %v2884, 0.25
    %v2929 = vmul.f32 %v2889, 0.25
    %v2930 = vmul.f32 %v2892, 0.25
    %v2931 = vmul.f32 %v2897, 0.25
    %v2932 = vmul.f32 %v2900, 0.25
    %v2933 = vmul.f32 %v2905, 0.25
    %v2934 = vmul.f32 %v2908, 0.25
    %v2935 = vmul.f32 %v2913, 0.25
    %v2936 = vmul.f32 %v2916, 0.25
    %v2937 = vmul.f32 %v2921, 0.25
    %v2938 = vmul.f32 %v2924, 0.25
    %v2939 = vadd.f32 %v2927, %v509
    %v2940 = vadd.f32 %v2928, %v510
    %v2941 = vadd.f32 %v2929, %v511
    %v2942 = vadd.f32 %v2930, %v512
    %v2943 = vadd.f32 %v2931, %v513
    %v2944 = vadd.f32 %v2932, %v514
    %v2945 = vadd.f32 %v2933, %v515
    %v2946 = vadd.f32 %v2934, %v516
    %v2947 = vadd.f32 %v2935, %v517
    %v2948 = vadd.f32 %v2936, %v518
    %v2949 = vadd.f32 %v2937, %v519
    %v2950 = vadd.f32 %v2938, %v520
    %v2951 = vsel %vm1005, %v2939, -inf
    %2952 = vmax.xlane.f32.xlu0 %v2951
    %v2953 = vpop.xlane.xlu0 %2952
    %v2954 = vsel %vm1005, %v2940, -inf
    %2955 = vmax.xlane.f32.xlu0 %v2954
    %v2956 = vpop.xlane.xlu0 %2955
    %v2957 = vsel %vm1005, %v2941, -inf
    %2958 = vmax.xlane.f32.xlu0 %v2957
    %v2959 = vpop.xlane.xlu0 %2958
    %v2960 = vsel %vm1005, %v2942, -inf
    %2961 = vmax.xlane.f32.xlu0 %v2960
    %v2962 = vpop.xlane.xlu0 %2961
    %v2963 = vsel %vm1005, %v2943, -inf
    %2964 = vmax.xlane.f32.xlu0 %v2963
    %v2965 = vpop.xlane.xlu0 %2964
    %v2966 = vsel %vm1005, %v2944, -inf
    %2967 = vmax.xlane.f32.xlu0 %v2966
    %v2968 = vpop.xlane.xlu0 %2967
    %v2969 = vsel %vm1005, %v2945, -inf
    %2970 = vmax.xlane.f32.xlu0 %v2969
    %v2971 = vpop.xlane.xlu0 %2970
    %v2972 = vsel %vm1005, %v2946, -inf
    %2973 = vmax.xlane.f32.xlu0 %v2972
    %v2974 = vpop.xlane.xlu0 %2973
    %v2975 = vsel %vm1005, %v2947, -inf
    %2976 = vmax.xlane.f32.xlu0 %v2975
    %v2977 = vpop.xlane.xlu0 %2976
    %v2978 = vsel %vm1005, %v2948, -inf
    %2979 = vmax.xlane.f32.xlu0 %v2978
    %v2980 = vpop.xlane.xlu0 %2979
    %v2981 = vsel %vm1005, %v2949, -inf
    %2982 = vmax.xlane.f32.xlu0 %v2981
    %v2983 = vpop.xlane.xlu0 %2982
    %v2984 = vsel %vm1005, %v2950, -inf
    %2985 = vmax.xlane.f32.xlu0 %v2984
    %v2986 = vpop.xlane.xlu0 %2985
    %v2987 = vsub.f32 %v2939, %v2953
    %v2988 = vsub.f32 %v2940, %v2956
    %v2989 = vsub.f32 %v2941, %v2959
    %v2990 = vsub.f32 %v2942, %v2962
    %v2991 = vsub.f32 %v2943, %v2965
    %v2992 = vsub.f32 %v2944, %v2968
    %v2993 = vsub.f32 %v2945, %v2971
    %v2994 = vsub.f32 %v2946, %v2974
    %v2995 = vsub.f32 %v2947, %v2977
    %v2996 = vsub.f32 %v2948, %v2980
    %v2997 = vsub.f32 %v2949, %v2983
    %v2998 = vsub.f32 %v2950, %v2986
    %v2999 = vmul.f32 %v2987, 1.442695
    %v3000 = vpow.pop %v2999
    %v3001 = vmul.f32 %v2988, 1.442695
    %v3002 = vpow.pop %v3001
    %v3003 = vmul.f32 %v2989, 1.442695
    %v3004 = vpow.pop %v3003
    %v3005 = vmul.f32 %v2990, 1.442695
    %v3006 = vpow.pop %v3005
    %v3007 = vmul.f32 %v2991, 1.442695
    %v3008 = vpow.pop %v3007
    %v3009 = vmul.f32 %v2992, 1.442695
    %v3010 = vpow.pop %v3009
    %v3011 = vmul.f32 %v2993, 1.442695
    %v3012 = vpow.pop %v3011
    %v3013 = vmul.f32 %v2994, 1.442695
    %v3014 = vpow.pop %v3013
    %v3015 = vmul.f32 %v2995, 1.442695
    %v3016 = vpow.pop %v3015
    %v3017 = vmul.f32 %v2996, 1.442695
    %v3018 = vpow.pop %v3017
    %v3019 = vmul.f32 %v2997, 1.442695
    %v3020 = vpow.pop %v3019
    %v3021 = vmul.f32 %v2998, 1.442695
    %v3022 = vpow.pop %v3021
    %v3023 = vsel %vm1005, %v3000, 0.0
    %3024 = vadd.xlane.f32.xlu0 %v3023
    %v3025 = vpop.xlane.xlu0 %3024
    %v3026 = vsel %vm1005, %v3002, 0.0
    %3027 = vadd.xlane.f32.xlu0 %v3026
    %v3028 = vpop.xlane.xlu0 %3027
    %v3029 = vsel %vm1005, %v3004, 0.0
    %3030 = vadd.xlane.f32.xlu0 %v3029
    %v3031 = vpop.xlane.xlu0 %3030
    %v3032 = vsel %vm1005, %v3006, 0.0
    %3033 = vadd.xlane.f32.xlu0 %v3032
    %v3034 = vpop.xlane.xlu0 %3033
    %v3035 = vsel %vm1005, %v3008, 0.0
    %3036 = vadd.xlane.f32.xlu0 %v3035
    %v3037 = vpop.xlane.xlu0 %3036
    %v3038 = vsel %vm1005, %v3010, 0.0
    %3039 = vadd.xlane.f32.xlu0 %v3038
    %v3040 = vpop.xlane.xlu0 %3039
    %v3041 = vsel %vm1005, %v3012, 0.0
    %3042 = vadd.xlane.f32.xlu0 %v3041
    %v3043 = vpop.xlane.xlu0 %3042
    %v3044 = vsel %vm1005, %v3014, 0.0
    %3045 = vadd.xlane.f32.xlu0 %v3044
    %v3046 = vpop.xlane.xlu0 %3045
    %v3047 = vsel %vm1005, %v3016, 0.0
    %3048 = vadd.xlane.f32.xlu0 %v3047
    %v3049 = vpop.xlane.xlu0 %3048
    %v3050 = vsel %vm1005, %v3018, 0.0
    %3051 = vadd.xlane.f32.xlu0 %v3050
    %v3052 = vpop.xlane.xlu0 %3051
    %v3053 = vsel %vm1005, %v3020, 0.0
    %3054 = vadd.xlane.f32.xlu0 %v3053
    %v3055 = vpop.xlane.xlu0 %3054
    %v3056 = vsel %vm1005, %v3022, 0.0
    %3057 = vadd.xlane.f32.xlu0 %v3056
    %v3058 = vpop.xlane.xlu0 %3057
    %v3059 = vrcp.pop %v3025
    %v3060 = vrcp.pop %v3028
    %v3061 = vrcp.pop %v3031
    %v3062 = vrcp.pop %v3034
    %v3063 = vrcp.pop %v3037
    %v3064 = vrcp.pop %v3040
    %v3065 = vrcp.pop %v3043
    %v3066 = vrcp.pop %v3046
    %v3067 = vrcp.pop %v3049
    %v3068 = vrcp.pop %v3052
    %v3069 = vrcp.pop %v3055
    %v3070 = vrcp.pop %v3058
    %v3071 = vmul.f32 %v3000, %v3059
    %v3072 = vmul.f32 %v3002, %v3060
    %v3073 = vmul.f32 %v3004, %v3061
    %v3074 = vmul.f32 %v3006, %v3062
    %v3075 = vmul.f32 %v3008, %v3063
    %v3076 = vmul.f32 %v3010, %v3064
    %v3077 = vmul.f32 %v3012, %v3065
    %v3078 = vmul.f32 %v3014, %v3066
    %v3079 = vmul.f32 %v3016, %v3067
    %v3080 = vmul.f32 %v3018, %v3068
    %v3081 = vmul.f32 %v3020, %v3069
    %v3082 = vmul.f32 %v3022, %v3070
    %v3083 = vpack.c.bf16 %v3072, %v3071
    %v3084 = vpack.c.bf16 %v3074, %v3073
    %v3085 = vpack.c.bf16 %v3076, %v3075
    %v3086 = vpack.c.bf16 %v3078, %v3077
    %v3087 = vpack.c.bf16 %v3080, %v3079
    %v3088 = vpack.c.bf16 %v3082, %v3081
    %3089 = vrot.lane.b32.xlu0 %v2786, 64
    %v3090 = vpop.permute.xlu0 %3089
    %3091 = vrot.lane.b32.xlu0 %v2787, 64
    %v3092 = vpop.permute.xlu0 %3091
    %3093 = vrot.lane.b32.xlu0 %v2788, 64
    %v3094 = vpop.permute.xlu0 %3093
    %3095 = vrot.lane.b32.xlu0 %v2789, 64
    %v3096 = vpop.permute.xlu0 %3095
    %3097 = vrot.lane.b32.xlu0 %v2790, 64
    %v3098 = vpop.permute.xlu0 %3097
    %3099 = vrot.lane.b32.xlu0 %v2791, 64
    %v3100 = vpop.permute.xlu0 %3099
    %v3108 = vsel %vm1005, %v3083, 0
    %v3111 = vsel %vm1005, %v3084, 0
    %v3114 = vsel %vm1005, %v3085, 0
    %v3117 = vsel %vm1005, %v3086, 0
    %v3120 = vsel %vm1005, %v3087, 0
    %v3123 = vsel %vm1005, %v3088, 0
    %3125 = vmatprep.subr.bf16.mxu0 0
    %3126 = vmatpush1.bf16.msra.mxu0 0
    %3127 = vmatprep.subr.bf16.mxu0 0
    %3128 = vmatpush1.bf16.msra.mxu0 0
    %3129 = vmatprep.subr.bf16.mxu0 0
    %3130 = vmatpush1.bf16.msra.mxu0 %v3100
    %3131 = vmatprep.subr.bf16.mxu0 0
    %3132 = vmatpush1.bf16.msra.mxu0 %v3098
    %3133 = vmatprep.subr.bf16.mxu0 0
    %3134 = vmatpush1.bf16.msra.mxu0 %v3096
    %3135 = vmatprep.subr.bf16.mxu0 0
    %3136 = vmatpush1.bf16.msra.mxu0 %v3094
    %3137 = vmatprep.subr.bf16.mxu0 0
    %3138 = vmatpush1.bf16.msra.mxu0 %v3092
    %3139 = vmatprep.subr.bf16.mxu0 0
    %3140 = vmatpush1.bf16.msra.mxu0 %v3090
    %3141 = vmatprep.subr.bf16.mxu0 0
    %3142 = vmatpush2.bf16.msra.mxu0 0
    %3143 = vmatprep.subr.bf16.mxu0 0
    %3144 = vmatpush2.bf16.msra.mxu0 0
    %3145 = vmatprep.subr.bf16.mxu0 0
    %3146 = vmatpush2.bf16.msra.mxu0 0
    %3147 = vmatprep.subr.bf16.mxu0 0
    %3148 = vmatpush2.bf16.msra.mxu0 0
    %3149 = vmatprep.subr.bf16.mxu0 0
    %3150 = vmatpush2.bf16.msra.mxu0 0
    %3151 = vmatprep.subr.bf16.mxu0 0
    %3152 = vmatpush2.bf16.msra.mxu0 0
    %3153 = vmatprep.subr.bf16.mxu0 0
    %3154 = vmatpush2.bf16.msra.mxu0 0
    %3155 = vmatprep.subr.bf16.mxu0 0
    %3156 = vmatpush2.bf16.msra.mxu0 0
    %3157 = vmatprep.mubr.bf16.mxu0 0
    %3158 = vmatmul.mubr.bf16.gmra.mxu0 %v3108
    %v3159 = vpop.f32.mrf.mxu0
    %v3160 = vadd.f32 0.0, %v3159
    %v3161 = vpop.f32.mrf.mxu0
    %v3162 = vpop.f32.mrf.mxu0
    %v3163 = vadd.f32 0.0, %v3162
    %v3164 = vpop.f32.mrf.mxu0
    %3165 = vmatprep.mubr.bf16.mxu0 0
    %3166 = vmatmul.mubr.bf16.gmra.mxu0 %v3111
    %v3167 = vpop.f32.mrf.mxu0
    %v3168 = vadd.f32 0.0, %v3167
    %v3169 = vpop.f32.mrf.mxu0
    %v3170 = vpop.f32.mrf.mxu0
    %v3171 = vadd.f32 0.0, %v3170
    %v3172 = vpop.f32.mrf.mxu0
    %3173 = vmatprep.mubr.bf16.mxu0 0
    %3174 = vmatmul.mubr.bf16.gmra.mxu0 %v3114
    %v3175 = vpop.f32.mrf.mxu0
    %v3176 = vadd.f32 0.0, %v3175
    %v3177 = vpop.f32.mrf.mxu0
    %v3178 = vpop.f32.mrf.mxu0
    %v3179 = vadd.f32 0.0, %v3178
    %v3180 = vpop.f32.mrf.mxu0
    %3181 = vmatprep.mubr.bf16.mxu0 0
    %3182 = vmatmul.mubr.bf16.gmra.mxu0 %v3117
    %v3183 = vpop.f32.mrf.mxu0
    %v3184 = vadd.f32 0.0, %v3183
    %v3185 = vpop.f32.mrf.mxu0
    %v3186 = vpop.f32.mrf.mxu0
    %v3187 = vadd.f32 0.0, %v3186
    %v3188 = vpop.f32.mrf.mxu0
    %3189 = vmatprep.mubr.bf16.mxu0 0
    %3190 = vmatmul.mubr.bf16.gmra.mxu0 %v3120
    %v3191 = vpop.f32.mrf.mxu0
    %v3192 = vadd.f32 0.0, %v3191
    %v3193 = vpop.f32.mrf.mxu0
    %v3194 = vpop.f32.mrf.mxu0
    %v3195 = vadd.f32 0.0, %v3194
    %v3196 = vpop.f32.mrf.mxu0
    %3197 = vmatprep.mubr.bf16.mxu0 0
    %3198 = vmatmul.mubr.bf16.gmra.mxu0 %v3123
    %v3199 = vpop.f32.mrf.mxu0
    %v3200 = vadd.f32 0.0, %v3199
    %v3201 = vpop.f32.mrf.mxu0
    %v3202 = vpop.f32.mrf.mxu0
    %v3203 = vadd.f32 0.0, %v3202
    %v3204 = vpop.f32.mrf.mxu0
    %3205 = vdwg.mxu0
    %3206 = vrot.lane.b32.xlu0 %v2786, 112
    %v3207 = vpop.permute.xlu0 %3206
    %3208 = vrot.lane.b32.xlu0 %v2787, 112
    %v3209 = vpop.permute.xlu0 %3208
    %3210 = vrot.lane.b32.xlu0 %v2788, 112
    %v3211 = vpop.permute.xlu0 %3210
    %3212 = vrot.lane.b32.xlu0 %v2789, 112
    %v3213 = vpop.permute.xlu0 %3212
    %3214 = vrot.lane.b32.xlu0 %v2790, 112
    %v3215 = vpop.permute.xlu0 %3214
    %3216 = vrot.lane.b32.xlu0 %v2791, 112
    %v3217 = vpop.permute.xlu0 %3216
    %3218 = vrot.lane.b32.xlu0 %v2786, 80
    %v3219 = vpop.permute.xlu0 %3218
    %3220 = vrot.lane.b32.xlu0 %v2787, 80
    %v3221 = vpop.permute.xlu0 %3220
    %3222 = vrot.lane.b32.xlu0 %v2788, 80
    %v3223 = vpop.permute.xlu0 %3222
    %3224 = vrot.lane.b32.xlu0 %v2789, 80
    %v3225 = vpop.permute.xlu0 %3224
    %3226 = vrot.lane.b32.xlu0 %v2790, 80
    %v3227 = vpop.permute.xlu0 %3226
    %3228 = vrot.lane.b32.xlu0 %v2791, 80
    %v3229 = vpop.permute.xlu0 %3228
    %v3231 = vsel %vm863, %v3207, 0
    %v3234 = vsel %vm863, %v3209, 0
    %v3237 = vsel %vm863, %v3211, 0
    %v3240 = vsel %vm863, %v3213, 0
    %v3243 = vsel %vm863, %v3215, 0
    %v3246 = vsel %vm863, %v3217, 0
    %v3249 = vsel %vm863, %v3219, 0
    %v3252 = vsel %vm863, %v3221, 0
    %v3255 = vsel %vm863, %v3223, 0
    %v3258 = vsel %vm863, %v3225, 0
    %v3261 = vsel %vm863, %v3227, 0
    %v3264 = vsel %vm863, %v3229, 0
    %3266 = vmatprep.subr.bf16.mxu0 0
    %3267 = vmatpush1.bf16.xpose.msra.mxu0 0
    %3268 = vmatprep.subr.bf16.mxu0 0
    %3269 = vmatpush1.bf16.xpose.msra.mxu0 0
    %3270 = vmatprep.subr.bf16.mxu0 0
    %3271 = vmatpush1.bf16.xpose.msra.mxu0 %v3264
    %3272 = vmatprep.subr.bf16.mxu0 0
    %3273 = vmatpush1.bf16.xpose.msra.mxu0 %v3261
    %3274 = vmatprep.subr.bf16.mxu0 0
    %3275 = vmatpush1.bf16.xpose.msra.mxu0 %v3258
    %3276 = vmatprep.subr.bf16.mxu0 0
    %3277 = vmatpush1.bf16.xpose.msra.mxu0 %v3255
    %3278 = vmatprep.subr.bf16.mxu0 0
    %3279 = vmatpush1.bf16.xpose.msra.mxu0 %v3252
    %3280 = vmatprep.subr.bf16.mxu0 0
    %3281 = vmatpush1.bf16.xpose.msra.mxu0 %v3249
    %3282 = vmatprep.subr.bf16.mxu0 0
    %3283 = vmatpush2.bf16.xpose.msra.mxu0 0
    %3284 = vmatprep.subr.bf16.mxu0 0
    %3285 = vmatpush2.bf16.xpose.msra.mxu0 0
    %3286 = vmatprep.subr.bf16.mxu0 0
    %3287 = vmatpush2.bf16.xpose.msra.mxu0 0
    %3288 = vmatprep.subr.bf16.mxu0 0
    %3289 = vmatpush2.bf16.xpose.msra.mxu0 0
    %3290 = vmatprep.subr.bf16.mxu0 0
    %3291 = vmatpush2.bf16.xpose.msra.mxu0 0
    %3292 = vmatprep.subr.bf16.mxu0 0
    %3293 = vmatpush2.bf16.xpose.msra.mxu0 0
    %3294 = vmatprep.subr.bf16.mxu0 0
    %3295 = vmatpush2.bf16.xpose.msra.mxu0 0
    %3296 = vmatprep.subr.bf16.mxu0 0
    %3297 = vmatpush2.bf16.xpose.msra.mxu0 0
    %3298 = vmatprep.mubr.bf16.mxu0 0
    %3299 = vmatmul.mubr.bf16.gmra.mxu0 %v3231
    %v3300 = vpop.f32.mrf.mxu0
    %v3301 = vadd.f32 0.0, %v3300
    %v3302 = vpop.f32.mrf.mxu0
    %v3303 = vpop.f32.mrf.mxu0
    %v3304 = vadd.f32 0.0, %v3303
    %v3305 = vpop.f32.mrf.mxu0
    %3306 = vmatprep.mubr.bf16.mxu0 0
    %3307 = vmatmul.mubr.bf16.gmra.mxu0 %v3234
    %v3308 = vpop.f32.mrf.mxu0
    %v3309 = vadd.f32 0.0, %v3308
    %v3310 = vpop.f32.mrf.mxu0
    %v3311 = vpop.f32.mrf.mxu0
    %v3312 = vadd.f32 0.0, %v3311
    %v3313 = vpop.f32.mrf.mxu0
    %3314 = vmatprep.mubr.bf16.mxu0 0
    %3315 = vmatmul.mubr.bf16.gmra.mxu0 %v3237
    %v3316 = vpop.f32.mrf.mxu0
    %v3317 = vadd.f32 0.0, %v3316
    %v3318 = vpop.f32.mrf.mxu0
    %v3319 = vpop.f32.mrf.mxu0
    %v3320 = vadd.f32 0.0, %v3319
    %v3321 = vpop.f32.mrf.mxu0
    %3322 = vmatprep.mubr.bf16.mxu0 0
    %3323 = vmatmul.mubr.bf16.gmra.mxu0 %v3240
    %v3324 = vpop.f32.mrf.mxu0
    %v3325 = vadd.f32 0.0, %v3324
    %v3326 = vpop.f32.mrf.mxu0
    %v3327 = vpop.f32.mrf.mxu0
    %v3328 = vadd.f32 0.0, %v3327
    %v3329 = vpop.f32.mrf.mxu0
    %3330 = vmatprep.mubr.bf16.mxu0 0
    %3331 = vmatmul.mubr.bf16.gmra.mxu0 %v3243
    %v3332 = vpop.f32.mrf.mxu0
    %v3333 = vadd.f32 0.0, %v3332
    %v3334 = vpop.f32.mrf.mxu0
    %v3335 = vpop.f32.mrf.mxu0
    %v3336 = vadd.f32 0.0, %v3335
    %v3337 = vpop.f32.mrf.mxu0
    %3338 = vmatprep.mubr.bf16.mxu0 0
    %3339 = vmatmul.mubr.bf16.gmra.mxu0 %v3246
    %v3340 = vpop.f32.mrf.mxu0
    %v3341 = vadd.f32 0.0, %v3340
    %v3342 = vpop.f32.mrf.mxu0
    %v3343 = vpop.f32.mrf.mxu0
    %v3344 = vadd.f32 0.0, %v3343
    %v3345 = vpop.f32.mrf.mxu0
    %3346 = vdwg.mxu0
    %v3347 = vmul.f32 %v3301, 0.25
    %v3348 = vmul.f32 %v3304, 0.25
    %v3349 = vmul.f32 %v3309, 0.25
    %v3350 = vmul.f32 %v3312, 0.25
    %v3351 = vmul.f32 %v3317, 0.25
    %v3352 = vmul.f32 %v3320, 0.25
    %v3353 = vmul.f32 %v3325, 0.25
    %v3354 = vmul.f32 %v3328, 0.25
    %v3355 = vmul.f32 %v3333, 0.25
    %v3356 = vmul.f32 %v3336, 0.25
    %v3357 = vmul.f32 %v3341, 0.25
    %v3358 = vmul.f32 %v3344, 0.25
    %v3359 = vadd.f32 %v3347, %v509
    %v3360 = vadd.f32 %v3348, %v510
    %v3361 = vadd.f32 %v3349, %v511
    %v3362 = vadd.f32 %v3350, %v512
    %v3363 = vadd.f32 %v3351, %v513
    %v3364 = vadd.f32 %v3352, %v514
    %v3365 = vadd.f32 %v3353, %v515
    %v3366 = vadd.f32 %v3354, %v516
    %v3367 = vadd.f32 %v3355, %v517
    %v3368 = vadd.f32 %v3356, %v518
    %v3369 = vadd.f32 %v3357, %v519
    %v3370 = vadd.f32 %v3358, %v520
    %v3371 = vsel %vm1005, %v3359, -inf
    %3372 = vmax.xlane.f32.xlu0 %v3371
    %v3373 = vpop.xlane.xlu0 %3372
    %v3374 = vsel %vm1005, %v3360, -inf
    %3375 = vmax.xlane.f32.xlu0 %v3374
    %v3376 = vpop.xlane.xlu0 %3375
    %v3377 = vsel %vm1005, %v3361, -inf
    %3378 = vmax.xlane.f32.xlu0 %v3377
    %v3379 = vpop.xlane.xlu0 %3378
    %v3380 = vsel %vm1005, %v3362, -inf
    %3381 = vmax.xlane.f32.xlu0 %v3380
    %v3382 = vpop.xlane.xlu0 %3381
    %v3383 = vsel %vm1005, %v3363, -inf
    %3384 = vmax.xlane.f32.xlu0 %v3383
    %v3385 = vpop.xlane.xlu0 %3384
    %v3386 = vsel %vm1005, %v3364, -inf
    %3387 = vmax.xlane.f32.xlu0 %v3386
    %v3388 = vpop.xlane.xlu0 %3387
    %v3389 = vsel %vm1005, %v3365, -inf
    %3390 = vmax.xlane.f32.xlu0 %v3389
    %v3391 = vpop.xlane.xlu0 %3390
    %v3392 = vsel %vm1005, %v3366, -inf
    %3393 = vmax.xlane.f32.xlu0 %v3392
    %v3394 = vpop.xlane.xlu0 %3393
    %v3395 = vsel %vm1005, %v3367, -inf
    %3396 = vmax.xlane.f32.xlu0 %v3395
    %v3397 = vpop.xlane.xlu0 %3396
    %v3398 = vsel %vm1005, %v3368, -inf
    %3399 = vmax.xlane.f32.xlu0 %v3398
    %v3400 = vpop.xlane.xlu0 %3399
    %v3401 = vsel %vm1005, %v3369, -inf
    %3402 = vmax.xlane.f32.xlu0 %v3401
    %v3403 = vpop.xlane.xlu0 %3402
    %v3404 = vsel %vm1005, %v3370, -inf
    %3405 = vmax.xlane.f32.xlu0 %v3404
    %v3406 = vpop.xlane.xlu0 %3405
    %v3407 = vsub.f32 %v3359, %v3373
    %v3408 = vsub.f32 %v3360, %v3376
    %v3409 = vsub.f32 %v3361, %v3379
    %v3410 = vsub.f32 %v3362, %v3382
    %v3411 = vsub.f32 %v3363, %v3385
    %v3412 = vsub.f32 %v3364, %v3388
    %v3413 = vsub.f32 %v3365, %v3391
    %v3414 = vsub.f32 %v3366, %v3394
    %v3415 = vsub.f32 %v3367, %v3397
    %v3416 = vsub.f32 %v3368, %v3400
    %v3417 = vsub.f32 %v3369, %v3403
    %v3418 = vsub.f32 %v3370, %v3406
    %v3419 = vmul.f32 %v3407, 1.442695
    %v3420 = vpow.pop %v3419
    %v3421 = vmul.f32 %v3408, 1.442695
    %v3422 = vpow.pop %v3421
    %v3423 = vmul.f32 %v3409, 1.442695
    %v3424 = vpow.pop %v3423
    %v3425 = vmul.f32 %v3410, 1.442695
    %v3426 = vpow.pop %v3425
    %v3427 = vmul.f32 %v3411, 1.442695
    %v3428 = vpow.pop %v3427
    %v3429 = vmul.f32 %v3412, 1.442695
    %v3430 = vpow.pop %v3429
    %v3431 = vmul.f32 %v3413, 1.442695
    %v3432 = vpow.pop %v3431
    %v3433 = vmul.f32 %v3414, 1.442695
    %v3434 = vpow.pop %v3433
    %v3435 = vmul.f32 %v3415, 1.442695
    %v3436 = vpow.pop %v3435
    %v3437 = vmul.f32 %v3416, 1.442695
    %v3438 = vpow.pop %v3437
    %v3439 = vmul.f32 %v3417, 1.442695
    %v3440 = vpow.pop %v3439
    %v3441 = vmul.f32 %v3418, 1.442695
    %v3442 = vpow.pop %v3441
    %v3443 = vsel %vm1005, %v3420, 0.0
    %3444 = vadd.xlane.f32.xlu0 %v3443
    %v3445 = vpop.xlane.xlu0 %3444
    %v3446 = vsel %vm1005, %v3422, 0.0
    %3447 = vadd.xlane.f32.xlu0 %v3446
    %v3448 = vpop.xlane.xlu0 %3447
    %v3449 = vsel %vm1005, %v3424, 0.0
    %3450 = vadd.xlane.f32.xlu0 %v3449
    %v3451 = vpop.xlane.xlu0 %3450
    %v3452 = vsel %vm1005, %v3426, 0.0
    %3453 = vadd.xlane.f32.xlu0 %v3452
    %v3454 = vpop.xlane.xlu0 %3453
    %v3455 = vsel %vm1005, %v3428, 0.0
    %3456 = vadd.xlane.f32.xlu0 %v3455
    %v3457 = vpop.xlane.xlu0 %3456
    %v3458 = vsel %vm1005, %v3430, 0.0
    %3459 = vadd.xlane.f32.xlu0 %v3458
    %v3460 = vpop.xlane.xlu0 %3459
    %v3461 = vsel %vm1005, %v3432, 0.0
    %3462 = vadd.xlane.f32.xlu0 %v3461
    %v3463 = vpop.xlane.xlu0 %3462
    %v3464 = vsel %vm1005, %v3434, 0.0
    %3465 = vadd.xlane.f32.xlu0 %v3464
    %v3466 = vpop.xlane.xlu0 %3465
    %v3467 = vsel %vm1005, %v3436, 0.0
    %3468 = vadd.xlane.f32.xlu0 %v3467
    %v3469 = vpop.xlane.xlu0 %3468
    %v3470 = vsel %vm1005, %v3438, 0.0
    %3471 = vadd.xlane.f32.xlu0 %v3470
    %v3472 = vpop.xlane.xlu0 %3471
    %v3473 = vsel %vm1005, %v3440, 0.0
    %3474 = vadd.xlane.f32.xlu0 %v3473
    %v3475 = vpop.xlane.xlu0 %3474
    %v3476 = vsel %vm1005, %v3442, 0.0
    %3477 = vadd.xlane.f32.xlu0 %v3476
    %v3478 = vpop.xlane.xlu0 %3477
    %v3479 = vrcp.pop %v3445
    %v3480 = vrcp.pop %v3448
    %v3481 = vrcp.pop %v3451
    %v3482 = vrcp.pop %v3454
    %v3483 = vrcp.pop %v3457
    %v3484 = vrcp.pop %v3460
    %v3485 = vrcp.pop %v3463
    %v3486 = vrcp.pop %v3466
    %v3487 = vrcp.pop %v3469
    %v3488 = vrcp.pop %v3472
    %v3489 = vrcp.pop %v3475
    %v3490 = vrcp.pop %v3478
    %v3491 = vmul.f32 %v3420, %v3479
    %v3492 = vmul.f32 %v3422, %v3480
    %v3493 = vmul.f32 %v3424, %v3481
    %v3494 = vmul.f32 %v3426, %v3482
    %v3495 = vmul.f32 %v3428, %v3483
    %v3496 = vmul.f32 %v3430, %v3484
    %v3497 = vmul.f32 %v3432, %v3485
    %v3498 = vmul.f32 %v3434, %v3486
    %v3499 = vmul.f32 %v3436, %v3487
    %v3500 = vmul.f32 %v3438, %v3488
    %v3501 = vmul.f32 %v3440, %v3489
    %v3502 = vmul.f32 %v3442, %v3490
    %v3503 = vpack.c.bf16 %v3492, %v3491
    %v3504 = vpack.c.bf16 %v3494, %v3493
    %v3505 = vpack.c.bf16 %v3496, %v3495
    %v3506 = vpack.c.bf16 %v3498, %v3497
    %v3507 = vpack.c.bf16 %v3500, %v3499
    %v3508 = vpack.c.bf16 %v3502, %v3501
    %3509 = vrot.lane.b32.xlu0 %v2786, 48
    %v3510 = vpop.permute.xlu0 %3509
    %3511 = vrot.lane.b32.xlu0 %v2787, 48
    %v3512 = vpop.permute.xlu0 %3511
    %3513 = vrot.lane.b32.xlu0 %v2788, 48
    %v3514 = vpop.permute.xlu0 %3513
    %3515 = vrot.lane.b32.xlu0 %v2789, 48
    %v3516 = vpop.permute.xlu0 %3515
    %3517 = vrot.lane.b32.xlu0 %v2790, 48
    %v3518 = vpop.permute.xlu0 %3517
    %3519 = vrot.lane.b32.xlu0 %v2791, 48
    %v3520 = vpop.permute.xlu0 %3519
    %v3528 = vsel %vm1005, %v3503, 0
    %v3531 = vsel %vm1005, %v3504, 0
    %v3534 = vsel %vm1005, %v3505, 0
    %v3537 = vsel %vm1005, %v3506, 0
    %v3540 = vsel %vm1005, %v3507, 0
    %v3543 = vsel %vm1005, %v3508, 0
    %3545 = vmatprep.subr.bf16.mxu0 0
    %3546 = vmatpush1.bf16.msra.mxu0 0
    %3547 = vmatprep.subr.bf16.mxu0 0
    %3548 = vmatpush1.bf16.msra.mxu0 0
    %3549 = vmatprep.subr.bf16.mxu0 0
    %3550 = vmatpush1.bf16.msra.mxu0 %v3520
    %3551 = vmatprep.subr.bf16.mxu0 0
    %3552 = vmatpush1.bf16.msra.mxu0 %v3518
    %3553 = vmatprep.subr.bf16.mxu0 0
    %3554 = vmatpush1.bf16.msra.mxu0 %v3516
    %3555 = vmatprep.subr.bf16.mxu0 0
    %3556 = vmatpush1.bf16.msra.mxu0 %v3514
    %3557 = vmatprep.subr.bf16.mxu0 0
    %3558 = vmatpush1.bf16.msra.mxu0 %v3512
    %3559 = vmatprep.subr.bf16.mxu0 0
    %3560 = vmatpush1.bf16.msra.mxu0 %v3510
    %3561 = vmatprep.subr.bf16.mxu0 0
    %3562 = vmatpush2.bf16.msra.mxu0 0
    %3563 = vmatprep.subr.bf16.mxu0 0
    %3564 = vmatpush2.bf16.msra.mxu0 0
    %3565 = vmatprep.subr.bf16.mxu0 0
    %3566 = vmatpush2.bf16.msra.mxu0 0
    %3567 = vmatprep.subr.bf16.mxu0 0
    %3568 = vmatpush2.bf16.msra.mxu0 0
    %3569 = vmatprep.subr.bf16.mxu0 0
    %3570 = vmatpush2.bf16.msra.mxu0 0
    %3571 = vmatprep.subr.bf16.mxu0 0
    %3572 = vmatpush2.bf16.msra.mxu0 0
    %3573 = vmatprep.subr.bf16.mxu0 0
    %3574 = vmatpush2.bf16.msra.mxu0 0
    %3575 = vmatprep.subr.bf16.mxu0 0
    %3576 = vmatpush2.bf16.msra.mxu0 0
    %3577 = vmatprep.mubr.bf16.mxu0 0
    %3578 = vmatmul.mubr.bf16.gmra.mxu0 %v3528
    %v3579 = vpop.f32.mrf.mxu0
    %v3580 = vadd.f32 0.0, %v3579
    %v3581 = vpop.f32.mrf.mxu0
    %v3582 = vpop.f32.mrf.mxu0
    %v3583 = vadd.f32 0.0, %v3582
    %v3584 = vpop.f32.mrf.mxu0
    %3585 = vmatprep.mubr.bf16.mxu0 0
    %3586 = vmatmul.mubr.bf16.gmra.mxu0 %v3531
    %v3587 = vpop.f32.mrf.mxu0
    %v3588 = vadd.f32 0.0, %v3587
    %v3589 = vpop.f32.mrf.mxu0
    %v3590 = vpop.f32.mrf.mxu0
    %v3591 = vadd.f32 0.0, %v3590
    %v3592 = vpop.f32.mrf.mxu0
    %3593 = vmatprep.mubr.bf16.mxu0 0
    %3594 = vmatmul.mubr.bf16.gmra.mxu0 %v3534
    %v3595 = vpop.f32.mrf.mxu0
    %v3596 = vadd.f32 0.0, %v3595
    %v3597 = vpop.f32.mrf.mxu0
    %v3598 = vpop.f32.mrf.mxu0
    %v3599 = vadd.f32 0.0, %v3598
    %v3600 = vpop.f32.mrf.mxu0
    %3601 = vmatprep.mubr.bf16.mxu0 0
    %3602 = vmatmul.mubr.bf16.gmra.mxu0 %v3537
    %v3603 = vpop.f32.mrf.mxu0
    %v3604 = vadd.f32 0.0, %v3603
    %v3605 = vpop.f32.mrf.mxu0
    %v3606 = vpop.f32.mrf.mxu0
    %v3607 = vadd.f32 0.0, %v3606
    %v3608 = vpop.f32.mrf.mxu0
    %3609 = vmatprep.mubr.bf16.mxu0 0
    %3610 = vmatmul.mubr.bf16.gmra.mxu0 %v3540
    %v3611 = vpop.f32.mrf.mxu0
    %v3612 = vadd.f32 0.0, %v3611
    %v3613 = vpop.f32.mrf.mxu0
    %v3614 = vpop.f32.mrf.mxu0
    %v3615 = vadd.f32 0.0, %v3614
    %v3616 = vpop.f32.mrf.mxu0
    %3617 = vmatprep.mubr.bf16.mxu0 0
    %3618 = vmatmul.mubr.bf16.gmra.mxu0 %v3543
    %v3619 = vpop.f32.mrf.mxu0
    %v3620 = vadd.f32 0.0, %v3619
    %v3621 = vpop.f32.mrf.mxu0
    %v3622 = vpop.f32.mrf.mxu0
    %v3623 = vadd.f32 0.0, %v3622
    %v3624 = vpop.f32.mrf.mxu0
    %3625 = vdwg.mxu0
    %3638 = vrot.lane.b32.xlu0 %v3580, 16
    %v3639 = vpop.permute.xlu0 %3638
    %3640 = vrot.lane.b32.xlu0 %v3583, 16
    %v3641 = vpop.permute.xlu0 %3640
    %3642 = vrot.lane.b32.xlu0 %v3588, 16
    %v3643 = vpop.permute.xlu0 %3642
    %3644 = vrot.lane.b32.xlu0 %v3591, 16
    %v3645 = vpop.permute.xlu0 %3644
    %3646 = vrot.lane.b32.xlu0 %v3596, 16
    %v3647 = vpop.permute.xlu0 %3646
    %3648 = vrot.lane.b32.xlu0 %v3599, 16
    %v3649 = vpop.permute.xlu0 %3648
    %3650 = vrot.lane.b32.xlu0 %v3604, 16
    %v3651 = vpop.permute.xlu0 %3650
    %3652 = vrot.lane.b32.xlu0 %v3607, 16
    %v3653 = vpop.permute.xlu0 %3652
    %3654 = vrot.lane.b32.xlu0 %v3612, 16
    %v3655 = vpop.permute.xlu0 %3654
    %3656 = vrot.lane.b32.xlu0 %v3615, 16
    %v3657 = vpop.permute.xlu0 %3656
    %3658 = vrot.lane.b32.xlu0 %v3620, 16
    %v3659 = vpop.permute.xlu0 %3658
    %3660 = vrot.lane.b32.xlu0 %v3623, 16
    %v3661 = vpop.permute.xlu0 %3660
    %v3674 = vsel %vm863, %v3160, %v3639
    %v3675 = vsel %vm863, %v3163, %v3641
    %v3676 = vsel %vm863, %v3168, %v3643
    %v3677 = vsel %vm863, %v3171, %v3645
    %v3678 = vsel %vm863, %v3176, %v3647
    %v3679 = vsel %vm863, %v3179, %v3649
    %v3680 = vsel %vm863, %v3184, %v3651
    %v3681 = vsel %vm863, %v3187, %v3653
    %v3682 = vsel %vm863, %v3192, %v3655
    %v3683 = vsel %vm863, %v3195, %v3657
    %v3684 = vsel %vm863, %v3200, %v3659
    %v3685 = vsel %vm863, %v3203, %v3661
    %v3686 = vld [vmem:[%s3 + $0x60] sm:$0xf]
    %v3687 = vld [vmem:[%s3 + $0x64] sm:$0xf]
    %v3688 = vld [vmem:[%s3 + $0x68] sm:$0xf]
    %v3689 = vld [vmem:[%s3 + $0x6c] sm:$0xf]
    %v3690 = vpack.c.bf16 %v3675, %v3674
    %v3691 = vpack.c.bf16 %v3677, %v3676
    %v3692 = vpack.c.bf16 %v3679, %v3678
    %v3693 = vpack.c.bf16 %v3681, %v3680
    %v3694 = vpack.c.bf16 %v3683, %v3682
    %v3695 = vpack.c.bf16 %v3685, %v3684
    %v3700 = vunpack.c.l.b16 %v3686
    %v3701 = vunpack.c.l.b16 %v3687
    %v3702 = vunpack.c.l.b16 %v3688
    %v3703 = vunpack.c.l.b16 %v3689
    %v3704 = vpack.c.b16 %v3701, %v3700
    %v3705 = vpack.c.b16 %v3703, %v3702
    %v3709 = vsel %vm523, %v3690, 0
    %v3712 = vsel %vm523, %v3691, 0
    %v3715 = vsel %vm523, %v3692, 0
    %v3718 = vsel %vm523, %v3693, 0
    %v3721 = vsel %vm523, %v3694, 0
    %v3724 = vsel %vm523, %v3695, 0
    %3726 = vmatprep.subr.bf16.mxu0 0
    %3727 = vmatpush1.bf16.msra.mxu0 0
    %3728 = vmatprep.subr.bf16.mxu0 0
    %3729 = vmatpush1.bf16.msra.mxu0 0
    %3730 = vmatprep.subr.bf16.mxu0 0
    %3731 = vmatpush1.bf16.msra.mxu0 0
    %3732 = vmatprep.subr.bf16.mxu0 0
    %3733 = vmatpush1.bf16.msra.mxu0 0
    %3734 = vmatprep.subr.bf16.mxu0 0
    %3735 = vmatpush1.bf16.msra.mxu0 0
    %3736 = vmatprep.subr.bf16.mxu0 0
    %3737 = vmatpush1.bf16.msra.mxu0 0
    %3738 = vmatprep.subr.bf16.mxu0 0
    %3739 = vmatpush1.bf16.msra.mxu0 %v3705
    %3740 = vmatprep.subr.bf16.mxu0 0
    %3741 = vmatpush1.bf16.msra.mxu0 %v3704
    %3742 = vmatprep.subr.bf16.mxu0 0
    %3743 = vmatpush2.bf16.msra.mxu0 0
    %3744 = vmatprep.subr.bf16.mxu0 0
    %3745 = vmatpush2.bf16.msra.mxu0 0
    %3746 = vmatprep.subr.bf16.mxu0 0
    %3747 = vmatpush2.bf16.msra.mxu0 0
    %3748 = vmatprep.subr.bf16.mxu0 0
    %3749 = vmatpush2.bf16.msra.mxu0 0
    %3750 = vmatprep.subr.bf16.mxu0 0
    %3751 = vmatpush2.bf16.msra.mxu0 0
    %3752 = vmatprep.subr.bf16.mxu0 0
    %3753 = vmatpush2.bf16.msra.mxu0 0
    %3754 = vmatprep.subr.bf16.mxu0 0
    %3755 = vmatpush2.bf16.msra.mxu0 0
    %3756 = vmatprep.subr.bf16.mxu0 0
    %3757 = vmatpush2.bf16.msra.mxu0 0
    %3758 = vmatprep.mubr.bf16.mxu0 0
    %3759 = vmatmul.mubr.bf16.gmra.mxu0 %v3709
    %v3760 = vpop.f32.mrf.mxu0
    %v3761 = vadd.f32 0.0, %v3760
    %v3762 = vpop.f32.mrf.mxu0
    %v3763 = vpop.f32.mrf.mxu0
    %v3764 = vadd.f32 0.0, %v3763
    %v3765 = vpop.f32.mrf.mxu0
    %3766 = vmatprep.mubr.bf16.mxu0 0
    %3767 = vmatmul.mubr.bf16.gmra.mxu0 %v3712
    %v3768 = vpop.f32.mrf.mxu0
    %v3769 = vadd.f32 0.0, %v3768
    %v3770 = vpop.f32.mrf.mxu0
    %v3771 = vpop.f32.mrf.mxu0
    %v3772 = vadd.f32 0.0, %v3771
    %v3773 = vpop.f32.mrf.mxu0
    %3774 = vmatprep.mubr.bf16.mxu0 0
    %3775 = vmatmul.mubr.bf16.gmra.mxu0 %v3715
    %v3776 = vpop.f32.mrf.mxu0
    %v3777 = vadd.f32 0.0, %v3776
    %v3778 = vpop.f32.mrf.mxu0
    %v3779 = vpop.f32.mrf.mxu0
    %v3780 = vadd.f32 0.0, %v3779
    %v3781 = vpop.f32.mrf.mxu0
    %3782 = vmatprep.mubr.bf16.mxu0 0
    %3783 = vmatmul.mubr.bf16.gmra.mxu0 %v3718
    %v3784 = vpop.f32.mrf.mxu0
    %v3785 = vadd.f32 0.0, %v3784
    %v3786 = vpop.f32.mrf.mxu0
    %v3787 = vpop.f32.mrf.mxu0
    %v3788 = vadd.f32 0.0, %v3787
    %v3789 = vpop.f32.mrf.mxu0
    %3790 = vmatprep.mubr.bf16.mxu0 0
    %3791 = vmatmul.mubr.bf16.gmra.mxu0 %v3721
    %v3792 = vpop.f32.mrf.mxu0
    %v3793 = vadd.f32 0.0, %v3792
    %v3794 = vpop.f32.mrf.mxu0
    %v3795 = vpop.f32.mrf.mxu0
    %v3796 = vadd.f32 0.0, %v3795
    %v3797 = vpop.f32.mrf.mxu0
    %3798 = vmatprep.mubr.bf16.mxu0 0
    %3799 = vmatmul.mubr.bf16.gmra.mxu0 %v3724
    %v3800 = vpop.f32.mrf.mxu0
    %v3801 = vadd.f32 0.0, %v3800
    %v3802 = vpop.f32.mrf.mxu0
    %v3803 = vpop.f32.mrf.mxu0
    %v3804 = vadd.f32 0.0, %v3803
    %v3805 = vpop.f32.mrf.mxu0
    %3806 = vdwg.mxu0
    %v3807 = vadd.f32 %v2458, %v3761
    %v3808 = vadd.f32 %v2459, %v3764
    %v3809 = vadd.f32 %v2460, %v3769
    %v3810 = vadd.f32 %v2461, %v3772
    %v3811 = vadd.f32 %v2462, %v3777
    %v3812 = vadd.f32 %v2463, %v3780
    %v3813 = vadd.f32 %v2464, %v3785
    %v3814 = vadd.f32 %v2465, %v3788
    %v3815 = vadd.f32 %v2466, %v3793
    %v3816 = vadd.f32 %v2467, %v3796
    %v3817 = vadd.f32 %v2468, %v3801
    %v3818 = vadd.f32 %v2469, %v3804
    %v3819 = vld [vmem:[%s4 + $0xb] sm:$0x1]
    %v3820 = vlaneseq
    %v3821 = vshrl.u32 %v3820, 7
    %v3822 = vsub.s32 0, %v3821
    %v3823 = vrot.slane %v3819, %v3822
    %v3824 = vadd.f32 %v3807, %v3823
    %v3825 = vadd.f32 %v3808, %v3823
    %v3826 = vadd.f32 %v3809, %v3823
    %v3827 = vadd.f32 %v3810, %v3823
    %v3828 = vadd.f32 %v3811, %v3823
    %v3829 = vadd.f32 %v3812, %v3823
    %v3830 = vadd.f32 %v3813, %v3823
    %v3831 = vadd.f32 %v3814, %v3823
    %v3832 = vadd.f32 %v3815, %v3823
    %v3833 = vadd.f32 %v3816, %v3823
    %v3834 = vadd.f32 %v3817, %v3823
    %v3835 = vadd.f32 %v3818, %v3823
    %v3836 = vld [vmem:[%s4 + $0xc] sm:$0x1]
    %v3837 = vld [vmem:[%s4 + $0xd] sm:$0x1]
    %v3838 = vsel %vm523, %v3824, 0.0
    %3839 = vadd.xlane.f32.xlu0 %v3838
    %v3840 = vpop.xlane.xlu0 %3839
    %v3841 = vsel %vm523, %v3825, 0.0
    %3842 = vadd.xlane.f32.xlu0 %v3841
    %v3843 = vpop.xlane.xlu0 %3842
    %v3844 = vsel %vm523, %v3826, 0.0
    %3845 = vadd.xlane.f32.xlu0 %v3844
    %v3846 = vpop.xlane.xlu0 %3845
    %v3847 = vsel %vm523, %v3827, 0.0
    %3848 = vadd.xlane.f32.xlu0 %v3847
    %v3849 = vpop.xlane.xlu0 %3848
    %v3850 = vsel %vm523, %v3828, 0.0
    %3851 = vadd.xlane.f32.xlu0 %v3850
    %v3852 = vpop.xlane.xlu0 %3851
    %v3853 = vsel %vm523, %v3829, 0.0
    %3854 = vadd.xlane.f32.xlu0 %v3853
    %v3855 = vpop.xlane.xlu0 %3854
    %v3856 = vsel %vm523, %v3830, 0.0
    %3857 = vadd.xlane.f32.xlu0 %v3856
    %v3858 = vpop.xlane.xlu0 %3857
    %v3859 = vsel %vm523, %v3831, 0.0
    %3860 = vadd.xlane.f32.xlu0 %v3859
    %v3861 = vpop.xlane.xlu0 %3860
    %v3862 = vsel %vm523, %v3832, 0.0
    %3863 = vadd.xlane.f32.xlu0 %v3862
    %v3864 = vpop.xlane.xlu0 %3863
    %v3865 = vsel %vm523, %v3833, 0.0
    %3866 = vadd.xlane.f32.xlu0 %v3865
    %v3867 = vpop.xlane.xlu0 %3866
    %v3868 = vsel %vm523, %v3834, 0.0
    %3869 = vadd.xlane.f32.xlu0 %v3868
    %v3870 = vpop.xlane.xlu0 %3869
    %v3871 = vsel %vm523, %v3835, 0.0
    %3872 = vadd.xlane.f32.xlu0 %v3871
    %v3873 = vpop.xlane.xlu0 %3872
    %v3874 = vmul.f32 %v3840, %v560
    %v3875 = vmul.f32 %v3843, %v560
    %v3876 = vmul.f32 %v3846, %v560
    %v3877 = vmul.f32 %v3849, %v560
    %v3878 = vmul.f32 %v3852, %v560
    %v3879 = vmul.f32 %v3855, %v560
    %v3880 = vmul.f32 %v3858, %v560
    %v3881 = vmul.f32 %v3861, %v560
    %v3882 = vmul.f32 %v3864, %v560
    %v3883 = vmul.f32 %v3867, %v560
    %v3884 = vmul.f32 %v3870, %v560
    %v3885 = vmul.f32 %v3873, %v560
    %v3886 = vsub.f32 %v3824, %v3874
    %v3887 = vsub.f32 %v3825, %v3875
    %v3888 = vsub.f32 %v3826, %v3876
    %v3889 = vsub.f32 %v3827, %v3877
    %v3890 = vsub.f32 %v3828, %v3878
    %v3891 = vsub.f32 %v3829, %v3879
    %v3892 = vsub.f32 %v3830, %v3880
    %v3893 = vsub.f32 %v3831, %v3881
    %v3894 = vsub.f32 %v3832, %v3882
    %v3895 = vsub.f32 %v3833, %v3883
    %v3896 = vsub.f32 %v3834, %v3884
    %v3897 = vsub.f32 %v3835, %v3885
    %v3898 = vmul.f32 %v3886, %v3886
    %v3899 = vmul.f32 %v3887, %v3887
    %v3900 = vmul.f32 %v3888, %v3888
    %v3901 = vmul.f32 %v3889, %v3889
    %v3902 = vmul.f32 %v3890, %v3890
    %v3903 = vmul.f32 %v3891, %v3891
    %v3904 = vmul.f32 %v3892, %v3892
    %v3905 = vmul.f32 %v3893, %v3893
    %v3906 = vmul.f32 %v3894, %v3894
    %v3907 = vmul.f32 %v3895, %v3895
    %v3908 = vmul.f32 %v3896, %v3896
    %v3909 = vmul.f32 %v3897, %v3897
    %v3910 = vsel %vm523, %v3898, 0.0
    %3911 = vadd.xlane.f32.xlu0 %v3910
    %v3912 = vpop.xlane.xlu0 %3911
    %v3913 = vsel %vm523, %v3899, 0.0
    %3914 = vadd.xlane.f32.xlu0 %v3913
    %v3915 = vpop.xlane.xlu0 %3914
    %v3916 = vsel %vm523, %v3900, 0.0
    %3917 = vadd.xlane.f32.xlu0 %v3916
    %v3918 = vpop.xlane.xlu0 %3917
    %v3919 = vsel %vm523, %v3901, 0.0
    %3920 = vadd.xlane.f32.xlu0 %v3919
    %v3921 = vpop.xlane.xlu0 %3920
    %v3922 = vsel %vm523, %v3902, 0.0
    %3923 = vadd.xlane.f32.xlu0 %v3922
    %v3924 = vpop.xlane.xlu0 %3923
    %v3925 = vsel %vm523, %v3903, 0.0
    %3926 = vadd.xlane.f32.xlu0 %v3925
    %v3927 = vpop.xlane.xlu0 %3926
    %v3928 = vsel %vm523, %v3904, 0.0
    %3929 = vadd.xlane.f32.xlu0 %v3928
    %v3930 = vpop.xlane.xlu0 %3929
    %v3931 = vsel %vm523, %v3905, 0.0
    %3932 = vadd.xlane.f32.xlu0 %v3931
    %v3933 = vpop.xlane.xlu0 %3932
    %v3934 = vsel %vm523, %v3906, 0.0
    %3935 = vadd.xlane.f32.xlu0 %v3934
    %v3936 = vpop.xlane.xlu0 %3935
    %v3937 = vsel %vm523, %v3907, 0.0
    %3938 = vadd.xlane.f32.xlu0 %v3937
    %v3939 = vpop.xlane.xlu0 %3938
    %v3940 = vsel %vm523, %v3908, 0.0
    %3941 = vadd.xlane.f32.xlu0 %v3940
    %v3942 = vpop.xlane.xlu0 %3941
    %v3943 = vsel %vm523, %v3909, 0.0
    %3944 = vadd.xlane.f32.xlu0 %v3943
    %v3945 = vpop.xlane.xlu0 %3944
    %v3946 = vmul.f32 %v3912, %v560
    %v3947 = vmul.f32 %v3915, %v560
    %v3948 = vmul.f32 %v3918, %v560
    %v3949 = vmul.f32 %v3921, %v560
    %v3950 = vmul.f32 %v3924, %v560
    %v3951 = vmul.f32 %v3927, %v560
    %v3952 = vmul.f32 %v3930, %v560
    %v3953 = vmul.f32 %v3933, %v560
    %v3954 = vmul.f32 %v3936, %v560
    %v3955 = vmul.f32 %v3939, %v560
    %v3956 = vmul.f32 %v3942, %v560
    %v3957 = vmul.f32 %v3945, %v560
    %v3958 = vadd.f32 %v3946, 1e-05
    %v3959 = vadd.f32 %v3947, 1e-05
    %v3960 = vadd.f32 %v3948, 1e-05
    %v3961 = vadd.f32 %v3949, 1e-05
    %v3962 = vadd.f32 %v3950, 1e-05
    %v3963 = vadd.f32 %v3951, 1e-05
    %v3964 = vadd.f32 %v3952, 1e-05
    %v3965 = vadd.f32 %v3953, 1e-05
    %v3966 = vadd.f32 %v3954, 1e-05
    %v3967 = vadd.f32 %v3955, 1e-05
    %v3968 = vadd.f32 %v3956, 1e-05
    %v3969 = vadd.f32 %v3957, 1e-05
    %v3970 = vrsqrt.pop %v3958
    %v3971 = vrsqrt.pop %v3959
    %v3972 = vrsqrt.pop %v3960
    %v3973 = vrsqrt.pop %v3961
    %v3974 = vrsqrt.pop %v3962
    %v3975 = vrsqrt.pop %v3963
    %v3976 = vrsqrt.pop %v3964
    %v3977 = vrsqrt.pop %v3965
    %v3978 = vrsqrt.pop %v3966
    %v3979 = vrsqrt.pop %v3967
    %v3980 = vrsqrt.pop %v3968
    %v3981 = vrsqrt.pop %v3969
    %v3982 = vmul.f32 %v3886, %v3970
    %v3983 = vmul.f32 %v3887, %v3971
    %v3984 = vmul.f32 %v3888, %v3972
    %v3985 = vmul.f32 %v3889, %v3973
    %v3986 = vmul.f32 %v3890, %v3974
    %v3987 = vmul.f32 %v3891, %v3975
    %v3988 = vmul.f32 %v3892, %v3976
    %v3989 = vmul.f32 %v3893, %v3977
    %v3990 = vmul.f32 %v3894, %v3978
    %v3991 = vmul.f32 %v3895, %v3979
    %v3992 = vmul.f32 %v3896, %v3980
    %v3993 = vmul.f32 %v3897, %v3981
    %v3994 = vlaneseq
    %v3995 = vshrl.u32 %v3994, 7
    %v3996 = vsub.s32 0, %v3995
    %v3997 = vrot.slane %v3836, %v3996
    %v3998 = vmul.f32 %v3982, %v3997
    %v3999 = vmul.f32 %v3983, %v3997
    %v4000 = vmul.f32 %v3984, %v3997
    %v4001 = vmul.f32 %v3985, %v3997
    %v4002 = vmul.f32 %v3986, %v3997
    %v4003 = vmul.f32 %v3987, %v3997
    %v4004 = vmul.f32 %v3988, %v3997
    %v4005 = vmul.f32 %v3989, %v3997
    %v4006 = vmul.f32 %v3990, %v3997
    %v4007 = vmul.f32 %v3991, %v3997
    %v4008 = vmul.f32 %v3992, %v3997
    %v4009 = vmul.f32 %v3993, %v3997
    %v4010 = vlaneseq
    %v4011 = vshrl.u32 %v4010, 7
    %v4012 = vsub.s32 0, %v4011
    %v4013 = vrot.slane %v3837, %v4012
    %v4014 = vadd.f32 %v3998, %v4013
    %v4015 = vadd.f32 %v3999, %v4013
    %v4016 = vadd.f32 %v4000, %v4013
    %v4017 = vadd.f32 %v4001, %v4013
    %v4018 = vadd.f32 %v4002, %v4013
    %v4019 = vadd.f32 %v4003, %v4013
    %v4020 = vadd.f32 %v4004, %v4013
    %v4021 = vadd.f32 %v4005, %v4013
    %v4022 = vadd.f32 %v4006, %v4013
    %v4023 = vadd.f32 %v4007, %v4013
    %v4024 = vadd.f32 %v4008, %v4013
    %v4025 = vadd.f32 %v4009, %v4013
    %v4026 = vld [vmem:[%s3 + $0x70] sm:$0xf]
    %v4027 = vld [vmem:[%s3 + $0x74] sm:$0xf]
    %v4028 = vld [vmem:[%s3 + $0x78] sm:$0xf]
    %v4029 = vld [vmem:[%s3 + $0x7c] sm:$0xf]
    %v4030 = vpack.c.bf16 %v4015, %v4014
    %v4031 = vpack.c.bf16 %v4017, %v4016
    %v4032 = vpack.c.bf16 %v4019, %v4018
    %v4033 = vpack.c.bf16 %v4021, %v4020
    %v4034 = vpack.c.bf16 %v4023, %v4022
    %v4035 = vpack.c.bf16 %v4025, %v4024
    %v4036 = vld [vmem:[%s4 + $0xe] sm:$0x1]
    %v4037 = vlaneseq
    %v4038 = vshrl.u32 %v4037, 7
    %v4039 = vsub.s32 0, %v4038
    %v4040 = vrot.slane %v4036, %v4039
    %v4045 = vunpack.c.l.b16 %v4026
    %v4046 = vunpack.c.l.b16 %v4027
    %v4047 = vunpack.c.l.b16 %v4028
    %v4048 = vunpack.c.l.b16 %v4029
    %v4049 = vpack.c.b16 %v4046, %v4045
    %v4050 = vpack.c.b16 %v4048, %v4047
    %v4054 = vsel %vm523, %v4030, 0
    %v4057 = vsel %vm523, %v4031, 0
    %v4060 = vsel %vm523, %v4032, 0
    %v4063 = vsel %vm523, %v4033, 0
    %v4066 = vsel %vm523, %v4034, 0
    %v4069 = vsel %vm523, %v4035, 0
    %4071 = vmatprep.subr.bf16.mxu0 0
    %4072 = vmatpush1.bf16.msra.mxu0 0
    %4073 = vmatprep.subr.bf16.mxu0 0
    %4074 = vmatpush1.bf16.msra.mxu0 0
    %4075 = vmatprep.subr.bf16.mxu0 0
    %4076 = vmatpush1.bf16.msra.mxu0 0
    %4077 = vmatprep.subr.bf16.mxu0 0
    %4078 = vmatpush1.bf16.msra.mxu0 0
    %4079 = vmatprep.subr.bf16.mxu0 0
    %4080 = vmatpush1.bf16.msra.mxu0 0
    %4081 = vmatprep.subr.bf16.mxu0 0
    %4082 = vmatpush1.bf16.msra.mxu0 0
    %4083 = vmatprep.subr.bf16.mxu0 0
    %4084 = vmatpush1.bf16.msra.mxu0 %v4050
    %4085 = vmatprep.subr.bf16.mxu0 0
    %4086 = vmatpush1.bf16.msra.mxu0 %v4049
    %4087 = vmatprep.subr.bf16.mxu0 0
    %4088 = vmatpush2.bf16.msra.mxu0 0
    %4089 = vmatprep.subr.bf16.mxu0 0
    %4090 = vmatpush2.bf16.msra.mxu0 0
    %4091 = vmatprep.subr.bf16.mxu0 0
    %4092 = vmatpush2.bf16.msra.mxu0 0
    %4093 = vmatprep.subr.bf16.mxu0 0
    %4094 = vmatpush2.bf16.msra.mxu0 0
    %4095 = vmatprep.subr.bf16.mxu0 0
    %4096 = vmatpush2.bf16.msra.mxu0 0
    %4097 = vmatprep.subr.bf16.mxu0 0
    %4098 = vmatpush2.bf16.msra.mxu0 0
    %4099 = vmatprep.subr.bf16.mxu0 0
    %4100 = vmatpush2.bf16.msra.mxu0 0
    %4101 = vmatprep.subr.bf16.mxu0 0
    %4102 = vmatpush2.bf16.msra.mxu0 0
    %4103 = vmatprep.mubr.bf16.mxu0 0
    %4104 = vmatmul.mubr.bf16.gmra.mxu0 %v4054
    %v4105 = vpop.f32.mrf.mxu0
    %v4106 = vadd.f32 %v4040, %v4105
    %v4107 = vpop.f32.mrf.mxu0
    %v4108 = vpop.f32.mrf.mxu0
    %v4109 = vadd.f32 %v4040, %v4108
    %v4110 = vpop.f32.mrf.mxu0
    %4111 = vmatprep.mubr.bf16.mxu0 0
    %4112 = vmatmul.mubr.bf16.gmra.mxu0 %v4057
    %v4113 = vpop.f32.mrf.mxu0
    %v4114 = vadd.f32 %v4040, %v4113
    %v4115 = vpop.f32.mrf.mxu0
    %v4116 = vpop.f32.mrf.mxu0
    %v4117 = vadd.f32 %v4040, %v4116
    %v4118 = vpop.f32.mrf.mxu0
    %4119 = vmatprep.mubr.bf16.mxu0 0
    %4120 = vmatmul.mubr.bf16.gmra.mxu0 %v4060
    %v4121 = vpop.f32.mrf.mxu0
    %v4122 = vadd.f32 %v4040, %v4121
    %v4123 = vpop.f32.mrf.mxu0
    %v4124 = vpop.f32.mrf.mxu0
    %v4125 = vadd.f32 %v4040, %v4124
    %v4126 = vpop.f32.mrf.mxu0
    %4127 = vmatprep.mubr.bf16.mxu0 0
    %4128 = vmatmul.mubr.bf16.gmra.mxu0 %v4063
    %v4129 = vpop.f32.mrf.mxu0
    %v4130 = vadd.f32 %v4040, %v4129
    %v4131 = vpop.f32.mrf.mxu0
    %v4132 = vpop.f32.mrf.mxu0
    %v4133 = vadd.f32 %v4040, %v4132
    %v4134 = vpop.f32.mrf.mxu0
    %4135 = vmatprep.mubr.bf16.mxu0 0
    %4136 = vmatmul.mubr.bf16.gmra.mxu0 %v4066
    %v4137 = vpop.f32.mrf.mxu0
    %v4138 = vadd.f32 %v4040, %v4137
    %v4139 = vpop.f32.mrf.mxu0
    %v4140 = vpop.f32.mrf.mxu0
    %v4141 = vadd.f32 %v4040, %v4140
    %v4142 = vpop.f32.mrf.mxu0
    %4143 = vmatprep.mubr.bf16.mxu0 0
    %4144 = vmatmul.mubr.bf16.gmra.mxu0 %v4069
    %v4145 = vpop.f32.mrf.mxu0
    %v4146 = vadd.f32 %v4040, %v4145
    %v4147 = vpop.f32.mrf.mxu0
    %v4148 = vpop.f32.mrf.mxu0
    %v4149 = vadd.f32 %v4040, %v4148
    %v4150 = vpop.f32.mrf.mxu0
    %4151 = vdwg.mxu0
    %v4152 = vmul.f32 %v4106, 1.702
    %v4153 = vmul.f32 %v4109, 1.702
    %v4154 = vmul.f32 %v4114, 1.702
    %v4155 = vmul.f32 %v4117, 1.702
    %v4156 = vmul.f32 %v4122, 1.702
    %v4157 = vmul.f32 %v4125, 1.702
    %v4158 = vmul.f32 %v4130, 1.702
    %v4159 = vmul.f32 %v4133, 1.702
    %v4160 = vmul.f32 %v4138, 1.702
    %v4161 = vmul.f32 %v4141, 1.702
    %v4162 = vmul.f32 %v4146, 1.702
    %v4163 = vmul.f32 %v4149, 1.702
    %v4164 = vxor.u32 %v4152, 2147483648
    %v4165 = vxor.u32 %v4153, 2147483648
    %v4166 = vxor.u32 %v4154, 2147483648
    %v4167 = vxor.u32 %v4155, 2147483648
    %v4168 = vxor.u32 %v4156, 2147483648
    %v4169 = vxor.u32 %v4157, 2147483648
    %v4170 = vxor.u32 %v4158, 2147483648
    %v4171 = vxor.u32 %v4159, 2147483648
    %v4172 = vxor.u32 %v4160, 2147483648
    %v4173 = vxor.u32 %v4161, 2147483648
    %v4174 = vxor.u32 %v4162, 2147483648
    %v4175 = vxor.u32 %v4163, 2147483648
    %v4176 = vmul.f32 %v4164, 1.442695
    %v4177 = vpow.pop %v4176
    %v4178 = vmul.f32 %v4165, 1.442695
    %v4179 = vpow.pop %v4178
    %v4180 = vmul.f32 %v4166, 1.442695
    %v4181 = vpow.pop %v4180
    %v4182 = vmul.f32 %v4167, 1.442695
    %v4183 = vpow.pop %v4182
    %v4184 = vmul.f32 %v4168, 1.442695
    %v4185 = vpow.pop %v4184
    %v4186 = vmul.f32 %v4169, 1.442695
    %v4187 = vpow.pop %v4186
    %v4188 = vmul.f32 %v4170, 1.442695
    %v4189 = vpow.pop %v4188
    %v4190 = vmul.f32 %v4171, 1.442695
    %v4191 = vpow.pop %v4190
    %v4192 = vmul.f32 %v4172, 1.442695
    %v4193 = vpow.pop %v4192
    %v4194 = vmul.f32 %v4173, 1.442695
    %v4195 = vpow.pop %v4194
    %v4196 = vmul.f32 %v4174, 1.442695
    %v4197 = vpow.pop %v4196
    %v4198 = vmul.f32 %v4175, 1.442695
    %v4199 = vpow.pop %v4198
    %v4200 = vadd.f32 %v4177, 1.0
    %v4201 = vadd.f32 %v4179, 1.0
    %v4202 = vadd.f32 %v4181, 1.0
    %v4203 = vadd.f32 %v4183, 1.0
    %v4204 = vadd.f32 %v4185, 1.0
    %v4205 = vadd.f32 %v4187, 1.0
    %v4206 = vadd.f32 %v4189, 1.0
    %v4207 = vadd.f32 %v4191, 1.0
    %v4208 = vadd.f32 %v4193, 1.0
    %v4209 = vadd.f32 %v4195, 1.0
    %v4210 = vadd.f32 %v4197, 1.0
    %v4211 = vadd.f32 %v4199, 1.0
    %v4212 = vrcp.pop %v4200
    %v4213 = vmul.f32 1.0, %v4212
    %v4214 = vrcp.pop %v4201
    %v4215 = vmul.f32 1.0, %v4214
    %v4216 = vrcp.pop %v4202
    %v4217 = vmul.f32 1.0, %v4216
    %v4218 = vrcp.pop %v4203
    %v4219 = vmul.f32 1.0, %v4218
    %v4220 = vrcp.pop %v4204
    %v4221 = vmul.f32 1.0, %v4220
    %v4222 = vrcp.pop %v4205
    %v4223 = vmul.f32 1.0, %v4222
    %v4224 = vrcp.pop %v4206
    %v4225 = vmul.f32 1.0, %v4224
    %v4226 = vrcp.pop %v4207
    %v4227 = vmul.f32 1.0, %v4226
    %v4228 = vrcp.pop %v4208
    %v4229 = vmul.f32 1.0, %v4228
    %v4230 = vrcp.pop %v4209
    %v4231 = vmul.f32 1.0, %v4230
    %v4232 = vrcp.pop %v4210
    %v4233 = vmul.f32 1.0, %v4232
    %v4234 = vrcp.pop %v4211
    %v4235 = vmul.f32 1.0, %v4234
    %v4236 = vmul.f32 %v4106, %v4213
    %v4237 = vmul.f32 %v4109, %v4215
    %v4238 = vmul.f32 %v4114, %v4217
    %v4239 = vmul.f32 %v4117, %v4219
    %v4240 = vmul.f32 %v4122, %v4221
    %v4241 = vmul.f32 %v4125, %v4223
    %v4242 = vmul.f32 %v4130, %v4225
    %v4243 = vmul.f32 %v4133, %v4227
    %v4244 = vmul.f32 %v4138, %v4229
    %v4245 = vmul.f32 %v4141, %v4231
    %v4246 = vmul.f32 %v4146, %v4233
    %v4247 = vmul.f32 %v4149, %v4235
    %v4248 = vld [vmem:[%s3 + $0x80] sm:$0xf]
    %v4249 = vld [vmem:[%s3 + $0x84] sm:$0xf]
    %v4250 = vld [vmem:[%s3 + $0x88] sm:$0xf]
    %v4251 = vld [vmem:[%s3 + $0x8c] sm:$0xf]
    %v4252 = vld [vmem:[%s3 + $0x90] sm:$0xf]
    %v4253 = vld [vmem:[%s3 + $0x94] sm:$0xf]
    %v4254 = vld [vmem:[%s3 + $0x98] sm:$0xf]
    %v4255 = vld [vmem:[%s3 + $0x9c] sm:$0xf]
    %v4256 = vpack.c.bf16 %v4237, %v4236
    %v4257 = vpack.c.bf16 %v4239, %v4238
    %v4258 = vpack.c.bf16 %v4241, %v4240
    %v4259 = vpack.c.bf16 %v4243, %v4242
    %v4260 = vpack.c.bf16 %v4245, %v4244
    %v4261 = vpack.c.bf16 %v4247, %v4246
    %v4270 = vunpack.c.l.b16 %v4248
    %v4271 = vunpack.c.l.b16 %v4249
    %v4272 = vunpack.c.l.b16 %v4250
    %v4273 = vunpack.c.l.b16 %v4251
    %v4274 = vunpack.c.l.b16 %v4252
    %v4275 = vunpack.c.l.b16 %v4253
    %v4276 = vunpack.c.l.b16 %v4254
    %v4277 = vunpack.c.l.b16 %v4255
    %v4278 = vpack.c.b16 %v4271, %v4270
    %v4279 = vpack.c.b16 %v4273, %v4272
    %v4280 = vpack.c.b16 %v4275, %v4274
    %v4281 = vpack.c.b16 %v4277, %v4276
    %v4287 = vsel %vm2341, %v4256, 0
    %v4290 = vsel %vm2341, %v4257, 0
    %v4293 = vsel %vm2341, %v4258, 0
    %v4296 = vsel %vm2341, %v4259, 0
    %v4299 = vsel %vm2341, %v4260, 0
    %v4302 = vsel %vm2341, %v4261, 0
    %4304 = vmatprep.subr.bf16.mxu0 0
    %4305 = vmatpush1.bf16.msra.mxu0 0
    %4306 = vmatprep.subr.bf16.mxu0 0
    %4307 = vmatpush1.bf16.msra.mxu0 0
    %4308 = vmatprep.subr.bf16.mxu0 0
    %4309 = vmatpush1.bf16.msra.mxu0 0
    %4310 = vmatprep.subr.bf16.mxu0 0
    %4311 = vmatpush1.bf16.msra.mxu0 0
    %4312 = vmatprep.subr.bf16.mxu0 0
    %4313 = vmatpush1.bf16.msra.mxu0 %v4281
    %4314 = vmatprep.subr.bf16.mxu0 0
    %4315 = vmatpush1.bf16.msra.mxu0 %v4280
    %4316 = vmatprep.subr.bf16.mxu0 0
    %4317 = vmatpush1.bf16.msra.mxu0 %v4279
    %4318 = vmatprep.subr.bf16.mxu0 0
    %4319 = vmatpush1.bf16.msra.mxu0 %v4278
    %4320 = vmatprep.subr.bf16.mxu0 0
    %4321 = vmatpush2.bf16.msra.mxu0 0
    %4322 = vmatprep.subr.bf16.mxu0 0
    %4323 = vmatpush2.bf16.msra.mxu0 0
    %4324 = vmatprep.subr.bf16.mxu0 0
    %4325 = vmatpush2.bf16.msra.mxu0 0
    %4326 = vmatprep.subr.bf16.mxu0 0
    %4327 = vmatpush2.bf16.msra.mxu0 0
    %4328 = vmatprep.subr.bf16.mxu0 0
    %4329 = vmatpush2.bf16.msra.mxu0 0
    %4330 = vmatprep.subr.bf16.mxu0 0
    %4331 = vmatpush2.bf16.msra.mxu0 0
    %4332 = vmatprep.subr.bf16.mxu0 0
    %4333 = vmatpush2.bf16.msra.mxu0 0
    %4334 = vmatprep.subr.bf16.mxu0 0
    %4335 = vmatpush2.bf16.msra.mxu0 0
    %4336 = vmatprep.mubr.bf16.mxu0 0
    %4337 = vmatmul.mubr.bf16.gmra.mxu0 %v4287
    %v4338 = vpop.f32.mrf.mxu0
    %v4339 = vadd.f32 0.0, %v4338
    %v4340 = vpop.f32.mrf.mxu0
    %v4341 = vpop.f32.mrf.mxu0
    %v4342 = vpop.f32.mrf.mxu0
    %4343 = vmatprep.mubr.bf16.mxu0 0
    %4344 = vmatmul.mubr.bf16.gmra.mxu0 %v4290
    %v4345 = vpop.f32.mrf.mxu0
    %v4346 = vadd.f32 0.0, %v4345
    %v4347 = vpop.f32.mrf.mxu0
    %v4348 = vpop.f32.mrf.mxu0
    %v4349 = vpop.f32.mrf.mxu0
    %4350 = vmatprep.mubr.bf16.mxu0 0
    %4351 = vmatmul.mubr.bf16.gmra.mxu0 %v4293
    %v4352 = vpop.f32.mrf.mxu0
    %v4353 = vpop.f32.mrf.mxu0
    %v4354 = vpop.f32.mrf.mxu0
    %v4355 = vadd.f32 0.0, %v4354
    %v4356 = vpop.f32.mrf.mxu0
    %4357 = vmatprep.mubr.bf16.mxu0 0
    %4358 = vmatmul.mubr.bf16.gmra.mxu0 %v4296
    %v4359 = vpop.f32.mrf.mxu0
    %v4360 = vadd.f32 0.0, %v4359
    %v4361 = vpop.f32.mrf.mxu0
    %v4362 = vpop.f32.mrf.mxu0
    %v4363 = vpop.f32.mrf.mxu0
    %4364 = vmatprep.mubr.bf16.mxu0 0
    %4365 = vmatmul.mubr.bf16.gmra.mxu0 %v4299
    %v4366 = vpop.f32.mrf.mxu0
    %v4367 = vadd.f32 0.0, %v4366
    %v4368 = vpop.f32.mrf.mxu0
    %v4369 = vpop.f32.mrf.mxu0
    %v4370 = vpop.f32.mrf.mxu0
    %4371 = vmatprep.mubr.bf16.mxu0 0
    %4372 = vmatmul.mubr.bf16.gmra.mxu0 %v4302
    %v4373 = vpop.f32.mrf.mxu0
    %v4374 = vpop.f32.mrf.mxu0
    %v4375 = vpop.f32.mrf.mxu0
    %v4376 = vadd.f32 0.0, %v4375
    %v4377 = vpop.f32.mrf.mxu0
    %4378 = vdwg.mxu0
    %v4379 = vadd.f32 %v3824, %v4339
    %v4380 = vadd.f32 %v3826, %v4346
    %v4381 = vadd.f32 %v3829, %v4355
    %v4382 = vadd.f32 %v3830, %v4360
    %v4383 = vadd.f32 %v3832, %v4367
    %v4384 = vadd.f32 %v3835, %v4376
    %v4385 = vld [vmem:[%s4 + $0xf] sm:$0x1]
    %v4386 = vlaneseq
    %v4387 = vshrl.u32 %v4386, 7
    %v4388 = vsub.s32 0, %v4387
    %v4389 = vrot.slane %v4385, %v4388
    %v4390 = vadd.f32 %v4379, %v4389
    %v4391 = vadd.f32 %v4380, %v4389
    %v4392 = vadd.f32 %v4381, %v4389
    %v4393 = vadd.f32 %v4382, %v4389
    %v4394 = vadd.f32 %v4383, %v4389
    %v4395 = vadd.f32 %v4384, %v4389
    %v4396 = vld [vmem:[%s4 + $0x10] sm:$0x1]
    %v4397 = vld [vmem:[%s4 + $0x11] sm:$0x1]
    %v4398 = vsel %vm523, %v4390, 0.0
    %4399 = vadd.xlane.f32.xlu0 %v4398
    %v4400 = vpop.xlane.xlu0 %4399
    %v4401 = vsel %vm523, %v4391, 0.0
    %4402 = vadd.xlane.f32.xlu0 %v4401
    %v4403 = vpop.xlane.xlu0 %4402
    %v4404 = vsel %vm523, %v4392, 0.0
    %4405 = vadd.xlane.f32.xlu0 %v4404
    %v4406 = vpop.xlane.xlu0 %4405
    %v4407 = vsel %vm523, %v4393, 0.0
    %4408 = vadd.xlane.f32.xlu0 %v4407
    %v4409 = vpop.xlane.xlu0 %4408
    %v4410 = vsel %vm523, %v4394, 0.0
    %4411 = vadd.xlane.f32.xlu0 %v4410
    %v4412 = vpop.xlane.xlu0 %4411
    %v4413 = vsel %vm523, %v4395, 0.0
    %4414 = vadd.xlane.f32.xlu0 %v4413
    %v4415 = vpop.xlane.xlu0 %4414
    %v4416 = vmul.f32 %v4400, %v560
    %v4417 = vmul.f32 %v4403, %v560
    %v4418 = vmul.f32 %v4406, %v560
    %v4419 = vmul.f32 %v4409, %v560
    %v4420 = vmul.f32 %v4412, %v560
    %v4421 = vmul.f32 %v4415, %v560
    %v4422 = vsub.f32 %v4390, %v4416
    %v4423 = vsub.f32 %v4391, %v4417
    %v4424 = vsub.f32 %v4392, %v4418
    %v4425 = vsub.f32 %v4393, %v4419
    %v4426 = vsub.f32 %v4394, %v4420
    %v4427 = vsub.f32 %v4395, %v4421
    %v4428 = vmul.f32 %v4422, %v4422
    %v4429 = vmul.f32 %v4423, %v4423
    %v4430 = vmul.f32 %v4424, %v4424
    %v4431 = vmul.f32 %v4425, %v4425
    %v4432 = vmul.f32 %v4426, %v4426
    %v4433 = vmul.f32 %v4427, %v4427
    %v4434 = vsel %vm523, %v4428, 0.0
    %4435 = vadd.xlane.f32.xlu0 %v4434
    %v4436 = vpop.xlane.xlu0 %4435
    %v4437 = vsel %vm523, %v4429, 0.0
    %4438 = vadd.xlane.f32.xlu0 %v4437
    %v4439 = vpop.xlane.xlu0 %4438
    %v4440 = vsel %vm523, %v4430, 0.0
    %4441 = vadd.xlane.f32.xlu0 %v4440
    %v4442 = vpop.xlane.xlu0 %4441
    %v4443 = vsel %vm523, %v4431, 0.0
    %4444 = vadd.xlane.f32.xlu0 %v4443
    %v4445 = vpop.xlane.xlu0 %4444
    %v4446 = vsel %vm523, %v4432, 0.0
    %4447 = vadd.xlane.f32.xlu0 %v4446
    %v4448 = vpop.xlane.xlu0 %4447
    %v4449 = vsel %vm523, %v4433, 0.0
    %4450 = vadd.xlane.f32.xlu0 %v4449
    %v4451 = vpop.xlane.xlu0 %4450
    %v4452 = vmul.f32 %v4436, %v560
    %v4453 = vmul.f32 %v4439, %v560
    %v4454 = vmul.f32 %v4442, %v560
    %v4455 = vmul.f32 %v4445, %v560
    %v4456 = vmul.f32 %v4448, %v560
    %v4457 = vmul.f32 %v4451, %v560
    %v4458 = vadd.f32 %v4452, 1e-05
    %v4459 = vadd.f32 %v4453, 1e-05
    %v4460 = vadd.f32 %v4454, 1e-05
    %v4461 = vadd.f32 %v4455, 1e-05
    %v4462 = vadd.f32 %v4456, 1e-05
    %v4463 = vadd.f32 %v4457, 1e-05
    %v4464 = vrsqrt.pop %v4458
    %v4465 = vrsqrt.pop %v4459
    %v4466 = vrsqrt.pop %v4460
    %v4467 = vrsqrt.pop %v4461
    %v4468 = vrsqrt.pop %v4462
    %v4469 = vrsqrt.pop %v4463
    %v4470 = vmul.f32 %v4422, %v4464
    %v4471 = vmul.f32 %v4423, %v4465
    %v4472 = vmul.f32 %v4424, %v4466
    %v4473 = vmul.f32 %v4425, %v4467
    %v4474 = vmul.f32 %v4426, %v4468
    %v4475 = vmul.f32 %v4427, %v4469
    %v4476 = vlaneseq
    %v4477 = vshrl.u32 %v4476, 7
    %v4478 = vsub.s32 0, %v4477
    %v4479 = vrot.slane %v4396, %v4478
    %v4480 = vmul.f32 %v4470, %v4479
    %v4481 = vmul.f32 %v4471, %v4479
    %v4482 = vmul.f32 %v4472, %v4479
    %v4483 = vmul.f32 %v4473, %v4479
    %v4484 = vmul.f32 %v4474, %v4479
    %v4485 = vmul.f32 %v4475, %v4479
    %v4486 = vlaneseq
    %v4487 = vshrl.u32 %v4486, 7
    %v4488 = vsub.s32 0, %v4487
    %v4489 = vrot.slane %v4397, %v4488
    %v4490 = vadd.f32 %v4480, %v4489
    %v4491 = vadd.f32 %v4481, %v4489
    %v4492 = vadd.f32 %v4482, %v4489
    %v4493 = vadd.f32 %v4483, %v4489
    %v4494 = vadd.f32 %v4484, %v4489
    %v4495 = vadd.f32 %v4485, %v4489
    %v4497 = vrot.slane %v4490, 6
    %v4500 = vrot.slane %v4491, 6
    %v4503 = vrot.slane %v4492, 6
    %v4506 = vrot.slane %v4493, 3
    %v4509 = vrot.slane %v4494, 3
    %v4512 = vrot.slane %v4495, 3
    %vm4514 = vcmask 1040384
    %v4515 = vsel %vm4514, %v4497, %v4500
    %vm4516 = vcmask 1041408
    %v4517 = vsel %vm4516, %v4515, %v4503
    %vm4518 = vcmask 1042432
    %v4519 = vsel %vm4518, %v4517, %v4506
    %vm4520 = vcmask 1043456
    %v4521 = vsel %vm4520, %v4519, %v4509
    %vm4522 = vcmask 1044480
    %v4523 = vsel %vm4522, %v4521, %v4512
    %v4524 = vld [vmem:[%s3 + $0xa0] sm:$0xf]
    %v4525 = vld [vmem:[%s3 + $0xa4] sm:$0xf]
    %v4526 = vld [vmem:[%s3 + $0xa8] sm:$0xf]
    %v4527 = vld [vmem:[%s3 + $0xac] sm:$0xf]
    %v4528 = vpack.c.bf16 %v4523, %v4523
    %v4533 = vunpack.c.l.b16 %v4524
    %v4534 = vunpack.c.l.b16 %v4525
    %v4535 = vunpack.c.l.b16 %v4526
    %v4536 = vunpack.c.l.b16 %v4527
    %v4537 = vpack.c.b16 %v4534, %v4533
    %v4538 = vpack.c.b16 %v4536, %v4535
    %v4542 = vsel %vm523, %v4528, 0
    %4544 = vmatprep.subr.bf16.mxu0 0
    %4545 = vmatpush1.bf16.msra.mxu0 0
    %4546 = vmatprep.subr.bf16.mxu0 0
    %4547 = vmatpush1.bf16.msra.mxu0 0
    %4548 = vmatprep.subr.bf16.mxu0 0
    %4549 = vmatpush1.bf16.msra.mxu0 0
    %4550 = vmatprep.subr.bf16.mxu0 0
    %4551 = vmatpush1.bf16.msra.mxu0 0
    %4552 = vmatprep.subr.bf16.mxu0 0
    %4553 = vmatpush1.bf16.msra.mxu0 0
    %4554 = vmatprep.subr.bf16.mxu0 0
    %4555 = vmatpush1.bf16.msra.mxu0 0
    %4556 = vmatprep.subr.bf16.mxu0 0
    %4557 = vmatpush1.bf16.msra.mxu0 %v4538
    %4558 = vmatprep.subr.bf16.mxu0 0
    %4559 = vmatpush1.bf16.msra.mxu0 %v4537
    %4560 = vmatprep.subr.bf16.mxu0 0
    %4561 = vmatpush2.bf16.msra.mxu0 0
    %4562 = vmatprep.subr.bf16.mxu0 0
    %4563 = vmatpush2.bf16.msra.mxu0 0
    %4564 = vmatprep.subr.bf16.mxu0 0
    %4565 = vmatpush2.bf16.msra.mxu0 0
    %4566 = vmatprep.subr.bf16.mxu0 0
    %4567 = vmatpush2.bf16.msra.mxu0 0
    %4568 = vmatprep.subr.bf16.mxu0 0
    %4569 = vmatpush2.bf16.msra.mxu0 0
    %4570 = vmatprep.subr.bf16.mxu0 0
    %4571 = vmatpush2.bf16.msra.mxu0 0
    %4572 = vmatprep.subr.bf16.mxu0 0
    %4573 = vmatpush2.bf16.msra.mxu0 0
    %4574 = vmatprep.subr.bf16.mxu0 0
    %4575 = vmatpush2.bf16.msra.mxu0 0
    %4576 = vmatprep.mubr.bf16.mxu0 0
    %4577 = vmatmul.mubr.bf16.gmra.mxu0 %v4542
    %v4578 = vpop.f32.mrf.mxu0
    %v4579 = vadd.f32 0.0, %v4578
    %v4580 = vpop.f32.mrf.mxu0
    %v4581 = vpop.f32.mrf.mxu0
    %v4582 = vpop.f32.mrf.mxu0
    %4583 = vdwg.mxu0
    %v4584 = vmul.f32 %v4579, %v4579
    %vm4585 = vcmask 259072
    %v4586 = vsel %vm4585, %v4584, 0.0
    %4587 = vadd.xlane.f32.xlu0 %v4586
    %v4588 = vpop.xlane.xlu0 %4587
    %v4589 = vrsqrt.pop %v4588
    %v4590 = vmul.f32 %v4579, %v4589
    %4591 = vst.msk [vmem:[#allocation3] sm:$0x3f] %vm4585, %v4590
    %v4592 = vld [vmem:[%s2] sm:$0xff]
    %v4593 = vld [vmem:[%s2 + $0x8] sm:$0xff]
    %v4594 = vld [vmem:[%s3 + $0xb0] sm:$0xf]
    %v4595 = vld [vmem:[%s3 + $0xb4] sm:$0xf]
    %v4596 = vld [vmem:[%s3 + $0xb8] sm:$0xf]
    %v4597 = vld [vmem:[%s3 + $0xbc] sm:$0xf]
    %v4598 = vld [vmem:[%s3 + $0xc0] sm:$0xf]
    %v4599 = vld [vmem:[%s3 + $0xc4] sm:$0xf]
    %v4600 = vld [vmem:[%s3 + $0xc8] sm:$0xf]
    %v4601 = vld [vmem:[%s3 + $0xcc] sm:$0xf]
    %v4602 = vld [vmem:[%s3 + $0xd0] sm:$0xf]
    %v4603 = vld [vmem:[%s3 + $0xd4] sm:$0xf]
    %v4604 = vld [vmem:[%s3 + $0xd8] sm:$0xf]
    %v4605 = vld [vmem:[%s3 + $0xdc] sm:$0xf]
    %v4606 = vld [vmem:[%s3 + $0xe0] sm:$0xf]
    %v4607 = vld [vmem:[%s3 + $0xe4] sm:$0xf]
    %v4608 = vld [vmem:[%s3 + $0xe8] sm:$0xf]
    %v4609 = vld [vmem:[%s3 + $0xec] sm:$0xf]
    %v4610 = vld [vmem:[%s3 + $0xf0] sm:$0xf]
    %v4611 = vld [vmem:[%s3 + $0xf4] sm:$0xf]
    %v4612 = vld [vmem:[%s3 + $0xf8] sm:$0xf]
    %v4613 = vld [vmem:[%s3 + $0xfc] sm:$0xf]
    %v4614 = vld [vmem:[%s3 + $0x100] sm:$0xf]
    %v4615 = vld [vmem:[%s3 + $0x104] sm:$0xf]
    %v4616 = vld [vmem:[%s3 + $0x108] sm:$0xf]
    %v4617 = vld [vmem:[%s3 + $0x10c] sm:$0xf]
    %v4618 = vpack.c.bf16 %v4592, %v4592
    %v4619 = vpack.c.bf16 %v4593, %v4593
    %v4644 = vunpack.c.l.b16 %v4594
    %v4645 = vunpack.c.l.b16 %v4595
    %v4646 = vunpack.c.l.b16 %v4596
    %v4647 = vunpack.c.l.b16 %v4597
    %v4648 = vunpack.c.l.b16 %v4598
    %v4649 = vunpack.c.l.b16 %v4599
    %v4650 = vunpack.c.l.b16 %v4600
    %v4651 = vunpack.c.l.b16 %v4601
    %v4652 = vunpack.c.l.b16 %v4602
    %v4653 = vunpack.c.l.b16 %v4603
    %v4654 = vunpack.c.l.b16 %v4604
    %v4655 = vunpack.c.l.b16 %v4605
    %v4656 = vunpack.c.l.b16 %v4606
    %v4657 = vunpack.c.l.b16 %v4607
    %v4658 = vunpack.c.l.b16 %v4608
    %v4659 = vunpack.c.l.b16 %v4609
    %v4660 = vunpack.c.l.b16 %v4610
    %v4661 = vunpack.c.l.b16 %v4611
    %v4662 = vunpack.c.l.b16 %v4612
    %v4663 = vunpack.c.l.b16 %v4613
    %v4664 = vunpack.c.l.b16 %v4614
    %v4665 = vunpack.c.l.b16 %v4615
    %v4666 = vunpack.c.l.b16 %v4616
    %v4667 = vunpack.c.l.b16 %v4617
    %v4668 = vpack.c.b16 %v4645, %v4644
    %v4669 = vpack.c.b16 %v4647, %v4646
    %v4670 = vpack.c.b16 %v4649, %v4648
    %v4671 = vpack.c.b16 %v4651, %v4650
    %v4672 = vpack.c.b16 %v4653, %v4652
    %v4673 = vpack.c.b16 %v4655, %v4654
    %v4674 = vpack.c.b16 %v4657, %v4656
    %v4675 = vpack.c.b16 %v4659, %v4658
    %v4676 = vpack.c.b16 %v4661, %v4660
    %v4677 = vpack.c.b16 %v4663, %v4662
    %v4678 = vpack.c.b16 %v4665, %v4664
    %v4679 = vpack.c.b16 %v4667, %v4666
    %v4693 = vsel %vm2341, %v4619, 0
    %4695 = vmatprep.subr.bf16.mxu0 0
    %4696 = vmatpush1.bf16.msra.mxu0 %v4675
    %4697 = vmatprep.subr.bf16.mxu0 0
    %4698 = vmatpush1.bf16.msra.mxu0 %v4674
    %4699 = vmatprep.subr.bf16.mxu0 0
    %4700 = vmatpush1.bf16.msra.mxu0 %v4673
    %4701 = vmatprep.subr.bf16.mxu0 0
    %4702 = vmatpush1.bf16.msra.mxu0 %v4672
    %4703 = vmatprep.subr.bf16.mxu0 0
    %4704 = vmatpush1.bf16.msra.mxu0 %v4671
    %4705 = vmatprep.subr.bf16.mxu0 0
    %4706 = vmatpush1.bf16.msra.mxu0 %v4670
    %4707 = vmatprep.subr.bf16.mxu0 0
    %4708 = vmatpush1.bf16.msra.mxu0 %v4669
    %4709 = vmatprep.subr.bf16.mxu0 0
    %4710 = vmatpush1.bf16.msra.mxu0 %v4668
    %4711 = vmatprep.subr.bf16.mxu0 0
    %4712 = vmatpush2.bf16.msra.mxu0 0
    %4713 = vmatprep.subr.bf16.mxu0 0
    %4714 = vmatpush2.bf16.msra.mxu0 0
    %4715 = vmatprep.subr.bf16.mxu0 0
    %4716 = vmatpush2.bf16.msra.mxu0 0
    %4717 = vmatprep.subr.bf16.mxu0 0
    %4718 = vmatpush2.bf16.msra.mxu0 0
    %4719 = vmatprep.subr.bf16.mxu0 0
    %4720 = vmatpush2.bf16.msra.mxu0 %v4679
    %4721 = vmatprep.subr.bf16.mxu0 0
    %4722 = vmatpush2.bf16.msra.mxu0 %v4678
    %4723 = vmatprep.subr.bf16.mxu0 0
    %4724 = vmatpush2.bf16.msra.mxu0 %v4677
    %4725 = vmatprep.subr.bf16.mxu0 0
    %4726 = vmatpush2.bf16.msra.mxu0 %v4676
    %4727 = vmatprep.mubr.bf16.mxu0 %v4693
    %4728 = vmatmul.mubr.bf16.gmra.mxu0 %v4618
    %v4729 = vpop.f32.mrf.mxu0
    %v4730 = vadd.f32 0.0, %v4729
    %v4731 = vpop.f32.mrf.mxu0
    %v4732 = vpop.f32.mrf.mxu0
    %v4733 = vpop.f32.mrf.mxu0
    %4734 = vdwg.mxu0
    %v4735 = vld [vmem:[%s3 + $0x110] sm:$0x3]
    %v4736 = vld [vmem:[%s4 + $0x12] sm:$0x1]
    %v4737 = vunpack.c.l.bf16 %v4735
    %v4738 = vadd.f32 %v4730, %v4737
    %v4740 = vrot.slane %v4737, 4
    %v4742 = vadd.f32 %v4730, %v4740
    %v4744 = vrot.slane %v4738, 7
    %v4747 = vrot.slane %v4736, 3
    %v4750 = vrot.slane %v4742, 6
    %v4752 = vsel %vm4514, %v4736, %v4744
    %v4753 = vsel %vm4522, %v4752, %v4747
    %vm4754 = vcmask 1045504
    %v4755 = vsel %vm4754, %v4753, %v4750
    %v4756 = vld [vmem:[%s4 + $0x13] sm:$0x1]
    %v4757 = vld [vmem:[%s4 + $0x14] sm:$0x1]
    %v4758 = vsel %vm523, %v4755, 0.0
    %4759 = vadd.xlane.f32.xlu0 %v4758
    %v4760 = vpop.xlane.xlu0 %4759
    %vm4761 = vcmask 254976
    %v4762 = vsel %vm4761, %v4750, 0.0
    %4763 = vadd.xlane.f32.xlu0 %v4762
    %v4764 = vpop.xlane.xlu0 %4763
    %v4765 = vmul.f32 %v4760, %v560
    %v4766 = vmul.f32 %v4764, %v560
    %v4767 = vsub.f32 %v4755, %v4765
    %v4768 = vsub.f32 %v4750, %v4766
    %v4769 = vmul.f32 %v4767, %v4767
    %v4770 = vmul.f32 %v4768, %v4768
    %v4771 = vsel %vm523, %v4769, 0.0
    %4772 = vadd.xlane.f32.xlu0 %v4771
    %v4773 = vpop.xlane.xlu0 %4772
    %v4774 = vsel %vm4761, %v4770, 0.0
    %4775 = vadd.xlane.f32.xlu0 %v4774
    %v4776 = vpop.xlane.xlu0 %4775
    %v4777 = vmul.f32 %v4773, %v560
    %v4778 = vmul.f32 %v4776, %v560
    %v4779 = vadd.f32 %v4777, 1e-05
    %v4780 = vadd.f32 %v4778, 1e-05
    %v4781 = vrsqrt.pop %v4779
    %v4782 = vrsqrt.pop %v4780
    %v4783 = vmul.f32 %v4767, %v4781
    %v4784 = vmul.f32 %v4768, %v4782
    %v4785 = vlaneseq
    %v4786 = vshrl.u32 %v4785, 7
    %v4787 = vsub.s32 0, %v4786
    %v4788 = vrot.slane %v4756, %v4787
    %v4789 = vmul.f32 %v4783, %v4788
    %v4790 = vmul.f32 %v4784, %v4788
    %v4791 = vlaneseq
    %v4792 = vshrl.u32 %v4791, 7
    %v4793 = vsub.s32 0, %v4792
    %v4794 = vrot.slane %v4757, %v4793
    %v4795 = vadd.f32 %v4789, %v4794
    %v4796 = vadd.f32 %v4790, %v4794
    %vm4797 = vcmp.lt.s32.totalorder %v39, 5
    %vm4798 = vcmp.lt.s32.totalorder %v40, 5
    %vm4799 = vmand %vm53, %vm4797
    %vm4800 = vmand %vm54, %vm4798
    %vm4801 = vmand %vm4799, %vm89
    %vm4802 = vmand %vm4800, %vm89
    %vm4803 = vcmp.lt.s32.totalorder %v52, 5
    %vm4804 = vmand %vm4801, %vm4803
    %vm4805 = vmand %vm4802, %vm4803
    %vm4806 = vcmp.ge.s32.totalorder %v39, 5
    %vm4807 = vcmp.ge.s32.totalorder %v40, 5
    %vm4808 = vcmp.lt.s32.totalorder %v39, 10
    %vm4809 = vcmp.lt.s32.totalorder %v40, 10
    %vm4810 = vmand %vm4806, %vm4808
    %vm4811 = vmand %vm4807, %vm4809
    %vm4812 = vcmp.ge.s32.totalorder %v52, 5
    %vm4813 = vmand %vm4810, %vm4812
    %vm4814 = vmand %vm4811, %vm4812
    %vm4815 = vcmp.lt.s32.totalorder %v52, 10
    %vm4816 = vmand %vm4813, %vm4815
    %vm4817 = vmand %vm4814, %vm4815
    %vm4818 = vmor %vm4804, %vm4816
    %vm4819 = vmor %vm4805, %vm4817
    %v4820 = vsel %vm4818, 0.0, -1e+09
    %v4821 = vsel %vm4819, 0.0, -1e+09
    %v4822 = vld [vmem:[%s4 + $0x15] sm:$0x1]
    %v4823 = vld [vmem:[%s4 + $0x16] sm:$0x1]
    %v4824 = vsel %vm523, %v4795, 0.0
    %4825 = vadd.xlane.f32.xlu0 %v4824
    %v4826 = vpop.xlane.xlu0 %4825
    %v4827 = vsel %vm4761, %v4796, 0.0
    %4828 = vadd.xlane.f32.xlu0 %v4827
    %v4829 = vpop.xlane.xlu0 %4828
    %v4830 = vmul.f32 %v4826, %v560
    %v4831 = vmul.f32 %v4829, %v560
    %v4832 = vsub.f32 %v4795, %v4830
    %v4833 = vsub.f32 %v4796, %v4831
    %v4834 = vmul.f32 %v4832, %v4832
    %v4835 = vmul.f32 %v4833, %v4833
    %v4836 = vsel %vm523, %v4834, 0.0
    %4837 = vadd.xlane.f32.xlu0 %v4836
    %v4838 = vpop.xlane.xlu0 %4837
    %v4839 = vsel %vm4761, %v4835, 0.0
    %4840 = vadd.xlane.f32.xlu0 %v4839
    %v4841 = vpop.xlane.xlu0 %4840
    %v4842 = vmul.f32 %v4838, %v560
    %v4843 = vmul.f32 %v4841, %v560
    %v4844 = vadd.f32 %v4842, 1e-05
    %v4845 = vadd.f32 %v4843, 1e-05
    %v4846 = vrsqrt.pop %v4844
    %v4847 = vrsqrt.pop %v4845
    %v4848 = vmul.f32 %v4832, %v4846
    %v4849 = vmul.f32 %v4833, %v4847
    %v4850 = vlaneseq
    %v4851 = vshrl.u32 %v4850, 7
    %v4852 = vsub.s32 0, %v4851
    %v4853 = vrot.slane %v4822, %v4852
    %v4854 = vmul.f32 %v4848, %v4853
    %v4855 = vmul.f32 %v4849, %v4853
    %v4856 = vlaneseq
    %v4857 = vshrl.u32 %v4856, 7
    %v4858 = vsub.s32 0, %v4857
    %v4859 = vrot.slane %v4823, %v4858
    %v4860 = vadd.f32 %v4854, %v4859
    %v4861 = vadd.f32 %v4855, %v4859
    %v4862 = vld [vmem:[%s3 + $0x118] sm:$0xf]
    %v4863 = vld [vmem:[%s3 + $0x11c] sm:$0xf]
    %v4864 = vld [vmem:[%s3 + $0x120] sm:$0xf]
    %v4865 = vld [vmem:[%s3 + $0x124] sm:$0xf]
    %v4866 = vpack.c.bf16 %v4861, %v4860
    %v4867 = vld [vmem:[%s4 + $0x17] sm:$0x1]
    %v4868 = vlaneseq
    %v4869 = vshrl.u32 %v4868, 7
    %v4870 = vsub.s32 0, %v4869
    %v4871 = vrot.slane %v4867, %v4870
    %v4876 = vunpack.c.l.b16 %v4862
    %v4877 = vunpack.c.l.b16 %v4863
    %v4878 = vunpack.c.l.b16 %v4864
    %v4879 = vunpack.c.l.b16 %v4865
    %v4880 = vpack.c.b16 %v4877, %v4876
    %v4881 = vpack.c.b16 %v4879, %v4878
    %v4885 = vsel %vm523, %v4866, 0
    %4887 = vmatprep.subr.bf16.mxu0 0
    %4888 = vmatpush1.bf16.msra.mxu0 0
    %4889 = vmatprep.subr.bf16.mxu0 0
    %4890 = vmatpush1.bf16.msra.mxu0 0
    %4891 = vmatprep.subr.bf16.mxu0 0
    %4892 = vmatpush1.bf16.msra.mxu0 0
    %4893 = vmatprep.subr.bf16.mxu0 0
    %4894 = vmatpush1.bf16.msra.mxu0 0
    %4895 = vmatprep.subr.bf16.mxu0 0
    %4896 = vmatpush1.bf16.msra.mxu0 0
    %4897 = vmatprep.subr.bf16.mxu0 0
    %4898 = vmatpush1.bf16.msra.mxu0 0
    %4899 = vmatprep.subr.bf16.mxu0 0
    %4900 = vmatpush1.bf16.msra.mxu0 %v4881
    %4901 = vmatprep.subr.bf16.mxu0 0
    %4902 = vmatpush1.bf16.msra.mxu0 %v4880
    %4903 = vmatprep.subr.bf16.mxu0 0
    %4904 = vmatpush2.bf16.msra.mxu0 0
    %4905 = vmatprep.subr.bf16.mxu0 0
    %4906 = vmatpush2.bf16.msra.mxu0 0
    %4907 = vmatprep.subr.bf16.mxu0 0
    %4908 = vmatpush2.bf16.msra.mxu0 0
    %4909 = vmatprep.subr.bf16.mxu0 0
    %4910 = vmatpush2.bf16.msra.mxu0 0
    %4911 = vmatprep.subr.bf16.mxu0 0
    %4912 = vmatpush2.bf16.msra.mxu0 0
    %4913 = vmatprep.subr.bf16.mxu0 0
    %4914 = vmatpush2.bf16.msra.mxu0 0
    %4915 = vmatprep.subr.bf16.mxu0 0
    %4916 = vmatpush2.bf16.msra.mxu0 0
    %4917 = vmatprep.subr.bf16.mxu0 0
    %4918 = vmatpush2.bf16.msra.mxu0 0
    %4919 = vmatprep.mubr.bf16.mxu0 0
    %4920 = vmatmul.mubr.bf16.gmra.mxu0 %v4885
    %v4921 = vpop.f32.mrf.mxu0
    %v4922 = vadd.f32 %v4871, %v4921
    %v4923 = vpop.f32.mrf.mxu0
    %v4924 = vpop.f32.mrf.mxu0
    %v4925 = vadd.f32 %v4871, %v4924
    %v4926 = vpop.f32.mrf.mxu0
    %4927 = vdwg.mxu0
    %v4928 = vpack.c.bf16 %v4925, %v4922
    %4930 = vrot.lane.b32.xlu0 %v4928, 96
    %v4931 = vpop.permute.xlu0 %4930
    %v4933 = vsel %vm863, %v4928, 0
    %v4936 = vsel %vm863, %v4931, 0
    %4938 = vmatprep.subr.bf16.mxu0 0
    %4939 = vmatpush1.bf16.xpose.msra.mxu0 0
    %4940 = vmatprep.subr.bf16.mxu0 0
    %4941 = vmatpush1.bf16.xpose.msra.mxu0 0
    %4942 = vmatprep.subr.bf16.mxu0 0
    %4943 = vmatpush1.bf16.xpose.msra.mxu0 0
    %4944 = vmatprep.subr.bf16.mxu0 0
    %4945 = vmatpush1.bf16.xpose.msra.mxu0 0
    %4946 = vmatprep.subr.bf16.mxu0 0
    %4947 = vmatpush1.bf16.xpose.msra.mxu0 0
    %4948 = vmatprep.subr.bf16.mxu0 0
    %4949 = vmatpush1.bf16.xpose.msra.mxu0 0
    %4950 = vmatprep.subr.bf16.mxu0 0
    %4951 = vmatpush1.bf16.xpose.msra.mxu0 0
    %4952 = vmatprep.subr.bf16.mxu0 0
    %4953 = vmatpush1.bf16.xpose.msra.mxu0 %v4936
    %4954 = vmatprep.subr.bf16.mxu0 0
    %4955 = vmatpush2.bf16.xpose.msra.mxu0 0
    %4956 = vmatprep.subr.bf16.mxu0 0
    %4957 = vmatpush2.bf16.xpose.msra.mxu0 0
    %4958 = vmatprep.subr.bf16.mxu0 0
    %4959 = vmatpush2.bf16.xpose.msra.mxu0 0
    %4960 = vmatprep.subr.bf16.mxu0 0
    %4961 = vmatpush2.bf16.xpose.msra.mxu0 0
    %4962 = vmatprep.subr.bf16.mxu0 0
    %4963 = vmatpush2.bf16.xpose.msra.mxu0 0
    %4964 = vmatprep.subr.bf16.mxu0 0
    %4965 = vmatpush2.bf16.xpose.msra.mxu0 0
    %4966 = vmatprep.subr.bf16.mxu0 0
    %4967 = vmatpush2.bf16.xpose.msra.mxu0 0
    %4968 = vmatprep.subr.bf16.mxu0 0
    %4969 = vmatpush2.bf16.xpose.msra.mxu0 0
    %4970 = vmatprep.mubr.bf16.mxu0 0
    %4971 = vmatmul.mubr.bf16.gmra.mxu0 %v4933
    %v4972 = vpop.f32.mrf.mxu0
    %v4973 = vadd.f32 0.0, %v4972
    %v4974 = vpop.f32.mrf.mxu0
    %v4975 = vpop.f32.mrf.mxu0
    %v4976 = vadd.f32 0.0, %v4975
    %v4977 = vpop.f32.mrf.mxu0
    %4978 = vdwg.mxu0
    %v4979 = vmul.f32 %v4973, 0.25
    %v4980 = vmul.f32 %v4976, 0.25
    %v4981 = vadd.f32 %v4979, %v4820
    %v4982 = vadd.f32 %v4980, %v4821
    %vm4983 = vcmask 80896
    %v4984 = vsel %vm4983, %v4981, -inf
    %4985 = vmax.xlane.f32.xlu0 %v4984
    %v4986 = vpop.xlane.xlu0 %4985
    %vm4987 = vcmask 74752
    %v4988 = vsel %vm4987, %v4982, -inf
    %4989 = vmax.xlane.f32.xlu0 %v4988
    %v4990 = vpop.xlane.xlu0 %4989
    %v4991 = vsub.f32 %v4981, %v4986
    %v4992 = vsub.f32 %v4982, %v4990
    %v4993 = vmul.f32 %v4991, 1.442695
    %v4994 = vpow.pop %v4993
    %v4995 = vmul.f32 %v4992, 1.442695
    %v4996 = vpow.pop %v4995
    %v4997 = vsel %vm4983, %v4994, 0.0
    %4998 = vadd.xlane.f32.xlu0 %v4997
    %v4999 = vpop.xlane.xlu0 %4998
    %v5000 = vsel %vm4987, %v4996, 0.0
    %5001 = vadd.xlane.f32.xlu0 %v5000
    %v5002 = vpop.xlane.xlu0 %5001
    %v5003 = vrcp.pop %v4999
    %v5004 = vrcp.pop %v5002
    %v5005 = vmul.f32 %v4994, %v5003
    %v5006 = vmul.f32 %v4996, %v5004
    %v5007 = vpack.c.bf16 %v5006, %v5005
    %5008 = vrot.lane.b32.xlu0 %v4928, 64
    %v5009 = vpop.permute.xlu0 %5008
    %v5011 = vsel %vm4983, %v5007, 0
    %v5014 = vsel %vm4522, %v5009, 0
    %5016 = vmatprep.subr.bf16.mxu0 0
    %5017 = vmatpush1.bf16.msra.mxu0 0
    %5018 = vmatprep.subr.bf16.mxu0 0
    %5019 = vmatpush1.bf16.msra.mxu0 0
    %5020 = vmatprep.subr.bf16.mxu0 0
    %5021 = vmatpush1.bf16.msra.mxu0 0
    %5022 = vmatprep.subr.bf16.mxu0 0
    %5023 = vmatpush1.bf16.msra.mxu0 0
    %5024 = vmatprep.subr.bf16.mxu0 0
    %5025 = vmatpush1.bf16.msra.mxu0 0
    %5026 = vmatprep.subr.bf16.mxu0 0
    %5027 = vmatpush1.bf16.msra.mxu0 0
    %5028 = vmatprep.subr.bf16.mxu0 0
    %5029 = vmatpush1.bf16.msra.mxu0 0
    %5030 = vmatprep.subr.bf16.mxu0 0
    %5031 = vmatpush1.bf16.msra.mxu0 %v5014
    %5032 = vmatprep.subr.bf16.mxu0 0
    %5033 = vmatpush2.bf16.msra.mxu0 0
    %5034 = vmatprep.subr.bf16.mxu0 0
    %5035 = vmatpush2.bf16.msra.mxu0 0
    %5036 = vmatprep.subr.bf16.mxu0 0
    %5037 = vmatpush2.bf16.msra.mxu0 0
    %5038 = vmatprep.subr.bf16.mxu0 0
    %5039 = vmatpush2.bf16.msra.mxu0 0
    %5040 = vmatprep.subr.bf16.mxu0 0
    %5041 = vmatpush2.bf16.msra.mxu0 0
    %5042 = vmatprep.subr.bf16.mxu0 0
    %5043 = vmatpush2.bf16.msra.mxu0 0
    %5044 = vmatprep.subr.bf16.mxu0 0
    %5045 = vmatpush2.bf16.msra.mxu0 0
    %5046 = vmatprep.subr.bf16.mxu0 0
    %5047 = vmatpush2.bf16.msra.mxu0 0
    %5048 = vmatprep.mubr.bf16.mxu0 0
    %5049 = vmatmul.mubr.bf16.gmra.mxu0 %v5011
    %v5050 = vpop.f32.mrf.mxu0
    %v5051 = vadd.f32 0.0, %v5050
    %v5052 = vpop.f32.mrf.mxu0
    %v5053 = vpop.f32.mrf.mxu0
    %v5054 = vadd.f32 0.0, %v5053
    %v5055 = vpop.f32.mrf.mxu0
    %5056 = vdwg.mxu0
    %5057 = vrot.lane.b32.xlu0 %v4928, 112
    %v5058 = vpop.permute.xlu0 %5057
    %5059 = vrot.lane.b32.xlu0 %v4928, 80
    %v5060 = vpop.permute.xlu0 %5059
    %v5062 = vsel %vm863, %v5058, 0
    %v5065 = vsel %vm863, %v5060, 0
    %5067 = vmatprep.subr.bf16.mxu0 0
    %5068 = vmatpush1.bf16.xpose.msra.mxu0 0
    %5069 = vmatprep.subr.bf16.mxu0 0
    %5070 = vmatpush1.bf16.xpose.msra.mxu0 0
    %5071 = vmatprep.subr.bf16.mxu0 0
    %5072 = vmatpush1.bf16.xpose.msra.mxu0 0
    %5073 = vmatprep.subr.bf16.mxu0 0
    %5074 = vmatpush1.bf16.xpose.msra.mxu0 0
    %5075 = vmatprep.subr.bf16.mxu0 0
    %5076 = vmatpush1.bf16.xpose.msra.mxu0 0
    %5077 = vmatprep.subr.bf16.mxu0 0
    %5078 = vmatpush1.bf16.xpose.msra.mxu0 0
    %5079 = vmatprep.subr.bf16.mxu0 0
    %5080 = vmatpush1.bf16.xpose.msra.mxu0 0
    %5081 = vmatprep.subr.bf16.mxu0 0
    %5082 = vmatpush1.bf16.xpose.msra.mxu0 %v5065
    %5083 = vmatprep.subr.bf16.mxu0 0
    %5084 = vmatpush2.bf16.xpose.msra.mxu0 0
    %5085 = vmatprep.subr.bf16.mxu0 0
    %5086 = vmatpush2.bf16.xpose.msra.mxu0 0
    %5087 = vmatprep.subr.bf16.mxu0 0
    %5088 = vmatpush2.bf16.xpose.msra.mxu0 0
    %5089 = vmatprep.subr.bf16.mxu0 0
    %5090 = vmatpush2.bf16.xpose.msra.mxu0 0
    %5091 = vmatprep.subr.bf16.mxu0 0
    %5092 = vmatpush2.bf16.xpose.msra.mxu0 0
    %5093 = vmatprep.subr.bf16.mxu0 0
    %5094 = vmatpush2.bf16.xpose.msra.mxu0 0
    %5095 = vmatprep.subr.bf16.mxu0 0
    %5096 = vmatpush2.bf16.xpose.msra.mxu0 0
    %5097 = vmatprep.subr.bf16.mxu0 0
    %5098 = vmatpush2.bf16.xpose.msra.mxu0 0
    %5099 = vmatprep.mubr.bf16.mxu0 0
    %5100 = vmatmul.mubr.bf16.gmra.mxu0 %v5062
    %v5101 = vpop.f32.mrf.mxu0
    %v5102 = vadd.f32 0.0, %v5101
    %v5103 = vpop.f32.mrf.mxu0
    %v5104 = vpop.f32.mrf.mxu0
    %v5105 = vadd.f32 0.0, %v5104
    %v5106 = vpop.f32.mrf.mxu0
    %5107 = vdwg.mxu0
    %v5108 = vmul.f32 %v5102, 0.25
    %v5109 = vmul.f32 %v5105, 0.25
    %v5110 = vadd.f32 %v5108, %v4820
    %v5111 = vadd.f32 %v5109, %v4821
    %v5112 = vsel %vm4983, %v5110, -inf
    %5113 = vmax.xlane.f32.xlu0 %v5112
    %v5114 = vpop.xlane.xlu0 %5113
    %v5115 = vsel %vm4987, %v5111, -inf
    %5116 = vmax.xlane.f32.xlu0 %v5115
    %v5117 = vpop.xlane.xlu0 %5116
    %v5118 = vsub.f32 %v5110, %v5114
    %v5119 = vsub.f32 %v5111, %v5117
    %v5120 = vmul.f32 %v5118, 1.442695
    %v5121 = vpow.pop %v5120
    %v5122 = vmul.f32 %v5119, 1.442695
    %v5123 = vpow.pop %v5122
    %v5124 = vsel %vm4983, %v5121, 0.0
    %5125 = vadd.xlane.f32.xlu0 %v5124
    %v5126 = vpop.xlane.xlu0 %5125
    %v5127 = vsel %vm4987, %v5123, 0.0
    %5128 = vadd.xlane.f32.xlu0 %v5127
    %v5129 = vpop.xlane.xlu0 %5128
    %v5130 = vrcp.pop %v5126
    %v5131 = vrcp.pop %v5129
    %v5132 = vmul.f32 %v5121, %v5130
    %v5133 = vmul.f32 %v5123, %v5131
    %v5134 = vpack.c.bf16 %v5133, %v5132
    %5135 = vrot.lane.b32.xlu0 %v4928, 48
    %v5136 = vpop.permute.xlu0 %5135
    %v5138 = vsel %vm4983, %v5134, 0
    %v5141 = vsel %vm4522, %v5136, 0
    %5143 = vmatprep.subr.bf16.mxu0 0
    %5144 = vmatpush1.bf16.msra.mxu0 0
    %5145 = vmatprep.subr.bf16.mxu0 0
    %5146 = vmatpush1.bf16.msra.mxu0 0
    %5147 = vmatprep.subr.bf16.mxu0 0
    %5148 = vmatpush1.bf16.msra.mxu0 0
    %5149 = vmatprep.subr.bf16.mxu0 0
    %5150 = vmatpush1.bf16.msra.mxu0 0
    %5151 = vmatprep.subr.bf16.mxu0 0
    %5152 = vmatpush1.bf16.msra.mxu0 0
    %5153 = vmatprep.subr.bf16.mxu0 0
    %5154 = vmatpush1.bf16.msra.mxu0 0
    %5155 = vmatprep.subr.bf16.mxu0 0
    %5156 = vmatpush1.bf16.msra.mxu0 0
    %5157 = vmatprep.subr.bf16.mxu0 0
    %5158 = vmatpush1.bf16.msra.mxu0 %v5141
    %5159 = vmatprep.subr.bf16.mxu0 0
    %5160 = vmatpush2.bf16.msra.mxu0 0
    %5161 = vmatprep.subr.bf16.mxu0 0
    %5162 = vmatpush2.bf16.msra.mxu0 0
    %5163 = vmatprep.subr.bf16.mxu0 0
    %5164 = vmatpush2.bf16.msra.mxu0 0
    %5165 = vmatprep.subr.bf16.mxu0 0
    %5166 = vmatpush2.bf16.msra.mxu0 0
    %5167 = vmatprep.subr.bf16.mxu0 0
    %5168 = vmatpush2.bf16.msra.mxu0 0
    %5169 = vmatprep.subr.bf16.mxu0 0
    %5170 = vmatpush2.bf16.msra.mxu0 0
    %5171 = vmatprep.subr.bf16.mxu0 0
    %5172 = vmatpush2.bf16.msra.mxu0 0
    %5173 = vmatprep.subr.bf16.mxu0 0
    %5174 = vmatpush2.bf16.msra.mxu0 0
    %5175 = vmatprep.mubr.bf16.mxu0 0
    %5176 = vmatmul.mubr.bf16.gmra.mxu0 %v5138
    %v5177 = vpop.f32.mrf.mxu0
    %v5178 = vadd.f32 0.0, %v5177
    %v5179 = vpop.f32.mrf.mxu0
    %v5180 = vpop.f32.mrf.mxu0
    %v5181 = vadd.f32 0.0, %v5180
    %v5182 = vpop.f32.mrf.mxu0
    %5183 = vdwg.mxu0
    %5186 = vrot.lane.b32.xlu0 %v5178, 16
    %v5187 = vpop.permute.xlu0 %5186
    %5188 = vrot.lane.b32.xlu0 %v5181, 16
    %v5189 = vpop.permute.xlu0 %5188
    %v5192 = vsel %vm863, %v5051, %v5187
    %v5193 = vsel %vm863, %v5054, %v5189
    %v5194 = vld [vmem:[%s3 + $0x128] sm:$0xf]
    %v5195 = vld [vmem:[%s3 + $0x12c] sm:$0xf]
    %v5196 = vld [vmem:[%s3 + $0x130] sm:$0xf]
    %v5197 = vld [vmem:[%s3 + $0x134] sm:$0xf]
    %v5198 = vpack.c.bf16 %v5193, %v5192
    %v5203 = vunpack.c.l.b16 %v5194
    %v5204 = vunpack.c.l.b16 %v5195
    %v5205 = vunpack.c.l.b16 %v5196
    %v5206 = vunpack.c.l.b16 %v5197
    %v5207 = vpack.c.b16 %v5204, %v5203
    %v5208 = vpack.c.b16 %v5206, %v5205
    %v5212 = vsel %vm523, %v5198, 0
    %5214 = vmatprep.subr.bf16.mxu0 0
    %5215 = vmatpush1.bf16.msra.mxu0 0
    %5216 = vmatprep.subr.bf16.mxu0 0
    %5217 = vmatpush1.bf16.msra.mxu0 0
    %5218 = vmatprep.subr.bf16.mxu0 0
    %5219 = vmatpush1.bf16.msra.mxu0 0
    %5220 = vmatprep.subr.bf16.mxu0 0
    %5221 = vmatpush1.bf16.msra.mxu0 0
    %5222 = vmatprep.subr.bf16.mxu0 0
    %5223 = vmatpush1.bf16.msra.mxu0 0
    %5224 = vmatprep.subr.bf16.mxu0 0
    %5225 = vmatpush1.bf16.msra.mxu0 0
    %5226 = vmatprep.subr.bf16.mxu0 0
    %5227 = vmatpush1.bf16.msra.mxu0 %v5208
    %5228 = vmatprep.subr.bf16.mxu0 0
    %5229 = vmatpush1.bf16.msra.mxu0 %v5207
    %5230 = vmatprep.subr.bf16.mxu0 0
    %5231 = vmatpush2.bf16.msra.mxu0 0
    %5232 = vmatprep.subr.bf16.mxu0 0
    %5233 = vmatpush2.bf16.msra.mxu0 0
    %5234 = vmatprep.subr.bf16.mxu0 0
    %5235 = vmatpush2.bf16.msra.mxu0 0
    %5236 = vmatprep.subr.bf16.mxu0 0
    %5237 = vmatpush2.bf16.msra.mxu0 0
    %5238 = vmatprep.subr.bf16.mxu0 0
    %5239 = vmatpush2.bf16.msra.mxu0 0
    %5240 = vmatprep.subr.bf16.mxu0 0
    %5241 = vmatpush2.bf16.msra.mxu0 0
    %5242 = vmatprep.subr.bf16.mxu0 0
    %5243 = vmatpush2.bf16.msra.mxu0 0
    %5244 = vmatprep.subr.bf16.mxu0 0
    %5245 = vmatpush2.bf16.msra.mxu0 0
    %5246 = vmatprep.mubr.bf16.mxu0 0
    %5247 = vmatmul.mubr.bf16.gmra.mxu0 %v5212
    %v5248 = vpop.f32.mrf.mxu0
    %v5249 = vadd.f32 0.0, %v5248
    %v5250 = vpop.f32.mrf.mxu0
    %v5251 = vpop.f32.mrf.mxu0
    %v5252 = vadd.f32 0.0, %v5251
    %v5253 = vpop.f32.mrf.mxu0
    %5254 = vdwg.mxu0
    %v5255 = vadd.f32 %v4795, %v5249
    %v5256 = vadd.f32 %v4796, %v5252
    %v5257 = vld [vmem:[%s4 + $0x18] sm:$0x1]
    %v5258 = vlaneseq
    %v5259 = vshrl.u32 %v5258, 7
    %v5260 = vsub.s32 0, %v5259
    %v5261 = vrot.slane %v5257, %v5260
    %v5262 = vadd.f32 %v5255, %v5261
    %v5263 = vadd.f32 %v5256, %v5261
    %v5264 = vld [vmem:[%s4 + $0x19] sm:$0x1]
    %v5265 = vld [vmem:[%s4 + $0x1a] sm:$0x1]
    %v5266 = vsel %vm523, %v5262, 0.0
    %5267 = vadd.xlane.f32.xlu0 %v5266
    %v5268 = vpop.xlane.xlu0 %5267
    %v5269 = vsel %vm4761, %v5263, 0.0
    %5270 = vadd.xlane.f32.xlu0 %v5269
    %v5271 = vpop.xlane.xlu0 %5270
    %v5272 = vmul.f32 %v5268, %v560
    %v5273 = vmul.f32 %v5271, %v560
    %v5274 = vsub.f32 %v5262, %v5272
    %v5275 = vsub.f32 %v5263, %v5273
    %v5276 = vmul.f32 %v5274, %v5274
    %v5277 = vmul.f32 %v5275, %v5275
    %v5278 = vsel %vm523, %v5276, 0.0
    %5279 = vadd.xlane.f32.xlu0 %v5278
    %v5280 = vpop.xlane.xlu0 %5279
    %v5281 = vsel %vm4761, %v5277, 0.0
    %5282 = vadd.xlane.f32.xlu0 %v5281
    %v5283 = vpop.xlane.xlu0 %5282
    %v5284 = vmul.f32 %v5280, %v560
    %v5285 = vmul.f32 %v5283, %v560
    %v5286 = vadd.f32 %v5284, 1e-05
    %v5287 = vadd.f32 %v5285, 1e-05
    %v5288 = vrsqrt.pop %v5286
    %v5289 = vrsqrt.pop %v5287
    %v5290 = vmul.f32 %v5274, %v5288
    %v5291 = vmul.f32 %v5275, %v5289
    %v5292 = vlaneseq
    %v5293 = vshrl.u32 %v5292, 7
    %v5294 = vsub.s32 0, %v5293
    %v5295 = vrot.slane %v5264, %v5294
    %v5296 = vmul.f32 %v5290, %v5295
    %v5297 = vmul.f32 %v5291, %v5295
    %v5298 = vlaneseq
    %v5299 = vshrl.u32 %v5298, 7
    %v5300 = vsub.s32 0, %v5299
    %v5301 = vrot.slane %v5265, %v5300
    %v5302 = vadd.f32 %v5296, %v5301
    %v5303 = vadd.f32 %v5297, %v5301
    %v5304 = vld [vmem:[%s3 + $0x138] sm:$0xf]
    %v5305 = vld [vmem:[%s3 + $0x13c] sm:$0xf]
    %v5306 = vld [vmem:[%s3 + $0x140] sm:$0xf]
    %v5307 = vld [vmem:[%s3 + $0x144] sm:$0xf]
    %v5308 = vpack.c.bf16 %v5303, %v5302
    %v5309 = vld [vmem:[%s4 + $0x1b] sm:$0x1]
    %v5310 = vlaneseq
    %v5311 = vshrl.u32 %v5310, 7
    %v5312 = vsub.s32 0, %v5311
    %v5313 = vrot.slane %v5309, %v5312
    %v5318 = vunpack.c.l.b16 %v5304
    %v5319 = vunpack.c.l.b16 %v5305
    %v5320 = vunpack.c.l.b16 %v5306
    %v5321 = vunpack.c.l.b16 %v5307
    %v5322 = vpack.c.b16 %v5319, %v5318
    %v5323 = vpack.c.b16 %v5321, %v5320
    %v5327 = vsel %vm523, %v5308, 0
    %5329 = vmatprep.subr.bf16.mxu0 0
    %5330 = vmatpush1.bf16.msra.mxu0 0
    %5331 = vmatprep.subr.bf16.mxu0 0
    %5332 = vmatpush1.bf16.msra.mxu0 0
    %5333 = vmatprep.subr.bf16.mxu0 0
    %5334 = vmatpush1.bf16.msra.mxu0 0
    %5335 = vmatprep.subr.bf16.mxu0 0
    %5336 = vmatpush1.bf16.msra.mxu0 0
    %5337 = vmatprep.subr.bf16.mxu0 0
    %5338 = vmatpush1.bf16.msra.mxu0 0
    %5339 = vmatprep.subr.bf16.mxu0 0
    %5340 = vmatpush1.bf16.msra.mxu0 0
    %5341 = vmatprep.subr.bf16.mxu0 0
    %5342 = vmatpush1.bf16.msra.mxu0 %v5323
    %5343 = vmatprep.subr.bf16.mxu0 0
    %5344 = vmatpush1.bf16.msra.mxu0 %v5322
    %5345 = vmatprep.subr.bf16.mxu0 0
    %5346 = vmatpush2.bf16.msra.mxu0 0
    %5347 = vmatprep.subr.bf16.mxu0 0
    %5348 = vmatpush2.bf16.msra.mxu0 0
    %5349 = vmatprep.subr.bf16.mxu0 0
    %5350 = vmatpush2.bf16.msra.mxu0 0
    %5351 = vmatprep.subr.bf16.mxu0 0
    %5352 = vmatpush2.bf16.msra.mxu0 0
    %5353 = vmatprep.subr.bf16.mxu0 0
    %5354 = vmatpush2.bf16.msra.mxu0 0
    %5355 = vmatprep.subr.bf16.mxu0 0
    %5356 = vmatpush2.bf16.msra.mxu0 0
    %5357 = vmatprep.subr.bf16.mxu0 0
    %5358 = vmatpush2.bf16.msra.mxu0 0
    %5359 = vmatprep.subr.bf16.mxu0 0
    %5360 = vmatpush2.bf16.msra.mxu0 0
    %5361 = vmatprep.mubr.bf16.mxu0 0
    %5362 = vmatmul.mubr.bf16.gmra.mxu0 %v5327
    %v5363 = vpop.f32.mrf.mxu0
    %v5364 = vadd.f32 %v5313, %v5363
    %v5365 = vpop.f32.mrf.mxu0
    %v5366 = vpop.f32.mrf.mxu0
    %v5367 = vadd.f32 %v5313, %v5366
    %v5368 = vpop.f32.mrf.mxu0
    %5369 = vdwg.mxu0
    %v5370 = vmul.f32 %v5364, 1.702
    %v5371 = vmul.f32 %v5367, 1.702
    %v5372 = vxor.u32 %v5370, 2147483648
    %v5373 = vxor.u32 %v5371, 2147483648
    %v5374 = vmul.f32 %v5372, 1.442695
    %v5375 = vpow.pop %v5374
    %v5376 = vmul.f32 %v5373, 1.442695
    %v5377 = vpow.pop %v5376
    %v5378 = vadd.f32 %v5375, 1.0
    %v5379 = vadd.f32 %v5377, 1.0
    %v5380 = vrcp.pop %v5378
    %v5381 = vmul.f32 1.0, %v5380
    %v5382 = vrcp.pop %v5379
    %v5383 = vmul.f32 1.0, %v5382
    %v5384 = vmul.f32 %v5364, %v5381
    %v5385 = vmul.f32 %v5367, %v5383
    %v5386 = vld [vmem:[%s3 + $0x148] sm:$0xf]
    %v5387 = vld [vmem:[%s3 + $0x14c] sm:$0xf]
    %v5388 = vld [vmem:[%s3 + $0x150] sm:$0xf]
    %v5389 = vld [vmem:[%s3 + $0x154] sm:$0xf]
    %v5390 = vld [vmem:[%s3 + $0x158] sm:$0xf]
    %v5391 = vld [vmem:[%s3 + $0x15c] sm:$0xf]
    %v5392 = vld [vmem:[%s3 + $0x160] sm:$0xf]
    %v5393 = vld [vmem:[%s3 + $0x164] sm:$0xf]
    %v5394 = vpack.c.bf16 %v5385, %v5384
    %v5403 = vunpack.c.l.b16 %v5386
    %v5404 = vunpack.c.l.b16 %v5387
    %v5405 = vunpack.c.l.b16 %v5388
    %v5406 = vunpack.c.l.b16 %v5389
    %v5407 = vunpack.c.l.b16 %v5390
    %v5408 = vunpack.c.l.b16 %v5391
    %v5409 = vunpack.c.l.b16 %v5392
    %v5410 = vunpack.c.l.b16 %v5393
    %v5411 = vpack.c.b16 %v5404, %v5403
    %v5412 = vpack.c.b16 %v5406, %v5405
    %v5413 = vpack.c.b16 %v5408, %v5407
    %v5414 = vpack.c.b16 %v5410, %v5409
    %v5420 = vsel %vm2341, %v5394, 0
    %5422 = vmatprep.subr.bf16.mxu0 0
    %5423 = vmatpush1.bf16.msra.mxu0 0
    %5424 = vmatprep.subr.bf16.mxu0 0
    %5425 = vmatpush1.bf16.msra.mxu0 0
    %5426 = vmatprep.subr.bf16.mxu0 0
    %5427 = vmatpush1.bf16.msra.mxu0 0
    %5428 = vmatprep.subr.bf16.mxu0 0
    %5429 = vmatpush1.bf16.msra.mxu0 0
    %5430 = vmatprep.subr.bf16.mxu0 0
    %5431 = vmatpush1.bf16.msra.mxu0 %v5414
    %5432 = vmatprep.subr.bf16.mxu0 0
    %5433 = vmatpush1.bf16.msra.mxu0 %v5413
    %5434 = vmatprep.subr.bf16.mxu0 0
    %5435 = vmatpush1.bf16.msra.mxu0 %v5412
    %5436 = vmatprep.subr.bf16.mxu0 0
    %5437 = vmatpush1.bf16.msra.mxu0 %v5411
    %5438 = vmatprep.subr.bf16.mxu0 0
    %5439 = vmatpush2.bf16.msra.mxu0 0
    %5440 = vmatprep.subr.bf16.mxu0 0
    %5441 = vmatpush2.bf16.msra.mxu0 0
    %5442 = vmatprep.subr.bf16.mxu0 0
    %5443 = vmatpush2.bf16.msra.mxu0 0
    %5444 = vmatprep.subr.bf16.mxu0 0
    %5445 = vmatpush2.bf16.msra.mxu0 0
    %5446 = vmatprep.subr.bf16.mxu0 0
    %5447 = vmatpush2.bf16.msra.mxu0 0
    %5448 = vmatprep.subr.bf16.mxu0 0
    %5449 = vmatpush2.bf16.msra.mxu0 0
    %5450 = vmatprep.subr.bf16.mxu0 0
    %5451 = vmatpush2.bf16.msra.mxu0 0
    %5452 = vmatprep.subr.bf16.mxu0 0
    %5453 = vmatpush2.bf16.msra.mxu0 0
    %5454 = vmatprep.mubr.bf16.mxu0 0
    %5455 = vmatmul.mubr.bf16.gmra.mxu0 %v5420
    %v5456 = vpop.f32.mrf.mxu0
    %v5457 = vadd.f32 0.0, %v5456
    %v5458 = vpop.f32.mrf.mxu0
    %v5459 = vpop.f32.mrf.mxu0
    %v5460 = vadd.f32 0.0, %v5459
    %v5461 = vpop.f32.mrf.mxu0
    %5462 = vdwg.mxu0
    %v5463 = vadd.f32 %v5262, %v5457
    %v5464 = vadd.f32 %v5263, %v5460
    %v5465 = vld [vmem:[%s4 + $0x1c] sm:$0x1]
    %v5466 = vlaneseq
    %v5467 = vshrl.u32 %v5466, 7
    %v5468 = vsub.s32 0, %v5467
    %v5469 = vrot.slane %v5465, %v5468
    %v5470 = vadd.f32 %v5463, %v5469
    %v5471 = vadd.f32 %v5464, %v5469
    %v5472 = vld [vmem:[%s4 + $0x1d] sm:$0x1]
    %v5473 = vld [vmem:[%s4 + $0x1e] sm:$0x1]
    %v5474 = vsel %vm523, %v5470, 0.0
    %5475 = vadd.xlane.f32.xlu0 %v5474
    %v5476 = vpop.xlane.xlu0 %5475
    %v5477 = vsel %vm4761, %v5471, 0.0
    %5478 = vadd.xlane.f32.xlu0 %v5477
    %v5479 = vpop.xlane.xlu0 %5478
    %v5480 = vmul.f32 %v5476, %v560
    %v5481 = vmul.f32 %v5479, %v560
    %v5482 = vsub.f32 %v5470, %v5480
    %v5483 = vsub.f32 %v5471, %v5481
    %v5484 = vmul.f32 %v5482, %v5482
    %v5485 = vmul.f32 %v5483, %v5483
    %v5486 = vsel %vm523, %v5484, 0.0
    %5487 = vadd.xlane.f32.xlu0 %v5486
    %v5488 = vpop.xlane.xlu0 %5487
    %v5489 = vsel %vm4761, %v5485, 0.0
    %5490 = vadd.xlane.f32.xlu0 %v5489
    %v5491 = vpop.xlane.xlu0 %5490
    %v5492 = vmul.f32 %v5488, %v560
    %v5493 = vmul.f32 %v5491, %v560
    %v5494 = vadd.f32 %v5492, 1e-05
    %v5495 = vadd.f32 %v5493, 1e-05
    %v5496 = vrsqrt.pop %v5494
    %v5497 = vrsqrt.pop %v5495
    %v5498 = vmul.f32 %v5482, %v5496
    %v5499 = vmul.f32 %v5483, %v5497
    %v5500 = vlaneseq
    %v5501 = vshrl.u32 %v5500, 7
    %v5502 = vsub.s32 0, %v5501
    %v5503 = vrot.slane %v5472, %v5502
    %v5504 = vmul.f32 %v5498, %v5503
    %v5505 = vmul.f32 %v5499, %v5503
    %v5506 = vlaneseq
    %v5507 = vshrl.u32 %v5506, 7
    %v5508 = vsub.s32 0, %v5507
    %v5509 = vrot.slane %v5473, %v5508
    %v5510 = vadd.f32 %v5504, %v5509
    %v5511 = vadd.f32 %v5505, %v5509
    %v5512 = vld [vmem:[%s3 + $0x168] sm:$0xf]
    %v5513 = vld [vmem:[%s3 + $0x16c] sm:$0xf]
    %v5514 = vld [vmem:[%s3 + $0x170] sm:$0xf]
    %v5515 = vld [vmem:[%s3 + $0x174] sm:$0xf]
    %v5516 = vpack.c.bf16 %v5511, %v5510
    %v5517 = vld [vmem:[%s4 + $0x1f] sm:$0x1]
    %v5518 = vlaneseq
    %v5519 = vshrl.u32 %v5518, 7
    %v5520 = vsub.s32 0, %v5519
    %v5521 = vrot.slane %v5517, %v5520
    %v5526 = vunpack.c.l.b16 %v5512
    %v5527 = vunpack.c.l.b16 %v5513
    %v5528 = vunpack.c.l.b16 %v5514
    %v5529 = vunpack.c.l.b16 %v5515
    %v5530 = vpack.c.b16 %v5527, %v5526
    %v5531 = vpack.c.b16 %v5529, %v5528
    %v5535 = vsel %vm523, %v5516, 0
    %5537 = vmatprep.subr.bf16.mxu0 0
    %5538 = vmatpush1.bf16.msra.mxu0 0
    %5539 = vmatprep.subr.bf16.mxu0 0
    %5540 = vmatpush1.bf16.msra.mxu0 0
    %5541 = vmatprep.subr.bf16.mxu0 0
    %5542 = vmatpush1.bf16.msra.mxu0 0
    %5543 = vmatprep.subr.bf16.mxu0 0
    %5544 = vmatpush1.bf16.msra.mxu0 0
    %5545 = vmatprep.subr.bf16.mxu0 0
    %5546 = vmatpush1.bf16.msra.mxu0 0
    %5547 = vmatprep.subr.bf16.mxu0 0
    %5548 = vmatpush1.bf16.msra.mxu0 0
    %5549 = vmatprep.subr.bf16.mxu0 0
    %5550 = vmatpush1.bf16.msra.mxu0 %v5531
    %5551 = vmatprep.subr.bf16.mxu0 0
    %5552 = vmatpush1.bf16.msra.mxu0 %v5530
    %5553 = vmatprep.subr.bf16.mxu0 0
    %5554 = vmatpush2.bf16.msra.mxu0 0
    %5555 = vmatprep.subr.bf16.mxu0 0
    %5556 = vmatpush2.bf16.msra.mxu0 0
    %5557 = vmatprep.subr.bf16.mxu0 0
    %5558 = vmatpush2.bf16.msra.mxu0 0
    %5559 = vmatprep.subr.bf16.mxu0 0
    %5560 = vmatpush2.bf16.msra.mxu0 0
    %5561 = vmatprep.subr.bf16.mxu0 0
    %5562 = vmatpush2.bf16.msra.mxu0 0
    %5563 = vmatprep.subr.bf16.mxu0 0
    %5564 = vmatpush2.bf16.msra.mxu0 0
    %5565 = vmatprep.subr.bf16.mxu0 0
    %5566 = vmatpush2.bf16.msra.mxu0 0
    %5567 = vmatprep.subr.bf16.mxu0 0
    %5568 = vmatpush2.bf16.msra.mxu0 0
    %5569 = vmatprep.mubr.bf16.mxu0 0
    %5570 = vmatmul.mubr.bf16.gmra.mxu0 %v5535
    %v5571 = vpop.f32.mrf.mxu0
    %v5572 = vadd.f32 %v5521, %v5571
    %v5573 = vpop.f32.mrf.mxu0
    %v5574 = vpop.f32.mrf.mxu0
    %v5575 = vadd.f32 %v5521, %v5574
    %v5576 = vpop.f32.mrf.mxu0
    %5577 = vdwg.mxu0
    %v5578 = vpack.c.bf16 %v5575, %v5572
    %5580 = vrot.lane.b32.xlu0 %v5578, 96
    %v5581 = vpop.permute.xlu0 %5580
    %v5583 = vsel %vm863, %v5578, 0
    %v5586 = vsel %vm863, %v5581, 0
    %5588 = vmatprep.subr.bf16.mxu0 0
    %5589 = vmatpush1.bf16.xpose.msra.mxu0 0
    %5590 = vmatprep.subr.bf16.mxu0 0
    %5591 = vmatpush1.bf16.xpose.msra.mxu0 0
    %5592 = vmatprep.subr.bf16.mxu0 0
    %5593 = vmatpush1.bf16.xpose.msra.mxu0 0
    %5594 = vmatprep.subr.bf16.mxu0 0
    %5595 = vmatpush1.bf16.xpose.msra.mxu0 0
    %5596 = vmatprep.subr.bf16.mxu0 0
    %5597 = vmatpush1.bf16.xpose.msra.mxu0 0
    %5598 = vmatprep.subr.bf16.mxu0 0
    %5599 = vmatpush1.bf16.xpose.msra.mxu0 0
    %5600 = vmatprep.subr.bf16.mxu0 0
    %5601 = vmatpush1.bf16.xpose.msra.mxu0 0
    %5602 = vmatprep.subr.bf16.mxu0 0
    %5603 = vmatpush1.bf16.xpose.msra.mxu0 %v5586
    %5604 = vmatprep.subr.bf16.mxu0 0
    %5605 = vmatpush2.bf16.xpose.msra.mxu0 0
    %5606 = vmatprep.subr.bf16.mxu0 0
    %5607 = vmatpush2.bf16.xpose.msra.mxu0 0
    %5608 = vmatprep.subr.bf16.mxu0 0
    %5609 = vmatpush2.bf16.xpose.msra.mxu0 0
    %5610 = vmatprep.subr.bf16.mxu0 0
    %5611 = vmatpush2.bf16.xpose.msra.mxu0 0
    %5612 = vmatprep.subr.bf16.mxu0 0
    %5613 = vmatpush2.bf16.xpose.msra.mxu0 0
    %5614 = vmatprep.subr.bf16.mxu0 0
    %5615 = vmatpush2.bf16.xpose.msra.mxu0 0
    %5616 = vmatprep.subr.bf16.mxu0 0
    %5617 = vmatpush2.bf16.xpose.msra.mxu0 0
    %5618 = vmatprep.subr.bf16.mxu0 0
    %5619 = vmatpush2.bf16.xpose.msra.mxu0 0
    %5620 = vmatprep.mubr.bf16.mxu0 0
    %5621 = vmatmul.mubr.bf16.gmra.mxu0 %v5583
    %v5622 = vpop.f32.mrf.mxu0
    %v5623 = vadd.f32 0.0, %v5622
    %v5624 = vpop.f32.mrf.mxu0
    %v5625 = vpop.f32.mrf.mxu0
    %v5626 = vadd.f32 0.0, %v5625
    %v5627 = vpop.f32.mrf.mxu0
    %5628 = vdwg.mxu0
    %v5629 = vmul.f32 %v5623, 0.25
    %v5630 = vmul.f32 %v5626, 0.25
    %v5631 = vadd.f32 %v5629, %v4820
    %v5632 = vadd.f32 %v5630, %v4821
    %v5633 = vsel %vm4983, %v5631, -inf
    %5634 = vmax.xlane.f32.xlu0 %v5633
    %v5635 = vpop.xlane.xlu0 %5634
    %v5636 = vsel %vm4987, %v5632, -inf
    %5637 = vmax.xlane.f32.xlu0 %v5636
    %v5638 = vpop.xlane.xlu0 %5637
    %v5639 = vsub.f32 %v5631, %v5635
    %v5640 = vsub.f32 %v5632, %v5638
    %v5641 = vmul.f32 %v5639, 1.442695
    %v5642 = vpow.pop %v5641
    %v5643 = vmul.f32 %v5640, 1.442695
    %v5644 = vpow.pop %v5643
    %v5645 = vsel %vm4983, %v5642, 0.0
    %5646 = vadd.xlane.f32.xlu0 %v5645
    %v5647 = vpop.xlane.xlu0 %5646
    %v5648 = vsel %vm4987, %v5644, 0.0
    %5649 = vadd.xlane.f32.xlu0 %v5648
    %v5650 = vpop.xlane.xlu0 %5649
    %v5651 = vrcp.pop %v5647
    %v5652 = vrcp.pop %v5650
    %v5653 = vmul.f32 %v5642, %v5651
    %v5654 = vmul.f32 %v5644, %v5652
    %v5655 = vpack.c.bf16 %v5654, %v5653
    %5656 = vrot.lane.b32.xlu0 %v5578, 64
    %v5657 = vpop.permute.xlu0 %5656
    %v5659 = vsel %vm4983, %v5655, 0
    %v5662 = vsel %vm4522, %v5657, 0
    %5664 = vmatprep.subr.bf16.mxu0 0
    %5665 = vmatpush1.bf16.msra.mxu0 0
    %5666 = vmatprep.subr.bf16.mxu0 0
    %5667 = vmatpush1.bf16.msra.mxu0 0
    %5668 = vmatprep.subr.bf16.mxu0 0
    %5669 = vmatpush1.bf16.msra.mxu0 0
    %5670 = vmatprep.subr.bf16.mxu0 0
    %5671 = vmatpush1.bf16.msra.mxu0 0
    %5672 = vmatprep.subr.bf16.mxu0 0
    %5673 = vmatpush1.bf16.msra.mxu0 0
    %5674 = vmatprep.subr.bf16.mxu0 0
    %5675 = vmatpush1.bf16.msra.mxu0 0
    %5676 = vmatprep.subr.bf16.mxu0 0
    %5677 = vmatpush1.bf16.msra.mxu0 0
    %5678 = vmatprep.subr.bf16.mxu0 0
    %5679 = vmatpush1.bf16.msra.mxu0 %v5662
    %5680 = vmatprep.subr.bf16.mxu0 0
    %5681 = vmatpush2.bf16.msra.mxu0 0
    %5682 = vmatprep.subr.bf16.mxu0 0
    %5683 = vmatpush2.bf16.msra.mxu0 0
    %5684 = vmatprep.subr.bf16.mxu0 0
    %5685 = vmatpush2.bf16.msra.mxu0 0
    %5686 = vmatprep.subr.bf16.mxu0 0
    %5687 = vmatpush2.bf16.msra.mxu0 0
    %5688 = vmatprep.subr.bf16.mxu0 0
    %5689 = vmatpush2.bf16.msra.mxu0 0
    %5690 = vmatprep.subr.bf16.mxu0 0
    %5691 = vmatpush2.bf16.msra.mxu0 0
    %5692 = vmatprep.subr.bf16.mxu0 0
    %5693 = vmatpush2.bf16.msra.mxu0 0
    %5694 = vmatprep.subr.bf16.mxu0 0
    %5695 = vmatpush2.bf16.msra.mxu0 0
    %5696 = vmatprep.mubr.bf16.mxu0 0
    %5697 = vmatmul.mubr.bf16.gmra.mxu0 %v5659
    %v5698 = vpop.f32.mrf.mxu0
    %v5699 = vadd.f32 0.0, %v5698
    %v5700 = vpop.f32.mrf.mxu0
    %v5701 = vpop.f32.mrf.mxu0
    %v5702 = vadd.f32 0.0, %v5701
    %v5703 = vpop.f32.mrf.mxu0
    %5704 = vdwg.mxu0
    %5705 = vrot.lane.b32.xlu0 %v5578, 112
    %v5706 = vpop.permute.xlu0 %5705
    %5707 = vrot.lane.b32.xlu0 %v5578, 80
    %v5708 = vpop.permute.xlu0 %5707
    %v5710 = vsel %vm863, %v5706, 0
    %v5713 = vsel %vm863, %v5708, 0
    %5715 = vmatprep.subr.bf16.mxu0 0
    %5716 = vmatpush1.bf16.xpose.msra.mxu0 0
    %5717 = vmatprep.subr.bf16.mxu0 0
    %5718 = vmatpush1.bf16.xpose.msra.mxu0 0
    %5719 = vmatprep.subr.bf16.mxu0 0
    %5720 = vmatpush1.bf16.xpose.msra.mxu0 0
    %5721 = vmatprep.subr.bf16.mxu0 0
    %5722 = vmatpush1.bf16.xpose.msra.mxu0 0
    %5723 = vmatprep.subr.bf16.mxu0 0
    %5724 = vmatpush1.bf16.xpose.msra.mxu0 0
    %5725 = vmatprep.subr.bf16.mxu0 0
    %5726 = vmatpush1.bf16.xpose.msra.mxu0 0
    %5727 = vmatprep.subr.bf16.mxu0 0
    %5728 = vmatpush1.bf16.xpose.msra.mxu0 0
    %5729 = vmatprep.subr.bf16.mxu0 0
    %5730 = vmatpush1.bf16.xpose.msra.mxu0 %v5713
    %5731 = vmatprep.subr.bf16.mxu0 0
    %5732 = vmatpush2.bf16.xpose.msra.mxu0 0
    %5733 = vmatprep.subr.bf16.mxu0 0
    %5734 = vmatpush2.bf16.xpose.msra.mxu0 0
    %5735 = vmatprep.subr.bf16.mxu0 0
    %5736 = vmatpush2.bf16.xpose.msra.mxu0 0
    %5737 = vmatprep.subr.bf16.mxu0 0
    %5738 = vmatpush2.bf16.xpose.msra.mxu0 0
    %5739 = vmatprep.subr.bf16.mxu0 0
    %5740 = vmatpush2.bf16.xpose.msra.mxu0 0
    %5741 = vmatprep.subr.bf16.mxu0 0
    %5742 = vmatpush2.bf16.xpose.msra.mxu0 0
    %5743 = vmatprep.subr.bf16.mxu0 0
    %5744 = vmatpush2.bf16.xpose.msra.mxu0 0
    %5745 = vmatprep.subr.bf16.mxu0 0
    %5746 = vmatpush2.bf16.xpose.msra.mxu0 0
    %5747 = vmatprep.mubr.bf16.mxu0 0
    %5748 = vmatmul.mubr.bf16.gmra.mxu0 %v5710
    %v5749 = vpop.f32.mrf.mxu0
    %v5750 = vadd.f32 0.0, %v5749
    %v5751 = vpop.f32.mrf.mxu0
    %v5752 = vpop.f32.mrf.mxu0
    %v5753 = vadd.f32 0.0, %v5752
    %v5754 = vpop.f32.mrf.mxu0
    %5755 = vdwg.mxu0
    %v5756 = vmul.f32 %v5750, 0.25
    %v5757 = vmul.f32 %v5753, 0.25
    %v5758 = vadd.f32 %v5756, %v4820
    %v5759 = vadd.f32 %v5757, %v4821
    %v5760 = vsel %vm4983, %v5758, -inf
    %5761 = vmax.xlane.f32.xlu0 %v5760
    %v5762 = vpop.xlane.xlu0 %5761
    %v5763 = vsel %vm4987, %v5759, -inf
    %5764 = vmax.xlane.f32.xlu0 %v5763
    %v5765 = vpop.xlane.xlu0 %5764
    %v5766 = vsub.f32 %v5758, %v5762
    %v5767 = vsub.f32 %v5759, %v5765
    %v5768 = vmul.f32 %v5766, 1.442695
    %v5769 = vpow.pop %v5768
    %v5770 = vmul.f32 %v5767, 1.442695
    %v5771 = vpow.pop %v5770
    %v5772 = vsel %vm4983, %v5769, 0.0
    %5773 = vadd.xlane.f32.xlu0 %v5772
    %v5774 = vpop.xlane.xlu0 %5773
    %v5775 = vsel %vm4987, %v5771, 0.0
    %5776 = vadd.xlane.f32.xlu0 %v5775
    %v5777 = vpop.xlane.xlu0 %5776
    %v5778 = vrcp.pop %v5774
    %v5779 = vrcp.pop %v5777
    %v5780 = vmul.f32 %v5769, %v5778
    %v5781 = vmul.f32 %v5771, %v5779
    %v5782 = vpack.c.bf16 %v5781, %v5780
    %5783 = vrot.lane.b32.xlu0 %v5578, 48
    %v5784 = vpop.permute.xlu0 %5783
    %v5786 = vsel %vm4983, %v5782, 0
    %v5789 = vsel %vm4522, %v5784, 0
    %5791 = vmatprep.subr.bf16.mxu0 0
    %5792 = vmatpush1.bf16.msra.mxu0 0
    %5793 = vmatprep.subr.bf16.mxu0 0
    %5794 = vmatpush1.bf16.msra.mxu0 0
    %5795 = vmatprep.subr.bf16.mxu0 0
    %5796 = vmatpush1.bf16.msra.mxu0 0
    %5797 = vmatprep.subr.bf16.mxu0 0
    %5798 = vmatpush1.bf16.msra.mxu0 0
    %5799 = vmatprep.subr.bf16.mxu0 0
    %5800 = vmatpush1.bf16.msra.mxu0 0
    %5801 = vmatprep.subr.bf16.mxu0 0
    %5802 = vmatpush1.bf16.msra.mxu0 0
    %5803 = vmatprep.subr.bf16.mxu0 0
    %5804 = vmatpush1.bf16.msra.mxu0 0
    %5805 = vmatprep.subr.bf16.mxu0 0
    %5806 = vmatpush1.bf16.msra.mxu0 %v5789
    %5807 = vmatprep.subr.bf16.mxu0 0
    %5808 = vmatpush2.bf16.msra.mxu0 0
    %5809 = vmatprep.subr.bf16.mxu0 0
    %5810 = vmatpush2.bf16.msra.mxu0 0
    %5811 = vmatprep.subr.bf16.mxu0 0
    %5812 = vmatpush2.bf16.msra.mxu0 0
    %5813 = vmatprep.subr.bf16.mxu0 0
    %5814 = vmatpush2.bf16.msra.mxu0 0
    %5815 = vmatprep.subr.bf16.mxu0 0
    %5816 = vmatpush2.bf16.msra.mxu0 0
    %5817 = vmatprep.subr.bf16.mxu0 0
    %5818 = vmatpush2.bf16.msra.mxu0 0
    %5819 = vmatprep.subr.bf16.mxu0 0
    %5820 = vmatpush2.bf16.msra.mxu0 0
    %5821 = vmatprep.subr.bf16.mxu0 0
    %5822 = vmatpush2.bf16.msra.mxu0 0
    %5823 = vmatprep.mubr.bf16.mxu0 0
    %5824 = vmatmul.mubr.bf16.gmra.mxu0 %v5786
    %v5825 = vpop.f32.mrf.mxu0
    %v5826 = vadd.f32 0.0, %v5825
    %v5827 = vpop.f32.mrf.mxu0
    %v5828 = vpop.f32.mrf.mxu0
    %v5829 = vadd.f32 0.0, %v5828
    %v5830 = vpop.f32.mrf.mxu0
    %5831 = vdwg.mxu0
    %5834 = vrot.lane.b32.xlu0 %v5826, 16
    %v5835 = vpop.permute.xlu0 %5834
    %5836 = vrot.lane.b32.xlu0 %v5829, 16
    %v5837 = vpop.permute.xlu0 %5836
    %v5840 = vsel %vm863, %v5699, %v5835
    %v5841 = vsel %vm863, %v5702, %v5837
    %v5842 = vld [vmem:[%s3 + $0x178] sm:$0xf]
    %v5843 = vld [vmem:[%s3 + $0x17c] sm:$0xf]
    %v5844 = vld [vmem:[%s3 + $0x180] sm:$0xf]
    %v5845 = vld [vmem:[%s3 + $0x184] sm:$0xf]
    %v5846 = vpack.c.bf16 %v5841, %v5840
    %v5851 = vunpack.c.l.b16 %v5842
    %v5852 = vunpack.c.l.b16 %v5843
    %v5853 = vunpack.c.l.b16 %v5844
    %v5854 = vunpack.c.l.b16 %v5845
    %v5855 = vpack.c.b16 %v5852, %v5851
    %v5856 = vpack.c.b16 %v5854, %v5853
    %v5860 = vsel %vm523, %v5846, 0
    %5862 = vmatprep.subr.bf16.mxu0 0
    %5863 = vmatpush1.bf16.msra.mxu0 0
    %5864 = vmatprep.subr.bf16.mxu0 0
    %5865 = vmatpush1.bf16.msra.mxu0 0
    %5866 = vmatprep.subr.bf16.mxu0 0
    %5867 = vmatpush1.bf16.msra.mxu0 0
    %5868 = vmatprep.subr.bf16.mxu0 0
    %5869 = vmatpush1.bf16.msra.mxu0 0
    %5870 = vmatprep.subr.bf16.mxu0 0
    %5871 = vmatpush1.bf16.msra.mxu0 0
    %5872 = vmatprep.subr.bf16.mxu0 0
    %5873 = vmatpush1.bf16.msra.mxu0 0
    %5874 = vmatprep.subr.bf16.mxu0 0
    %5875 = vmatpush1.bf16.msra.mxu0 %v5856
    %5876 = vmatprep.subr.bf16.mxu0 0
    %5877 = vmatpush1.bf16.msra.mxu0 %v5855
    %5878 = vmatprep.subr.bf16.mxu0 0
    %5879 = vmatpush2.bf16.msra.mxu0 0
    %5880 = vmatprep.subr.bf16.mxu0 0
    %5881 = vmatpush2.bf16.msra.mxu0 0
    %5882 = vmatprep.subr.bf16.mxu0 0
    %5883 = vmatpush2.bf16.msra.mxu0 0
    %5884 = vmatprep.subr.bf16.mxu0 0
    %5885 = vmatpush2.bf16.msra.mxu0 0
    %5886 = vmatprep.subr.bf16.mxu0 0
    %5887 = vmatpush2.bf16.msra.mxu0 0
    %5888 = vmatprep.subr.bf16.mxu0 0
    %5889 = vmatpush2.bf16.msra.mxu0 0
    %5890 = vmatprep.subr.bf16.mxu0 0
    %5891 = vmatpush2.bf16.msra.mxu0 0
    %5892 = vmatprep.subr.bf16.mxu0 0
    %5893 = vmatpush2.bf16.msra.mxu0 0
    %5894 = vmatprep.mubr.bf16.mxu0 0
    %5895 = vmatmul.mubr.bf16.gmra.mxu0 %v5860
    %v5896 = vpop.f32.mrf.mxu0
    %v5897 = vadd.f32 0.0, %v5896
    %v5898 = vpop.f32.mrf.mxu0
    %v5899 = vpop.f32.mrf.mxu0
    %v5900 = vadd.f32 0.0, %v5899
    %v5901 = vpop.f32.mrf.mxu0
    %5902 = vdwg.mxu0
    %v5903 = vadd.f32 %v5470, %v5897
    %v5904 = vadd.f32 %v5471, %v5900
    %v5905 = vld [vmem:[%s4 + $0x20] sm:$0x1]
    %v5906 = vlaneseq
    %v5907 = vshrl.u32 %v5906, 7
    %v5908 = vsub.s32 0, %v5907
    %v5909 = vrot.slane %v5905, %v5908
    %v5910 = vadd.f32 %v5903, %v5909
    %v5911 = vadd.f32 %v5904, %v5909
    %v5912 = vld [vmem:[%s4 + $0x21] sm:$0x1]
    %v5913 = vld [vmem:[%s4 + $0x22] sm:$0x1]
    %v5914 = vsel %vm523, %v5910, 0.0
    %5915 = vadd.xlane.f32.xlu0 %v5914
    %v5916 = vpop.xlane.xlu0 %5915
    %v5917 = vsel %vm4761, %v5911, 0.0
    %5918 = vadd.xlane.f32.xlu0 %v5917
    %v5919 = vpop.xlane.xlu0 %5918
    %v5920 = vmul.f32 %v5916, %v560
    %v5921 = vmul.f32 %v5919, %v560
    %v5922 = vsub.f32 %v5910, %v5920
    %v5923 = vsub.f32 %v5911, %v5921
    %v5924 = vmul.f32 %v5922, %v5922
    %v5925 = vmul.f32 %v5923, %v5923
    %v5926 = vsel %vm523, %v5924, 0.0
    %5927 = vadd.xlane.f32.xlu0 %v5926
    %v5928 = vpop.xlane.xlu0 %5927
    %v5929 = vsel %vm4761, %v5925, 0.0
    %5930 = vadd.xlane.f32.xlu0 %v5929
    %v5931 = vpop.xlane.xlu0 %5930
    %v5932 = vmul.f32 %v5928, %v560
    %v5933 = vmul.f32 %v5931, %v560
    %v5934 = vadd.f32 %v5932, 1e-05
    %v5935 = vadd.f32 %v5933, 1e-05
    %v5936 = vrsqrt.pop %v5934
    %v5937 = vrsqrt.pop %v5935
    %v5938 = vmul.f32 %v5922, %v5936
    %v5939 = vmul.f32 %v5923, %v5937
    %v5940 = vlaneseq
    %v5941 = vshrl.u32 %v5940, 7
    %v5942 = vsub.s32 0, %v5941
    %v5943 = vrot.slane %v5912, %v5942
    %v5944 = vmul.f32 %v5938, %v5943
    %v5945 = vmul.f32 %v5939, %v5943
    %v5946 = vlaneseq
    %v5947 = vshrl.u32 %v5946, 7
    %v5948 = vsub.s32 0, %v5947
    %v5949 = vrot.slane %v5913, %v5948
    %v5950 = vadd.f32 %v5944, %v5949
    %v5951 = vadd.f32 %v5945, %v5949
    %v5952 = vld [vmem:[%s3 + $0x188] sm:$0xf]
    %v5953 = vld [vmem:[%s3 + $0x18c] sm:$0xf]
    %v5954 = vld [vmem:[%s3 + $0x190] sm:$0xf]
    %v5955 = vld [vmem:[%s3 + $0x194] sm:$0xf]
    %v5956 = vpack.c.bf16 %v5951, %v5950
    %v5957 = vld [vmem:[%s4 + $0x23] sm:$0x1]
    %v5958 = vlaneseq
    %v5959 = vshrl.u32 %v5958, 7
    %v5960 = vsub.s32 0, %v5959
    %v5961 = vrot.slane %v5957, %v5960
    %v5966 = vunpack.c.l.b16 %v5952
    %v5967 = vunpack.c.l.b16 %v5953
    %v5968 = vunpack.c.l.b16 %v5954
    %v5969 = vunpack.c.l.b16 %v5955
    %v5970 = vpack.c.b16 %v5967, %v5966
    %v5971 = vpack.c.b16 %v5969, %v5968
    %v5975 = vsel %vm523, %v5956, 0
    %5977 = vmatprep.subr.bf16.mxu0 0
    %5978 = vmatpush1.bf16.msra.mxu0 0
    %5979 = vmatprep.subr.bf16.mxu0 0
    %5980 = vmatpush1.bf16.msra.mxu0 0
    %5981 = vmatprep.subr.bf16.mxu0 0
    %5982 = vmatpush1.bf16.msra.mxu0 0
    %5983 = vmatprep.subr.bf16.mxu0 0
    %5984 = vmatpush1.bf16.msra.mxu0 0
    %5985 = vmatprep.subr.bf16.mxu0 0
    %5986 = vmatpush1.bf16.msra.mxu0 0
    %5987 = vmatprep.subr.bf16.mxu0 0
    %5988 = vmatpush1.bf16.msra.mxu0 0
    %5989 = vmatprep.subr.bf16.mxu0 0
    %5990 = vmatpush1.bf16.msra.mxu0 %v5971
    %5991 = vmatprep.subr.bf16.mxu0 0
    %5992 = vmatpush1.bf16.msra.mxu0 %v5970
    %5993 = vmatprep.subr.bf16.mxu0 0
    %5994 = vmatpush2.bf16.msra.mxu0 0
    %5995 = vmatprep.subr.bf16.mxu0 0
    %5996 = vmatpush2.bf16.msra.mxu0 0
    %5997 = vmatprep.subr.bf16.mxu0 0
    %5998 = vmatpush2.bf16.msra.mxu0 0
    %5999 = vmatprep.subr.bf16.mxu0 0
    %6000 = vmatpush2.bf16.msra.mxu0 0
    %6001 = vmatprep.subr.bf16.mxu0 0
    %6002 = vmatpush2.bf16.msra.mxu0 0
    %6003 = vmatprep.subr.bf16.mxu0 0
    %6004 = vmatpush2.bf16.msra.mxu0 0
    %6005 = vmatprep.subr.bf16.mxu0 0
    %6006 = vmatpush2.bf16.msra.mxu0 0
    %6007 = vmatprep.subr.bf16.mxu0 0
    %6008 = vmatpush2.bf16.msra.mxu0 0
    %6009 = vmatprep.mubr.bf16.mxu0 0
    %6010 = vmatmul.mubr.bf16.gmra.mxu0 %v5975
    %v6011 = vpop.f32.mrf.mxu0
    %v6012 = vadd.f32 %v5961, %v6011
    %v6013 = vpop.f32.mrf.mxu0
    %v6014 = vpop.f32.mrf.mxu0
    %v6015 = vadd.f32 %v5961, %v6014
    %v6016 = vpop.f32.mrf.mxu0
    %6017 = vdwg.mxu0
    %v6018 = vmul.f32 %v6012, 1.702
    %v6019 = vmul.f32 %v6015, 1.702
    %v6020 = vxor.u32 %v6018, 2147483648
    %v6021 = vxor.u32 %v6019, 2147483648
    %v6022 = vmul.f32 %v6020, 1.442695
    %v6023 = vpow.pop %v6022
    %v6024 = vmul.f32 %v6021, 1.442695
    %v6025 = vpow.pop %v6024
    %v6026 = vadd.f32 %v6023, 1.0
    %v6027 = vadd.f32 %v6025, 1.0
    %v6028 = vrcp.pop %v6026
    %v6029 = vmul.f32 1.0, %v6028
    %v6030 = vrcp.pop %v6027
    %v6031 = vmul.f32 1.0, %v6030
    %v6032 = vmul.f32 %v6012, %v6029
    %v6033 = vmul.f32 %v6015, %v6031
    %v6034 = vld [vmem:[%s3 + $0x198] sm:$0xf]
    %v6035 = vld [vmem:[%s3 + $0x19c] sm:$0xf]
    %v6036 = vld [vmem:[%s3 + $0x1a0] sm:$0xf]
    %v6037 = vld [vmem:[%s3 + $0x1a4] sm:$0xf]
    %v6038 = vld [vmem:[%s3 + $0x1a8] sm:$0xf]
    %v6039 = vld [vmem:[%s3 + $0x1ac] sm:$0xf]
    %v6040 = vld [vmem:[%s3 + $0x1b0] sm:$0xf]
    %v6041 = vld [vmem:[%s3 + $0x1b4] sm:$0xf]
    %v6042 = vpack.c.bf16 %v6033, %v6032
    %v6051 = vunpack.c.l.b16 %v6034
    %v6052 = vunpack.c.l.b16 %v6035
    %v6053 = vunpack.c.l.b16 %v6036
    %v6054 = vunpack.c.l.b16 %v6037
    %v6055 = vunpack.c.l.b16 %v6038
    %v6056 = vunpack.c.l.b16 %v6039
    %v6057 = vunpack.c.l.b16 %v6040
    %v6058 = vunpack.c.l.b16 %v6041
    %v6059 = vpack.c.b16 %v6052, %v6051
    %v6060 = vpack.c.b16 %v6054, %v6053
    %v6061 = vpack.c.b16 %v6056, %v6055
    %v6062 = vpack.c.b16 %v6058, %v6057
    %v6068 = vsel %vm2341, %v6042, 0
    %6070 = vmatprep.subr.bf16.mxu0 0
    %6071 = vmatpush1.bf16.msra.mxu0 0
    %6072 = vmatprep.subr.bf16.mxu0 0
    %6073 = vmatpush1.bf16.msra.mxu0 0
    %6074 = vmatprep.subr.bf16.mxu0 0
    %6075 = vmatpush1.bf16.msra.mxu0 0
    %6076 = vmatprep.subr.bf16.mxu0 0
    %6077 = vmatpush1.bf16.msra.mxu0 0
    %6078 = vmatprep.subr.bf16.mxu0 0
    %6079 = vmatpush1.bf16.msra.mxu0 %v6062
    %6080 = vmatprep.subr.bf16.mxu0 0
    %6081 = vmatpush1.bf16.msra.mxu0 %v6061
    %6082 = vmatprep.subr.bf16.mxu0 0
    %6083 = vmatpush1.bf16.msra.mxu0 %v6060
    %6084 = vmatprep.subr.bf16.mxu0 0
    %6085 = vmatpush1.bf16.msra.mxu0 %v6059
    %6086 = vmatprep.subr.bf16.mxu0 0
    %6087 = vmatpush2.bf16.msra.mxu0 0
    %6088 = vmatprep.subr.bf16.mxu0 0
    %6089 = vmatpush2.bf16.msra.mxu0 0
    %6090 = vmatprep.subr.bf16.mxu0 0
    %6091 = vmatpush2.bf16.msra.mxu0 0
    %6092 = vmatprep.subr.bf16.mxu0 0
    %6093 = vmatpush2.bf16.msra.mxu0 0
    %6094 = vmatprep.subr.bf16.mxu0 0
    %6095 = vmatpush2.bf16.msra.mxu0 0
    %6096 = vmatprep.subr.bf16.mxu0 0
    %6097 = vmatpush2.bf16.msra.mxu0 0
    %6098 = vmatprep.subr.bf16.mxu0 0
    %6099 = vmatpush2.bf16.msra.mxu0 0
    %6100 = vmatprep.subr.bf16.mxu0 0
    %6101 = vmatpush2.bf16.msra.mxu0 0
    %6102 = vmatprep.mubr.bf16.mxu0 0
    %6103 = vmatmul.mubr.bf16.gmra.mxu0 %v6068
    %v6104 = vpop.f32.mrf.mxu0
    %v6105 = vadd.f32 0.0, %v6104
    %v6106 = vpop.f32.mrf.mxu0
    %v6107 = vpop.f32.mrf.mxu0
    %v6108 = vadd.f32 0.0, %v6107
    %v6109 = vpop.f32.mrf.mxu0
    %6110 = vdwg.mxu0
    %v6111 = vadd.f32 %v5910, %v6105
    %v6112 = vadd.f32 %v5911, %v6108
    %v6113 = vld [vmem:[%s4 + $0x24] sm:$0x1]
    %v6114 = vlaneseq
    %v6115 = vshrl.u32 %v6114, 7
    %v6116 = vsub.s32 0, %v6115
    %v6117 = vrot.slane %v6113, %v6116
    %v6118 = vadd.f32 %v6111, %v6117
    %v6119 = vadd.f32 %v6112, %v6117
    %v6120 = vld [vmem:[%s4 + $0x25] sm:$0x1]
    %v6121 = vld [vmem:[%s4 + $0x26] sm:$0x1]
    %v6122 = vsel %vm523, %v6118, 0.0
    %6123 = vadd.xlane.f32.xlu0 %v6122
    %v6124 = vpop.xlane.xlu0 %6123
    %v6125 = vsel %vm4761, %v6119, 0.0
    %6126 = vadd.xlane.f32.xlu0 %v6125
    %v6127 = vpop.xlane.xlu0 %6126
    %v6128 = vmul.f32 %v6124, %v560
    %v6129 = vmul.f32 %v6127, %v560
    %v6130 = vsub.f32 %v6118, %v6128
    %v6131 = vsub.f32 %v6119, %v6129
    %v6132 = vmul.f32 %v6130, %v6130
    %v6133 = vmul.f32 %v6131, %v6131
    %v6134 = vsel %vm523, %v6132, 0.0
    %6135 = vadd.xlane.f32.xlu0 %v6134
    %v6136 = vpop.xlane.xlu0 %6135
    %v6137 = vsel %vm4761, %v6133, 0.0
    %6138 = vadd.xlane.f32.xlu0 %v6137
    %v6139 = vpop.xlane.xlu0 %6138
    %v6140 = vmul.f32 %v6136, %v560
    %v6141 = vmul.f32 %v6139, %v560
    %v6142 = vadd.f32 %v6140, 1e-05
    %v6143 = vadd.f32 %v6141, 1e-05
    %v6144 = vrsqrt.pop %v6142
    %v6145 = vrsqrt.pop %v6143
    %v6146 = vmul.f32 %v6130, %v6144
    %v6147 = vmul.f32 %v6131, %v6145
    %v6148 = vlaneseq
    %v6149 = vshrl.u32 %v6148, 7
    %v6150 = vsub.s32 0, %v6149
    %v6151 = vrot.slane %v6120, %v6150
    %v6152 = vmul.f32 %v6146, %v6151
    %v6153 = vmul.f32 %v6147, %v6151
    %v6154 = vlaneseq
    %v6155 = vshrl.u32 %v6154, 7
    %v6156 = vsub.s32 0, %v6155
    %v6157 = vrot.slane %v6121, %v6156
    %v6158 = vadd.f32 %v6152, %v6157
    %v6159 = vadd.f32 %v6153, %v6157
    %v6161 = vrot.slane %v6158, 1
    %v6164 = vrot.slane %v6158, 2
    %v6165 = vrot.slane %v6159, 2
    %v6166 = vsel %vm4754, %v6164, %v6165
    %v6168 = vsel %vm4520, %v6161, %v6166
    %v6169 = vld [vmem:[%s3 + $0x1b8] sm:$0xf]
    %v6170 = vld [vmem:[%s3 + $0x1bc] sm:$0xf]
    %v6171 = vld [vmem:[%s3 + $0x1c0] sm:$0xf]
    %v6172 = vld [vmem:[%s3 + $0x1c4] sm:$0xf]
    %v6173 = vpack.c.bf16 %v6168, %v6168
    %v6178 = vunpack.c.l.b16 %v6169
    %v6179 = vunpack.c.l.b16 %v6170
    %v6180 = vunpack.c.l.b16 %v6171
    %v6181 = vunpack.c.l.b16 %v6172
    %v6182 = vpack.c.b16 %v6179, %v6178
    %v6183 = vpack.c.b16 %v6181, %v6180
    %v6187 = vsel %vm523, %v6173, 0
    %6189 = vmatprep.subr.bf16.mxu0 0
    %6190 = vmatpush1.bf16.msra.mxu0 0
    %6191 = vmatprep.subr.bf16.mxu0 0
    %6192 = vmatpush1.bf16.msra.mxu0 0
    %6193 = vmatprep.subr.bf16.mxu0 0
    %6194 = vmatpush1.bf16.msra.mxu0 0
    %6195 = vmatprep.subr.bf16.mxu0 0
    %6196 = vmatpush1.bf16.msra.mxu0 0
    %6197 = vmatprep.subr.bf16.mxu0 0
    %6198 = vmatpush1.bf16.msra.mxu0 0
    %6199 = vmatprep.subr.bf16.mxu0 0
    %6200 = vmatpush1.bf16.msra.mxu0 0
    %6201 = vmatprep.subr.bf16.mxu0 0
    %6202 = vmatpush1.bf16.msra.mxu0 %v6183
    %6203 = vmatprep.subr.bf16.mxu0 0
    %6204 = vmatpush1.bf16.msra.mxu0 %v6182
    %6205 = vmatprep.subr.bf16.mxu0 0
    %6206 = vmatpush2.bf16.msra.mxu0 0
    %6207 = vmatprep.subr.bf16.mxu0 0
    %6208 = vmatpush2.bf16.msra.mxu0 0
    %6209 = vmatprep.subr.bf16.mxu0 0
    %6210 = vmatpush2.bf16.msra.mxu0 0
    %6211 = vmatprep.subr.bf16.mxu0 0
    %6212 = vmatpush2.bf16.msra.mxu0 0
    %6213 = vmatprep.subr.bf16.mxu0 0
    %6214 = vmatpush2.bf16.msra.mxu0 0
    %6215 = vmatprep.subr.bf16.mxu0 0
    %6216 = vmatpush2.bf16.msra.mxu0 0
    %6217 = vmatprep.subr.bf16.mxu0 0
    %6218 = vmatpush2.bf16.msra.mxu0 0
    %6219 = vmatprep.subr.bf16.mxu0 0
    %6220 = vmatpush2.bf16.msra.mxu0 0
    %6221 = vmatprep.mubr.bf16.mxu0 0
    %6222 = vmatmul.mubr.bf16.gmra.mxu0 %v6187
    %v6223 = vpop.f32.mrf.mxu0
    %v6224 = vadd.f32 0.0, %v6223
    %v6225 = vpop.f32.mrf.mxu0
    %v6226 = vpop.f32.mrf.mxu0
    %v6227 = vpop.f32.mrf.mxu0
    %6228 = vdwg.mxu0
    %v6229 = vmul.f32 %v6224, %v6224
    %v6230 = vsel %vm523, %v6229, 0.0
    %6231 = vadd.xlane.f32.xlu0 %v6230
    %v6232 = vpop.xlane.xlu0 %6231
    %v6233 = vrsqrt.pop %v6232
    %v6234 = vmul.f32 %v6224, %v6233
    %s6235 = sld [smem:[#allocation2]]
    %v6236 = vstv %s6235
    %v6237 = vmul.f32 %v6236, 1.442695
    %v6238 = vpow.pop %v6237
    %s6239 = vtos %v6238
    %v6240 = vpack.c.bf16 %v6234, %v6234
    %v6241 = vpack.c.bf16 %v4590, %v4590
    %v6243 = vsel %vm523, %v6240, 0
    %v6246 = vsel %vm523, %v6241, 0
    %6248 = vmatprep.subr.bf16.mxu0 0
    %6249 = vmatpush1.bf16.xpose.msra.mxu0 0
    %6250 = vmatprep.subr.bf16.mxu0 0
    %6251 = vmatpush1.bf16.xpose.msra.mxu0 0
    %6252 = vmatprep.subr.bf16.mxu0 0
    %6253 = vmatpush1.bf16.xpose.msra.mxu0 0
    %6254 = vmatprep.subr.bf16.mxu0 0
    %6255 = vmatpush1.bf16.xpose.msra.mxu0 0
    %6256 = vmatprep.subr.bf16.mxu0 0
    %6257 = vmatpush1.bf16.xpose.msra.mxu0 0
    %6258 = vmatprep.subr.bf16.mxu0 0
    %6259 = vmatpush1.bf16.xpose.msra.mxu0 0
    %6260 = vmatprep.subr.bf16.mxu0 0
    %6261 = vmatpush1.bf16.xpose.msra.mxu0 0
    %6262 = vmatprep.subr.bf16.mxu0 0
    %6263 = vmatpush1.bf16.xpose.msra.mxu0 %v6246
    %6264 = vmatprep.subr.bf16.mxu0 0
    %6265 = vmatpush2.bf16.xpose.msra.mxu0 0
    %6266 = vmatprep.subr.bf16.mxu0 0
    %6267 = vmatpush2.bf16.xpose.msra.mxu0 0
    %6268 = vmatprep.subr.bf16.mxu0 0
    %6269 = vmatpush2.bf16.xpose.msra.mxu0 0
    %6270 = vmatprep.subr.bf16.mxu0 0
    %6271 = vmatpush2.bf16.xpose.msra.mxu0 0
    %6272 = vmatprep.subr.bf16.mxu0 0
    %6273 = vmatpush2.bf16.xpose.msra.mxu0 0
    %6274 = vmatprep.subr.bf16.mxu0 0
    %6275 = vmatpush2.bf16.xpose.msra.mxu0 0
    %6276 = vmatprep.subr.bf16.mxu0 0
    %6277 = vmatpush2.bf16.xpose.msra.mxu0 0
    %6278 = vmatprep.subr.bf16.mxu0 0
    %6279 = vmatpush2.bf16.xpose.msra.mxu0 0
    %6280 = vmatprep.mubr.bf16.mxu0 0
    %6281 = vmatmul.mubr.bf16.gmra.mxu0 %v6243
    %v6282 = vpop.f32.mrf.mxu0
    %v6283 = vadd.f32 0.0, %v6282
    %v6284 = vpop.f32.mrf.mxu0
    %v6285 = vpop.f32.mrf.mxu0
    %v6286 = vpop.f32.mrf.mxu0
    %6287 = vdwg.mxu0
    %v6288 = vstv %s6239
    %v6289 = vmul.f32 %v6288, %v6283
    %vm6290 = vcmask 48128
    %6291 = vst.msk [vmem:[#allocation5] sm:$0xff] %vm6290, %v6289
    // Predicated region
    $region22: #{tpu_custom_call.1} parent=1 // pred_check
      _
    $region23: #{tpu_custom_call.1} parent=1 // pred_check_branch
      %6293 = sbr.rel (0) target = $region25
    $region24: #{tpu_custom_call.1} parent=1 // pred_region
      %s6295 = ssub.s32 128, 128
      %6296 = vsyncadd [#allocation4], %s6295
      %s6298 = sshll.u32 [#allocation3], 4
      %s6299 = int_to_ptr.vmem [resolvable:$true] %s6298
      %6301 = dma.vmem_to_hbm [thread:$0]  %s6299, 128, %s5, [#allocation4]
    $region25: #{tpu_custom_call.1} parent=1 // pred_fallthru
      _
    // Predicated region
    $region26: #{tpu_custom_call.1} parent=1 // pred_check
      _
    $region27: #{tpu_custom_call.1} parent=1 // pred_check_branch
      %6303 = sbr.rel (0) target = $region29
    $region28: #{tpu_custom_call.1} parent=1 // pred_region
      %s6305 = ssub.s32 128, 128
      %6306 = vsyncadd [#allocation6], %s6305
      %s6308 = sshll.u32 [#allocation5], 4
      %s6309 = int_to_ptr.vmem [resolvable:$true] %s6308
      %6311 = dma.vmem_to_hbm [thread:$0]  %s6309, 128, %s6, [#allocation6]
    $region29: #{tpu_custom_call.1} parent=1 // pred_fallthru
      _
    // Predicated region
    $region30: #{tpu_custom_call.1} parent=1 // pred_check
      _
    $region31: #{tpu_custom_call.1} parent=1 // pred_check_branch
      %6313 = sbr.rel (0) target = $region33
    $region32: #{tpu_custom_call.1} parent=1 // pred_region
      %6314 = dma.done [#allocation4], 128
    $region33: #{tpu_custom_call.1} parent=1 // pred_fallthru
      _
    // Predicated region
    $region34: #{tpu_custom_call.1} parent=1 // pred_check
      _
    $region35: #{tpu_custom_call.1} parent=1 // pred_check_branch
      %6316 = sbr.rel (0) target = $region37
    $region36: #{tpu_custom_call.1} parent=1 // pred_region
      %6317 = dma.done [#allocation6], 128
    $region37: #{tpu_custom_call.1} parent=1 // pred_fallthru
      _
    %6318 = vsyncpa [#allocation4], 1
    %6319 = vsyncpa [#allocation6], 1

</llo_original>
